<compile_context>
chip_gen: v7x
topology: tpu7x:2x2x1
jax: 0.10.0
libtpu: 0.0.40
codegen_flags: <defaults>
</compile_context>

<pallas_src>
import functools

import jax
import jax.numpy as jnp
from jax.experimental import pallas as pl
from jax.experimental.pallas import tpu as pltpu

KPAD = 16     # channel padding for conv in/out channels (real: 6 / 6 / 12)
CPOUT = 128   # lane padding of the final logits (lane-dense output store)
HID = 1024    # decoder hidden width


def _round_up(n, m):
    return (n + m - 1) // m * m


def _nbytes(a):
    n = 1
    for s in a.shape:
        n *= int(s)
    return n * jnp.dtype(a.dtype).itemsize


# ----------------------------- fused Pallas kernel -----------------------------

def _neural_kernel(x_ref, w1_ref, b1_ref, w2_ref, b2_ref, w1p_ref, l1b_ref,
                   l2w_ref, l2b_ref, o_ref, y_ref, *, TB, H, W, OH2, OW2):
    """One batch tile of `Neural.forward`, fully VMEM-resident.

    x_ref   : (1, ROWS, KPAD)  f32   channel-last rows r = b*H*W + h*W + w (zero-padded)
    w1_ref  : (9, KPAD, KPAD)  bf16  conv1 weight (BN scale folded), k = i*3 + j
    b1_ref  : (1, KPAD)        f32   conv1 + BN folded bias
    w2_ref  : (9, KPAD, KPAD)  bf16  conv2 weight (BN scale folded)
    b2_ref  : (1, KPAD)        f32
    w1p_ref : (16, KPAD, HID)  bf16  Linear1 weight, rows permuted to (spatial p, channel)
    l1b_ref : (1, HID)         f32
    l2w_ref : (HID, CPOUT)     bf16  Linear2 weight, output dim zero-padded to 128 lanes
    l2b_ref : (1, CPOUT)       f32
    o_ref   : (1, TB, CPOUT)   f32   padded logits for this batch tile
    y_ref   : (ROWS, KPAD)     f32   scratch staging conv activations
    """
    f32, bf16 = jnp.float32, jnp.bfloat16
    HW = H * W
    N = TB * HW
    ROWS = y_ref.shape[0]
    hid = w1p_ref.shape[2]

    # ---- conv_block1: Conv2d(C,6,3) + BN + ReLU (9 shifted full-plane matmuls) ----
    acc1 = jnp.zeros((N, KPAD), f32)
    for i in range(3):
        for j in range(3):
            d = i * W + j
            acc1 = acc1 + jnp.dot(x_ref[0, d:d + N, :].astype(bf16),
                                  w1_ref[i * 3 + j],
                                  preferred_element_type=f32)
    y1 = jnp.maximum(acc1 + b1_ref[...], 0.0)

    # Stage y1 (plus zeroed tail rows) so conv2 can read shifted slabs.
    y_ref[N:ROWS, :] = jnp.zeros((ROWS - N, KPAD), f32)
    y_ref[0:N, :] = y1

    # ---- conv_block2: Conv2d(6,12,3) + BN + ReLU ----
    acc2 = jnp.zeros((N, KPAD), f32)
    for i in range(3):
        for j in range(3):
            d = i * W + j
            acc2 = acc2 + jnp.dot(y_ref[d:d + N, :].astype(bf16),
                                  w2_ref[i * 3 + j],
                                  preferred_element_type=f32)
    y2 = jnp.maximum(acc2 + b2_ref[...], 0.0)

    # Restage: rows [0, N) now hold conv2 output (valid where h < OH2 and w < OW2).
    y_ref[0:N, :] = y2

    # ---- decoder: Linear(12*4*4, 1024) -> Sigmoid -> Linear(1024, n_classes) ----
    # PyTorch's (C,H,W) flatten order is baked into w1p; each valid spatial position
    # contributes one (TB,16)@(16,HID) matmul; the batch rows are gathered with a
    # single strided read (rows b*HW + r for b = 0..TB-1).
    h_acc = jnp.zeros((TB, hid), f32)
    for p in range(OH2 * OW2):
        oh, ow = p // OW2, p % OW2
        r = oh * W + ow
        rows = y_ref[pl.ds(r, TB, stride=HW), :]           # (TB, KPAD)
        h_acc = h_acc + jnp.dot(rows.astype(bf16), w1p_ref[p],
                                preferred_element_type=f32)
    h_pre = h_acc + l1b_ref[...]

    # Sigmoid: exp on the EUP + reciprocal (approx=True would make it fully EUP-resident).
    sig = pl.reciprocal(1.0 + jnp.exp(-h_pre), approx=False)

    out = jnp.dot(sig.astype(bf16), l2w_ref[...],
                  preferred_element_type=f32) + l2b_ref[...]
    o_ref[0, :, :] = out


# ------------------------- host-side one-time weight packing -------------------------

def prepare_weights(params, n_classes, eps=1e-5):
    """Fold BN into the conv weights, compact channel padding to KPAD=16, cast the
    large weights to bf16, and permute Linear1's rows so NHWC layout + PyTorch's
    (C,H,W) flatten order are absorbed on the host."""
    assert n_classes <= CPOUT

    def fold_conv(w_oihw, conv_b, g, beta, rm, rv):
        scale = g / jnp.sqrt(rv + eps)                       # (Cout,)
        bias = beta + (conv_b - rm) * scale                  # (Cout,)
        cout, cin, kh, kw = w_oihw.shape
        assert cin <= KPAD and cout <= KPAD
        w = (w_oihw * scale[:, None, None, None]).transpose(2, 3, 1, 0)  # (kh,kw,cin,cout)
        w = w.reshape(kh * kw, cin, cout)
        w_pad = jnp.zeros((kh * kw, KPAD, KPAD), jnp.float32).at[:, :cin, :cout].set(w)
        b_pad = jnp.zeros((1, KPAD), jnp.float32).at[0, :cout].set(bias)
        return w_pad.astype(jnp.bfloat16), b_pad

    w1, b1 = fold_conv(params["c1_w"], params["c1_b"], params["bn1_g"],
                       params["bn1_b"], params["bn1_rm"], params["bn1_rv"])
    w2, b2 = fold_conv(params["c2_w"], params["c2_b"], params["bn2_g"],
                       params["bn2_b"], params["bn2_rm"], params["bn2_rv"])

    # Linear1: PyTorch flatten index = c*16 + oh*4 + ow  ->  (p = oh*4 + ow, c) rows,
    # contraction dim compacted to KPAD (12 real channels), bf16.
    c2out, oh2, ow2 = 12, 4, 4
    l1 = params["l1_w"].reshape(c2out, oh2, ow2, HID).transpose(1, 2, 0, 3)  # (4,4,12,HID)
    l1 = l1.reshape(oh2 * ow2, c2out, HID)
    w1p = jnp.zeros((oh2 * ow2, KPAD, HID), jnp.float32).at[:, :c2out, :].set(l1)
    w1p = w1p.astype(jnp.bfloat16)
    l1b = params["l1_b"].reshape(1, HID).astype(jnp.float32)

    # Linear2: pad the output dim to 128 lanes for a lane-dense output store, bf16.
    l2w = jnp.zeros((HID, CPOUT), jnp.float32).at[:, :n_classes].set(params["l2_w"])
    l2w = l2w.astype(jnp.bfloat16)
    l2b = jnp.zeros((1, CPOUT), jnp.float32).at[0, :n_classes].set(params["l2_b"].reshape(-1))

    return dict(w1=w1, b1=b1, w2=w2, b2=b2, w1p=w1p, l1b=l1b, l2w=l2w, l2b=l2b)


# ----------------------------------- forward -----------------------------------

def neural_forward(x_nchw, packed, n_classes):
    B, C, H, W = x_nchw.shape
    OH2, OW2 = H - 4, W - 4                     # spatial after two 3x3 valid convs
    # Geometry guard: the decoder expects 12*4*4 features -> two VALID 3x3 convs on 8x8.
    assert (H, W, OH2, OW2) == (8, 8, 4, 4), "Neural.forward requires 8x8 spatial input"
    assert C <= KPAD, "input channels must fit the KPAD channel padding"

    HW = H * W
    TB = min(B, 2)                              # images per grid step (<=128 act. rows)
    NT = pl.cdiv(B, TB)
    B_pad = NT * TB
    N_t = TB * HW
    ROWS_T = _round_up(N_t + 2 * W + 2, 8)      # room for the max shift d = 2*W + 2

    # NCHW -> channel-last rows (b*H*W + h*W + w, c), zero-padded, split into tile slabs.
    x_rows = x_nchw.transpose(0, 2, 3, 1).reshape(B * HW, C)
    x_full = jnp.zeros((B_pad * HW, KPAD), jnp.float32).at[:B * HW, :C].set(x_rows)
    x_tiles = jnp.zeros((NT, ROWS_T, KPAD), jnp.float32).at[:, :N_t, :].set(
        x_full.reshape(NT, N_t, KPAD))

    kernel = functools.partial(_neural_kernel, TB=TB, H=H, W=W, OH2=OH2, OW2=OW2)

    weights = [packed["w1"], packed["b1"], packed["w2"], packed["b2"],
               packed["w1p"], packed["l1b"], packed["l2w"], packed["l2b"]]

    def resident(a):
        # Whole weight as one block, constant index -> stays VMEM-resident across grid.
        if len(a.shape) == 2:
            return pl.BlockSpec(a.shape, lambda t: (0, 0))
        return pl.BlockSpec(a.shape, lambda t: (0, 0, 0))

    grid_spec = pltpu.PrefetchScalarGridSpec(
        num_scalar_prefetch=0,
        grid=(NT,),
        in_specs=[pl.BlockSpec((1, ROWS_T, KPAD), lambda t: (t, 0, 0))]
                 + [resident(a) for a in weights],
        out_specs=pl.BlockSpec((1, TB, CPOUT), lambda t: (t, 0, 0)),
        scratch_shapes=[pltpu.VMEM((ROWS_T, KPAD), jnp.float32)],
    )

    # VMEM budget computed from the actual footprint (double-buffered blocks + scratch
    # + headroom); well under 64 MiB (v7x) / 128 MiB (v5e, v6e).
    per_step = (ROWS_T * KPAD * 4
                + sum(_nbytes(a) for a in weights)
                + TB * CPOUT * 4)
    vmem_limit = int(min(32 * 1024 * 1024, 2 * per_step + 8 * 1024 * 1024))

    out = pl.pallas_call(
        kernel,
        out_shape=jax.ShapeDtypeStruct((NT, TB, CPOUT), jnp.float32),
        grid_spec=grid_spec,
        compiler_params=pltpu.CompilerParams(
            dimension_semantics=("parallel",),   # shard batch tiles across v7x's two TCs
            vmem_limit_bytes=vmem_limit),
    )(x_tiles, *weights)

    return out.reshape(B_pad, CPOUT)[:B, :n_classes]


# ----------------------- pure-JAX reference (sanity check) -----------------------

def neural_forward_ref(x, params, eps=1e-5):
    def block(xin, w, b, g, beta, rm, rv):
        y = jax.lax.conv_general_dilated(xin, w, (1, 1), "VALID",
                                         dimension_numbers=("NCHW", "OIHW", "NCHW"))
        y = y + b[None, :, None, None]
        y = (y - rm[None, :, None, None]) / jnp.sqrt(rv[None, :, None, None] + eps)
        y = y * g[None, :, None, None] + beta[None, :, None, None]
        return jnp.maximum(y, 0.0)

    y = block(x, params["c1_w"], params["c1_b"], params["bn1_g"], params["bn1_b"],
              params["bn1_rm"], params["bn1_rv"])
    y = block(y, params["c2_w"], params["c2_b"], params["bn2_g"], params["bn2_b"],
              params["bn2_rm"], params["bn2_rv"])
    flat = y.reshape(y.shape[0], -1)
    h = jax.nn.sigmoid(flat @ params["l1_w"] + params["l1_b"])
    return h @ params["l2_w"] + params["l2_b"]


# ------------------------- deterministic parameter init -------------------------

def init_params(key, in_features=6, n_classes=10):
    ks = jax.random.split(key, 16)

    def unif(k, shape, fan_in):
        lim = 1.0 / jnp.sqrt(jnp.float32(fan_in))
        return jax.random.uniform(k, shape, jnp.float32, -lim, lim)

    p = {}
    # conv_block1: Conv2d(in_features, 6, 3), BN(6)
    p["c1_w"] = unif(ks[0], (6, in_features, 3, 3), in_features * 9)
    p["c1_b"] = unif(ks[1], (6,), in_features * 9)
    p["bn1_g"] = jax.random.uniform(ks[2], (6,), jnp.float32, 0.5, 1.5)
    p["bn1_b"] = jax.random.uniform(ks[3], (6,), jnp.float32, -0.5, 0.5)
    p["bn1_rm"] = jax.random.uniform(ks[4], (6,), jnp.float32, -0.5, 0.5)
    p["bn1_rv"] = jax.random.uniform(ks[5], (6,), jnp.float32, 0.5, 1.5)
    # conv_block2: Conv2d(6, 12, 3), BN(12)   (forward feeds the 6-channel output)
    p["c2_w"] = unif(ks[6], (12, 6, 3, 3), 6 * 9)
    p["c2_b"] = unif(ks[7], (12,), 6 * 9)
    p["bn2_g"] = jax.random.uniform(ks[8], (12,), jnp.float32, 0.5, 1.5)
    p["bn2_b"] = jax.random.uniform(ks[9], (12,), jnp.float32, -0.5, 0.5)
    p["bn2_rm"] = jax.random.uniform(ks[10], (12,), jnp.float32, -0.5, 0.5)
    p["bn2_rv"] = jax.random.uniform(ks[11], (12,), jnp.float32, 0.5, 1.5)
    # decoder: Linear(192, 1024), Linear(1024, n_classes); weights stored as (in, out)
    p["l1_w"] = unif(ks[12], (12 * 4 * 4, HID), 12 * 4 * 4)
    p["l1_b"] = unif(ks[13], (1, HID), 12 * 4 * 4)
    p["l2_w"] = unif(ks[14], (HID, n_classes), HID)
    p["l2_b"] = unif(ks[15], (1, n_classes), HID)
    return p


if __name__ == "__main__":
    key = jax.random.PRNGKey(0)
    kx, kp = jax.random.split(key)

    B, C, H, W = 2, 6, 8, 8          # NCHW; 8x8 -> 4x4 after two 3x3 valid convs
    n_classes = 10
    x = jax.random.normal(kx, (B, C, H, W), jnp.float32)
    params = init_params(kp, in_features=C, n_classes=n_classes)
    packed = prepare_weights(params, n_classes)

    fwd = jax.jit(functools.partial(neural_forward, n_classes=n_classes))
    out = jax.block_until_ready(fwd(x, packed))
    ref = jax.block_until_ready(neural_forward_ref(x, params))

    assert out.shape == (B, n_classes), out.shape
    # bf16 weights + bf16 MXU operands -> loosened tolerance per review.
    assert jnp.allclose(out, ref, atol=3e-2, rtol=3e-2), \
        "Pallas output mismatch vs JAX reference"
    print("KERNEL_OK")
</pallas_src>

<mosaic_0001>
module attributes {stable_mosaic.version = 11 : i64} {
  func.func @_neural_kernel(%arg0: i32, %arg1: memref<1x152x16xf32, #tpu.memory_space<vmem>>, %arg2: memref<9x16x16xbf16, #tpu.memory_space<vmem>>, %arg3: memref<1x16xf32, #tpu.memory_space<vmem>>, %arg4: memref<9x16x16xbf16, #tpu.memory_space<vmem>>, %arg5: memref<1x16xf32, #tpu.memory_space<vmem>>, %arg6: memref<16x16x1024xbf16, #tpu.memory_space<vmem>>, %arg7: memref<1x1024xf32, #tpu.memory_space<vmem>>, %arg8: memref<1024x128xbf16, #tpu.memory_space<vmem>>, %arg9: memref<1x128xf32, #tpu.memory_space<vmem>>, %arg10: memref<1x2x128xf32, #tpu.memory_space<vmem>>, %arg11: memref<152x16xf32, #tpu.memory_space<vmem>>) attributes {dimension_semantics = [#tpu.dimension_semantics<parallel>], iteration_bounds = array<i64: 1>, scalar_prefetch = 0 : i64, scratch_operands = 1 : i64, tpu.core_type = #tpu.core_type<tc>, window_params = [{transform_indices = @transform_0, window_bounds = array<i64: 1, 152, 16>}, {pipeline_mode = #tpu.pipeline_mode<synchronous>, transform_indices = @transform_1, window_bounds = array<i64: 9, 16, 16>}, {pipeline_mode = #tpu.pipeline_mode<synchronous>, transform_indices = @transform_2, window_bounds = array<i64: 1, 16>}, {pipeline_mode = #tpu.pipeline_mode<synchronous>, transform_indices = @transform_3, window_bounds = array<i64: 9, 16, 16>}, {pipeline_mode = #tpu.pipeline_mode<synchronous>, transform_indices = @transform_4, window_bounds = array<i64: 1, 16>}, {pipeline_mode = #tpu.pipeline_mode<synchronous>, transform_indices = @transform_5, window_bounds = array<i64: 16, 16, 1024>}, {pipeline_mode = #tpu.pipeline_mode<synchronous>, transform_indices = @transform_6, window_bounds = array<i64: 1, 1024>}, {pipeline_mode = #tpu.pipeline_mode<synchronous>, transform_indices = @transform_7, window_bounds = array<i64: 1024, 128>}, {pipeline_mode = #tpu.pipeline_mode<synchronous>, transform_indices = @transform_8, window_bounds = array<i64: 1, 128>}, {transform_indices = @transform_9, window_bounds = array<i64: 1, 2, 128>}]} {
    %cst = arith.constant 0.000000e+00 : f32
    %0 = vector.broadcast %cst : f32 to vector<128x16xf32>
    %c0 = arith.constant 0 : index
    %c0_0 = arith.constant 0 : index
    %c0_1 = arith.constant 0 : index
    %1 = vector.load %arg1[%c0, %c0_0, %c0_1] : memref<1x152x16xf32, #tpu.memory_space<vmem>>, vector<1x128x16xf32>
    %2 = vector.shape_cast %1 : vector<1x128x16xf32> to vector<128x16xf32>
    %3 = arith.truncf %2 : vector<128x16xf32> to vector<128x16xbf16>
    %c0_2 = arith.constant 0 : index
    %c0_3 = arith.constant 0 : index
    %c0_4 = arith.constant 0 : index
    %4 = vector.load %arg2[%c0_2, %c0_3, %c0_4] : memref<9x16x16xbf16, #tpu.memory_space<vmem>>, vector<1x16x16xbf16>
    %5 = vector.shape_cast %4 : vector<1x16x16xbf16> to vector<16x16xbf16>
    %cst_5 = arith.constant dense<0.000000e+00> : vector<128x16xf32>
    %6 = tpu.matmul %3, %5, %cst_5 {dimension_numbers = #tpu.dot_dimension_numbers<[1], [0], [0], [1], [0, 0, 1, 1], [], []>} : vector<128x16xbf16>, vector<16x16xbf16>, vector<128x16xf32> -> vector<128x16xf32>
    %7 = arith.addf %0, %6 : vector<128x16xf32>
    %c0_6 = arith.constant 0 : index
    %c1 = arith.constant 1 : index
    %c0_7 = arith.constant 0 : index
    %8 = vector.load %arg1[%c0_6, %c1, %c0_7] : memref<1x152x16xf32, #tpu.memory_space<vmem>>, vector<1x128x16xf32>
    %9 = vector.shape_cast %8 : vector<1x128x16xf32> to vector<128x16xf32>
    %10 = arith.truncf %9 : vector<128x16xf32> to vector<128x16xbf16>
    %c1_8 = arith.constant 1 : index
    %c0_9 = arith.constant 0 : index
    %c0_10 = arith.constant 0 : index
    %11 = vector.load %arg2[%c1_8, %c0_9, %c0_10] : memref<9x16x16xbf16, #tpu.memory_space<vmem>>, vector<1x16x16xbf16>
    %12 = vector.shape_cast %11 : vector<1x16x16xbf16> to vector<16x16xbf16>
    %cst_11 = arith.constant dense<0.000000e+00> : vector<128x16xf32>
    %13 = tpu.matmul %10, %12, %cst_11 {dimension_numbers = #tpu.dot_dimension_numbers<[1], [0], [0], [1], [0, 0, 1, 1], [], []>} : vector<128x16xbf16>, vector<16x16xbf16>, vector<128x16xf32> -> vector<128x16xf32>
    %14 = arith.addf %7, %13 : vector<128x16xf32>
    %c0_12 = arith.constant 0 : index
    %c2 = arith.constant 2 : index
    %c0_13 = arith.constant 0 : index
    %15 = vector.load %arg1[%c0_12, %c2, %c0_13] : memref<1x152x16xf32, #tpu.memory_space<vmem>>, vector<1x128x16xf32>
    %16 = vector.shape_cast %15 : vector<1x128x16xf32> to vector<128x16xf32>
    %17 = arith.truncf %16 : vector<128x16xf32> to vector<128x16xbf16>
    %c2_14 = arith.constant 2 : index
    %c0_15 = arith.constant 0 : index
    %c0_16 = arith.constant 0 : index
    %18 = vector.load %arg2[%c2_14, %c0_15, %c0_16] : memref<9x16x16xbf16, #tpu.memory_space<vmem>>, vector<1x16x16xbf16>
    %19 = vector.shape_cast %18 : vector<1x16x16xbf16> to vector<16x16xbf16>
    %cst_17 = arith.constant dense<0.000000e+00> : vector<128x16xf32>
    %20 = tpu.matmul %17, %19, %cst_17 {dimension_numbers = #tpu.dot_dimension_numbers<[1], [0], [0], [1], [0, 0, 1, 1], [], []>} : vector<128x16xbf16>, vector<16x16xbf16>, vector<128x16xf32> -> vector<128x16xf32>
    %21 = arith.addf %14, %20 : vector<128x16xf32>
    %c0_18 = arith.constant 0 : index
    %c8 = arith.constant 8 : index
    %c0_19 = arith.constant 0 : index
    %22 = vector.load %arg1[%c0_18, %c8, %c0_19] : memref<1x152x16xf32, #tpu.memory_space<vmem>>, vector<1x128x16xf32>
    %23 = vector.shape_cast %22 : vector<1x128x16xf32> to vector<128x16xf32>
    %24 = arith.truncf %23 : vector<128x16xf32> to vector<128x16xbf16>
    %c3 = arith.constant 3 : index
    %c0_20 = arith.constant 0 : index
    %c0_21 = arith.constant 0 : index
    %25 = vector.load %arg2[%c3, %c0_20, %c0_21] : memref<9x16x16xbf16, #tpu.memory_space<vmem>>, vector<1x16x16xbf16>
    %26 = vector.shape_cast %25 : vector<1x16x16xbf16> to vector<16x16xbf16>
    %cst_22 = arith.constant dense<0.000000e+00> : vector<128x16xf32>
    %27 = tpu.matmul %24, %26, %cst_22 {dimension_numbers = #tpu.dot_dimension_numbers<[1], [0], [0], [1], [0, 0, 1, 1], [], []>} : vector<128x16xbf16>, vector<16x16xbf16>, vector<128x16xf32> -> vector<128x16xf32>
    %28 = arith.addf %21, %27 : vector<128x16xf32>
    %c0_23 = arith.constant 0 : index
    %c9 = arith.constant 9 : index
    %c0_24 = arith.constant 0 : index
    %29 = vector.load %arg1[%c0_23, %c9, %c0_24] : memref<1x152x16xf32, #tpu.memory_space<vmem>>, vector<1x128x16xf32>
    %30 = vector.shape_cast %29 : vector<1x128x16xf32> to vector<128x16xf32>
    %31 = arith.truncf %30 : vector<128x16xf32> to vector<128x16xbf16>
    %c4 = arith.constant 4 : index
    %c0_25 = arith.constant 0 : index
    %c0_26 = arith.constant 0 : index
    %32 = vector.load %arg2[%c4, %c0_25, %c0_26] : memref<9x16x16xbf16, #tpu.memory_space<vmem>>, vector<1x16x16xbf16>
    %33 = vector.shape_cast %32 : vector<1x16x16xbf16> to vector<16x16xbf16>
    %cst_27 = arith.constant dense<0.000000e+00> : vector<128x16xf32>
    %34 = tpu.matmul %31, %33, %cst_27 {dimension_numbers = #tpu.dot_dimension_numbers<[1], [0], [0], [1], [0, 0, 1, 1], [], []>} : vector<128x16xbf16>, vector<16x16xbf16>, vector<128x16xf32> -> vector<128x16xf32>
    %35 = arith.addf %28, %34 : vector<128x16xf32>
    %c0_28 = arith.constant 0 : index
    %c10 = arith.constant 10 : index
    %c0_29 = arith.constant 0 : index
    %36 = vector.load %arg1[%c0_28, %c10, %c0_29] : memref<1x152x16xf32, #tpu.memory_space<vmem>>, vector<1x128x16xf32>
    %37 = vector.shape_cast %36 : vector<1x128x16xf32> to vector<128x16xf32>
    %38 = arith.truncf %37 : vector<128x16xf32> to vector<128x16xbf16>
    %c5 = arith.constant 5 : index
    %c0_30 = arith.constant 0 : index
    %c0_31 = arith.constant 0 : index
    %39 = vector.load %arg2[%c5, %c0_30, %c0_31] : memref<9x16x16xbf16, #tpu.memory_space<vmem>>, vector<1x16x16xbf16>
    %40 = vector.shape_cast %39 : vector<1x16x16xbf16> to vector<16x16xbf16>
    %cst_32 = arith.constant dense<0.000000e+00> : vector<128x16xf32>
    %41 = tpu.matmul %38, %40, %cst_32 {dimension_numbers = #tpu.dot_dimension_numbers<[1], [0], [0], [1], [0, 0, 1, 1], [], []>} : vector<128x16xbf16>, vector<16x16xbf16>, vector<128x16xf32> -> vector<128x16xf32>
    %42 = arith.addf %35, %41 : vector<128x16xf32>
    %c0_33 = arith.constant 0 : index
    %c16 = arith.constant 16 : index
    %c0_34 = arith.constant 0 : index
    %43 = vector.load %arg1[%c0_33, %c16, %c0_34] : memref<1x152x16xf32, #tpu.memory_space<vmem>>, vector<1x128x16xf32>
    %44 = vector.shape_cast %43 : vector<1x128x16xf32> to vector<128x16xf32>
    %45 = arith.truncf %44 : vector<128x16xf32> to vector<128x16xbf16>
    %c6 = arith.constant 6 : index
    %c0_35 = arith.constant 0 : index
    %c0_36 = arith.constant 0 : index
    %46 = vector.load %arg2[%c6, %c0_35, %c0_36] : memref<9x16x16xbf16, #tpu.memory_space<vmem>>, vector<1x16x16xbf16>
    %47 = vector.shape_cast %46 : vector<1x16x16xbf16> to vector<16x16xbf16>
    %cst_37 = arith.constant dense<0.000000e+00> : vector<128x16xf32>
    %48 = tpu.matmul %45, %47, %cst_37 {dimension_numbers = #tpu.dot_dimension_numbers<[1], [0], [0], [1], [0, 0, 1, 1], [], []>} : vector<128x16xbf16>, vector<16x16xbf16>, vector<128x16xf32> -> vector<128x16xf32>
    %49 = arith.addf %42, %48 : vector<128x16xf32>
    %c0_38 = arith.constant 0 : index
    %c17 = arith.constant 17 : index
    %c0_39 = arith.constant 0 : index
    %50 = vector.load %arg1[%c0_38, %c17, %c0_39] : memref<1x152x16xf32, #tpu.memory_space<vmem>>, vector<1x128x16xf32>
    %51 = vector.shape_cast %50 : vector<1x128x16xf32> to vector<128x16xf32>
    %52 = arith.truncf %51 : vector<128x16xf32> to vector<128x16xbf16>
    %c7 = arith.constant 7 : index
    %c0_40 = arith.constant 0 : index
    %c0_41 = arith.constant 0 : index
    %53 = vector.load %arg2[%c7, %c0_40, %c0_41] : memref<9x16x16xbf16, #tpu.memory_space<vmem>>, vector<1x16x16xbf16>
    %54 = vector.shape_cast %53 : vector<1x16x16xbf16> to vector<16x16xbf16>
    %cst_42 = arith.constant dense<0.000000e+00> : vector<128x16xf32>
    %55 = tpu.matmul %52, %54, %cst_42 {dimension_numbers = #tpu.dot_dimension_numbers<[1], [0], [0], [1], [0, 0, 1, 1], [], []>} : vector<128x16xbf16>, vector<16x16xbf16>, vector<128x16xf32> -> vector<128x16xf32>
    %56 = arith.addf %49, %55 : vector<128x16xf32>
    %c0_43 = arith.constant 0 : index
    %c18 = arith.constant 18 : index
    %c0_44 = arith.constant 0 : index
    %57 = vector.load %arg1[%c0_43, %c18, %c0_44] : memref<1x152x16xf32, #tpu.memory_space<vmem>>, vector<1x128x16xf32>
    %58 = vector.shape_cast %57 : vector<1x128x16xf32> to vector<128x16xf32>
    %59 = arith.truncf %58 : vector<128x16xf32> to vector<128x16xbf16>
    %c8_45 = arith.constant 8 : index
    %c0_46 = arith.constant 0 : index
    %c0_47 = arith.constant 0 : index
    %60 = vector.load %arg2[%c8_45, %c0_46, %c0_47] : memref<9x16x16xbf16, #tpu.memory_space<vmem>>, vector<1x16x16xbf16>
    %61 = vector.shape_cast %60 : vector<1x16x16xbf16> to vector<16x16xbf16>
    %cst_48 = arith.constant dense<0.000000e+00> : vector<128x16xf32>
    %62 = tpu.matmul %59, %61, %cst_48 {dimension_numbers = #tpu.dot_dimension_numbers<[1], [0], [0], [1], [0, 0, 1, 1], [], []>} : vector<128x16xbf16>, vector<16x16xbf16>, vector<128x16xf32> -> vector<128x16xf32>
    %63 = arith.addf %56, %62 : vector<128x16xf32>
    %c0_49 = arith.constant 0 : index
    %c0_50 = arith.constant 0 : index
    %64 = vector.load %arg3[%c0_49, %c0_50] : memref<1x16xf32, #tpu.memory_space<vmem>>, vector<1x16xf32>
    %65 = vector.broadcast %64 : vector<1x16xf32> to vector<128x16xf32>
    %66 = arith.addf %63, %65 : vector<128x16xf32>
    %cst_51 = arith.constant 0.000000e+00 : f32
    %67 = vector.broadcast %cst_51 : f32 to vector<128x16xf32>
    %68 = arith.maximumf %66, %67 : vector<128x16xf32>
    %cst_52 = arith.constant 0.000000e+00 : f32
    %69 = vector.broadcast %cst_52 : f32 to vector<24x16xf32>
    %c128 = arith.constant 128 : index
    %c0_53 = arith.constant 0 : index
    %70 = vector.load %arg11[%c128, %c0_53] : memref<152x16xf32, #tpu.memory_space<vmem>>, vector<24x16xf32>
    tpu.vector_store %arg11[%c128, %c0_53], %69 {strides = array<i32>} : memref<152x16xf32, #tpu.memory_space<vmem>>, vector<24x16xf32>,
    %c0_54 = arith.constant 0 : index
    %c0_55 = arith.constant 0 : index
    %71 = vector.load %arg11[%c0_54, %c0_55] : memref<152x16xf32, #tpu.memory_space<vmem>>, vector<128x16xf32>
    tpu.vector_store %arg11[%c0_54, %c0_55], %68 {strides = array<i32>} : memref<152x16xf32, #tpu.memory_space<vmem>>, vector<128x16xf32>,
    %cst_56 = arith.constant 0.000000e+00 : f32
    %72 = vector.broadcast %cst_56 : f32 to vector<128x16xf32>
    %c0_57 = arith.constant 0 : index
    %c0_58 = arith.constant 0 : index
    %73 = vector.load %arg11[%c0_57, %c0_58] : memref<152x16xf32, #tpu.memory_space<vmem>>, vector<128x16xf32>
    %74 = arith.truncf %73 : vector<128x16xf32> to vector<128x16xbf16>
    %c0_59 = arith.constant 0 : index
    %c0_60 = arith.constant 0 : index
    %c0_61 = arith.constant 0 : index
    %75 = vector.load %arg4[%c0_59, %c0_60, %c0_61] : memref<9x16x16xbf16, #tpu.memory_space<vmem>>, vector<1x16x16xbf16>
    %76 = vector.shape_cast %75 : vector<1x16x16xbf16> to vector<16x16xbf16>
    %cst_62 = arith.constant dense<0.000000e+00> : vector<128x16xf32>
    %77 = tpu.matmul %74, %76, %cst_62 {dimension_numbers = #tpu.dot_dimension_numbers<[1], [0], [0], [1], [0, 0, 1, 1], [], []>} : vector<128x16xbf16>, vector<16x16xbf16>, vector<128x16xf32> -> vector<128x16xf32>
    %78 = arith.addf %72, %77 : vector<128x16xf32>
    %c1_63 = arith.constant 1 : index
    %c0_64 = arith.constant 0 : index
    %79 = vector.load %arg11[%c1_63, %c0_64] : memref<152x16xf32, #tpu.memory_space<vmem>>, vector<128x16xf32>
    %80 = arith.truncf %79 : vector<128x16xf32> to vector<128x16xbf16>
    %c1_65 = arith.constant 1 : index
    %c0_66 = arith.constant 0 : index
    %c0_67 = arith.constant 0 : index
    %81 = vector.load %arg4[%c1_65, %c0_66, %c0_67] : memref<9x16x16xbf16, #tpu.memory_space<vmem>>, vector<1x16x16xbf16>
    %82 = vector.shape_cast %81 : vector<1x16x16xbf16> to vector<16x16xbf16>
    %cst_68 = arith.constant dense<0.000000e+00> : vector<128x16xf32>
    %83 = tpu.matmul %80, %82, %cst_68 {dimension_numbers = #tpu.dot_dimension_numbers<[1], [0], [0], [1], [0, 0, 1, 1], [], []>} : vector<128x16xbf16>, vector<16x16xbf16>, vector<128x16xf32> -> vector<128x16xf32>
    %84 = arith.addf %78, %83 : vector<128x16xf32>
    %c2_69 = arith.constant 2 : index
    %c0_70 = arith.constant 0 : index
    %85 = vector.load %arg11[%c2_69, %c0_70] : memref<152x16xf32, #tpu.memory_space<vmem>>, vector<128x16xf32>
    %86 = arith.truncf %85 : vector<128x16xf32> to vector<128x16xbf16>
    %c2_71 = arith.constant 2 : index
    %c0_72 = arith.constant 0 : index
    %c0_73 = arith.constant 0 : index
    %87 = vector.load %arg4[%c2_71, %c0_72, %c0_73] : memref<9x16x16xbf16, #tpu.memory_space<vmem>>, vector<1x16x16xbf16>
    %88 = vector.shape_cast %87 : vector<1x16x16xbf16> to vector<16x16xbf16>
    %cst_74 = arith.constant dense<0.000000e+00> : vector<128x16xf32>
    %89 = tpu.matmul %86, %88, %cst_74 {dimension_numbers = #tpu.dot_dimension_numbers<[1], [0], [0], [1], [0, 0, 1, 1], [], []>} : vector<128x16xbf16>, vector<16x16xbf16>, vector<128x16xf32> -> vector<128x16xf32>
    %90 = arith.addf %84, %89 : vector<128x16xf32>
    %c8_75 = arith.constant 8 : index
    %c0_76 = arith.constant 0 : index
    %91 = vector.load %arg11[%c8_75, %c0_76] : memref<152x16xf32, #tpu.memory_space<vmem>>, vector<128x16xf32>
    %92 = arith.truncf %91 : vector<128x16xf32> to vector<128x16xbf16>
    %c3_77 = arith.constant 3 : index
    %c0_78 = arith.constant 0 : index
    %c0_79 = arith.constant 0 : index
    %93 = vector.load %arg4[%c3_77, %c0_78, %c0_79] : memref<9x16x16xbf16, #tpu.memory_space<vmem>>, vector<1x16x16xbf16>
    %94 = vector.shape_cast %93 : vector<1x16x16xbf16> to vector<16x16xbf16>
    %cst_80 = arith.constant dense<0.000000e+00> : vector<128x16xf32>
    %95 = tpu.matmul %92, %94, %cst_80 {dimension_numbers = #tpu.dot_dimension_numbers<[1], [0], [0], [1], [0, 0, 1, 1], [], []>} : vector<128x16xbf16>, vector<16x16xbf16>, vector<128x16xf32> -> vector<128x16xf32>
    %96 = arith.addf %90, %95 : vector<128x16xf32>
    %c9_81 = arith.constant 9 : index
    %c0_82 = arith.constant 0 : index
    %97 = vector.load %arg11[%c9_81, %c0_82] : memref<152x16xf32, #tpu.memory_space<vmem>>, vector<128x16xf32>
    %98 = arith.truncf %97 : vector<128x16xf32> to vector<128x16xbf16>
    %c4_83 = arith.constant 4 : index
    %c0_84 = arith.constant 0 : index
    %c0_85 = arith.constant 0 : index
    %99 = vector.load %arg4[%c4_83, %c0_84, %c0_85] : memref<9x16x16xbf16, #tpu.memory_space<vmem>>, vector<1x16x16xbf16>
    %100 = vector.shape_cast %99 : vector<1x16x16xbf16> to vector<16x16xbf16>
    %cst_86 = arith.constant dense<0.000000e+00> : vector<128x16xf32>
    %101 = tpu.matmul %98, %100, %cst_86 {dimension_numbers = #tpu.dot_dimension_numbers<[1], [0], [0], [1], [0, 0, 1, 1], [], []>} : vector<128x16xbf16>, vector<16x16xbf16>, vector<128x16xf32> -> vector<128x16xf32>
    %102 = arith.addf %96, %101 : vector<128x16xf32>
    %c10_87 = arith.constant 10 : index
    %c0_88 = arith.constant 0 : index
    %103 = vector.load %arg11[%c10_87, %c0_88] : memref<152x16xf32, #tpu.memory_space<vmem>>, vector<128x16xf32>
    %104 = arith.truncf %103 : vector<128x16xf32> to vector<128x16xbf16>
    %c5_89 = arith.constant 5 : index
    %c0_90 = arith.constant 0 : index
    %c0_91 = arith.constant 0 : index
    %105 = vector.load %arg4[%c5_89, %c0_90, %c0_91] : memref<9x16x16xbf16, #tpu.memory_space<vmem>>, vector<1x16x16xbf16>
    %106 = vector.shape_cast %105 : vector<1x16x16xbf16> to vector<16x16xbf16>
    %cst_92 = arith.constant dense<0.000000e+00> : vector<128x16xf32>
    %107 = tpu.matmul %104, %106, %cst_92 {dimension_numbers = #tpu.dot_dimension_numbers<[1], [0], [0], [1], [0, 0, 1, 1], [], []>} : vector<128x16xbf16>, vector<16x16xbf16>, vector<128x16xf32> -> vector<128x16xf32>
    %108 = arith.addf %102, %107 : vector<128x16xf32>
    %c16_93 = arith.constant 16 : index
    %c0_94 = arith.constant 0 : index
    %109 = vector.load %arg11[%c16_93, %c0_94] : memref<152x16xf32, #tpu.memory_space<vmem>>, vector<128x16xf32>
    %110 = arith.truncf %109 : vector<128x16xf32> to vector<128x16xbf16>
    %c6_95 = arith.constant 6 : index
    %c0_96 = arith.constant 0 : index
    %c0_97 = arith.constant 0 : index
    %111 = vector.load %arg4[%c6_95, %c0_96, %c0_97] : memref<9x16x16xbf16, #tpu.memory_space<vmem>>, vector<1x16x16xbf16>
    %112 = vector.shape_cast %111 : vector<1x16x16xbf16> to vector<16x16xbf16>
    %cst_98 = arith.constant dense<0.000000e+00> : vector<128x16xf32>
    %113 = tpu.matmul %110, %112, %cst_98 {dimension_numbers = #tpu.dot_dimension_numbers<[1], [0], [0], [1], [0, 0, 1, 1], [], []>} : vector<128x16xbf16>, vector<16x16xbf16>, vector<128x16xf32> -> vector<128x16xf32>
    %114 = arith.addf %108, %113 : vector<128x16xf32>
    %c17_99 = arith.constant 17 : index
    %c0_100 = arith.constant 0 : index
    %115 = vector.load %arg11[%c17_99, %c0_100] : memref<152x16xf32, #tpu.memory_space<vmem>>, vector<128x16xf32>
    %116 = arith.truncf %115 : vector<128x16xf32> to vector<128x16xbf16>
    %c7_101 = arith.constant 7 : index
    %c0_102 = arith.constant 0 : index
    %c0_103 = arith.constant 0 : index
    %117 = vector.load %arg4[%c7_101, %c0_102, %c0_103] : memref<9x16x16xbf16, #tpu.memory_space<vmem>>, vector<1x16x16xbf16>
    %118 = vector.shape_cast %117 : vector<1x16x16xbf16> to vector<16x16xbf16>
    %cst_104 = arith.constant dense<0.000000e+00> : vector<128x16xf32>
    %119 = tpu.matmul %116, %118, %cst_104 {dimension_numbers = #tpu.dot_dimension_numbers<[1], [0], [0], [1], [0, 0, 1, 1], [], []>} : vector<128x16xbf16>, vector<16x16xbf16>, vector<128x16xf32> -> vector<128x16xf32>
    %120 = arith.addf %114, %119 : vector<128x16xf32>
    %c18_105 = arith.constant 18 : index
    %c0_106 = arith.constant 0 : index
    %121 = vector.load %arg11[%c18_105, %c0_106] : memref<152x16xf32, #tpu.memory_space<vmem>>, vector<128x16xf32>
    %122 = arith.truncf %121 : vector<128x16xf32> to vector<128x16xbf16>
    %c8_107 = arith.constant 8 : index
    %c0_108 = arith.constant 0 : index
    %c0_109 = arith.constant 0 : index
    %123 = vector.load %arg4[%c8_107, %c0_108, %c0_109] : memref<9x16x16xbf16, #tpu.memory_space<vmem>>, vector<1x16x16xbf16>
    %124 = vector.shape_cast %123 : vector<1x16x16xbf16> to vector<16x16xbf16>
    %cst_110 = arith.constant dense<0.000000e+00> : vector<128x16xf32>
    %125 = tpu.matmul %122, %124, %cst_110 {dimension_numbers = #tpu.dot_dimension_numbers<[1], [0], [0], [1], [0, 0, 1, 1], [], []>} : vector<128x16xbf16>, vector<16x16xbf16>, vector<128x16xf32> -> vector<128x16xf32>
    %126 = arith.addf %120, %125 : vector<128x16xf32>
    %c0_111 = arith.constant 0 : index
    %c0_112 = arith.constant 0 : index
    %127 = vector.load %arg5[%c0_111, %c0_112] : memref<1x16xf32, #tpu.memory_space<vmem>>, vector<1x16xf32>
    %128 = vector.broadcast %127 : vector<1x16xf32> to vector<128x16xf32>
    %129 = arith.addf %126, %128 : vector<128x16xf32>
    %cst_113 = arith.constant 0.000000e+00 : f32
    %130 = vector.broadcast %cst_113 : f32 to vector<128x16xf32>
    %131 = arith.maximumf %129, %130 : vector<128x16xf32>
    %c0_114 = arith.constant 0 : index
    %c0_115 = arith.constant 0 : index
    %132 = vector.load %arg11[%c0_114, %c0_115] : memref<152x16xf32, #tpu.memory_space<vmem>>, vector<128x16xf32>
    tpu.vector_store %arg11[%c0_114, %c0_115], %131 {strides = array<i32>} : memref<152x16xf32, #tpu.memory_space<vmem>>, vector<128x16xf32>,
    %cst_116 = arith.constant 0.000000e+00 : f32
    %133 = vector.broadcast %cst_116 : f32 to vector<2x1024xf32>
    %c0_117 = arith.constant 0 : index
    %c0_118 = arith.constant 0 : index
    %134 = tpu.strided_load %arg11[%c0_117, %c0_118] {strides = array<i32: 64, 1>} : memref<152x16xf32, #tpu.memory_space<vmem>>, vector<2x16xf32>
    %135 = arith.truncf %134 : vector<2x16xf32> to vector<2x16xbf16>
    %c0_119 = arith.constant 0 : index
    %c0_120 = arith.constant 0 : index
    %c0_121 = arith.constant 0 : index
    %136 = vector.load %arg6[%c0_119, %c0_120, %c0_121] : memref<16x16x1024xbf16, #tpu.memory_space<vmem>>, vector<1x16x1024xbf16>
    %137 = vector.shape_cast %136 : vector<1x16x1024xbf16> to vector<16x1024xbf16>
    %cst_122 = arith.constant dense<0.000000e+00> : vector<2x1024xf32>
    %138 = tpu.matmul %135, %137, %cst_122 {dimension_numbers = #tpu.dot_dimension_numbers<[1], [0], [0], [1], [0, 0, 1, 1], [], []>} : vector<2x16xbf16>, vector<16x1024xbf16>, vector<2x1024xf32> -> vector<2x1024xf32>
    %139 = arith.addf %133, %138 : vector<2x1024xf32>
    %c1_123 = arith.constant 1 : index
    %c0_124 = arith.constant 0 : index
    %140 = tpu.strided_load %arg11[%c1_123, %c0_124] {strides = array<i32: 64, 1>} : memref<152x16xf32, #tpu.memory_space<vmem>>, vector<2x16xf32>
    %141 = arith.truncf %140 : vector<2x16xf32> to vector<2x16xbf16>
    %c1_125 = arith.constant 1 : index
    %c0_126 = arith.constant 0 : index
    %c0_127 = arith.constant 0 : index
    %142 = vector.load %arg6[%c1_125, %c0_126, %c0_127] : memref<16x16x1024xbf16, #tpu.memory_space<vmem>>, vector<1x16x1024xbf16>
    %143 = vector.shape_cast %142 : vector<1x16x1024xbf16> to vector<16x1024xbf16>
    %cst_128 = arith.constant dense<0.000000e+00> : vector<2x1024xf32>
    %144 = tpu.matmul %141, %143, %cst_128 {dimension_numbers = #tpu.dot_dimension_numbers<[1], [0], [0], [1], [0, 0, 1, 1], [], []>} : vector<2x16xbf16>, vector<16x1024xbf16>, vector<2x1024xf32> -> vector<2x1024xf32>
    %145 = arith.addf %139, %144 : vector<2x1024xf32>
    %c2_129 = arith.constant 2 : index
    %c0_130 = arith.constant 0 : index
    %146 = tpu.strided_load %arg11[%c2_129, %c0_130] {strides = array<i32: 64, 1>} : memref<152x16xf32, #tpu.memory_space<vmem>>, vector<2x16xf32>
    %147 = arith.truncf %146 : vector<2x16xf32> to vector<2x16xbf16>
    %c2_131 = arith.constant 2 : index
    %c0_132 = arith.constant 0 : index
    %c0_133 = arith.constant 0 : index
    %148 = vector.load %arg6[%c2_131, %c0_132, %c0_133] : memref<16x16x1024xbf16, #tpu.memory_space<vmem>>, vector<1x16x1024xbf16>
    %149 = vector.shape_cast %148 : vector<1x16x1024xbf16> to vector<16x1024xbf16>
    %cst_134 = arith.constant dense<0.000000e+00> : vector<2x1024xf32>
    %150 = tpu.matmul %147, %149, %cst_134 {dimension_numbers = #tpu.dot_dimension_numbers<[1], [0], [0], [1], [0, 0, 1, 1], [], []>} : vector<2x16xbf16>, vector<16x1024xbf16>, vector<2x1024xf32> -> vector<2x1024xf32>
    %151 = arith.addf %145, %150 : vector<2x1024xf32>
    %c3_135 = arith.constant 3 : index
    %c0_136 = arith.constant 0 : index
    %152 = tpu.strided_load %arg11[%c3_135, %c0_136] {strides = array<i32: 64, 1>} : memref<152x16xf32, #tpu.memory_space<vmem>>, vector<2x16xf32>
    %153 = arith.truncf %152 : vector<2x16xf32> to vector<2x16xbf16>
    %c3_137 = arith.constant 3 : index
    %c0_138 = arith.constant 0 : index
    %c0_139 = arith.constant 0 : index
    %154 = vector.load %arg6[%c3_137, %c0_138, %c0_139] : memref<16x16x1024xbf16, #tpu.memory_space<vmem>>, vector<1x16x1024xbf16>
    %155 = vector.shape_cast %154 : vector<1x16x1024xbf16> to vector<16x1024xbf16>
    %cst_140 = arith.constant dense<0.000000e+00> : vector<2x1024xf32>
    %156 = tpu.matmul %153, %155, %cst_140 {dimension_numbers = #tpu.dot_dimension_numbers<[1], [0], [0], [1], [0, 0, 1, 1], [], []>} : vector<2x16xbf16>, vector<16x1024xbf16>, vector<2x1024xf32> -> vector<2x1024xf32>
    %157 = arith.addf %151, %156 : vector<2x1024xf32>
    %c8_141 = arith.constant 8 : index
    %c0_142 = arith.constant 0 : index
    %158 = tpu.strided_load %arg11[%c8_141, %c0_142] {strides = array<i32: 64, 1>} : memref<152x16xf32, #tpu.memory_space<vmem>>, vector<2x16xf32>
    %159 = arith.truncf %158 : vector<2x16xf32> to vector<2x16xbf16>
    %c4_143 = arith.constant 4 : index
    %c0_144 = arith.constant 0 : index
    %c0_145 = arith.constant 0 : index
    %160 = vector.load %arg6[%c4_143, %c0_144, %c0_145] : memref<16x16x1024xbf16, #tpu.memory_space<vmem>>, vector<1x16x1024xbf16>
    %161 = vector.shape_cast %160 : vector<1x16x1024xbf16> to vector<16x1024xbf16>
    %cst_146 = arith.constant dense<0.000000e+00> : vector<2x1024xf32>
    %162 = tpu.matmul %159, %161, %cst_146 {dimension_numbers = #tpu.dot_dimension_numbers<[1], [0], [0], [1], [0, 0, 1, 1], [], []>} : vector<2x16xbf16>, vector<16x1024xbf16>, vector<2x1024xf32> -> vector<2x1024xf32>
    %163 = arith.addf %157, %162 : vector<2x1024xf32>
    %c9_147 = arith.constant 9 : index
    %c0_148 = arith.constant 0 : index
    %164 = tpu.strided_load %arg11[%c9_147, %c0_148] {strides = array<i32: 64, 1>} : memref<152x16xf32, #tpu.memory_space<vmem>>, vector<2x16xf32>
    %165 = arith.truncf %164 : vector<2x16xf32> to vector<2x16xbf16>
    %c5_149 = arith.constant 5 : index
    %c0_150 = arith.constant 0 : index
    %c0_151 = arith.constant 0 : index
    %166 = vector.load %arg6[%c5_149, %c0_150, %c0_151] : memref<16x16x1024xbf16, #tpu.memory_space<vmem>>, vector<1x16x1024xbf16>
    %167 = vector.shape_cast %166 : vector<1x16x1024xbf16> to vector<16x1024xbf16>
    %cst_152 = arith.constant dense<0.000000e+00> : vector<2x1024xf32>
    %168 = tpu.matmul %165, %167, %cst_152 {dimension_numbers = #tpu.dot_dimension_numbers<[1], [0], [0], [1], [0, 0, 1, 1], [], []>} : vector<2x16xbf16>, vector<16x1024xbf16>, vector<2x1024xf32> -> vector<2x1024xf32>
    %169 = arith.addf %163, %168 : vector<2x1024xf32>
    %c10_153 = arith.constant 10 : index
    %c0_154 = arith.constant 0 : index
    %170 = tpu.strided_load %arg11[%c10_153, %c0_154] {strides = array<i32: 64, 1>} : memref<152x16xf32, #tpu.memory_space<vmem>>, vector<2x16xf32>
    %171 = arith.truncf %170 : vector<2x16xf32> to vector<2x16xbf16>
    %c6_155 = arith.constant 6 : index
    %c0_156 = arith.constant 0 : index
    %c0_157 = arith.constant 0 : index
    %172 = vector.load %arg6[%c6_155, %c0_156, %c0_157] : memref<16x16x1024xbf16, #tpu.memory_space<vmem>>, vector<1x16x1024xbf16>
    %173 = vector.shape_cast %172 : vector<1x16x1024xbf16> to vector<16x1024xbf16>
    %cst_158 = arith.constant dense<0.000000e+00> : vector<2x1024xf32>
    %174 = tpu.matmul %171, %173, %cst_158 {dimension_numbers = #tpu.dot_dimension_numbers<[1], [0], [0], [1], [0, 0, 1, 1], [], []>} : vector<2x16xbf16>, vector<16x1024xbf16>, vector<2x1024xf32> -> vector<2x1024xf32>
    %175 = arith.addf %169, %174 : vector<2x1024xf32>
    %c11 = arith.constant 11 : index
    %c0_159 = arith.constant 0 : index
    %176 = tpu.strided_load %arg11[%c11, %c0_159] {strides = array<i32: 64, 1>} : memref<152x16xf32, #tpu.memory_space<vmem>>, vector<2x16xf32>
    %177 = arith.truncf %176 : vector<2x16xf32> to vector<2x16xbf16>
    %c7_160 = arith.constant 7 : index
    %c0_161 = arith.constant 0 : index
    %c0_162 = arith.constant 0 : index
    %178 = vector.load %arg6[%c7_160, %c0_161, %c0_162] : memref<16x16x1024xbf16, #tpu.memory_space<vmem>>, vector<1x16x1024xbf16>
    %179 = vector.shape_cast %178 : vector<1x16x1024xbf16> to vector<16x1024xbf16>
    %cst_163 = arith.constant dense<0.000000e+00> : vector<2x1024xf32>
    %180 = tpu.matmul %177, %179, %cst_163 {dimension_numbers = #tpu.dot_dimension_numbers<[1], [0], [0], [1], [0, 0, 1, 1], [], []>} : vector<2x16xbf16>, vector<16x1024xbf16>, vector<2x1024xf32> -> vector<2x1024xf32>
    %181 = arith.addf %175, %180 : vector<2x1024xf32>
    %c16_164 = arith.constant 16 : index
    %c0_165 = arith.constant 0 : index
    %182 = tpu.strided_load %arg11[%c16_164, %c0_165] {strides = array<i32: 64, 1>} : memref<152x16xf32, #tpu.memory_space<vmem>>, vector<2x16xf32>
    %183 = arith.truncf %182 : vector<2x16xf32> to vector<2x16xbf16>
    %c8_166 = arith.constant 8 : index
    %c0_167 = arith.constant 0 : index
    %c0_168 = arith.constant 0 : index
    %184 = vector.load %arg6[%c8_166, %c0_167, %c0_168] : memref<16x16x1024xbf16, #tpu.memory_space<vmem>>, vector<1x16x1024xbf16>
    %185 = vector.shape_cast %184 : vector<1x16x1024xbf16> to vector<16x1024xbf16>
    %cst_169 = arith.constant dense<0.000000e+00> : vector<2x1024xf32>
    %186 = tpu.matmul %183, %185, %cst_169 {dimension_numbers = #tpu.dot_dimension_numbers<[1], [0], [0], [1], [0, 0, 1, 1], [], []>} : vector<2x16xbf16>, vector<16x1024xbf16>, vector<2x1024xf32> -> vector<2x1024xf32>
    %187 = arith.addf %181, %186 : vector<2x1024xf32>
    %c17_170 = arith.constant 17 : index
    %c0_171 = arith.constant 0 : index
    %188 = tpu.strided_load %arg11[%c17_170, %c0_171] {strides = array<i32: 64, 1>} : memref<152x16xf32, #tpu.memory_space<vmem>>, vector<2x16xf32>
    %189 = arith.truncf %188 : vector<2x16xf32> to vector<2x16xbf16>
    %c9_172 = arith.constant 9 : index
    %c0_173 = arith.constant 0 : index
    %c0_174 = arith.constant 0 : index
    %190 = vector.load %arg6[%c9_172, %c0_173, %c0_174] : memref<16x16x1024xbf16, #tpu.memory_space<vmem>>, vector<1x16x1024xbf16>
    %191 = vector.shape_cast %190 : vector<1x16x1024xbf16> to vector<16x1024xbf16>
    %cst_175 = arith.constant dense<0.000000e+00> : vector<2x1024xf32>
    %192 = tpu.matmul %189, %191, %cst_175 {dimension_numbers = #tpu.dot_dimension_numbers<[1], [0], [0], [1], [0, 0, 1, 1], [], []>} : vector<2x16xbf16>, vector<16x1024xbf16>, vector<2x1024xf32> -> vector<2x1024xf32>
    %193 = arith.addf %187, %192 : vector<2x1024xf32>
    %c18_176 = arith.constant 18 : index
    %c0_177 = arith.constant 0 : index
    %194 = tpu.strided_load %arg11[%c18_176, %c0_177] {strides = array<i32: 64, 1>} : memref<152x16xf32, #tpu.memory_space<vmem>>, vector<2x16xf32>
    %195 = arith.truncf %194 : vector<2x16xf32> to vector<2x16xbf16>
    %c10_178 = arith.constant 10 : index
    %c0_179 = arith.constant 0 : index
    %c0_180 = arith.constant 0 : index
    %196 = vector.load %arg6[%c10_178, %c0_179, %c0_180] : memref<16x16x1024xbf16, #tpu.memory_space<vmem>>, vector<1x16x1024xbf16>
    %197 = vector.shape_cast %196 : vector<1x16x1024xbf16> to vector<16x1024xbf16>
    %cst_181 = arith.constant dense<0.000000e+00> : vector<2x1024xf32>
    %198 = tpu.matmul %195, %197, %cst_181 {dimension_numbers = #tpu.dot_dimension_numbers<[1], [0], [0], [1], [0, 0, 1, 1], [], []>} : vector<2x16xbf16>, vector<16x1024xbf16>, vector<2x1024xf32> -> vector<2x1024xf32>
    %199 = arith.addf %193, %198 : vector<2x1024xf32>
    %c19 = arith.constant 19 : index
    %c0_182 = arith.constant 0 : index
    %200 = tpu.strided_load %arg11[%c19, %c0_182] {strides = array<i32: 64, 1>} : memref<152x16xf32, #tpu.memory_space<vmem>>, vector<2x16xf32>
    %201 = arith.truncf %200 : vector<2x16xf32> to vector<2x16xbf16>
    %c11_183 = arith.constant 11 : index
    %c0_184 = arith.constant 0 : index
    %c0_185 = arith.constant 0 : index
    %202 = vector.load %arg6[%c11_183, %c0_184, %c0_185] : memref<16x16x1024xbf16, #tpu.memory_space<vmem>>, vector<1x16x1024xbf16>
    %203 = vector.shape_cast %202 : vector<1x16x1024xbf16> to vector<16x1024xbf16>
    %cst_186 = arith.constant dense<0.000000e+00> : vector<2x1024xf32>
    %204 = tpu.matmul %201, %203, %cst_186 {dimension_numbers = #tpu.dot_dimension_numbers<[1], [0], [0], [1], [0, 0, 1, 1], [], []>} : vector<2x16xbf16>, vector<16x1024xbf16>, vector<2x1024xf32> -> vector<2x1024xf32>
    %205 = arith.addf %199, %204 : vector<2x1024xf32>
    %c24 = arith.constant 24 : index
    %c0_187 = arith.constant 0 : index
    %206 = tpu.strided_load %arg11[%c24, %c0_187] {strides = array<i32: 64, 1>} : memref<152x16xf32, #tpu.memory_space<vmem>>, vector<2x16xf32>
    %207 = arith.truncf %206 : vector<2x16xf32> to vector<2x16xbf16>
    %c12 = arith.constant 12 : index
    %c0_188 = arith.constant 0 : index
    %c0_189 = arith.constant 0 : index
    %208 = vector.load %arg6[%c12, %c0_188, %c0_189] : memref<16x16x1024xbf16, #tpu.memory_space<vmem>>, vector<1x16x1024xbf16>
    %209 = vector.shape_cast %208 : vector<1x16x1024xbf16> to vector<16x1024xbf16>
    %cst_190 = arith.constant dense<0.000000e+00> : vector<2x1024xf32>
    %210 = tpu.matmul %207, %209, %cst_190 {dimension_numbers = #tpu.dot_dimension_numbers<[1], [0], [0], [1], [0, 0, 1, 1], [], []>} : vector<2x16xbf16>, vector<16x1024xbf16>, vector<2x1024xf32> -> vector<2x1024xf32>
    %211 = arith.addf %205, %210 : vector<2x1024xf32>
    %c25 = arith.constant 25 : index
    %c0_191 = arith.constant 0 : index
    %212 = tpu.strided_load %arg11[%c25, %c0_191] {strides = array<i32: 64, 1>} : memref<152x16xf32, #tpu.memory_space<vmem>>, vector<2x16xf32>
    %213 = arith.truncf %212 : vector<2x16xf32> to vector<2x16xbf16>
    %c13 = arith.constant 13 : index
    %c0_192 = arith.constant 0 : index
    %c0_193 = arith.constant 0 : index
    %214 = vector.load %arg6[%c13, %c0_192, %c0_193] : memref<16x16x1024xbf16, #tpu.memory_space<vmem>>, vector<1x16x1024xbf16>
    %215 = vector.shape_cast %214 : vector<1x16x1024xbf16> to vector<16x1024xbf16>
    %cst_194 = arith.constant dense<0.000000e+00> : vector<2x1024xf32>
    %216 = tpu.matmul %213, %215, %cst_194 {dimension_numbers = #tpu.dot_dimension_numbers<[1], [0], [0], [1], [0, 0, 1, 1], [], []>} : vector<2x16xbf16>, vector<16x1024xbf16>, vector<2x1024xf32> -> vector<2x1024xf32>
    %217 = arith.addf %211, %216 : vector<2x1024xf32>
    %c26 = arith.constant 26 : index
    %c0_195 = arith.constant 0 : index
    %218 = tpu.strided_load %arg11[%c26, %c0_195] {strides = array<i32: 64, 1>} : memref<152x16xf32, #tpu.memory_space<vmem>>, vector<2x16xf32>
    %219 = arith.truncf %218 : vector<2x16xf32> to vector<2x16xbf16>
    %c14 = arith.constant 14 : index
    %c0_196 = arith.constant 0 : index
    %c0_197 = arith.constant 0 : index
    %220 = vector.load %arg6[%c14, %c0_196, %c0_197] : memref<16x16x1024xbf16, #tpu.memory_space<vmem>>, vector<1x16x1024xbf16>
    %221 = vector.shape_cast %220 : vector<1x16x1024xbf16> to vector<16x1024xbf16>
    %cst_198 = arith.constant dense<0.000000e+00> : vector<2x1024xf32>
    %222 = tpu.matmul %219, %221, %cst_198 {dimension_numbers = #tpu.dot_dimension_numbers<[1], [0], [0], [1], [0, 0, 1, 1], [], []>} : vector<2x16xbf16>, vector<16x1024xbf16>, vector<2x1024xf32> -> vector<2x1024xf32>
    %223 = arith.addf %217, %222 : vector<2x1024xf32>
    %c27 = arith.constant 27 : index
    %c0_199 = arith.constant 0 : index
    %224 = tpu.strided_load %arg11[%c27, %c0_199] {strides = array<i32: 64, 1>} : memref<152x16xf32, #tpu.memory_space<vmem>>, vector<2x16xf32>
    %225 = arith.truncf %224 : vector<2x16xf32> to vector<2x16xbf16>
    %c15 = arith.constant 15 : index
    %c0_200 = arith.constant 0 : index
    %c0_201 = arith.constant 0 : index
    %226 = vector.load %arg6[%c15, %c0_200, %c0_201] : memref<16x16x1024xbf16, #tpu.memory_space<vmem>>, vector<1x16x1024xbf16>
    %227 = vector.shape_cast %226 : vector<1x16x1024xbf16> to vector<16x1024xbf16>
    %cst_202 = arith.constant dense<0.000000e+00> : vector<2x1024xf32>
    %228 = tpu.matmul %225, %227, %cst_202 {dimension_numbers = #tpu.dot_dimension_numbers<[1], [0], [0], [1], [0, 0, 1, 1], [], []>} : vector<2x16xbf16>, vector<16x1024xbf16>, vector<2x1024xf32> -> vector<2x1024xf32>
    %229 = arith.addf %223, %228 : vector<2x1024xf32>
    %c0_203 = arith.constant 0 : index
    %c0_204 = arith.constant 0 : index
    %230 = vector.load %arg7[%c0_203, %c0_204] : memref<1x1024xf32, #tpu.memory_space<vmem>>, vector<1x1024xf32>
    %231 = vector.broadcast %230 : vector<1x1024xf32> to vector<2x1024xf32>
    %232 = arith.addf %229, %231 : vector<2x1024xf32>
    %cst_205 = arith.constant 0.000000e+00 : f32
    %233 = vector.broadcast %cst_205 : f32 to vector<2x1024xf32>
    %234 = arith.subf %233, %232 : vector<2x1024xf32>
    %235 = math.exp %234 : vector<2x1024xf32>
    %cst_206 = arith.constant 1.000000e+00 : f32
    %236 = vector.broadcast %cst_206 : f32 to vector<2x1024xf32>
    %237 = arith.addf %236, %235 : vector<2x1024xf32>
    %238 = tpu.reciprocal %237 : vector<2x1024xf32> -> vector<2x1024xf32>
    %239 = arith.truncf %238 : vector<2x1024xf32> to vector<2x1024xbf16>
    %c0_207 = arith.constant 0 : index
    %c0_208 = arith.constant 0 : index
    %240 = vector.load %arg8[%c0_207, %c0_208] : memref<1024x128xbf16, #tpu.memory_space<vmem>>, vector<1024x128xbf16>
    %cst_209 = arith.constant dense<0.000000e+00> : vector<2x128xf32>
    %241 = tpu.matmul %239, %240, %cst_209 {dimension_numbers = #tpu.dot_dimension_numbers<[1], [0], [0], [1], [0, 0, 1, 1], [], []>} : vector<2x1024xbf16>, vector<1024x128xbf16>, vector<2x128xf32> -> vector<2x128xf32>
    %c0_210 = arith.constant 0 : index
    %c0_211 = arith.constant 0 : index
    %242 = vector.load %arg9[%c0_210, %c0_211] : memref<1x128xf32, #tpu.memory_space<vmem>>, vector<1x128xf32>
    %243 = vector.broadcast %242 : vector<1x128xf32> to vector<2x128xf32>
    %244 = arith.addf %241, %243 : vector<2x128xf32>
    %c0_212 = arith.constant 0 : index
    %c0_213 = arith.constant 0 : index
    %c0_214 = arith.constant 0 : index
    %245 = vector.load %arg10[%c0_212, %c0_213, %c0_214] : memref<1x2x128xf32, #tpu.memory_space<vmem>>, vector<1x2x128xf32>
    %246 = vector.shape_cast %245 : vector<1x2x128xf32> to vector<2x128xf32>
    %247 = vector.shape_cast %244 : vector<2x128xf32> to vector<1x2x128xf32>
    tpu.vector_store %arg10[%c0_212, %c0_213, %c0_214], %247 {strides = array<i32>} : memref<1x2x128xf32, #tpu.memory_space<vmem>>, vector<1x2x128xf32>,
    return
  }
  func.func @transform_0(%arg0: i32) -> (i32, i32, i32) {
    %c0_i32 = arith.constant 0 : i32
    %c0_i32_0 = arith.constant 0 : i32
    %c0_i32_1 = arith.constant 0 : i32
    return %arg0, %c0_i32, %c0_i32_0 : i32, i32, i32
  }
  func.func @transform_1(%arg0: i32) -> (i32, i32, i32) {
    %c0_i32 = arith.constant 0 : i32
    %c0_i32_0 = arith.constant 0 : i32
    %c0_i32_1 = arith.constant 0 : i32
    %c0_i32_2 = arith.constant 0 : i32
    return %c0_i32, %c0_i32_0, %c0_i32_1 : i32, i32, i32
  }
  func.func @transform_2(%arg0: i32) -> (i32, i32) {
    %c0_i32 = arith.constant 0 : i32
    %c0_i32_0 = arith.constant 0 : i32
    %c0_i32_1 = arith.constant 0 : i32
    return %c0_i32, %c0_i32_0 : i32, i32
  }
  func.func @transform_3(%arg0: i32) -> (i32, i32, i32) {
    %c0_i32 = arith.constant 0 : i32
    %c0_i32_0 = arith.constant 0 : i32
    %c0_i32_1 = arith.constant 0 : i32
    %c0_i32_2 = arith.constant 0 : i32
    return %c0_i32, %c0_i32_0, %c0_i32_1 : i32, i32, i32
  }
  func.func @transform_4(%arg0: i32) -> (i32, i32) {
    %c0_i32 = arith.constant 0 : i32
    %c0_i32_0 = arith.constant 0 : i32
    %c0_i32_1 = arith.constant 0 : i32
    return %c0_i32, %c0_i32_0 : i32, i32
  }
  func.func @transform_5(%arg0: i32) -> (i32, i32, i32) {
    %c0_i32 = arith.constant 0 : i32
    %c0_i32_0 = arith.constant 0 : i32
    %c0_i32_1 = arith.constant 0 : i32
    %c0_i32_2 = arith.constant 0 : i32
    return %c0_i32, %c0_i32_0, %c0_i32_1 : i32, i32, i32
  }
  func.func @transform_6(%arg0: i32) -> (i32, i32) {
    %c0_i32 = arith.constant 0 : i32
    %c0_i32_0 = arith.constant 0 : i32
    %c0_i32_1 = arith.constant 0 : i32
    return %c0_i32, %c0_i32_0 : i32, i32
  }
  func.func @transform_7(%arg0: i32) -> (i32, i32) {
    %c0_i32 = arith.constant 0 : i32
    %c0_i32_0 = arith.constant 0 : i32
    %c0_i32_1 = arith.constant 0 : i32
    return %c0_i32, %c0_i32_0 : i32, i32
  }
  func.func @transform_8(%arg0: i32) -> (i32, i32) {
    %c0_i32 = arith.constant 0 : i32
    %c0_i32_0 = arith.constant 0 : i32
    %c0_i32_1 = arith.constant 0 : i32
    return %c0_i32, %c0_i32_0 : i32, i32
  }
  func.func @transform_9(%arg0: i32) -> (i32, i32, i32) {
    %c0_i32 = arith.constant 0 : i32
    %c0_i32_0 = arith.constant 0 : i32
    %c0_i32_1 = arith.constant 0 : i32
    return %arg0, %c0_i32, %c0_i32_0 : i32, i32, i32
  }
}

</mosaic_0001>

<llo_original>
// kernel: neural_forward.1
$region0: #{neural_forward.1}
  #allocation0 [shape = 'u32[]', space=smem, size = 0x4, offset = 0x4, fixed_abs, tag = 'smem constant byte address 0x4 - core index']
  #allocation1 [shape = 'u32[144,128]{1,0:T(1,128)}', space=vmem, size = 0x12000, scoped, tag = 'internal scratch']
  #allocation2 [shape = 'f32[152,16]{1,0:T(8,128)}', space=vmem, size = 0x13000, scoped, tag = 'scratch operand']
  %s0 = inlined_call_operand.vmem [shape: f32[1,152,16], index: 0, kind: input, shape index: {}]
  %s1 = inlined_call_operand.vmem [shape: bf16[9,16,16], index: 1, kind: input, shape index: {}]
  %s2 = inlined_call_operand.vmem [shape: f32[1,16], index: 2, kind: input, shape index: {}]
  %s3 = inlined_call_operand.vmem [shape: bf16[9,16,16], index: 3, kind: input, shape index: {}]
  %s4 = inlined_call_operand.vmem [shape: f32[1,16], index: 4, kind: input, shape index: {}]
  %s5 = inlined_call_operand.hbm [shape: bf16[16,16,1024], index: 5, kind: input, shape index: {}]
  %s6 = inlined_call_operand.vmem [shape: f32[1,1024], index: 6, kind: input, shape index: {}]
  %s7 = inlined_call_operand.vmem [shape: bf16[1024,128], index: 7, kind: input, shape index: {}]
  %s8 = inlined_call_operand.vmem [shape: f32[1,128], index: 8, kind: input, shape index: {}]
  %s9 = inlined_call_operand.hbm [shape: f32[1,2,128], index: 9, kind: output, shape index: {}]
  %s10 = sld [smem:[#allocation0]]
  $region50: #{neural_forward.1} parent=0
    _
  %s12 = ssub.s32 1, %s10
  %s13 = scalar_select 0, %s12, %s10
  $region1: #{neural_forward.1} parent=0
    #allocation3 [shape = 'u8[524288]{0}', space=vmem, size = 0x80000, scoped, tag = 'input window, operand 5, single buffered']
    #allocation4 [shape = 's32[1]{0}', space=sflag, size = 0x4, scoped, tag = 'scoped memory for neural_forward.1']
    #allocation5 [shape = 's32[1]{0}', space=sflag, size = 0x4, scoped, tag = 'scoped memory for neural_forward.1']
    #allocation6 [shape = 'u8[1024]{0}', space=vmem, size = 0x400, scoped, tag = 'output window, operand 0, single buffered']
    %14 = vsyncpa [#allocation4], 0
    %15 = vsyncpa [#allocation5], 0
    // Predicated region
    $region2: #{neural_forward.1} parent=1 // pred_check
      _
    $region3: #{neural_forward.1} parent=1 // pred_check_branch
      %17 = sbr.rel (0) target = $region5
    $region4: #{neural_forward.1} parent=1 // pred_region
      _
    $region5: #{neural_forward.1} parent=1 // pred_fallthru
      _
    // Predicated region
    $region6: #{neural_forward.1} parent=1 // pred_check
      _
    $region7: #{neural_forward.1} parent=1 // pred_check_branch
      %19 = sbr.rel (0) target = $region9
    $region8: #{neural_forward.1} parent=1 // pred_region
      _
    $region9: #{neural_forward.1} parent=1 // pred_fallthru
      _
    // Predicated region
    $region10: #{neural_forward.1} parent=1 // pred_check
      _
    $region11: #{neural_forward.1} parent=1 // pred_check_branch
      %21 = sbr.rel (0) target = $region13
    $region12: #{neural_forward.1} parent=1 // pred_region
      _
    $region13: #{neural_forward.1} parent=1 // pred_fallthru
      _
    // Predicated region
    $region14: #{neural_forward.1} parent=1 // pred_check
      _
    $region15: #{neural_forward.1} parent=1 // pred_check_branch
      %23 = sbr.rel (0) target = $region17
    $region16: #{neural_forward.1} parent=1 // pred_region
      _
    $region17: #{neural_forward.1} parent=1 // pred_fallthru
      _
    // Predicated region
    $region18: #{neural_forward.1} parent=1 // pred_check
      _
    $region19: #{neural_forward.1} parent=1 // pred_check_branch
      %25 = sbr.rel (0) target = $region21
    $region20: #{neural_forward.1} parent=1 // pred_region
      _
    $region21: #{neural_forward.1} parent=1 // pred_fallthru
      _
    // Predicated region
    $region22: #{neural_forward.1} parent=1 // pred_check
      _
    $region23: #{neural_forward.1} parent=1 // pred_check_branch
      %27 = sbr.rel (0) target = $region25
    $region24: #{neural_forward.1} parent=1 // pred_region
      %s29 = ssub.s32 16384, 16384
      %30 = vsyncadd [#allocation4], %s29
      %s31 = sshll.u32 [#allocation3], 4
      %s32 = int_to_ptr.vmem [resolvable:$true] %s31
      %37 = dma.hbm_to_vmem [thread:$0]  %s5, 16384, %s32, [#allocation4], 512, 512, 32
    $region25: #{neural_forward.1} parent=1 // pred_fallthru
      _
    // Predicated region
    $region26: #{neural_forward.1} parent=1 // pred_check
      _
    $region27: #{neural_forward.1} parent=1 // pred_check_branch
      %39 = sbr.rel (0) target = $region29
    $region28: #{neural_forward.1} parent=1 // pred_region
      _
    $region29: #{neural_forward.1} parent=1 // pred_fallthru
      _
    // Predicated region
    $region30: #{neural_forward.1} parent=1 // pred_check
      _
    $region31: #{neural_forward.1} parent=1 // pred_check_branch
      %41 = sbr.rel (0) target = $region33
    $region32: #{neural_forward.1} parent=1 // pred_region
      _
    $region33: #{neural_forward.1} parent=1 // pred_fallthru
      _
    // Predicated region
    $region34: #{neural_forward.1} parent=1 // pred_check
      _
    $region35: #{neural_forward.1} parent=1 // pred_check_branch
      %43 = sbr.rel (0) target = $region37
    $region36: #{neural_forward.1} parent=1 // pred_region
      _
    $region37: #{neural_forward.1} parent=1 // pred_fallthru
      _
    // Predicated region
    $region38: #{neural_forward.1} parent=1 // pred_check
      _
    $region39: #{neural_forward.1} parent=1 // pred_check_branch
      %45 = sbr.rel (0) target = $region41
    $region40: #{neural_forward.1} parent=1 // pred_region
      %46 = dma.done [#allocation4], 16384
    $region41: #{neural_forward.1} parent=1 // pred_fallthru
      _
    %v48 = vld [vmem:[%s0] sm:$0xff]
    %v49 = vld [vmem:[%s0 + $0x8] sm:$0xff]
    %v50 = vld [vmem:[%s0 + $0x10] sm:$0xff]
    %v51 = vld [vmem:[%s0 + $0x18] sm:$0xff]
    %v52 = vld [vmem:[%s0 + $0x20] sm:$0xff]
    %v53 = vld [vmem:[%s0 + $0x28] sm:$0xff]
    %v54 = vld [vmem:[%s0 + $0x30] sm:$0xff]
    %v55 = vld [vmem:[%s0 + $0x38] sm:$0xff]
    %v56 = vld [vmem:[%s0 + $0x40] sm:$0xff]
    %v57 = vld [vmem:[%s0 + $0x48] sm:$0xff]
    %v58 = vld [vmem:[%s0 + $0x50] sm:$0xff]
    %v59 = vld [vmem:[%s0 + $0x58] sm:$0xff]
    %v60 = vld [vmem:[%s0 + $0x60] sm:$0xff]
    %v61 = vld [vmem:[%s0 + $0x68] sm:$0xff]
    %v62 = vld [vmem:[%s0 + $0x70] sm:$0xff]
    %v63 = vld [vmem:[%s0 + $0x78] sm:$0xff]
    %v64 = vpack.c.bf16 %v49, %v48
    %v65 = vpack.c.bf16 %v51, %v50
    %v66 = vpack.c.bf16 %v53, %v52
    %v67 = vpack.c.bf16 %v55, %v54
    %v68 = vpack.c.bf16 %v57, %v56
    %v69 = vpack.c.bf16 %v59, %v58
    %v70 = vpack.c.bf16 %v61, %v60
    %v71 = vpack.c.bf16 %v63, %v62
    %v72 = vld [vmem:[%s1] sm:$0xf]
    %v73 = vld [vmem:[%s1 + $0x4] sm:$0xf]
    %v74 = vld [vmem:[%s0 + $0x1] sm:$0xff]
    %v75 = vld [vmem:[%s0 + $0x9] sm:$0xff]
    %v76 = vld [vmem:[%s0 + $0x11] sm:$0xff]
    %v77 = vld [vmem:[%s0 + $0x19] sm:$0xff]
    %v78 = vld [vmem:[%s0 + $0x21] sm:$0xff]
    %v79 = vld [vmem:[%s0 + $0x29] sm:$0xff]
    %v80 = vld [vmem:[%s0 + $0x31] sm:$0xff]
    %v81 = vld [vmem:[%s0 + $0x39] sm:$0xff]
    %v82 = vld [vmem:[%s0 + $0x41] sm:$0xff]
    %v83 = vld [vmem:[%s0 + $0x49] sm:$0xff]
    %v84 = vld [vmem:[%s0 + $0x51] sm:$0xff]
    %v85 = vld [vmem:[%s0 + $0x59] sm:$0xff]
    %v86 = vld [vmem:[%s0 + $0x61] sm:$0xff]
    %v87 = vld [vmem:[%s0 + $0x69] sm:$0xff]
    %v88 = vld [vmem:[%s0 + $0x71] sm:$0xff]
    %v89 = vld [vmem:[%s0 + $0x79] sm:$0xff]
    %v90 = vpack.c.bf16 %v75, %v74
    %v91 = vpack.c.bf16 %v77, %v76
    %v92 = vpack.c.bf16 %v79, %v78
    %v93 = vpack.c.bf16 %v81, %v80
    %v94 = vpack.c.bf16 %v83, %v82
    %v95 = vpack.c.bf16 %v85, %v84
    %v96 = vpack.c.bf16 %v87, %v86
    %v97 = vpack.c.bf16 %v89, %v88
    %s98 = scalar_lea.vmem %s1, 8
    %v99 = vld [vmem:[%s98] sm:$0xf]
    %v100 = vld [vmem:[%s98 + $0x4] sm:$0xf]
    %v103 = vunpack.c.l.b16 %v99
    %v104 = vunpack.c.l.b16 %v100
    %v105 = vpack.c.b16 %v104, %v103
    %vm107 = vcmask 130048
    %v109 = vsel %vm107, %v90, 0
    %v112 = vsel %vm107, %v91, 0
    %v115 = vsel %vm107, %v92, 0
    %v118 = vsel %vm107, %v93, 0
    %v121 = vsel %vm107, %v94, 0
    %v124 = vsel %vm107, %v95, 0
    %v127 = vsel %vm107, %v96, 0
    %v130 = vsel %vm107, %v97, 0
    %132 = vmatprep.subr.bf16.mxu0 0
    %133 = vmatpush1.bf16.msra.mxu0 %v105
    %134 = vmatprep.subr.bf16.mxu0 0
    %135 = vmatpush1.bf16.msra.mxu0 0
    %136 = vmatprep.subr.bf16.mxu0 0
    %137 = vmatpush1.bf16.msra.mxu0 0
    %138 = vmatprep.subr.bf16.mxu0 0
    %139 = vmatpush1.bf16.msra.mxu0 0
    %140 = vmatprep.subr.bf16.mxu0 0
    %141 = vmatpush1.bf16.msra.mxu0 0
    %142 = vmatprep.subr.bf16.mxu0 0
    %143 = vmatpush1.bf16.msra.mxu0 0
    %144 = vmatprep.subr.bf16.mxu0 0
    %145 = vmatpush1.bf16.msra.mxu0 0
    %146 = vmatprep.subr.bf16.mxu0 0
    %147 = vmatpush1.bf16.msra.mxu0 0
    %148 = vmatprep.subr.bf16.mxu0 0
    %149 = vmatpush1.bf16.msra.mxu0 0
    %150 = vmatprep.subr.bf16.mxu0 0
    %151 = vmatpush1.bf16.msra.mxu0 0
    %152 = vmatprep.subr.bf16.mxu0 0
    %153 = vmatpush1.bf16.msra.mxu0 0
    %154 = vmatprep.subr.bf16.mxu0 0
    %155 = vmatpush1.bf16.msra.mxu0 0
    %156 = vmatprep.subr.bf16.mxu0 0
    %157 = vmatpush1.bf16.msra.mxu0 0
    %158 = vmatprep.subr.bf16.mxu0 0
    %159 = vmatpush1.bf16.msra.mxu0 0
    %160 = vmatprep.subr.bf16.mxu0 0
    %161 = vmatpush1.bf16.msra.mxu0 0
    %162 = vmatprep.subr.bf16.mxu0 0
    %163 = vmatpush1.bf16.msra.mxu0 0
    %164 = vmatprep.mubr.bf16.mxu0 0
    %165 = vmatmul.mubr.bf16.gmra.mrb[0].mxu0 %v109
    %v166 = vpop.f32.mrb[0].mxu0
    %v167 = vadd.f32 0.0, %v166
    %v168 = vpop.f32.mrb[0].mxu0
    %v169 = vpop.f32.mrb[0].mxu0
    %v170 = vadd.f32 0.0, %v169
    %v171 = vpop.f32.mrb[0].mxu0
    %172 = vmatprep.mubr.bf16.mxu0 0
    %173 = vmatmul.mubr.bf16.gmra.mrb[0].mxu0 %v112
    %v174 = vpop.f32.mrb[0].mxu0
    %v175 = vadd.f32 0.0, %v174
    %v176 = vpop.f32.mrb[0].mxu0
    %v177 = vpop.f32.mrb[0].mxu0
    %v178 = vadd.f32 0.0, %v177
    %v179 = vpop.f32.mrb[0].mxu0
    %180 = vmatprep.mubr.bf16.mxu0 0
    %181 = vmatmul.mubr.bf16.gmra.mrb[0].mxu0 %v115
    %v182 = vpop.f32.mrb[0].mxu0
    %v183 = vadd.f32 0.0, %v182
    %v184 = vpop.f32.mrb[0].mxu0
    %v185 = vpop.f32.mrb[0].mxu0
    %v186 = vadd.f32 0.0, %v185
    %v187 = vpop.f32.mrb[0].mxu0
    %188 = vmatprep.mubr.bf16.mxu0 0
    %189 = vmatmul.mubr.bf16.gmra.mrb[0].mxu0 %v118
    %v190 = vpop.f32.mrb[0].mxu0
    %v191 = vadd.f32 0.0, %v190
    %v192 = vpop.f32.mrb[0].mxu0
    %v193 = vpop.f32.mrb[0].mxu0
    %v194 = vadd.f32 0.0, %v193
    %v195 = vpop.f32.mrb[0].mxu0
    %196 = vmatprep.mubr.bf16.mxu0 0
    %197 = vmatmul.mubr.bf16.gmra.mrb[0].mxu0 %v121
    %v198 = vpop.f32.mrb[0].mxu0
    %v199 = vadd.f32 0.0, %v198
    %v200 = vpop.f32.mrb[0].mxu0
    %v201 = vpop.f32.mrb[0].mxu0
    %v202 = vadd.f32 0.0, %v201
    %v203 = vpop.f32.mrb[0].mxu0
    %204 = vmatprep.mubr.bf16.mxu0 0
    %205 = vmatmul.mubr.bf16.gmra.mrb[0].mxu0 %v124
    %v206 = vpop.f32.mrb[0].mxu0
    %v207 = vadd.f32 0.0, %v206
    %v208 = vpop.f32.mrb[0].mxu0
    %v209 = vpop.f32.mrb[0].mxu0
    %v210 = vadd.f32 0.0, %v209
    %v211 = vpop.f32.mrb[0].mxu0
    %212 = vmatprep.mubr.bf16.mxu0 0
    %213 = vmatmul.mubr.bf16.gmra.mrb[0].mxu0 %v127
    %v214 = vpop.f32.mrb[0].mxu0
    %v215 = vadd.f32 0.0, %v214
    %v216 = vpop.f32.mrb[0].mxu0
    %v217 = vpop.f32.mrb[0].mxu0
    %v218 = vadd.f32 0.0, %v217
    %v219 = vpop.f32.mrb[0].mxu0
    %220 = vmatprep.mubr.bf16.mxu0 0
    %221 = vmatmul.mubr.bf16.gmra.mrb[0].mxu0 %v130
    %v222 = vpop.f32.mrb[0].mxu0
    %v223 = vadd.f32 0.0, %v222
    %v224 = vpop.f32.mrb[0].mxu0
    %v225 = vpop.f32.mrb[0].mxu0
    %v226 = vadd.f32 0.0, %v225
    %v227 = vpop.f32.mrb[0].mxu0
    %228 = vdwg.mxu0
    %v231 = vunpack.c.l.b16 %v72
    %v232 = vunpack.c.l.b16 %v73
    %v233 = vpack.c.b16 %v232, %v231
    %v236 = vsel %vm107, %v64, 0
    %v239 = vsel %vm107, %v65, 0
    %v242 = vsel %vm107, %v66, 0
    %v245 = vsel %vm107, %v67, 0
    %v248 = vsel %vm107, %v68, 0
    %v251 = vsel %vm107, %v69, 0
    %v254 = vsel %vm107, %v70, 0
    %v257 = vsel %vm107, %v71, 0
    %259 = vmatprep.subr.bf16.mxu0 0
    %260 = vmatpush1.bf16.msra.mxu0 %v233
    %261 = vmatprep.subr.bf16.mxu0 0
    %262 = vmatpush1.bf16.msra.mxu0 0
    %263 = vmatprep.subr.bf16.mxu0 0
    %264 = vmatpush1.bf16.msra.mxu0 0
    %265 = vmatprep.subr.bf16.mxu0 0
    %266 = vmatpush1.bf16.msra.mxu0 0
    %267 = vmatprep.subr.bf16.mxu0 0
    %268 = vmatpush1.bf16.msra.mxu0 0
    %269 = vmatprep.subr.bf16.mxu0 0
    %270 = vmatpush1.bf16.msra.mxu0 0
    %271 = vmatprep.subr.bf16.mxu0 0
    %272 = vmatpush1.bf16.msra.mxu0 0
    %273 = vmatprep.subr.bf16.mxu0 0
    %274 = vmatpush1.bf16.msra.mxu0 0
    %275 = vmatprep.subr.bf16.mxu0 0
    %276 = vmatpush1.bf16.msra.mxu0 0
    %277 = vmatprep.subr.bf16.mxu0 0
    %278 = vmatpush1.bf16.msra.mxu0 0
    %279 = vmatprep.subr.bf16.mxu0 0
    %280 = vmatpush1.bf16.msra.mxu0 0
    %281 = vmatprep.subr.bf16.mxu0 0
    %282 = vmatpush1.bf16.msra.mxu0 0
    %283 = vmatprep.subr.bf16.mxu0 0
    %284 = vmatpush1.bf16.msra.mxu0 0
    %285 = vmatprep.subr.bf16.mxu0 0
    %286 = vmatpush1.bf16.msra.mxu0 0
    %287 = vmatprep.subr.bf16.mxu0 0
    %288 = vmatpush1.bf16.msra.mxu0 0
    %289 = vmatprep.subr.bf16.mxu0 0
    %290 = vmatpush1.bf16.msra.mxu0 0
    %291 = vmatprep.mubr.bf16.mxu0 0
    %292 = vmatmul.mubr.bf16.gmra.mrb[0].mxu0 %v236
    %v293 = vpop.f32.mrb[0].mxu0
    %v294 = vadd.f32 %v167, %v293
    %v295 = vpop.f32.mrb[0].mxu0
    %v296 = vpop.f32.mrb[0].mxu0
    %v297 = vadd.f32 %v170, %v296
    %v298 = vpop.f32.mrb[0].mxu0
    %299 = vmatprep.mubr.bf16.mxu0 0
    %300 = vmatmul.mubr.bf16.gmra.mrb[0].mxu0 %v239
    %v301 = vpop.f32.mrb[0].mxu0
    %v302 = vadd.f32 %v175, %v301
    %v303 = vpop.f32.mrb[0].mxu0
    %v304 = vpop.f32.mrb[0].mxu0
    %v305 = vadd.f32 %v178, %v304
    %v306 = vpop.f32.mrb[0].mxu0
    %307 = vmatprep.mubr.bf16.mxu0 0
    %308 = vmatmul.mubr.bf16.gmra.mrb[0].mxu0 %v242
    %v309 = vpop.f32.mrb[0].mxu0
    %v310 = vadd.f32 %v183, %v309
    %v311 = vpop.f32.mrb[0].mxu0
    %v312 = vpop.f32.mrb[0].mxu0
    %v313 = vadd.f32 %v186, %v312
    %v314 = vpop.f32.mrb[0].mxu0
    %315 = vmatprep.mubr.bf16.mxu0 0
    %316 = vmatmul.mubr.bf16.gmra.mrb[0].mxu0 %v245
    %v317 = vpop.f32.mrb[0].mxu0
    %v318 = vadd.f32 %v191, %v317
    %v319 = vpop.f32.mrb[0].mxu0
    %v320 = vpop.f32.mrb[0].mxu0
    %v321 = vadd.f32 %v194, %v320
    %v322 = vpop.f32.mrb[0].mxu0
    %323 = vmatprep.mubr.bf16.mxu0 0
    %324 = vmatmul.mubr.bf16.gmra.mrb[0].mxu0 %v248
    %v325 = vpop.f32.mrb[0].mxu0
    %v326 = vadd.f32 %v199, %v325
    %v327 = vpop.f32.mrb[0].mxu0
    %v328 = vpop.f32.mrb[0].mxu0
    %v329 = vadd.f32 %v202, %v328
    %v330 = vpop.f32.mrb[0].mxu0
    %331 = vmatprep.mubr.bf16.mxu0 0
    %332 = vmatmul.mubr.bf16.gmra.mrb[0].mxu0 %v251
    %v333 = vpop.f32.mrb[0].mxu0
    %v334 = vadd.f32 %v207, %v333
    %v335 = vpop.f32.mrb[0].mxu0
    %v336 = vpop.f32.mrb[0].mxu0
    %v337 = vadd.f32 %v210, %v336
    %v338 = vpop.f32.mrb[0].mxu0
    %339 = vmatprep.mubr.bf16.mxu0 0
    %340 = vmatmul.mubr.bf16.gmra.mrb[0].mxu0 %v254
    %v341 = vpop.f32.mrb[0].mxu0
    %v342 = vadd.f32 %v215, %v341
    %v343 = vpop.f32.mrb[0].mxu0
    %v344 = vpop.f32.mrb[0].mxu0
    %v345 = vadd.f32 %v218, %v344
    %v346 = vpop.f32.mrb[0].mxu0
    %347 = vmatprep.mubr.bf16.mxu0 0
    %348 = vmatmul.mubr.bf16.gmra.mrb[0].mxu0 %v257
    %v349 = vpop.f32.mrb[0].mxu0
    %v350 = vadd.f32 %v223, %v349
    %v351 = vpop.f32.mrb[0].mxu0
    %v352 = vpop.f32.mrb[0].mxu0
    %v353 = vadd.f32 %v226, %v352
    %v354 = vpop.f32.mrb[0].mxu0
    %355 = vdwg.mxu0
    %v356 = vld [vmem:[%s0 + $0x2] sm:$0xff]
    %v357 = vld [vmem:[%s0 + $0xa] sm:$0xff]
    %v358 = vld [vmem:[%s0 + $0x12] sm:$0xff]
    %v359 = vld [vmem:[%s0 + $0x1a] sm:$0xff]
    %v360 = vld [vmem:[%s0 + $0x22] sm:$0xff]
    %v361 = vld [vmem:[%s0 + $0x2a] sm:$0xff]
    %v362 = vld [vmem:[%s0 + $0x32] sm:$0xff]
    %v363 = vld [vmem:[%s0 + $0x3a] sm:$0xff]
    %v364 = vld [vmem:[%s0 + $0x42] sm:$0xff]
    %v365 = vld [vmem:[%s0 + $0x4a] sm:$0xff]
    %v366 = vld [vmem:[%s0 + $0x52] sm:$0xff]
    %v367 = vld [vmem:[%s0 + $0x5a] sm:$0xff]
    %v368 = vld [vmem:[%s0 + $0x62] sm:$0xff]
    %v369 = vld [vmem:[%s0 + $0x6a] sm:$0xff]
    %v370 = vld [vmem:[%s0 + $0x72] sm:$0xff]
    %v371 = vld [vmem:[%s0 + $0x7a] sm:$0xff]
    %v372 = vpack.c.bf16 %v357, %v356
    %v373 = vpack.c.bf16 %v359, %v358
    %v374 = vpack.c.bf16 %v361, %v360
    %v375 = vpack.c.bf16 %v363, %v362
    %v376 = vpack.c.bf16 %v365, %v364
    %v377 = vpack.c.bf16 %v367, %v366
    %v378 = vpack.c.bf16 %v369, %v368
    %v379 = vpack.c.bf16 %v371, %v370
    %s380 = scalar_lea.vmem %s1, 16
    %v381 = vld [vmem:[%s380] sm:$0xf]
    %v382 = vld [vmem:[%s380 + $0x4] sm:$0xf]
    %v385 = vunpack.c.l.b16 %v381
    %v386 = vunpack.c.l.b16 %v382
    %v387 = vpack.c.b16 %v386, %v385
    %v390 = vsel %vm107, %v372, 0
    %v393 = vsel %vm107, %v373, 0
    %v396 = vsel %vm107, %v374, 0
    %v399 = vsel %vm107, %v375, 0
    %v402 = vsel %vm107, %v376, 0
    %v405 = vsel %vm107, %v377, 0
    %v408 = vsel %vm107, %v378, 0
    %v411 = vsel %vm107, %v379, 0
    %413 = vmatprep.subr.bf16.mxu0 0
    %414 = vmatpush1.bf16.msra.mxu0 %v387
    %415 = vmatprep.subr.bf16.mxu0 0
    %416 = vmatpush1.bf16.msra.mxu0 0
    %417 = vmatprep.subr.bf16.mxu0 0
    %418 = vmatpush1.bf16.msra.mxu0 0
    %419 = vmatprep.subr.bf16.mxu0 0
    %420 = vmatpush1.bf16.msra.mxu0 0
    %421 = vmatprep.subr.bf16.mxu0 0
    %422 = vmatpush1.bf16.msra.mxu0 0
    %423 = vmatprep.subr.bf16.mxu0 0
    %424 = vmatpush1.bf16.msra.mxu0 0
    %425 = vmatprep.subr.bf16.mxu0 0
    %426 = vmatpush1.bf16.msra.mxu0 0
    %427 = vmatprep.subr.bf16.mxu0 0
    %428 = vmatpush1.bf16.msra.mxu0 0
    %429 = vmatprep.subr.bf16.mxu0 0
    %430 = vmatpush1.bf16.msra.mxu0 0
    %431 = vmatprep.subr.bf16.mxu0 0
    %432 = vmatpush1.bf16.msra.mxu0 0
    %433 = vmatprep.subr.bf16.mxu0 0
    %434 = vmatpush1.bf16.msra.mxu0 0
    %435 = vmatprep.subr.bf16.mxu0 0
    %436 = vmatpush1.bf16.msra.mxu0 0
    %437 = vmatprep.subr.bf16.mxu0 0
    %438 = vmatpush1.bf16.msra.mxu0 0
    %439 = vmatprep.subr.bf16.mxu0 0
    %440 = vmatpush1.bf16.msra.mxu0 0
    %441 = vmatprep.subr.bf16.mxu0 0
    %442 = vmatpush1.bf16.msra.mxu0 0
    %443 = vmatprep.subr.bf16.mxu0 0
    %444 = vmatpush1.bf16.msra.mxu0 0
    %445 = vmatprep.mubr.bf16.mxu0 0
    %446 = vmatmul.mubr.bf16.gmra.mrb[0].mxu0 %v390
    %v447 = vpop.f32.mrb[0].mxu0
    %v448 = vadd.f32 0.0, %v447
    %v449 = vpop.f32.mrb[0].mxu0
    %v450 = vpop.f32.mrb[0].mxu0
    %v451 = vadd.f32 0.0, %v450
    %v452 = vpop.f32.mrb[0].mxu0
    %453 = vmatprep.mubr.bf16.mxu0 0
    %454 = vmatmul.mubr.bf16.gmra.mrb[0].mxu0 %v393
    %v455 = vpop.f32.mrb[0].mxu0
    %v456 = vadd.f32 0.0, %v455
    %v457 = vpop.f32.mrb[0].mxu0
    %v458 = vpop.f32.mrb[0].mxu0
    %v459 = vadd.f32 0.0, %v458
    %v460 = vpop.f32.mrb[0].mxu0
    %461 = vmatprep.mubr.bf16.mxu0 0
    %462 = vmatmul.mubr.bf16.gmra.mrb[0].mxu0 %v396
    %v463 = vpop.f32.mrb[0].mxu0
    %v464 = vadd.f32 0.0, %v463
    %v465 = vpop.f32.mrb[0].mxu0
    %v466 = vpop.f32.mrb[0].mxu0
    %v467 = vadd.f32 0.0, %v466
    %v468 = vpop.f32.mrb[0].mxu0
    %469 = vmatprep.mubr.bf16.mxu0 0
    %470 = vmatmul.mubr.bf16.gmra.mrb[0].mxu0 %v399
    %v471 = vpop.f32.mrb[0].mxu0
    %v472 = vadd.f32 0.0, %v471
    %v473 = vpop.f32.mrb[0].mxu0
    %v474 = vpop.f32.mrb[0].mxu0
    %v475 = vadd.f32 0.0, %v474
    %v476 = vpop.f32.mrb[0].mxu0
    %477 = vmatprep.mubr.bf16.mxu0 0
    %478 = vmatmul.mubr.bf16.gmra.mrb[0].mxu0 %v402
    %v479 = vpop.f32.mrb[0].mxu0
    %v480 = vadd.f32 0.0, %v479
    %v481 = vpop.f32.mrb[0].mxu0
    %v482 = vpop.f32.mrb[0].mxu0
    %v483 = vadd.f32 0.0, %v482
    %v484 = vpop.f32.mrb[0].mxu0
    %485 = vmatprep.mubr.bf16.mxu0 0
    %486 = vmatmul.mubr.bf16.gmra.mrb[0].mxu0 %v405
    %v487 = vpop.f32.mrb[0].mxu0
    %v488 = vadd.f32 0.0, %v487
    %v489 = vpop.f32.mrb[0].mxu0
    %v490 = vpop.f32.mrb[0].mxu0
    %v491 = vadd.f32 0.0, %v490
    %v492 = vpop.f32.mrb[0].mxu0
    %493 = vmatprep.mubr.bf16.mxu0 0
    %494 = vmatmul.mubr.bf16.gmra.mrb[0].mxu0 %v408
    %v495 = vpop.f32.mrb[0].mxu0
    %v496 = vadd.f32 0.0, %v495
    %v497 = vpop.f32.mrb[0].mxu0
    %v498 = vpop.f32.mrb[0].mxu0
    %v499 = vadd.f32 0.0, %v498
    %v500 = vpop.f32.mrb[0].mxu0
    %501 = vmatprep.mubr.bf16.mxu0 0
    %502 = vmatmul.mubr.bf16.gmra.mrb[0].mxu0 %v411
    %v503 = vpop.f32.mrb[0].mxu0
    %v504 = vadd.f32 0.0, %v503
    %v505 = vpop.f32.mrb[0].mxu0
    %v506 = vpop.f32.mrb[0].mxu0
    %v507 = vadd.f32 0.0, %v506
    %v508 = vpop.f32.mrb[0].mxu0
    %509 = vdwg.mxu0
    %v510 = vadd.f32 %v294, %v448
    %v511 = vadd.f32 %v297, %v451
    %v512 = vadd.f32 %v302, %v456
    %v513 = vadd.f32 %v305, %v459
    %v514 = vadd.f32 %v310, %v464
    %v515 = vadd.f32 %v313, %v467
    %v516 = vadd.f32 %v318, %v472
    %v517 = vadd.f32 %v321, %v475
    %v518 = vadd.f32 %v326, %v480
    %v519 = vadd.f32 %v329, %v483
    %v520 = vadd.f32 %v334, %v488
    %v521 = vadd.f32 %v337, %v491
    %v522 = vadd.f32 %v342, %v496
    %v523 = vadd.f32 %v345, %v499
    %v524 = vadd.f32 %v350, %v504
    %v525 = vadd.f32 %v353, %v507
    %v526 = vld [vmem:[%s0 + $0x8] sm:$0xff]
    %v527 = vld [vmem:[%s0 + $0x10] sm:$0xff]
    %v528 = vld [vmem:[%s0 + $0x18] sm:$0xff]
    %v529 = vld [vmem:[%s0 + $0x20] sm:$0xff]
    %v530 = vld [vmem:[%s0 + $0x28] sm:$0xff]
    %v531 = vld [vmem:[%s0 + $0x30] sm:$0xff]
    %v532 = vld [vmem:[%s0 + $0x38] sm:$0xff]
    %v533 = vld [vmem:[%s0 + $0x40] sm:$0xff]
    %v534 = vld [vmem:[%s0 + $0x48] sm:$0xff]
    %v535 = vld [vmem:[%s0 + $0x50] sm:$0xff]
    %v536 = vld [vmem:[%s0 + $0x58] sm:$0xff]
    %v537 = vld [vmem:[%s0 + $0x60] sm:$0xff]
    %v538 = vld [vmem:[%s0 + $0x68] sm:$0xff]
    %v539 = vld [vmem:[%s0 + $0x70] sm:$0xff]
    %v540 = vld [vmem:[%s0 + $0x78] sm:$0xff]
    %v541 = vld [vmem:[%s0 + $0x80] sm:$0xff]
    %v542 = vpack.c.bf16 %v527, %v526
    %v543 = vpack.c.bf16 %v529, %v528
    %v544 = vpack.c.bf16 %v531, %v530
    %v545 = vpack.c.bf16 %v533, %v532
    %v546 = vpack.c.bf16 %v535, %v534
    %v547 = vpack.c.bf16 %v537, %v536
    %v548 = vpack.c.bf16 %v539, %v538
    %v549 = vpack.c.bf16 %v541, %v540
    %s550 = scalar_lea.vmem %s1, 24
    %v551 = vld [vmem:[%s550] sm:$0xf]
    %v552 = vld [vmem:[%s550 + $0x4] sm:$0xf]
    %v555 = vunpack.c.l.b16 %v551
    %v556 = vunpack.c.l.b16 %v552
    %v557 = vpack.c.b16 %v556, %v555
    %v560 = vsel %vm107, %v542, 0
    %v563 = vsel %vm107, %v543, 0
    %v566 = vsel %vm107, %v544, 0
    %v569 = vsel %vm107, %v545, 0
    %v572 = vsel %vm107, %v546, 0
    %v575 = vsel %vm107, %v547, 0
    %v578 = vsel %vm107, %v548, 0
    %v581 = vsel %vm107, %v549, 0
    %583 = vmatprep.subr.bf16.mxu0 0
    %584 = vmatpush1.bf16.msra.mxu0 %v557
    %585 = vmatprep.subr.bf16.mxu0 0
    %586 = vmatpush1.bf16.msra.mxu0 0
    %587 = vmatprep.subr.bf16.mxu0 0
    %588 = vmatpush1.bf16.msra.mxu0 0
    %589 = vmatprep.subr.bf16.mxu0 0
    %590 = vmatpush1.bf16.msra.mxu0 0
    %591 = vmatprep.subr.bf16.mxu0 0
    %592 = vmatpush1.bf16.msra.mxu0 0
    %593 = vmatprep.subr.bf16.mxu0 0
    %594 = vmatpush1.bf16.msra.mxu0 0
    %595 = vmatprep.subr.bf16.mxu0 0
    %596 = vmatpush1.bf16.msra.mxu0 0
    %597 = vmatprep.subr.bf16.mxu0 0
    %598 = vmatpush1.bf16.msra.mxu0 0
    %599 = vmatprep.subr.bf16.mxu0 0
    %600 = vmatpush1.bf16.msra.mxu0 0
    %601 = vmatprep.subr.bf16.mxu0 0
    %602 = vmatpush1.bf16.msra.mxu0 0
    %603 = vmatprep.subr.bf16.mxu0 0
    %604 = vmatpush1.bf16.msra.mxu0 0
    %605 = vmatprep.subr.bf16.mxu0 0
    %606 = vmatpush1.bf16.msra.mxu0 0
    %607 = vmatprep.subr.bf16.mxu0 0
    %608 = vmatpush1.bf16.msra.mxu0 0
    %609 = vmatprep.subr.bf16.mxu0 0
    %610 = vmatpush1.bf16.msra.mxu0 0
    %611 = vmatprep.subr.bf16.mxu0 0
    %612 = vmatpush1.bf16.msra.mxu0 0
    %613 = vmatprep.subr.bf16.mxu0 0
    %614 = vmatpush1.bf16.msra.mxu0 0
    %615 = vmatprep.mubr.bf16.mxu0 0
    %616 = vmatmul.mubr.bf16.gmra.mrb[0].mxu0 %v560
    %v617 = vpop.f32.mrb[0].mxu0
    %v618 = vadd.f32 0.0, %v617
    %v619 = vpop.f32.mrb[0].mxu0
    %v620 = vpop.f32.mrb[0].mxu0
    %v621 = vadd.f32 0.0, %v620
    %v622 = vpop.f32.mrb[0].mxu0
    %623 = vmatprep.mubr.bf16.mxu0 0
    %624 = vmatmul.mubr.bf16.gmra.mrb[0].mxu0 %v563
    %v625 = vpop.f32.mrb[0].mxu0
    %v626 = vadd.f32 0.0, %v625
    %v627 = vpop.f32.mrb[0].mxu0
    %v628 = vpop.f32.mrb[0].mxu0
    %v629 = vadd.f32 0.0, %v628
    %v630 = vpop.f32.mrb[0].mxu0
    %631 = vmatprep.mubr.bf16.mxu0 0
    %632 = vmatmul.mubr.bf16.gmra.mrb[0].mxu0 %v566
    %v633 = vpop.f32.mrb[0].mxu0
    %v634 = vadd.f32 0.0, %v633
    %v635 = vpop.f32.mrb[0].mxu0
    %v636 = vpop.f32.mrb[0].mxu0
    %v637 = vadd.f32 0.0, %v636
    %v638 = vpop.f32.mrb[0].mxu0
    %639 = vmatprep.mubr.bf16.mxu0 0
    %640 = vmatmul.mubr.bf16.gmra.mrb[0].mxu0 %v569
    %v641 = vpop.f32.mrb[0].mxu0
    %v642 = vadd.f32 0.0, %v641
    %v643 = vpop.f32.mrb[0].mxu0
    %v644 = vpop.f32.mrb[0].mxu0
    %v645 = vadd.f32 0.0, %v644
    %v646 = vpop.f32.mrb[0].mxu0
    %647 = vmatprep.mubr.bf16.mxu0 0
    %648 = vmatmul.mubr.bf16.gmra.mrb[0].mxu0 %v572
    %v649 = vpop.f32.mrb[0].mxu0
    %v650 = vadd.f32 0.0, %v649
    %v651 = vpop.f32.mrb[0].mxu0
    %v652 = vpop.f32.mrb[0].mxu0
    %v653 = vadd.f32 0.0, %v652
    %v654 = vpop.f32.mrb[0].mxu0
    %655 = vmatprep.mubr.bf16.mxu0 0
    %656 = vmatmul.mubr.bf16.gmra.mrb[0].mxu0 %v575
    %v657 = vpop.f32.mrb[0].mxu0
    %v658 = vadd.f32 0.0, %v657
    %v659 = vpop.f32.mrb[0].mxu0
    %v660 = vpop.f32.mrb[0].mxu0
    %v661 = vadd.f32 0.0, %v660
    %v662 = vpop.f32.mrb[0].mxu0
    %663 = vmatprep.mubr.bf16.mxu0 0
    %664 = vmatmul.mubr.bf16.gmra.mrb[0].mxu0 %v578
    %v665 = vpop.f32.mrb[0].mxu0
    %v666 = vadd.f32 0.0, %v665
    %v667 = vpop.f32.mrb[0].mxu0
    %v668 = vpop.f32.mrb[0].mxu0
    %v669 = vadd.f32 0.0, %v668
    %v670 = vpop.f32.mrb[0].mxu0
    %671 = vmatprep.mubr.bf16.mxu0 0
    %672 = vmatmul.mubr.bf16.gmra.mrb[0].mxu0 %v581
    %v673 = vpop.f32.mrb[0].mxu0
    %v674 = vadd.f32 0.0, %v673
    %v675 = vpop.f32.mrb[0].mxu0
    %v676 = vpop.f32.mrb[0].mxu0
    %v677 = vadd.f32 0.0, %v676
    %v678 = vpop.f32.mrb[0].mxu0
    %679 = vdwg.mxu0
    %v680 = vadd.f32 %v510, %v618
    %v681 = vadd.f32 %v511, %v621
    %v682 = vadd.f32 %v512, %v626
    %v683 = vadd.f32 %v513, %v629
    %v684 = vadd.f32 %v514, %v634
    %v685 = vadd.f32 %v515, %v637
    %v686 = vadd.f32 %v516, %v642
    %v687 = vadd.f32 %v517, %v645
    %v688 = vadd.f32 %v518, %v650
    %v689 = vadd.f32 %v519, %v653
    %v690 = vadd.f32 %v520, %v658
    %v691 = vadd.f32 %v521, %v661
    %v692 = vadd.f32 %v522, %v666
    %v693 = vadd.f32 %v523, %v669
    %v694 = vadd.f32 %v524, %v674
    %v695 = vadd.f32 %v525, %v677
    %v696 = vld [vmem:[%s0 + $0x9] sm:$0xff]
    %v697 = vld [vmem:[%s0 + $0x11] sm:$0xff]
    %v698 = vld [vmem:[%s0 + $0x19] sm:$0xff]
    %v699 = vld [vmem:[%s0 + $0x21] sm:$0xff]
    %v700 = vld [vmem:[%s0 + $0x29] sm:$0xff]
    %v701 = vld [vmem:[%s0 + $0x31] sm:$0xff]
    %v702 = vld [vmem:[%s0 + $0x39] sm:$0xff]
    %v703 = vld [vmem:[%s0 + $0x41] sm:$0xff]
    %v704 = vld [vmem:[%s0 + $0x49] sm:$0xff]
    %v705 = vld [vmem:[%s0 + $0x51] sm:$0xff]
    %v706 = vld [vmem:[%s0 + $0x59] sm:$0xff]
    %v707 = vld [vmem:[%s0 + $0x61] sm:$0xff]
    %v708 = vld [vmem:[%s0 + $0x69] sm:$0xff]
    %v709 = vld [vmem:[%s0 + $0x71] sm:$0xff]
    %v710 = vld [vmem:[%s0 + $0x79] sm:$0xff]
    %v711 = vld [vmem:[%s0 + $0x81] sm:$0xff]
    %v712 = vpack.c.bf16 %v697, %v696
    %v713 = vpack.c.bf16 %v699, %v698
    %v714 = vpack.c.bf16 %v701, %v700
    %v715 = vpack.c.bf16 %v703, %v702
    %v716 = vpack.c.bf16 %v705, %v704
    %v717 = vpack.c.bf16 %v707, %v706
    %v718 = vpack.c.bf16 %v709, %v708
    %v719 = vpack.c.bf16 %v711, %v710
    %s720 = scalar_lea.vmem %s1, 32
    %v721 = vld [vmem:[%s720] sm:$0xf]
    %v722 = vld [vmem:[%s720 + $0x4] sm:$0xf]
    %v725 = vunpack.c.l.b16 %v721
    %v726 = vunpack.c.l.b16 %v722
    %v727 = vpack.c.b16 %v726, %v725
    %v730 = vsel %vm107, %v712, 0
    %v733 = vsel %vm107, %v713, 0
    %v736 = vsel %vm107, %v714, 0
    %v739 = vsel %vm107, %v715, 0
    %v742 = vsel %vm107, %v716, 0
    %v745 = vsel %vm107, %v717, 0
    %v748 = vsel %vm107, %v718, 0
    %v751 = vsel %vm107, %v719, 0
    %753 = vmatprep.subr.bf16.mxu0 0
    %754 = vmatpush1.bf16.msra.mxu0 %v727
    %755 = vmatprep.subr.bf16.mxu0 0
    %756 = vmatpush1.bf16.msra.mxu0 0
    %757 = vmatprep.subr.bf16.mxu0 0
    %758 = vmatpush1.bf16.msra.mxu0 0
    %759 = vmatprep.subr.bf16.mxu0 0
    %760 = vmatpush1.bf16.msra.mxu0 0
    %761 = vmatprep.subr.bf16.mxu0 0
    %762 = vmatpush1.bf16.msra.mxu0 0
    %763 = vmatprep.subr.bf16.mxu0 0
    %764 = vmatpush1.bf16.msra.mxu0 0
    %765 = vmatprep.subr.bf16.mxu0 0
    %766 = vmatpush1.bf16.msra.mxu0 0
    %767 = vmatprep.subr.bf16.mxu0 0
    %768 = vmatpush1.bf16.msra.mxu0 0
    %769 = vmatprep.subr.bf16.mxu0 0
    %770 = vmatpush1.bf16.msra.mxu0 0
    %771 = vmatprep.subr.bf16.mxu0 0
    %772 = vmatpush1.bf16.msra.mxu0 0
    %773 = vmatprep.subr.bf16.mxu0 0
    %774 = vmatpush1.bf16.msra.mxu0 0
    %775 = vmatprep.subr.bf16.mxu0 0
    %776 = vmatpush1.bf16.msra.mxu0 0
    %777 = vmatprep.subr.bf16.mxu0 0
    %778 = vmatpush1.bf16.msra.mxu0 0
    %779 = vmatprep.subr.bf16.mxu0 0
    %780 = vmatpush1.bf16.msra.mxu0 0
    %781 = vmatprep.subr.bf16.mxu0 0
    %782 = vmatpush1.bf16.msra.mxu0 0
    %783 = vmatprep.subr.bf16.mxu0 0
    %784 = vmatpush1.bf16.msra.mxu0 0
    %785 = vmatprep.mubr.bf16.mxu0 0
    %786 = vmatmul.mubr.bf16.gmra.mrb[0].mxu0 %v730
    %v787 = vpop.f32.mrb[0].mxu0
    %v788 = vadd.f32 0.0, %v787
    %v789 = vpop.f32.mrb[0].mxu0
    %v790 = vpop.f32.mrb[0].mxu0
    %v791 = vadd.f32 0.0, %v790
    %v792 = vpop.f32.mrb[0].mxu0
    %793 = vmatprep.mubr.bf16.mxu0 0
    %794 = vmatmul.mubr.bf16.gmra.mrb[0].mxu0 %v733
    %v795 = vpop.f32.mrb[0].mxu0
    %v796 = vadd.f32 0.0, %v795
    %v797 = vpop.f32.mrb[0].mxu0
    %v798 = vpop.f32.mrb[0].mxu0
    %v799 = vadd.f32 0.0, %v798
    %v800 = vpop.f32.mrb[0].mxu0
    %801 = vmatprep.mubr.bf16.mxu0 0
    %802 = vmatmul.mubr.bf16.gmra.mrb[0].mxu0 %v736
    %v803 = vpop.f32.mrb[0].mxu0
    %v804 = vadd.f32 0.0, %v803
    %v805 = vpop.f32.mrb[0].mxu0
    %v806 = vpop.f32.mrb[0].mxu0
    %v807 = vadd.f32 0.0, %v806
    %v808 = vpop.f32.mrb[0].mxu0
    %809 = vmatprep.mubr.bf16.mxu0 0
    %810 = vmatmul.mubr.bf16.gmra.mrb[0].mxu0 %v739
    %v811 = vpop.f32.mrb[0].mxu0
    %v812 = vadd.f32 0.0, %v811
    %v813 = vpop.f32.mrb[0].mxu0
    %v814 = vpop.f32.mrb[0].mxu0
    %v815 = vadd.f32 0.0, %v814
    %v816 = vpop.f32.mrb[0].mxu0
    %817 = vmatprep.mubr.bf16.mxu0 0
    %818 = vmatmul.mubr.bf16.gmra.mrb[0].mxu0 %v742
    %v819 = vpop.f32.mrb[0].mxu0
    %v820 = vadd.f32 0.0, %v819
    %v821 = vpop.f32.mrb[0].mxu0
    %v822 = vpop.f32.mrb[0].mxu0
    %v823 = vadd.f32 0.0, %v822
    %v824 = vpop.f32.mrb[0].mxu0
    %825 = vmatprep.mubr.bf16.mxu0 0
    %826 = vmatmul.mubr.bf16.gmra.mrb[0].mxu0 %v745
    %v827 = vpop.f32.mrb[0].mxu0
    %v828 = vadd.f32 0.0, %v827
    %v829 = vpop.f32.mrb[0].mxu0
    %v830 = vpop.f32.mrb[0].mxu0
    %v831 = vadd.f32 0.0, %v830
    %v832 = vpop.f32.mrb[0].mxu0
    %833 = vmatprep.mubr.bf16.mxu0 0
    %834 = vmatmul.mubr.bf16.gmra.mrb[0].mxu0 %v748
    %v835 = vpop.f32.mrb[0].mxu0
    %v836 = vadd.f32 0.0, %v835
    %v837 = vpop.f32.mrb[0].mxu0
    %v838 = vpop.f32.mrb[0].mxu0
    %v839 = vadd.f32 0.0, %v838
    %v840 = vpop.f32.mrb[0].mxu0
    %841 = vmatprep.mubr.bf16.mxu0 0
    %842 = vmatmul.mubr.bf16.gmra.mrb[0].mxu0 %v751
    %v843 = vpop.f32.mrb[0].mxu0
    %v844 = vadd.f32 0.0, %v843
    %v845 = vpop.f32.mrb[0].mxu0
    %v846 = vpop.f32.mrb[0].mxu0
    %v847 = vadd.f32 0.0, %v846
    %v848 = vpop.f32.mrb[0].mxu0
    %849 = vdwg.mxu0
    %v850 = vadd.f32 %v680, %v788
    %v851 = vadd.f32 %v681, %v791
    %v852 = vadd.f32 %v682, %v796
    %v853 = vadd.f32 %v683, %v799
    %v854 = vadd.f32 %v684, %v804
    %v855 = vadd.f32 %v685, %v807
    %v856 = vadd.f32 %v686, %v812
    %v857 = vadd.f32 %v687, %v815
    %v858 = vadd.f32 %v688, %v820
    %v859 = vadd.f32 %v689, %v823
    %v860 = vadd.f32 %v690, %v828
    %v861 = vadd.f32 %v691, %v831
    %v862 = vadd.f32 %v692, %v836
    %v863 = vadd.f32 %v693, %v839
    %v864 = vadd.f32 %v694, %v844
    %v865 = vadd.f32 %v695, %v847
    %v866 = vld [vmem:[%s0 + $0xa] sm:$0xff]
    %v867 = vld [vmem:[%s0 + $0x12] sm:$0xff]
    %v868 = vld [vmem:[%s0 + $0x1a] sm:$0xff]
    %v869 = vld [vmem:[%s0 + $0x22] sm:$0xff]
    %v870 = vld [vmem:[%s0 + $0x2a] sm:$0xff]
    %v871 = vld [vmem:[%s0 + $0x32] sm:$0xff]
    %v872 = vld [vmem:[%s0 + $0x3a] sm:$0xff]
    %v873 = vld [vmem:[%s0 + $0x42] sm:$0xff]
    %v874 = vld [vmem:[%s0 + $0x4a] sm:$0xff]
    %v875 = vld [vmem:[%s0 + $0x52] sm:$0xff]
    %v876 = vld [vmem:[%s0 + $0x5a] sm:$0xff]
    %v877 = vld [vmem:[%s0 + $0x62] sm:$0xff]
    %v878 = vld [vmem:[%s0 + $0x6a] sm:$0xff]
    %v879 = vld [vmem:[%s0 + $0x72] sm:$0xff]
    %v880 = vld [vmem:[%s0 + $0x7a] sm:$0xff]
    %v881 = vld [vmem:[%s0 + $0x82] sm:$0xff]
    %v882 = vpack.c.bf16 %v867, %v866
    %v883 = vpack.c.bf16 %v869, %v868
    %v884 = vpack.c.bf16 %v871, %v870
    %v885 = vpack.c.bf16 %v873, %v872
    %v886 = vpack.c.bf16 %v875, %v874
    %v887 = vpack.c.bf16 %v877, %v876
    %v888 = vpack.c.bf16 %v879, %v878
    %v889 = vpack.c.bf16 %v881, %v880
    %s890 = scalar_lea.vmem %s1, 40
    %v891 = vld [vmem:[%s890] sm:$0xf]
    %v892 = vld [vmem:[%s890 + $0x4] sm:$0xf]
    %v895 = vunpack.c.l.b16 %v891
    %v896 = vunpack.c.l.b16 %v892
    %v897 = vpack.c.b16 %v896, %v895
    %v900 = vsel %vm107, %v882, 0
    %v903 = vsel %vm107, %v883, 0
    %v906 = vsel %vm107, %v884, 0
    %v909 = vsel %vm107, %v885, 0
    %v912 = vsel %vm107, %v886, 0
    %v915 = vsel %vm107, %v887, 0
    %v918 = vsel %vm107, %v888, 0
    %v921 = vsel %vm107, %v889, 0
    %923 = vmatprep.subr.bf16.mxu0 0
    %924 = vmatpush1.bf16.msra.mxu0 %v897
    %925 = vmatprep.subr.bf16.mxu0 0
    %926 = vmatpush1.bf16.msra.mxu0 0
    %927 = vmatprep.subr.bf16.mxu0 0
    %928 = vmatpush1.bf16.msra.mxu0 0
    %929 = vmatprep.subr.bf16.mxu0 0
    %930 = vmatpush1.bf16.msra.mxu0 0
    %931 = vmatprep.subr.bf16.mxu0 0
    %932 = vmatpush1.bf16.msra.mxu0 0
    %933 = vmatprep.subr.bf16.mxu0 0
    %934 = vmatpush1.bf16.msra.mxu0 0
    %935 = vmatprep.subr.bf16.mxu0 0
    %936 = vmatpush1.bf16.msra.mxu0 0
    %937 = vmatprep.subr.bf16.mxu0 0
    %938 = vmatpush1.bf16.msra.mxu0 0
    %939 = vmatprep.subr.bf16.mxu0 0
    %940 = vmatpush1.bf16.msra.mxu0 0
    %941 = vmatprep.subr.bf16.mxu0 0
    %942 = vmatpush1.bf16.msra.mxu0 0
    %943 = vmatprep.subr.bf16.mxu0 0
    %944 = vmatpush1.bf16.msra.mxu0 0
    %945 = vmatprep.subr.bf16.mxu0 0
    %946 = vmatpush1.bf16.msra.mxu0 0
    %947 = vmatprep.subr.bf16.mxu0 0
    %948 = vmatpush1.bf16.msra.mxu0 0
    %949 = vmatprep.subr.bf16.mxu0 0
    %950 = vmatpush1.bf16.msra.mxu0 0
    %951 = vmatprep.subr.bf16.mxu0 0
    %952 = vmatpush1.bf16.msra.mxu0 0
    %953 = vmatprep.subr.bf16.mxu0 0
    %954 = vmatpush1.bf16.msra.mxu0 0
    %955 = vmatprep.mubr.bf16.mxu0 0
    %956 = vmatmul.mubr.bf16.gmra.mrb[0].mxu0 %v900
    %v957 = vpop.f32.mrb[0].mxu0
    %v958 = vadd.f32 0.0, %v957
    %v959 = vpop.f32.mrb[0].mxu0
    %v960 = vpop.f32.mrb[0].mxu0
    %v961 = vadd.f32 0.0, %v960
    %v962 = vpop.f32.mrb[0].mxu0
    %963 = vmatprep.mubr.bf16.mxu0 0
    %964 = vmatmul.mubr.bf16.gmra.mrb[0].mxu0 %v903
    %v965 = vpop.f32.mrb[0].mxu0
    %v966 = vadd.f32 0.0, %v965
    %v967 = vpop.f32.mrb[0].mxu0
    %v968 = vpop.f32.mrb[0].mxu0
    %v969 = vadd.f32 0.0, %v968
    %v970 = vpop.f32.mrb[0].mxu0
    %971 = vmatprep.mubr.bf16.mxu0 0
    %972 = vmatmul.mubr.bf16.gmra.mrb[0].mxu0 %v906
    %v973 = vpop.f32.mrb[0].mxu0
    %v974 = vadd.f32 0.0, %v973
    %v975 = vpop.f32.mrb[0].mxu0
    %v976 = vpop.f32.mrb[0].mxu0
    %v977 = vadd.f32 0.0, %v976
    %v978 = vpop.f32.mrb[0].mxu0
    %979 = vmatprep.mubr.bf16.mxu0 0
    %980 = vmatmul.mubr.bf16.gmra.mrb[0].mxu0 %v909
    %v981 = vpop.f32.mrb[0].mxu0
    %v982 = vadd.f32 0.0, %v981
    %v983 = vpop.f32.mrb[0].mxu0
    %v984 = vpop.f32.mrb[0].mxu0
    %v985 = vadd.f32 0.0, %v984
    %v986 = vpop.f32.mrb[0].mxu0
    %987 = vmatprep.mubr.bf16.mxu0 0
    %988 = vmatmul.mubr.bf16.gmra.mrb[0].mxu0 %v912
    %v989 = vpop.f32.mrb[0].mxu0
    %v990 = vadd.f32 0.0, %v989
    %v991 = vpop.f32.mrb[0].mxu0
    %v992 = vpop.f32.mrb[0].mxu0
    %v993 = vadd.f32 0.0, %v992
    %v994 = vpop.f32.mrb[0].mxu0
    %995 = vmatprep.mubr.bf16.mxu0 0
    %996 = vmatmul.mubr.bf16.gmra.mrb[0].mxu0 %v915
    %v997 = vpop.f32.mrb[0].mxu0
    %v998 = vadd.f32 0.0, %v997
    %v999 = vpop.f32.mrb[0].mxu0
    %v1000 = vpop.f32.mrb[0].mxu0
    %v1001 = vadd.f32 0.0, %v1000
    %v1002 = vpop.f32.mrb[0].mxu0
    %1003 = vmatprep.mubr.bf16.mxu0 0
    %1004 = vmatmul.mubr.bf16.gmra.mrb[0].mxu0 %v918
    %v1005 = vpop.f32.mrb[0].mxu0
    %v1006 = vadd.f32 0.0, %v1005
    %v1007 = vpop.f32.mrb[0].mxu0
    %v1008 = vpop.f32.mrb[0].mxu0
    %v1009 = vadd.f32 0.0, %v1008
    %v1010 = vpop.f32.mrb[0].mxu0
    %1011 = vmatprep.mubr.bf16.mxu0 0
    %1012 = vmatmul.mubr.bf16.gmra.mrb[0].mxu0 %v921
    %v1013 = vpop.f32.mrb[0].mxu0
    %v1014 = vadd.f32 0.0, %v1013
    %v1015 = vpop.f32.mrb[0].mxu0
    %v1016 = vpop.f32.mrb[0].mxu0
    %v1017 = vadd.f32 0.0, %v1016
    %v1018 = vpop.f32.mrb[0].mxu0
    %1019 = vdwg.mxu0
    %v1020 = vadd.f32 %v850, %v958
    %v1021 = vadd.f32 %v851, %v961
    %v1022 = vadd.f32 %v852, %v966
    %v1023 = vadd.f32 %v853, %v969
    %v1024 = vadd.f32 %v854, %v974
    %v1025 = vadd.f32 %v855, %v977
    %v1026 = vadd.f32 %v856, %v982
    %v1027 = vadd.f32 %v857, %v985
    %v1028 = vadd.f32 %v858, %v990
    %v1029 = vadd.f32 %v859, %v993
    %v1030 = vadd.f32 %v860, %v998
    %v1031 = vadd.f32 %v861, %v1001
    %v1032 = vadd.f32 %v862, %v1006
    %v1033 = vadd.f32 %v863, %v1009
    %v1034 = vadd.f32 %v864, %v1014
    %v1035 = vadd.f32 %v865, %v1017
    %v1036 = vld [vmem:[%s0 + $0x10] sm:$0xff]
    %v1037 = vld [vmem:[%s0 + $0x18] sm:$0xff]
    %v1038 = vld [vmem:[%s0 + $0x20] sm:$0xff]
    %v1039 = vld [vmem:[%s0 + $0x28] sm:$0xff]
    %v1040 = vld [vmem:[%s0 + $0x30] sm:$0xff]
    %v1041 = vld [vmem:[%s0 + $0x38] sm:$0xff]
    %v1042 = vld [vmem:[%s0 + $0x40] sm:$0xff]
    %v1043 = vld [vmem:[%s0 + $0x48] sm:$0xff]
    %v1044 = vld [vmem:[%s0 + $0x50] sm:$0xff]
    %v1045 = vld [vmem:[%s0 + $0x58] sm:$0xff]
    %v1046 = vld [vmem:[%s0 + $0x60] sm:$0xff]
    %v1047 = vld [vmem:[%s0 + $0x68] sm:$0xff]
    %v1048 = vld [vmem:[%s0 + $0x70] sm:$0xff]
    %v1049 = vld [vmem:[%s0 + $0x78] sm:$0xff]
    %v1050 = vld [vmem:[%s0 + $0x80] sm:$0xff]
    %v1051 = vld [vmem:[%s0 + $0x88] sm:$0xff]
    %v1052 = vpack.c.bf16 %v1037, %v1036
    %v1053 = vpack.c.bf16 %v1039, %v1038
    %v1054 = vpack.c.bf16 %v1041, %v1040
    %v1055 = vpack.c.bf16 %v1043, %v1042
    %v1056 = vpack.c.bf16 %v1045, %v1044
    %v1057 = vpack.c.bf16 %v1047, %v1046
    %v1058 = vpack.c.bf16 %v1049, %v1048
    %v1059 = vpack.c.bf16 %v1051, %v1050
    %s1060 = scalar_lea.vmem %s1, 48
    %v1061 = vld [vmem:[%s1060] sm:$0xf]
    %v1062 = vld [vmem:[%s1060 + $0x4] sm:$0xf]
    %v1065 = vunpack.c.l.b16 %v1061
    %v1066 = vunpack.c.l.b16 %v1062
    %v1067 = vpack.c.b16 %v1066, %v1065
    %v1070 = vsel %vm107, %v1052, 0
    %v1073 = vsel %vm107, %v1053, 0
    %v1076 = vsel %vm107, %v1054, 0
    %v1079 = vsel %vm107, %v1055, 0
    %v1082 = vsel %vm107, %v1056, 0
    %v1085 = vsel %vm107, %v1057, 0
    %v1088 = vsel %vm107, %v1058, 0
    %v1091 = vsel %vm107, %v1059, 0
    %1093 = vmatprep.subr.bf16.mxu0 0
    %1094 = vmatpush1.bf16.msra.mxu0 %v1067
    %1095 = vmatprep.subr.bf16.mxu0 0
    %1096 = vmatpush1.bf16.msra.mxu0 0
    %1097 = vmatprep.subr.bf16.mxu0 0
    %1098 = vmatpush1.bf16.msra.mxu0 0
    %1099 = vmatprep.subr.bf16.mxu0 0
    %1100 = vmatpush1.bf16.msra.mxu0 0
    %1101 = vmatprep.subr.bf16.mxu0 0
    %1102 = vmatpush1.bf16.msra.mxu0 0
    %1103 = vmatprep.subr.bf16.mxu0 0
    %1104 = vmatpush1.bf16.msra.mxu0 0
    %1105 = vmatprep.subr.bf16.mxu0 0
    %1106 = vmatpush1.bf16.msra.mxu0 0
    %1107 = vmatprep.subr.bf16.mxu0 0
    %1108 = vmatpush1.bf16.msra.mxu0 0
    %1109 = vmatprep.subr.bf16.mxu0 0
    %1110 = vmatpush1.bf16.msra.mxu0 0
    %1111 = vmatprep.subr.bf16.mxu0 0
    %1112 = vmatpush1.bf16.msra.mxu0 0
    %1113 = vmatprep.subr.bf16.mxu0 0
    %1114 = vmatpush1.bf16.msra.mxu0 0
    %1115 = vmatprep.subr.bf16.mxu0 0
    %1116 = vmatpush1.bf16.msra.mxu0 0
    %1117 = vmatprep.subr.bf16.mxu0 0
    %1118 = vmatpush1.bf16.msra.mxu0 0
    %1119 = vmatprep.subr.bf16.mxu0 0
    %1120 = vmatpush1.bf16.msra.mxu0 0
    %1121 = vmatprep.subr.bf16.mxu0 0
    %1122 = vmatpush1.bf16.msra.mxu0 0
    %1123 = vmatprep.subr.bf16.mxu0 0
    %1124 = vmatpush1.bf16.msra.mxu0 0
    %1125 = vmatprep.mubr.bf16.mxu0 0
    %1126 = vmatmul.mubr.bf16.gmra.mrb[0].mxu0 %v1070
    %v1127 = vpop.f32.mrb[0].mxu0
    %v1128 = vadd.f32 0.0, %v1127
    %v1129 = vpop.f32.mrb[0].mxu0
    %v1130 = vpop.f32.mrb[0].mxu0
    %v1131 = vadd.f32 0.0, %v1130
    %v1132 = vpop.f32.mrb[0].mxu0
    %1133 = vmatprep.mubr.bf16.mxu0 0
    %1134 = vmatmul.mubr.bf16.gmra.mrb[0].mxu0 %v1073
    %v1135 = vpop.f32.mrb[0].mxu0
    %v1136 = vadd.f32 0.0, %v1135
    %v1137 = vpop.f32.mrb[0].mxu0
    %v1138 = vpop.f32.mrb[0].mxu0
    %v1139 = vadd.f32 0.0, %v1138
    %v1140 = vpop.f32.mrb[0].mxu0
    %1141 = vmatprep.mubr.bf16.mxu0 0
    %1142 = vmatmul.mubr.bf16.gmra.mrb[0].mxu0 %v1076
    %v1143 = vpop.f32.mrb[0].mxu0
    %v1144 = vadd.f32 0.0, %v1143
    %v1145 = vpop.f32.mrb[0].mxu0
    %v1146 = vpop.f32.mrb[0].mxu0
    %v1147 = vadd.f32 0.0, %v1146
    %v1148 = vpop.f32.mrb[0].mxu0
    %1149 = vmatprep.mubr.bf16.mxu0 0
    %1150 = vmatmul.mubr.bf16.gmra.mrb[0].mxu0 %v1079
    %v1151 = vpop.f32.mrb[0].mxu0
    %v1152 = vadd.f32 0.0, %v1151
    %v1153 = vpop.f32.mrb[0].mxu0
    %v1154 = vpop.f32.mrb[0].mxu0
    %v1155 = vadd.f32 0.0, %v1154
    %v1156 = vpop.f32.mrb[0].mxu0
    %1157 = vmatprep.mubr.bf16.mxu0 0
    %1158 = vmatmul.mubr.bf16.gmra.mrb[0].mxu0 %v1082
    %v1159 = vpop.f32.mrb[0].mxu0
    %v1160 = vadd.f32 0.0, %v1159
    %v1161 = vpop.f32.mrb[0].mxu0
    %v1162 = vpop.f32.mrb[0].mxu0
    %v1163 = vadd.f32 0.0, %v1162
    %v1164 = vpop.f32.mrb[0].mxu0
    %1165 = vmatprep.mubr.bf16.mxu0 0
    %1166 = vmatmul.mubr.bf16.gmra.mrb[0].mxu0 %v1085
    %v1167 = vpop.f32.mrb[0].mxu0
    %v1168 = vadd.f32 0.0, %v1167
    %v1169 = vpop.f32.mrb[0].mxu0
    %v1170 = vpop.f32.mrb[0].mxu0
    %v1171 = vadd.f32 0.0, %v1170
    %v1172 = vpop.f32.mrb[0].mxu0
    %1173 = vmatprep.mubr.bf16.mxu0 0
    %1174 = vmatmul.mubr.bf16.gmra.mrb[0].mxu0 %v1088
    %v1175 = vpop.f32.mrb[0].mxu0
    %v1176 = vadd.f32 0.0, %v1175
    %v1177 = vpop.f32.mrb[0].mxu0
    %v1178 = vpop.f32.mrb[0].mxu0
    %v1179 = vadd.f32 0.0, %v1178
    %v1180 = vpop.f32.mrb[0].mxu0
    %1181 = vmatprep.mubr.bf16.mxu0 0
    %1182 = vmatmul.mubr.bf16.gmra.mrb[0].mxu0 %v1091
    %v1183 = vpop.f32.mrb[0].mxu0
    %v1184 = vadd.f32 0.0, %v1183
    %v1185 = vpop.f32.mrb[0].mxu0
    %v1186 = vpop.f32.mrb[0].mxu0
    %v1187 = vadd.f32 0.0, %v1186
    %v1188 = vpop.f32.mrb[0].mxu0
    %1189 = vdwg.mxu0
    %v1190 = vadd.f32 %v1020, %v1128
    %v1191 = vadd.f32 %v1021, %v1131
    %v1192 = vadd.f32 %v1022, %v1136
    %v1193 = vadd.f32 %v1023, %v1139
    %v1194 = vadd.f32 %v1024, %v1144
    %v1195 = vadd.f32 %v1025, %v1147
    %v1196 = vadd.f32 %v1026, %v1152
    %v1197 = vadd.f32 %v1027, %v1155
    %v1198 = vadd.f32 %v1028, %v1160
    %v1199 = vadd.f32 %v1029, %v1163
    %v1200 = vadd.f32 %v1030, %v1168
    %v1201 = vadd.f32 %v1031, %v1171
    %v1202 = vadd.f32 %v1032, %v1176
    %v1203 = vadd.f32 %v1033, %v1179
    %v1204 = vadd.f32 %v1034, %v1184
    %v1205 = vadd.f32 %v1035, %v1187
    %v1206 = vld [vmem:[%s0 + $0x11] sm:$0xff]
    %v1207 = vld [vmem:[%s0 + $0x19] sm:$0xff]
    %v1208 = vld [vmem:[%s0 + $0x21] sm:$0xff]
    %v1209 = vld [vmem:[%s0 + $0x29] sm:$0xff]
    %v1210 = vld [vmem:[%s0 + $0x31] sm:$0xff]
    %v1211 = vld [vmem:[%s0 + $0x39] sm:$0xff]
    %v1212 = vld [vmem:[%s0 + $0x41] sm:$0xff]
    %v1213 = vld [vmem:[%s0 + $0x49] sm:$0xff]
    %v1214 = vld [vmem:[%s0 + $0x51] sm:$0xff]
    %v1215 = vld [vmem:[%s0 + $0x59] sm:$0xff]
    %v1216 = vld [vmem:[%s0 + $0x61] sm:$0xff]
    %v1217 = vld [vmem:[%s0 + $0x69] sm:$0xff]
    %v1218 = vld [vmem:[%s0 + $0x71] sm:$0xff]
    %v1219 = vld [vmem:[%s0 + $0x79] sm:$0xff]
    %v1220 = vld [vmem:[%s0 + $0x81] sm:$0xff]
    %v1221 = vld [vmem:[%s0 + $0x89] sm:$0xff]
    %v1222 = vpack.c.bf16 %v1207, %v1206
    %v1223 = vpack.c.bf16 %v1209, %v1208
    %v1224 = vpack.c.bf16 %v1211, %v1210
    %v1225 = vpack.c.bf16 %v1213, %v1212
    %v1226 = vpack.c.bf16 %v1215, %v1214
    %v1227 = vpack.c.bf16 %v1217, %v1216
    %v1228 = vpack.c.bf16 %v1219, %v1218
    %v1229 = vpack.c.bf16 %v1221, %v1220
    %s1230 = scalar_lea.vmem %s1, 56
    %v1231 = vld [vmem:[%s1230] sm:$0xf]
    %v1232 = vld [vmem:[%s1230 + $0x4] sm:$0xf]
    %v1235 = vunpack.c.l.b16 %v1231
    %v1236 = vunpack.c.l.b16 %v1232
    %v1237 = vpack.c.b16 %v1236, %v1235
    %v1240 = vsel %vm107, %v1222, 0
    %v1243 = vsel %vm107, %v1223, 0
    %v1246 = vsel %vm107, %v1224, 0
    %v1249 = vsel %vm107, %v1225, 0
    %v1252 = vsel %vm107, %v1226, 0
    %v1255 = vsel %vm107, %v1227, 0
    %v1258 = vsel %vm107, %v1228, 0
    %v1261 = vsel %vm107, %v1229, 0
    %1263 = vmatprep.subr.bf16.mxu0 0
    %1264 = vmatpush1.bf16.msra.mxu0 %v1237
    %1265 = vmatprep.subr.bf16.mxu0 0
    %1266 = vmatpush1.bf16.msra.mxu0 0
    %1267 = vmatprep.subr.bf16.mxu0 0
    %1268 = vmatpush1.bf16.msra.mxu0 0
    %1269 = vmatprep.subr.bf16.mxu0 0
    %1270 = vmatpush1.bf16.msra.mxu0 0
    %1271 = vmatprep.subr.bf16.mxu0 0
    %1272 = vmatpush1.bf16.msra.mxu0 0
    %1273 = vmatprep.subr.bf16.mxu0 0
    %1274 = vmatpush1.bf16.msra.mxu0 0
    %1275 = vmatprep.subr.bf16.mxu0 0
    %1276 = vmatpush1.bf16.msra.mxu0 0
    %1277 = vmatprep.subr.bf16.mxu0 0
    %1278 = vmatpush1.bf16.msra.mxu0 0
    %1279 = vmatprep.subr.bf16.mxu0 0
    %1280 = vmatpush1.bf16.msra.mxu0 0
    %1281 = vmatprep.subr.bf16.mxu0 0
    %1282 = vmatpush1.bf16.msra.mxu0 0
    %1283 = vmatprep.subr.bf16.mxu0 0
    %1284 = vmatpush1.bf16.msra.mxu0 0
    %1285 = vmatprep.subr.bf16.mxu0 0
    %1286 = vmatpush1.bf16.msra.mxu0 0
    %1287 = vmatprep.subr.bf16.mxu0 0
    %1288 = vmatpush1.bf16.msra.mxu0 0
    %1289 = vmatprep.subr.bf16.mxu0 0
    %1290 = vmatpush1.bf16.msra.mxu0 0
    %1291 = vmatprep.subr.bf16.mxu0 0
    %1292 = vmatpush1.bf16.msra.mxu0 0
    %1293 = vmatprep.subr.bf16.mxu0 0
    %1294 = vmatpush1.bf16.msra.mxu0 0
    %1295 = vmatprep.mubr.bf16.mxu0 0
    %1296 = vmatmul.mubr.bf16.gmra.mrb[0].mxu0 %v1240
    %v1297 = vpop.f32.mrb[0].mxu0
    %v1298 = vadd.f32 0.0, %v1297
    %v1299 = vpop.f32.mrb[0].mxu0
    %v1300 = vpop.f32.mrb[0].mxu0
    %v1301 = vadd.f32 0.0, %v1300
    %v1302 = vpop.f32.mrb[0].mxu0
    %1303 = vmatprep.mubr.bf16.mxu0 0
    %1304 = vmatmul.mubr.bf16.gmra.mrb[0].mxu0 %v1243
    %v1305 = vpop.f32.mrb[0].mxu0
    %v1306 = vadd.f32 0.0, %v1305
    %v1307 = vpop.f32.mrb[0].mxu0
    %v1308 = vpop.f32.mrb[0].mxu0
    %v1309 = vadd.f32 0.0, %v1308
    %v1310 = vpop.f32.mrb[0].mxu0
    %1311 = vmatprep.mubr.bf16.mxu0 0
    %1312 = vmatmul.mubr.bf16.gmra.mrb[0].mxu0 %v1246
    %v1313 = vpop.f32.mrb[0].mxu0
    %v1314 = vadd.f32 0.0, %v1313
    %v1315 = vpop.f32.mrb[0].mxu0
    %v1316 = vpop.f32.mrb[0].mxu0
    %v1317 = vadd.f32 0.0, %v1316
    %v1318 = vpop.f32.mrb[0].mxu0
    %1319 = vmatprep.mubr.bf16.mxu0 0
    %1320 = vmatmul.mubr.bf16.gmra.mrb[0].mxu0 %v1249
    %v1321 = vpop.f32.mrb[0].mxu0
    %v1322 = vadd.f32 0.0, %v1321
    %v1323 = vpop.f32.mrb[0].mxu0
    %v1324 = vpop.f32.mrb[0].mxu0
    %v1325 = vadd.f32 0.0, %v1324
    %v1326 = vpop.f32.mrb[0].mxu0
    %1327 = vmatprep.mubr.bf16.mxu0 0
    %1328 = vmatmul.mubr.bf16.gmra.mrb[0].mxu0 %v1252
    %v1329 = vpop.f32.mrb[0].mxu0
    %v1330 = vadd.f32 0.0, %v1329
    %v1331 = vpop.f32.mrb[0].mxu0
    %v1332 = vpop.f32.mrb[0].mxu0
    %v1333 = vadd.f32 0.0, %v1332
    %v1334 = vpop.f32.mrb[0].mxu0
    %1335 = vmatprep.mubr.bf16.mxu0 0
    %1336 = vmatmul.mubr.bf16.gmra.mrb[0].mxu0 %v1255
    %v1337 = vpop.f32.mrb[0].mxu0
    %v1338 = vadd.f32 0.0, %v1337
    %v1339 = vpop.f32.mrb[0].mxu0
    %v1340 = vpop.f32.mrb[0].mxu0
    %v1341 = vadd.f32 0.0, %v1340
    %v1342 = vpop.f32.mrb[0].mxu0
    %1343 = vmatprep.mubr.bf16.mxu0 0
    %1344 = vmatmul.mubr.bf16.gmra.mrb[0].mxu0 %v1258
    %v1345 = vpop.f32.mrb[0].mxu0
    %v1346 = vadd.f32 0.0, %v1345
    %v1347 = vpop.f32.mrb[0].mxu0
    %v1348 = vpop.f32.mrb[0].mxu0
    %v1349 = vadd.f32 0.0, %v1348
    %v1350 = vpop.f32.mrb[0].mxu0
    %1351 = vmatprep.mubr.bf16.mxu0 0
    %1352 = vmatmul.mubr.bf16.gmra.mrb[0].mxu0 %v1261
    %v1353 = vpop.f32.mrb[0].mxu0
    %v1354 = vadd.f32 0.0, %v1353
    %v1355 = vpop.f32.mrb[0].mxu0
    %v1356 = vpop.f32.mrb[0].mxu0
    %v1357 = vadd.f32 0.0, %v1356
    %v1358 = vpop.f32.mrb[0].mxu0
    %1359 = vdwg.mxu0
    %v1360 = vadd.f32 %v1190, %v1298
    %v1361 = vadd.f32 %v1191, %v1301
    %v1362 = vadd.f32 %v1192, %v1306
    %v1363 = vadd.f32 %v1193, %v1309
    %v1364 = vadd.f32 %v1194, %v1314
    %v1365 = vadd.f32 %v1195, %v1317
    %v1366 = vadd.f32 %v1196, %v1322
    %v1367 = vadd.f32 %v1197, %v1325
    %v1368 = vadd.f32 %v1198, %v1330
    %v1369 = vadd.f32 %v1199, %v1333
    %v1370 = vadd.f32 %v1200, %v1338
    %v1371 = vadd.f32 %v1201, %v1341
    %v1372 = vadd.f32 %v1202, %v1346
    %v1373 = vadd.f32 %v1203, %v1349
    %v1374 = vadd.f32 %v1204, %v1354
    %v1375 = vadd.f32 %v1205, %v1357
    %v1376 = vld [vmem:[%s0 + $0x12] sm:$0xff]
    %v1377 = vld [vmem:[%s0 + $0x1a] sm:$0xff]
    %v1378 = vld [vmem:[%s0 + $0x22] sm:$0xff]
    %v1379 = vld [vmem:[%s0 + $0x2a] sm:$0xff]
    %v1380 = vld [vmem:[%s0 + $0x32] sm:$0xff]
    %v1381 = vld [vmem:[%s0 + $0x3a] sm:$0xff]
    %v1382 = vld [vmem:[%s0 + $0x42] sm:$0xff]
    %v1383 = vld [vmem:[%s0 + $0x4a] sm:$0xff]
    %v1384 = vld [vmem:[%s0 + $0x52] sm:$0xff]
    %v1385 = vld [vmem:[%s0 + $0x5a] sm:$0xff]
    %v1386 = vld [vmem:[%s0 + $0x62] sm:$0xff]
    %v1387 = vld [vmem:[%s0 + $0x6a] sm:$0xff]
    %v1388 = vld [vmem:[%s0 + $0x72] sm:$0xff]
    %v1389 = vld [vmem:[%s0 + $0x7a] sm:$0xff]
    %v1390 = vld [vmem:[%s0 + $0x82] sm:$0xff]
    %v1391 = vld [vmem:[%s0 + $0x8a] sm:$0xff]
    %v1392 = vpack.c.bf16 %v1377, %v1376
    %v1393 = vpack.c.bf16 %v1379, %v1378
    %v1394 = vpack.c.bf16 %v1381, %v1380
    %v1395 = vpack.c.bf16 %v1383, %v1382
    %v1396 = vpack.c.bf16 %v1385, %v1384
    %v1397 = vpack.c.bf16 %v1387, %v1386
    %v1398 = vpack.c.bf16 %v1389, %v1388
    %v1399 = vpack.c.bf16 %v1391, %v1390
    %s1400 = scalar_lea.vmem %s1, 64
    %v1401 = vld [vmem:[%s1400] sm:$0xf]
    %v1402 = vld [vmem:[%s1400 + $0x4] sm:$0xf]
    %v1405 = vunpack.c.l.b16 %v1401
    %v1406 = vunpack.c.l.b16 %v1402
    %v1407 = vpack.c.b16 %v1406, %v1405
    %v1410 = vsel %vm107, %v1392, 0
    %v1413 = vsel %vm107, %v1393, 0
    %v1416 = vsel %vm107, %v1394, 0
    %v1419 = vsel %vm107, %v1395, 0
    %v1422 = vsel %vm107, %v1396, 0
    %v1425 = vsel %vm107, %v1397, 0
    %v1428 = vsel %vm107, %v1398, 0
    %v1431 = vsel %vm107, %v1399, 0
    %1433 = vmatprep.subr.bf16.mxu0 0
    %1434 = vmatpush1.bf16.msra.mxu0 %v1407
    %1435 = vmatprep.subr.bf16.mxu0 0
    %1436 = vmatpush1.bf16.msra.mxu0 0
    %1437 = vmatprep.subr.bf16.mxu0 0
    %1438 = vmatpush1.bf16.msra.mxu0 0
    %1439 = vmatprep.subr.bf16.mxu0 0
    %1440 = vmatpush1.bf16.msra.mxu0 0
    %1441 = vmatprep.subr.bf16.mxu0 0
    %1442 = vmatpush1.bf16.msra.mxu0 0
    %1443 = vmatprep.subr.bf16.mxu0 0
    %1444 = vmatpush1.bf16.msra.mxu0 0
    %1445 = vmatprep.subr.bf16.mxu0 0
    %1446 = vmatpush1.bf16.msra.mxu0 0
    %1447 = vmatprep.subr.bf16.mxu0 0
    %1448 = vmatpush1.bf16.msra.mxu0 0
    %1449 = vmatprep.subr.bf16.mxu0 0
    %1450 = vmatpush1.bf16.msra.mxu0 0
    %1451 = vmatprep.subr.bf16.mxu0 0
    %1452 = vmatpush1.bf16.msra.mxu0 0
    %1453 = vmatprep.subr.bf16.mxu0 0
    %1454 = vmatpush1.bf16.msra.mxu0 0
    %1455 = vmatprep.subr.bf16.mxu0 0
    %1456 = vmatpush1.bf16.msra.mxu0 0
    %1457 = vmatprep.subr.bf16.mxu0 0
    %1458 = vmatpush1.bf16.msra.mxu0 0
    %1459 = vmatprep.subr.bf16.mxu0 0
    %1460 = vmatpush1.bf16.msra.mxu0 0
    %1461 = vmatprep.subr.bf16.mxu0 0
    %1462 = vmatpush1.bf16.msra.mxu0 0
    %1463 = vmatprep.subr.bf16.mxu0 0
    %1464 = vmatpush1.bf16.msra.mxu0 0
    %1465 = vmatprep.mubr.bf16.mxu0 0
    %1466 = vmatmul.mubr.bf16.gmra.mrb[0].mxu0 %v1410
    %v1467 = vpop.f32.mrb[0].mxu0
    %v1468 = vadd.f32 0.0, %v1467
    %v1469 = vpop.f32.mrb[0].mxu0
    %v1470 = vpop.f32.mrb[0].mxu0
    %v1471 = vadd.f32 0.0, %v1470
    %v1472 = vpop.f32.mrb[0].mxu0
    %1473 = vmatprep.mubr.bf16.mxu0 0
    %1474 = vmatmul.mubr.bf16.gmra.mrb[0].mxu0 %v1413
    %v1475 = vpop.f32.mrb[0].mxu0
    %v1476 = vadd.f32 0.0, %v1475
    %v1477 = vpop.f32.mrb[0].mxu0
    %v1478 = vpop.f32.mrb[0].mxu0
    %v1479 = vadd.f32 0.0, %v1478
    %v1480 = vpop.f32.mrb[0].mxu0
    %1481 = vmatprep.mubr.bf16.mxu0 0
    %1482 = vmatmul.mubr.bf16.gmra.mrb[0].mxu0 %v1416
    %v1483 = vpop.f32.mrb[0].mxu0
    %v1484 = vadd.f32 0.0, %v1483
    %v1485 = vpop.f32.mrb[0].mxu0
    %v1486 = vpop.f32.mrb[0].mxu0
    %v1487 = vadd.f32 0.0, %v1486
    %v1488 = vpop.f32.mrb[0].mxu0
    %1489 = vmatprep.mubr.bf16.mxu0 0
    %1490 = vmatmul.mubr.bf16.gmra.mrb[0].mxu0 %v1419
    %v1491 = vpop.f32.mrb[0].mxu0
    %v1492 = vadd.f32 0.0, %v1491
    %v1493 = vpop.f32.mrb[0].mxu0
    %v1494 = vpop.f32.mrb[0].mxu0
    %v1495 = vadd.f32 0.0, %v1494
    %v1496 = vpop.f32.mrb[0].mxu0
    %1497 = vmatprep.mubr.bf16.mxu0 0
    %1498 = vmatmul.mubr.bf16.gmra.mrb[0].mxu0 %v1422
    %v1499 = vpop.f32.mrb[0].mxu0
    %v1500 = vadd.f32 0.0, %v1499
    %v1501 = vpop.f32.mrb[0].mxu0
    %v1502 = vpop.f32.mrb[0].mxu0
    %v1503 = vadd.f32 0.0, %v1502
    %v1504 = vpop.f32.mrb[0].mxu0
    %1505 = vmatprep.mubr.bf16.mxu0 0
    %1506 = vmatmul.mubr.bf16.gmra.mrb[0].mxu0 %v1425
    %v1507 = vpop.f32.mrb[0].mxu0
    %v1508 = vadd.f32 0.0, %v1507
    %v1509 = vpop.f32.mrb[0].mxu0
    %v1510 = vpop.f32.mrb[0].mxu0
    %v1511 = vadd.f32 0.0, %v1510
    %v1512 = vpop.f32.mrb[0].mxu0
    %1513 = vmatprep.mubr.bf16.mxu0 0
    %1514 = vmatmul.mubr.bf16.gmra.mrb[0].mxu0 %v1428
    %v1515 = vpop.f32.mrb[0].mxu0
    %v1516 = vadd.f32 0.0, %v1515
    %v1517 = vpop.f32.mrb[0].mxu0
    %v1518 = vpop.f32.mrb[0].mxu0
    %v1519 = vadd.f32 0.0, %v1518
    %v1520 = vpop.f32.mrb[0].mxu0
    %1521 = vmatprep.mubr.bf16.mxu0 0
    %1522 = vmatmul.mubr.bf16.gmra.mrb[0].mxu0 %v1431
    %v1523 = vpop.f32.mrb[0].mxu0
    %v1524 = vadd.f32 0.0, %v1523
    %v1525 = vpop.f32.mrb[0].mxu0
    %v1526 = vpop.f32.mrb[0].mxu0
    %v1527 = vadd.f32 0.0, %v1526
    %v1528 = vpop.f32.mrb[0].mxu0
    %1529 = vdwg.mxu0
    %v1530 = vadd.f32 %v1360, %v1468
    %v1531 = vadd.f32 %v1361, %v1471
    %v1532 = vadd.f32 %v1362, %v1476
    %v1533 = vadd.f32 %v1363, %v1479
    %v1534 = vadd.f32 %v1364, %v1484
    %v1535 = vadd.f32 %v1365, %v1487
    %v1536 = vadd.f32 %v1366, %v1492
    %v1537 = vadd.f32 %v1367, %v1495
    %v1538 = vadd.f32 %v1368, %v1500
    %v1539 = vadd.f32 %v1369, %v1503
    %v1540 = vadd.f32 %v1370, %v1508
    %v1541 = vadd.f32 %v1371, %v1511
    %v1542 = vadd.f32 %v1372, %v1516
    %v1543 = vadd.f32 %v1373, %v1519
    %v1544 = vadd.f32 %v1374, %v1524
    %v1545 = vadd.f32 %v1375, %v1527
    %v1546 = vld [vmem:[%s2] sm:$0x1]
    %v1548 = vlaneseq
    %v1549 = vshrl.u32 %v1548, 7
    %v1550 = vsub.s32 0, %v1549
    %v1551 = vrot.slane %v1546, %v1550
    %v1553 = vadd.f32 %v1530, %v1551
    %v1554 = vadd.f32 %v1531, %v1551
    %v1555 = vadd.f32 %v1532, %v1551
    %v1556 = vadd.f32 %v1533, %v1551
    %v1557 = vadd.f32 %v1534, %v1551
    %v1558 = vadd.f32 %v1535, %v1551
    %v1559 = vadd.f32 %v1536, %v1551
    %v1560 = vadd.f32 %v1537, %v1551
    %v1561 = vadd.f32 %v1538, %v1551
    %v1562 = vadd.f32 %v1539, %v1551
    %v1563 = vadd.f32 %v1540, %v1551
    %v1564 = vadd.f32 %v1541, %v1551
    %v1565 = vadd.f32 %v1542, %v1551
    %v1566 = vadd.f32 %v1543, %v1551
    %v1567 = vadd.f32 %v1544, %v1551
    %v1568 = vadd.f32 %v1545, %v1551
    %v1569 = vmax.f32 %v1553, 0.0
    %v1570 = vmax.f32 %v1554, 0.0
    %v1571 = vmax.f32 %v1555, 0.0
    %v1572 = vmax.f32 %v1556, 0.0
    %v1573 = vmax.f32 %v1557, 0.0
    %v1574 = vmax.f32 %v1558, 0.0
    %v1575 = vmax.f32 %v1559, 0.0
    %v1576 = vmax.f32 %v1560, 0.0
    %v1577 = vmax.f32 %v1561, 0.0
    %v1578 = vmax.f32 %v1562, 0.0
    %v1579 = vmax.f32 %v1563, 0.0
    %v1580 = vmax.f32 %v1564, 0.0
    %v1581 = vmax.f32 %v1565, 0.0
    %v1582 = vmax.f32 %v1566, 0.0
    %v1583 = vmax.f32 %v1567, 0.0
    %v1584 = vmax.f32 %v1568, 0.0
    %1585 = vst.msk [vmem:[#allocation2 + $0x80] sm:$0xff] %vm107, 0.0
    %1586 = vst.msk [vmem:[#allocation2 + $0x88] sm:$0xff] %vm107, 0.0
    %1587 = vst.msk [vmem:[#allocation2 + $0x90] sm:$0xff] %vm107, 0.0
    %1588 = vst.msk [vmem:[#allocation2] sm:$0xff] %vm107, %v1569
    %1589 = vst.msk [vmem:[#allocation2 + $0x8] sm:$0xff] %vm107, %v1570
    %1590 = vst.msk [vmem:[#allocation2 + $0x10] sm:$0xff] %vm107, %v1571
    %1591 = vst.msk [vmem:[#allocation2 + $0x18] sm:$0xff] %vm107, %v1572
    %1592 = vst.msk [vmem:[#allocation2 + $0x20] sm:$0xff] %vm107, %v1573
    %1593 = vst.msk [vmem:[#allocation2 + $0x28] sm:$0xff] %vm107, %v1574
    %1594 = vst.msk [vmem:[#allocation2 + $0x30] sm:$0xff] %vm107, %v1575
    %1595 = vst.msk [vmem:[#allocation2 + $0x38] sm:$0xff] %vm107, %v1576
    %1596 = vst.msk [vmem:[#allocation2 + $0x40] sm:$0xff] %vm107, %v1577
    %1597 = vst.msk [vmem:[#allocation2 + $0x48] sm:$0xff] %vm107, %v1578
    %1598 = vst.msk [vmem:[#allocation2 + $0x50] sm:$0xff] %vm107, %v1579
    %1599 = vst.msk [vmem:[#allocation2 + $0x58] sm:$0xff] %vm107, %v1580
    %1600 = vst.msk [vmem:[#allocation2 + $0x60] sm:$0xff] %vm107, %v1581
    %1601 = vst.msk [vmem:[#allocation2 + $0x68] sm:$0xff] %vm107, %v1582
    %1602 = vst.msk [vmem:[#allocation2 + $0x70] sm:$0xff] %vm107, %v1583
    %1603 = vst.msk [vmem:[#allocation2 + $0x78] sm:$0xff] %vm107, %v1584
    %v1604 = vld [vmem:[#allocation2] sm:$0xff]
    %v1605 = vld [vmem:[#allocation2 + $0x8] sm:$0xff]
    %v1606 = vld [vmem:[#allocation2 + $0x10] sm:$0xff]
    %v1607 = vld [vmem:[#allocation2 + $0x18] sm:$0xff]
    %v1608 = vld [vmem:[#allocation2 + $0x20] sm:$0xff]
    %v1609 = vld [vmem:[#allocation2 + $0x28] sm:$0xff]
    %v1610 = vld [vmem:[#allocation2 + $0x30] sm:$0xff]
    %v1611 = vld [vmem:[#allocation2 + $0x38] sm:$0xff]
    %v1612 = vld [vmem:[#allocation2 + $0x40] sm:$0xff]
    %v1613 = vld [vmem:[#allocation2 + $0x48] sm:$0xff]
    %v1614 = vld [vmem:[#allocation2 + $0x50] sm:$0xff]
    %v1615 = vld [vmem:[#allocation2 + $0x58] sm:$0xff]
    %v1616 = vld [vmem:[#allocation2 + $0x60] sm:$0xff]
    %v1617 = vld [vmem:[#allocation2 + $0x68] sm:$0xff]
    %v1618 = vld [vmem:[#allocation2 + $0x70] sm:$0xff]
    %v1619 = vld [vmem:[#allocation2 + $0x78] sm:$0xff]
    %v1620 = vpack.c.bf16 %v1605, %v1604
    %v1621 = vpack.c.bf16 %v1607, %v1606
    %v1622 = vpack.c.bf16 %v1609, %v1608
    %v1623 = vpack.c.bf16 %v1611, %v1610
    %v1624 = vpack.c.bf16 %v1613, %v1612
    %v1625 = vpack.c.bf16 %v1615, %v1614
    %v1626 = vpack.c.bf16 %v1617, %v1616
    %v1627 = vpack.c.bf16 %v1619, %v1618
    %v1628 = vld [vmem:[%s3] sm:$0xf]
    %v1629 = vld [vmem:[%s3 + $0x4] sm:$0xf]
    %v1630 = vld [vmem:[#allocation2 + $0x1] sm:$0xff]
    %v1631 = vld [vmem:[#allocation2 + $0x9] sm:$0xff]
    %v1632 = vld [vmem:[#allocation2 + $0x11] sm:$0xff]
    %v1633 = vld [vmem:[#allocation2 + $0x19] sm:$0xff]
    %v1634 = vld [vmem:[#allocation2 + $0x21] sm:$0xff]
    %v1635 = vld [vmem:[#allocation2 + $0x29] sm:$0xff]
    %v1636 = vld [vmem:[#allocation2 + $0x31] sm:$0xff]
    %v1637 = vld [vmem:[#allocation2 + $0x39] sm:$0xff]
    %v1638 = vld [vmem:[#allocation2 + $0x41] sm:$0xff]
    %v1639 = vld [vmem:[#allocation2 + $0x49] sm:$0xff]
    %v1640 = vld [vmem:[#allocation2 + $0x51] sm:$0xff]
    %v1641 = vld [vmem:[#allocation2 + $0x59] sm:$0xff]
    %v1642 = vld [vmem:[#allocation2 + $0x61] sm:$0xff]
    %v1643 = vld [vmem:[#allocation2 + $0x69] sm:$0xff]
    %v1644 = vld [vmem:[#allocation2 + $0x71] sm:$0xff]
    %v1645 = vld [vmem:[#allocation2 + $0x79] sm:$0xff]
    %v1646 = vpack.c.bf16 %v1631, %v1630
    %v1647 = vpack.c.bf16 %v1633, %v1632
    %v1648 = vpack.c.bf16 %v1635, %v1634
    %v1649 = vpack.c.bf16 %v1637, %v1636
    %v1650 = vpack.c.bf16 %v1639, %v1638
    %v1651 = vpack.c.bf16 %v1641, %v1640
    %v1652 = vpack.c.bf16 %v1643, %v1642
    %v1653 = vpack.c.bf16 %v1645, %v1644
    %s1654 = scalar_lea.vmem %s3, 8
    %v1655 = vld [vmem:[%s1654] sm:$0xf]
    %v1656 = vld [vmem:[%s1654 + $0x4] sm:$0xf]
    %v1659 = vunpack.c.l.b16 %v1655
    %v1660 = vunpack.c.l.b16 %v1656
    %v1661 = vpack.c.b16 %v1660, %v1659
    %v1664 = vsel %vm107, %v1646, 0
    %v1667 = vsel %vm107, %v1647, 0
    %v1670 = vsel %vm107, %v1648, 0
    %v1673 = vsel %vm107, %v1649, 0
    %v1676 = vsel %vm107, %v1650, 0
    %v1679 = vsel %vm107, %v1651, 0
    %v1682 = vsel %vm107, %v1652, 0
    %v1685 = vsel %vm107, %v1653, 0
    %1687 = vmatprep.subr.bf16.mxu0 0
    %1688 = vmatpush1.bf16.msra.mxu0 %v1661
    %1689 = vmatprep.subr.bf16.mxu0 0
    %1690 = vmatpush1.bf16.msra.mxu0 0
    %1691 = vmatprep.subr.bf16.mxu0 0
    %1692 = vmatpush1.bf16.msra.mxu0 0
    %1693 = vmatprep.subr.bf16.mxu0 0
    %1694 = vmatpush1.bf16.msra.mxu0 0
    %1695 = vmatprep.subr.bf16.mxu0 0
    %1696 = vmatpush1.bf16.msra.mxu0 0
    %1697 = vmatprep.subr.bf16.mxu0 0
    %1698 = vmatpush1.bf16.msra.mxu0 0
    %1699 = vmatprep.subr.bf16.mxu0 0
    %1700 = vmatpush1.bf16.msra.mxu0 0
    %1701 = vmatprep.subr.bf16.mxu0 0
    %1702 = vmatpush1.bf16.msra.mxu0 0
    %1703 = vmatprep.subr.bf16.mxu0 0
    %1704 = vmatpush1.bf16.msra.mxu0 0
    %1705 = vmatprep.subr.bf16.mxu0 0
    %1706 = vmatpush1.bf16.msra.mxu0 0
    %1707 = vmatprep.subr.bf16.mxu0 0
    %1708 = vmatpush1.bf16.msra.mxu0 0
    %1709 = vmatprep.subr.bf16.mxu0 0
    %1710 = vmatpush1.bf16.msra.mxu0 0
    %1711 = vmatprep.subr.bf16.mxu0 0
    %1712 = vmatpush1.bf16.msra.mxu0 0
    %1713 = vmatprep.subr.bf16.mxu0 0
    %1714 = vmatpush1.bf16.msra.mxu0 0
    %1715 = vmatprep.subr.bf16.mxu0 0
    %1716 = vmatpush1.bf16.msra.mxu0 0
    %1717 = vmatprep.subr.bf16.mxu0 0
    %1718 = vmatpush1.bf16.msra.mxu0 0
    %1719 = vmatprep.mubr.bf16.mxu0 0
    %1720 = vmatmul.mubr.bf16.gmra.mrb[0].mxu0 %v1664
    %v1721 = vpop.f32.mrb[0].mxu0
    %v1722 = vadd.f32 0.0, %v1721
    %v1723 = vpop.f32.mrb[0].mxu0
    %v1724 = vpop.f32.mrb[0].mxu0
    %v1725 = vadd.f32 0.0, %v1724
    %v1726 = vpop.f32.mrb[0].mxu0
    %1727 = vmatprep.mubr.bf16.mxu0 0
    %1728 = vmatmul.mubr.bf16.gmra.mrb[0].mxu0 %v1667
    %v1729 = vpop.f32.mrb[0].mxu0
    %v1730 = vadd.f32 0.0, %v1729
    %v1731 = vpop.f32.mrb[0].mxu0
    %v1732 = vpop.f32.mrb[0].mxu0
    %v1733 = vadd.f32 0.0, %v1732
    %v1734 = vpop.f32.mrb[0].mxu0
    %1735 = vmatprep.mubr.bf16.mxu0 0
    %1736 = vmatmul.mubr.bf16.gmra.mrb[0].mxu0 %v1670
    %v1737 = vpop.f32.mrb[0].mxu0
    %v1738 = vadd.f32 0.0, %v1737
    %v1739 = vpop.f32.mrb[0].mxu0
    %v1740 = vpop.f32.mrb[0].mxu0
    %v1741 = vadd.f32 0.0, %v1740
    %v1742 = vpop.f32.mrb[0].mxu0
    %1743 = vmatprep.mubr.bf16.mxu0 0
    %1744 = vmatmul.mubr.bf16.gmra.mrb[0].mxu0 %v1673
    %v1745 = vpop.f32.mrb[0].mxu0
    %v1746 = vadd.f32 0.0, %v1745
    %v1747 = vpop.f32.mrb[0].mxu0
    %v1748 = vpop.f32.mrb[0].mxu0
    %v1749 = vadd.f32 0.0, %v1748
    %v1750 = vpop.f32.mrb[0].mxu0
    %1751 = vmatprep.mubr.bf16.mxu0 0
    %1752 = vmatmul.mubr.bf16.gmra.mrb[0].mxu0 %v1676
    %v1753 = vpop.f32.mrb[0].mxu0
    %v1754 = vadd.f32 0.0, %v1753
    %v1755 = vpop.f32.mrb[0].mxu0
    %v1756 = vpop.f32.mrb[0].mxu0
    %v1757 = vadd.f32 0.0, %v1756
    %v1758 = vpop.f32.mrb[0].mxu0
    %1759 = vmatprep.mubr.bf16.mxu0 0
    %1760 = vmatmul.mubr.bf16.gmra.mrb[0].mxu0 %v1679
    %v1761 = vpop.f32.mrb[0].mxu0
    %v1762 = vadd.f32 0.0, %v1761
    %v1763 = vpop.f32.mrb[0].mxu0
    %v1764 = vpop.f32.mrb[0].mxu0
    %v1765 = vadd.f32 0.0, %v1764
    %v1766 = vpop.f32.mrb[0].mxu0
    %1767 = vmatprep.mubr.bf16.mxu0 0
    %1768 = vmatmul.mubr.bf16.gmra.mrb[0].mxu0 %v1682
    %v1769 = vpop.f32.mrb[0].mxu0
    %v1770 = vadd.f32 0.0, %v1769
    %v1771 = vpop.f32.mrb[0].mxu0
    %v1772 = vpop.f32.mrb[0].mxu0
    %v1773 = vadd.f32 0.0, %v1772
    %v1774 = vpop.f32.mrb[0].mxu0
    %1775 = vmatprep.mubr.bf16.mxu0 0
    %1776 = vmatmul.mubr.bf16.gmra.mrb[0].mxu0 %v1685
    %v1777 = vpop.f32.mrb[0].mxu0
    %v1778 = vadd.f32 0.0, %v1777
    %v1779 = vpop.f32.mrb[0].mxu0
    %v1780 = vpop.f32.mrb[0].mxu0
    %v1781 = vadd.f32 0.0, %v1780
    %v1782 = vpop.f32.mrb[0].mxu0
    %1783 = vdwg.mxu0
    %v1786 = vunpack.c.l.b16 %v1628
    %v1787 = vunpack.c.l.b16 %v1629
    %v1788 = vpack.c.b16 %v1787, %v1786
    %v1791 = vsel %vm107, %v1620, 0
    %v1794 = vsel %vm107, %v1621, 0
    %v1797 = vsel %vm107, %v1622, 0
    %v1800 = vsel %vm107, %v1623, 0
    %v1803 = vsel %vm107, %v1624, 0
    %v1806 = vsel %vm107, %v1625, 0
    %v1809 = vsel %vm107, %v1626, 0
    %v1812 = vsel %vm107, %v1627, 0
    %1814 = vmatprep.subr.bf16.mxu0 0
    %1815 = vmatpush1.bf16.msra.mxu0 %v1788
    %1816 = vmatprep.subr.bf16.mxu0 0
    %1817 = vmatpush1.bf16.msra.mxu0 0
    %1818 = vmatprep.subr.bf16.mxu0 0
    %1819 = vmatpush1.bf16.msra.mxu0 0
    %1820 = vmatprep.subr.bf16.mxu0 0
    %1821 = vmatpush1.bf16.msra.mxu0 0
    %1822 = vmatprep.subr.bf16.mxu0 0
    %1823 = vmatpush1.bf16.msra.mxu0 0
    %1824 = vmatprep.subr.bf16.mxu0 0
    %1825 = vmatpush1.bf16.msra.mxu0 0
    %1826 = vmatprep.subr.bf16.mxu0 0
    %1827 = vmatpush1.bf16.msra.mxu0 0
    %1828 = vmatprep.subr.bf16.mxu0 0
    %1829 = vmatpush1.bf16.msra.mxu0 0
    %1830 = vmatprep.subr.bf16.mxu0 0
    %1831 = vmatpush1.bf16.msra.mxu0 0
    %1832 = vmatprep.subr.bf16.mxu0 0
    %1833 = vmatpush1.bf16.msra.mxu0 0
    %1834 = vmatprep.subr.bf16.mxu0 0
    %1835 = vmatpush1.bf16.msra.mxu0 0
    %1836 = vmatprep.subr.bf16.mxu0 0
    %1837 = vmatpush1.bf16.msra.mxu0 0
    %1838 = vmatprep.subr.bf16.mxu0 0
    %1839 = vmatpush1.bf16.msra.mxu0 0
    %1840 = vmatprep.subr.bf16.mxu0 0
    %1841 = vmatpush1.bf16.msra.mxu0 0
    %1842 = vmatprep.subr.bf16.mxu0 0
    %1843 = vmatpush1.bf16.msra.mxu0 0
    %1844 = vmatprep.subr.bf16.mxu0 0
    %1845 = vmatpush1.bf16.msra.mxu0 0
    %1846 = vmatprep.mubr.bf16.mxu0 0
    %1847 = vmatmul.mubr.bf16.gmra.mrb[0].mxu0 %v1791
    %v1848 = vpop.f32.mrb[0].mxu0
    %v1849 = vadd.f32 %v1722, %v1848
    %v1850 = vpop.f32.mrb[0].mxu0
    %v1851 = vpop.f32.mrb[0].mxu0
    %v1852 = vadd.f32 %v1725, %v1851
    %v1853 = vpop.f32.mrb[0].mxu0
    %1854 = vmatprep.mubr.bf16.mxu0 0
    %1855 = vmatmul.mubr.bf16.gmra.mrb[0].mxu0 %v1794
    %v1856 = vpop.f32.mrb[0].mxu0
    %v1857 = vadd.f32 %v1730, %v1856
    %v1858 = vpop.f32.mrb[0].mxu0
    %v1859 = vpop.f32.mrb[0].mxu0
    %v1860 = vadd.f32 %v1733, %v1859
    %v1861 = vpop.f32.mrb[0].mxu0
    %1862 = vmatprep.mubr.bf16.mxu0 0
    %1863 = vmatmul.mubr.bf16.gmra.mrb[0].mxu0 %v1797
    %v1864 = vpop.f32.mrb[0].mxu0
    %v1865 = vadd.f32 %v1738, %v1864
    %v1866 = vpop.f32.mrb[0].mxu0
    %v1867 = vpop.f32.mrb[0].mxu0
    %v1868 = vadd.f32 %v1741, %v1867
    %v1869 = vpop.f32.mrb[0].mxu0
    %1870 = vmatprep.mubr.bf16.mxu0 0
    %1871 = vmatmul.mubr.bf16.gmra.mrb[0].mxu0 %v1800
    %v1872 = vpop.f32.mrb[0].mxu0
    %v1873 = vadd.f32 %v1746, %v1872
    %v1874 = vpop.f32.mrb[0].mxu0
    %v1875 = vpop.f32.mrb[0].mxu0
    %v1876 = vadd.f32 %v1749, %v1875
    %v1877 = vpop.f32.mrb[0].mxu0
    %1878 = vmatprep.mubr.bf16.mxu0 0
    %1879 = vmatmul.mubr.bf16.gmra.mrb[0].mxu0 %v1803
    %v1880 = vpop.f32.mrb[0].mxu0
    %v1881 = vadd.f32 %v1754, %v1880
    %v1882 = vpop.f32.mrb[0].mxu0
    %v1883 = vpop.f32.mrb[0].mxu0
    %v1884 = vadd.f32 %v1757, %v1883
    %v1885 = vpop.f32.mrb[0].mxu0
    %1886 = vmatprep.mubr.bf16.mxu0 0
    %1887 = vmatmul.mubr.bf16.gmra.mrb[0].mxu0 %v1806
    %v1888 = vpop.f32.mrb[0].mxu0
    %v1889 = vadd.f32 %v1762, %v1888
    %v1890 = vpop.f32.mrb[0].mxu0
    %v1891 = vpop.f32.mrb[0].mxu0
    %v1892 = vadd.f32 %v1765, %v1891
    %v1893 = vpop.f32.mrb[0].mxu0
    %1894 = vmatprep.mubr.bf16.mxu0 0
    %1895 = vmatmul.mubr.bf16.gmra.mrb[0].mxu0 %v1809
    %v1896 = vpop.f32.mrb[0].mxu0
    %v1897 = vadd.f32 %v1770, %v1896
    %v1898 = vpop.f32.mrb[0].mxu0
    %v1899 = vpop.f32.mrb[0].mxu0
    %v1900 = vadd.f32 %v1773, %v1899
    %v1901 = vpop.f32.mrb[0].mxu0
    %1902 = vmatprep.mubr.bf16.mxu0 0
    %1903 = vmatmul.mubr.bf16.gmra.mrb[0].mxu0 %v1812
    %v1904 = vpop.f32.mrb[0].mxu0
    %v1905 = vadd.f32 %v1778, %v1904
    %v1906 = vpop.f32.mrb[0].mxu0
    %v1907 = vpop.f32.mrb[0].mxu0
    %v1908 = vadd.f32 %v1781, %v1907
    %v1909 = vpop.f32.mrb[0].mxu0
    %1910 = vdwg.mxu0
    %v1911 = vld [vmem:[#allocation2 + $0x2] sm:$0xff]
    %v1912 = vld [vmem:[#allocation2 + $0xa] sm:$0xff]
    %v1913 = vld [vmem:[#allocation2 + $0x12] sm:$0xff]
    %v1914 = vld [vmem:[#allocation2 + $0x1a] sm:$0xff]
    %v1915 = vld [vmem:[#allocation2 + $0x22] sm:$0xff]
    %v1916 = vld [vmem:[#allocation2 + $0x2a] sm:$0xff]
    %v1917 = vld [vmem:[#allocation2 + $0x32] sm:$0xff]
    %v1918 = vld [vmem:[#allocation2 + $0x3a] sm:$0xff]
    %v1919 = vld [vmem:[#allocation2 + $0x42] sm:$0xff]
    %v1920 = vld [vmem:[#allocation2 + $0x4a] sm:$0xff]
    %v1921 = vld [vmem:[#allocation2 + $0x52] sm:$0xff]
    %v1922 = vld [vmem:[#allocation2 + $0x5a] sm:$0xff]
    %v1923 = vld [vmem:[#allocation2 + $0x62] sm:$0xff]
    %v1924 = vld [vmem:[#allocation2 + $0x6a] sm:$0xff]
    %v1925 = vld [vmem:[#allocation2 + $0x72] sm:$0xff]
    %v1926 = vld [vmem:[#allocation2 + $0x7a] sm:$0xff]
    %v1927 = vpack.c.bf16 %v1912, %v1911
    %v1928 = vpack.c.bf16 %v1914, %v1913
    %v1929 = vpack.c.bf16 %v1916, %v1915
    %v1930 = vpack.c.bf16 %v1918, %v1917
    %v1931 = vpack.c.bf16 %v1920, %v1919
    %v1932 = vpack.c.bf16 %v1922, %v1921
    %v1933 = vpack.c.bf16 %v1924, %v1923
    %v1934 = vpack.c.bf16 %v1926, %v1925
    %s1935 = scalar_lea.vmem %s3, 16
    %v1936 = vld [vmem:[%s1935] sm:$0xf]
    %v1937 = vld [vmem:[%s1935 + $0x4] sm:$0xf]
    %v1940 = vunpack.c.l.b16 %v1936
    %v1941 = vunpack.c.l.b16 %v1937
    %v1942 = vpack.c.b16 %v1941, %v1940
    %v1945 = vsel %vm107, %v1927, 0
    %v1948 = vsel %vm107, %v1928, 0
    %v1951 = vsel %vm107, %v1929, 0
    %v1954 = vsel %vm107, %v1930, 0
    %v1957 = vsel %vm107, %v1931, 0
    %v1960 = vsel %vm107, %v1932, 0
    %v1963 = vsel %vm107, %v1933, 0
    %v1966 = vsel %vm107, %v1934, 0
    %1968 = vmatprep.subr.bf16.mxu0 0
    %1969 = vmatpush1.bf16.msra.mxu0 %v1942
    %1970 = vmatprep.subr.bf16.mxu0 0
    %1971 = vmatpush1.bf16.msra.mxu0 0
    %1972 = vmatprep.subr.bf16.mxu0 0
    %1973 = vmatpush1.bf16.msra.mxu0 0
    %1974 = vmatprep.subr.bf16.mxu0 0
    %1975 = vmatpush1.bf16.msra.mxu0 0
    %1976 = vmatprep.subr.bf16.mxu0 0
    %1977 = vmatpush1.bf16.msra.mxu0 0
    %1978 = vmatprep.subr.bf16.mxu0 0
    %1979 = vmatpush1.bf16.msra.mxu0 0
    %1980 = vmatprep.subr.bf16.mxu0 0
    %1981 = vmatpush1.bf16.msra.mxu0 0
    %1982 = vmatprep.subr.bf16.mxu0 0
    %1983 = vmatpush1.bf16.msra.mxu0 0
    %1984 = vmatprep.subr.bf16.mxu0 0
    %1985 = vmatpush1.bf16.msra.mxu0 0
    %1986 = vmatprep.subr.bf16.mxu0 0
    %1987 = vmatpush1.bf16.msra.mxu0 0
    %1988 = vmatprep.subr.bf16.mxu0 0
    %1989 = vmatpush1.bf16.msra.mxu0 0
    %1990 = vmatprep.subr.bf16.mxu0 0
    %1991 = vmatpush1.bf16.msra.mxu0 0
    %1992 = vmatprep.subr.bf16.mxu0 0
    %1993 = vmatpush1.bf16.msra.mxu0 0
    %1994 = vmatprep.subr.bf16.mxu0 0
    %1995 = vmatpush1.bf16.msra.mxu0 0
    %1996 = vmatprep.subr.bf16.mxu0 0
    %1997 = vmatpush1.bf16.msra.mxu0 0
    %1998 = vmatprep.subr.bf16.mxu0 0
    %1999 = vmatpush1.bf16.msra.mxu0 0
    %2000 = vmatprep.mubr.bf16.mxu0 0
    %2001 = vmatmul.mubr.bf16.gmra.mrb[0].mxu0 %v1945
    %v2002 = vpop.f32.mrb[0].mxu0
    %v2003 = vadd.f32 0.0, %v2002
    %v2004 = vpop.f32.mrb[0].mxu0
    %v2005 = vpop.f32.mrb[0].mxu0
    %v2006 = vadd.f32 0.0, %v2005
    %v2007 = vpop.f32.mrb[0].mxu0
    %2008 = vmatprep.mubr.bf16.mxu0 0
    %2009 = vmatmul.mubr.bf16.gmra.mrb[0].mxu0 %v1948
    %v2010 = vpop.f32.mrb[0].mxu0
    %v2011 = vadd.f32 0.0, %v2010
    %v2012 = vpop.f32.mrb[0].mxu0
    %v2013 = vpop.f32.mrb[0].mxu0
    %v2014 = vadd.f32 0.0, %v2013
    %v2015 = vpop.f32.mrb[0].mxu0
    %2016 = vmatprep.mubr.bf16.mxu0 0
    %2017 = vmatmul.mubr.bf16.gmra.mrb[0].mxu0 %v1951
    %v2018 = vpop.f32.mrb[0].mxu0
    %v2019 = vadd.f32 0.0, %v2018
    %v2020 = vpop.f32.mrb[0].mxu0
    %v2021 = vpop.f32.mrb[0].mxu0
    %v2022 = vadd.f32 0.0, %v2021
    %v2023 = vpop.f32.mrb[0].mxu0
    %2024 = vmatprep.mubr.bf16.mxu0 0
    %2025 = vmatmul.mubr.bf16.gmra.mrb[0].mxu0 %v1954
    %v2026 = vpop.f32.mrb[0].mxu0
    %v2027 = vadd.f32 0.0, %v2026
    %v2028 = vpop.f32.mrb[0].mxu0
    %v2029 = vpop.f32.mrb[0].mxu0
    %v2030 = vadd.f32 0.0, %v2029
    %v2031 = vpop.f32.mrb[0].mxu0
    %2032 = vmatprep.mubr.bf16.mxu0 0
    %2033 = vmatmul.mubr.bf16.gmra.mrb[0].mxu0 %v1957
    %v2034 = vpop.f32.mrb[0].mxu0
    %v2035 = vadd.f32 0.0, %v2034
    %v2036 = vpop.f32.mrb[0].mxu0
    %v2037 = vpop.f32.mrb[0].mxu0
    %v2038 = vadd.f32 0.0, %v2037
    %v2039 = vpop.f32.mrb[0].mxu0
    %2040 = vmatprep.mubr.bf16.mxu0 0
    %2041 = vmatmul.mubr.bf16.gmra.mrb[0].mxu0 %v1960
    %v2042 = vpop.f32.mrb[0].mxu0
    %v2043 = vadd.f32 0.0, %v2042
    %v2044 = vpop.f32.mrb[0].mxu0
    %v2045 = vpop.f32.mrb[0].mxu0
    %v2046 = vadd.f32 0.0, %v2045
    %v2047 = vpop.f32.mrb[0].mxu0
    %2048 = vmatprep.mubr.bf16.mxu0 0
    %2049 = vmatmul.mubr.bf16.gmra.mrb[0].mxu0 %v1963
    %v2050 = vpop.f32.mrb[0].mxu0
    %v2051 = vadd.f32 0.0, %v2050
    %v2052 = vpop.f32.mrb[0].mxu0
    %v2053 = vpop.f32.mrb[0].mxu0
    %v2054 = vadd.f32 0.0, %v2053
    %v2055 = vpop.f32.mrb[0].mxu0
    %2056 = vmatprep.mubr.bf16.mxu0 0
    %2057 = vmatmul.mubr.bf16.gmra.mrb[0].mxu0 %v1966
    %v2058 = vpop.f32.mrb[0].mxu0
    %v2059 = vadd.f32 0.0, %v2058
    %v2060 = vpop.f32.mrb[0].mxu0
    %v2061 = vpop.f32.mrb[0].mxu0
    %v2062 = vadd.f32 0.0, %v2061
    %v2063 = vpop.f32.mrb[0].mxu0
    %2064 = vdwg.mxu0
    %v2065 = vadd.f32 %v1849, %v2003
    %v2066 = vadd.f32 %v1852, %v2006
    %v2067 = vadd.f32 %v1857, %v2011
    %v2068 = vadd.f32 %v1860, %v2014
    %v2069 = vadd.f32 %v1865, %v2019
    %v2070 = vadd.f32 %v1868, %v2022
    %v2071 = vadd.f32 %v1873, %v2027
    %v2072 = vadd.f32 %v1876, %v2030
    %v2073 = vadd.f32 %v1881, %v2035
    %v2074 = vadd.f32 %v1884, %v2038
    %v2075 = vadd.f32 %v1889, %v2043
    %v2076 = vadd.f32 %v1892, %v2046
    %v2077 = vadd.f32 %v1897, %v2051
    %v2078 = vadd.f32 %v1900, %v2054
    %v2079 = vadd.f32 %v1905, %v2059
    %v2080 = vadd.f32 %v1908, %v2062
    %v2081 = vld [vmem:[#allocation2 + $0x8] sm:$0xff]
    %v2082 = vld [vmem:[#allocation2 + $0x10] sm:$0xff]
    %v2083 = vld [vmem:[#allocation2 + $0x18] sm:$0xff]
    %v2084 = vld [vmem:[#allocation2 + $0x20] sm:$0xff]
    %v2085 = vld [vmem:[#allocation2 + $0x28] sm:$0xff]
    %v2086 = vld [vmem:[#allocation2 + $0x30] sm:$0xff]
    %v2087 = vld [vmem:[#allocation2 + $0x38] sm:$0xff]
    %v2088 = vld [vmem:[#allocation2 + $0x40] sm:$0xff]
    %v2089 = vld [vmem:[#allocation2 + $0x48] sm:$0xff]
    %v2090 = vld [vmem:[#allocation2 + $0x50] sm:$0xff]
    %v2091 = vld [vmem:[#allocation2 + $0x58] sm:$0xff]
    %v2092 = vld [vmem:[#allocation2 + $0x60] sm:$0xff]
    %v2093 = vld [vmem:[#allocation2 + $0x68] sm:$0xff]
    %v2094 = vld [vmem:[#allocation2 + $0x70] sm:$0xff]
    %v2095 = vld [vmem:[#allocation2 + $0x78] sm:$0xff]
    %v2096 = vld [vmem:[#allocation2 + $0x80] sm:$0xff]
    %v2097 = vpack.c.bf16 %v2082, %v2081
    %v2098 = vpack.c.bf16 %v2084, %v2083
    %v2099 = vpack.c.bf16 %v2086, %v2085
    %v2100 = vpack.c.bf16 %v2088, %v2087
    %v2101 = vpack.c.bf16 %v2090, %v2089
    %v2102 = vpack.c.bf16 %v2092, %v2091
    %v2103 = vpack.c.bf16 %v2094, %v2093
    %v2104 = vpack.c.bf16 %v2096, %v2095
    %s2105 = scalar_lea.vmem %s3, 24
    %v2106 = vld [vmem:[%s2105] sm:$0xf]
    %v2107 = vld [vmem:[%s2105 + $0x4] sm:$0xf]
    %v2110 = vunpack.c.l.b16 %v2106
    %v2111 = vunpack.c.l.b16 %v2107
    %v2112 = vpack.c.b16 %v2111, %v2110
    %v2115 = vsel %vm107, %v2097, 0
    %v2118 = vsel %vm107, %v2098, 0
    %v2121 = vsel %vm107, %v2099, 0
    %v2124 = vsel %vm107, %v2100, 0
    %v2127 = vsel %vm107, %v2101, 0
    %v2130 = vsel %vm107, %v2102, 0
    %v2133 = vsel %vm107, %v2103, 0
    %v2136 = vsel %vm107, %v2104, 0
    %2138 = vmatprep.subr.bf16.mxu0 0
    %2139 = vmatpush1.bf16.msra.mxu0 %v2112
    %2140 = vmatprep.subr.bf16.mxu0 0
    %2141 = vmatpush1.bf16.msra.mxu0 0
    %2142 = vmatprep.subr.bf16.mxu0 0
    %2143 = vmatpush1.bf16.msra.mxu0 0
    %2144 = vmatprep.subr.bf16.mxu0 0
    %2145 = vmatpush1.bf16.msra.mxu0 0
    %2146 = vmatprep.subr.bf16.mxu0 0
    %2147 = vmatpush1.bf16.msra.mxu0 0
    %2148 = vmatprep.subr.bf16.mxu0 0
    %2149 = vmatpush1.bf16.msra.mxu0 0
    %2150 = vmatprep.subr.bf16.mxu0 0
    %2151 = vmatpush1.bf16.msra.mxu0 0
    %2152 = vmatprep.subr.bf16.mxu0 0
    %2153 = vmatpush1.bf16.msra.mxu0 0
    %2154 = vmatprep.subr.bf16.mxu0 0
    %2155 = vmatpush1.bf16.msra.mxu0 0
    %2156 = vmatprep.subr.bf16.mxu0 0
    %2157 = vmatpush1.bf16.msra.mxu0 0
    %2158 = vmatprep.subr.bf16.mxu0 0
    %2159 = vmatpush1.bf16.msra.mxu0 0
    %2160 = vmatprep.subr.bf16.mxu0 0
    %2161 = vmatpush1.bf16.msra.mxu0 0
    %2162 = vmatprep.subr.bf16.mxu0 0
    %2163 = vmatpush1.bf16.msra.mxu0 0
    %2164 = vmatprep.subr.bf16.mxu0 0
    %2165 = vmatpush1.bf16.msra.mxu0 0
    %2166 = vmatprep.subr.bf16.mxu0 0
    %2167 = vmatpush1.bf16.msra.mxu0 0
    %2168 = vmatprep.subr.bf16.mxu0 0
    %2169 = vmatpush1.bf16.msra.mxu0 0
    %2170 = vmatprep.mubr.bf16.mxu0 0
    %2171 = vmatmul.mubr.bf16.gmra.mrb[0].mxu0 %v2115
    %v2172 = vpop.f32.mrb[0].mxu0
    %v2173 = vadd.f32 0.0, %v2172
    %v2174 = vpop.f32.mrb[0].mxu0
    %v2175 = vpop.f32.mrb[0].mxu0
    %v2176 = vadd.f32 0.0, %v2175
    %v2177 = vpop.f32.mrb[0].mxu0
    %2178 = vmatprep.mubr.bf16.mxu0 0
    %2179 = vmatmul.mubr.bf16.gmra.mrb[0].mxu0 %v2118
    %v2180 = vpop.f32.mrb[0].mxu0
    %v2181 = vadd.f32 0.0, %v2180
    %v2182 = vpop.f32.mrb[0].mxu0
    %v2183 = vpop.f32.mrb[0].mxu0
    %v2184 = vadd.f32 0.0, %v2183
    %v2185 = vpop.f32.mrb[0].mxu0
    %2186 = vmatprep.mubr.bf16.mxu0 0
    %2187 = vmatmul.mubr.bf16.gmra.mrb[0].mxu0 %v2121
    %v2188 = vpop.f32.mrb[0].mxu0
    %v2189 = vadd.f32 0.0, %v2188
    %v2190 = vpop.f32.mrb[0].mxu0
    %v2191 = vpop.f32.mrb[0].mxu0
    %v2192 = vadd.f32 0.0, %v2191
    %v2193 = vpop.f32.mrb[0].mxu0
    %2194 = vmatprep.mubr.bf16.mxu0 0
    %2195 = vmatmul.mubr.bf16.gmra.mrb[0].mxu0 %v2124
    %v2196 = vpop.f32.mrb[0].mxu0
    %v2197 = vadd.f32 0.0, %v2196
    %v2198 = vpop.f32.mrb[0].mxu0
    %v2199 = vpop.f32.mrb[0].mxu0
    %v2200 = vadd.f32 0.0, %v2199
    %v2201 = vpop.f32.mrb[0].mxu0
    %2202 = vmatprep.mubr.bf16.mxu0 0
    %2203 = vmatmul.mubr.bf16.gmra.mrb[0].mxu0 %v2127
    %v2204 = vpop.f32.mrb[0].mxu0
    %v2205 = vadd.f32 0.0, %v2204
    %v2206 = vpop.f32.mrb[0].mxu0
    %v2207 = vpop.f32.mrb[0].mxu0
    %v2208 = vadd.f32 0.0, %v2207
    %v2209 = vpop.f32.mrb[0].mxu0
    %2210 = vmatprep.mubr.bf16.mxu0 0
    %2211 = vmatmul.mubr.bf16.gmra.mrb[0].mxu0 %v2130
    %v2212 = vpop.f32.mrb[0].mxu0
    %v2213 = vadd.f32 0.0, %v2212
    %v2214 = vpop.f32.mrb[0].mxu0
    %v2215 = vpop.f32.mrb[0].mxu0
    %v2216 = vadd.f32 0.0, %v2215
    %v2217 = vpop.f32.mrb[0].mxu0
    %2218 = vmatprep.mubr.bf16.mxu0 0
    %2219 = vmatmul.mubr.bf16.gmra.mrb[0].mxu0 %v2133
    %v2220 = vpop.f32.mrb[0].mxu0
    %v2221 = vadd.f32 0.0, %v2220
    %v2222 = vpop.f32.mrb[0].mxu0
    %v2223 = vpop.f32.mrb[0].mxu0
    %v2224 = vadd.f32 0.0, %v2223
    %v2225 = vpop.f32.mrb[0].mxu0
    %2226 = vmatprep.mubr.bf16.mxu0 0
    %2227 = vmatmul.mubr.bf16.gmra.mrb[0].mxu0 %v2136
    %v2228 = vpop.f32.mrb[0].mxu0
    %v2229 = vadd.f32 0.0, %v2228
    %v2230 = vpop.f32.mrb[0].mxu0
    %v2231 = vpop.f32.mrb[0].mxu0
    %v2232 = vadd.f32 0.0, %v2231
    %v2233 = vpop.f32.mrb[0].mxu0
    %2234 = vdwg.mxu0
    %v2235 = vadd.f32 %v2065, %v2173
    %v2236 = vadd.f32 %v2066, %v2176
    %v2237 = vadd.f32 %v2067, %v2181
    %v2238 = vadd.f32 %v2068, %v2184
    %v2239 = vadd.f32 %v2069, %v2189
    %v2240 = vadd.f32 %v2070, %v2192
    %v2241 = vadd.f32 %v2071, %v2197
    %v2242 = vadd.f32 %v2072, %v2200
    %v2243 = vadd.f32 %v2073, %v2205
    %v2244 = vadd.f32 %v2074, %v2208
    %v2245 = vadd.f32 %v2075, %v2213
    %v2246 = vadd.f32 %v2076, %v2216
    %v2247 = vadd.f32 %v2077, %v2221
    %v2248 = vadd.f32 %v2078, %v2224
    %v2249 = vadd.f32 %v2079, %v2229
    %v2250 = vadd.f32 %v2080, %v2232
    %v2251 = vld [vmem:[#allocation2 + $0x9] sm:$0xff]
    %v2252 = vld [vmem:[#allocation2 + $0x11] sm:$0xff]
    %v2253 = vld [vmem:[#allocation2 + $0x19] sm:$0xff]
    %v2254 = vld [vmem:[#allocation2 + $0x21] sm:$0xff]
    %v2255 = vld [vmem:[#allocation2 + $0x29] sm:$0xff]
    %v2256 = vld [vmem:[#allocation2 + $0x31] sm:$0xff]
    %v2257 = vld [vmem:[#allocation2 + $0x39] sm:$0xff]
    %v2258 = vld [vmem:[#allocation2 + $0x41] sm:$0xff]
    %v2259 = vld [vmem:[#allocation2 + $0x49] sm:$0xff]
    %v2260 = vld [vmem:[#allocation2 + $0x51] sm:$0xff]
    %v2261 = vld [vmem:[#allocation2 + $0x59] sm:$0xff]
    %v2262 = vld [vmem:[#allocation2 + $0x61] sm:$0xff]
    %v2263 = vld [vmem:[#allocation2 + $0x69] sm:$0xff]
    %v2264 = vld [vmem:[#allocation2 + $0x71] sm:$0xff]
    %v2265 = vld [vmem:[#allocation2 + $0x79] sm:$0xff]
    %v2266 = vld [vmem:[#allocation2 + $0x81] sm:$0xff]
    %v2267 = vpack.c.bf16 %v2252, %v2251
    %v2268 = vpack.c.bf16 %v2254, %v2253
    %v2269 = vpack.c.bf16 %v2256, %v2255
    %v2270 = vpack.c.bf16 %v2258, %v2257
    %v2271 = vpack.c.bf16 %v2260, %v2259
    %v2272 = vpack.c.bf16 %v2262, %v2261
    %v2273 = vpack.c.bf16 %v2264, %v2263
    %v2274 = vpack.c.bf16 %v2266, %v2265
    %s2275 = scalar_lea.vmem %s3, 32
    %v2276 = vld [vmem:[%s2275] sm:$0xf]
    %v2277 = vld [vmem:[%s2275 + $0x4] sm:$0xf]
    %v2280 = vunpack.c.l.b16 %v2276
    %v2281 = vunpack.c.l.b16 %v2277
    %v2282 = vpack.c.b16 %v2281, %v2280
    %v2285 = vsel %vm107, %v2267, 0
    %v2288 = vsel %vm107, %v2268, 0
    %v2291 = vsel %vm107, %v2269, 0
    %v2294 = vsel %vm107, %v2270, 0
    %v2297 = vsel %vm107, %v2271, 0
    %v2300 = vsel %vm107, %v2272, 0
    %v2303 = vsel %vm107, %v2273, 0
    %v2306 = vsel %vm107, %v2274, 0
    %2308 = vmatprep.subr.bf16.mxu0 0
    %2309 = vmatpush1.bf16.msra.mxu0 %v2282
    %2310 = vmatprep.subr.bf16.mxu0 0
    %2311 = vmatpush1.bf16.msra.mxu0 0
    %2312 = vmatprep.subr.bf16.mxu0 0
    %2313 = vmatpush1.bf16.msra.mxu0 0
    %2314 = vmatprep.subr.bf16.mxu0 0
    %2315 = vmatpush1.bf16.msra.mxu0 0
    %2316 = vmatprep.subr.bf16.mxu0 0
    %2317 = vmatpush1.bf16.msra.mxu0 0
    %2318 = vmatprep.subr.bf16.mxu0 0
    %2319 = vmatpush1.bf16.msra.mxu0 0
    %2320 = vmatprep.subr.bf16.mxu0 0
    %2321 = vmatpush1.bf16.msra.mxu0 0
    %2322 = vmatprep.subr.bf16.mxu0 0
    %2323 = vmatpush1.bf16.msra.mxu0 0
    %2324 = vmatprep.subr.bf16.mxu0 0
    %2325 = vmatpush1.bf16.msra.mxu0 0
    %2326 = vmatprep.subr.bf16.mxu0 0
    %2327 = vmatpush1.bf16.msra.mxu0 0
    %2328 = vmatprep.subr.bf16.mxu0 0
    %2329 = vmatpush1.bf16.msra.mxu0 0
    %2330 = vmatprep.subr.bf16.mxu0 0
    %2331 = vmatpush1.bf16.msra.mxu0 0
    %2332 = vmatprep.subr.bf16.mxu0 0
    %2333 = vmatpush1.bf16.msra.mxu0 0
    %2334 = vmatprep.subr.bf16.mxu0 0
    %2335 = vmatpush1.bf16.msra.mxu0 0
    %2336 = vmatprep.subr.bf16.mxu0 0
    %2337 = vmatpush1.bf16.msra.mxu0 0
    %2338 = vmatprep.subr.bf16.mxu0 0
    %2339 = vmatpush1.bf16.msra.mxu0 0
    %2340 = vmatprep.mubr.bf16.mxu0 0
    %2341 = vmatmul.mubr.bf16.gmra.mrb[0].mxu0 %v2285
    %v2342 = vpop.f32.mrb[0].mxu0
    %v2343 = vadd.f32 0.0, %v2342
    %v2344 = vpop.f32.mrb[0].mxu0
    %v2345 = vpop.f32.mrb[0].mxu0
    %v2346 = vadd.f32 0.0, %v2345
    %v2347 = vpop.f32.mrb[0].mxu0
    %2348 = vmatprep.mubr.bf16.mxu0 0
    %2349 = vmatmul.mubr.bf16.gmra.mrb[0].mxu0 %v2288
    %v2350 = vpop.f32.mrb[0].mxu0
    %v2351 = vadd.f32 0.0, %v2350
    %v2352 = vpop.f32.mrb[0].mxu0
    %v2353 = vpop.f32.mrb[0].mxu0
    %v2354 = vadd.f32 0.0, %v2353
    %v2355 = vpop.f32.mrb[0].mxu0
    %2356 = vmatprep.mubr.bf16.mxu0 0
    %2357 = vmatmul.mubr.bf16.gmra.mrb[0].mxu0 %v2291
    %v2358 = vpop.f32.mrb[0].mxu0
    %v2359 = vadd.f32 0.0, %v2358
    %v2360 = vpop.f32.mrb[0].mxu0
    %v2361 = vpop.f32.mrb[0].mxu0
    %v2362 = vadd.f32 0.0, %v2361
    %v2363 = vpop.f32.mrb[0].mxu0
    %2364 = vmatprep.mubr.bf16.mxu0 0
    %2365 = vmatmul.mubr.bf16.gmra.mrb[0].mxu0 %v2294
    %v2366 = vpop.f32.mrb[0].mxu0
    %v2367 = vadd.f32 0.0, %v2366
    %v2368 = vpop.f32.mrb[0].mxu0
    %v2369 = vpop.f32.mrb[0].mxu0
    %v2370 = vadd.f32 0.0, %v2369
    %v2371 = vpop.f32.mrb[0].mxu0
    %2372 = vmatprep.mubr.bf16.mxu0 0
    %2373 = vmatmul.mubr.bf16.gmra.mrb[0].mxu0 %v2297
    %v2374 = vpop.f32.mrb[0].mxu0
    %v2375 = vadd.f32 0.0, %v2374
    %v2376 = vpop.f32.mrb[0].mxu0
    %v2377 = vpop.f32.mrb[0].mxu0
    %v2378 = vadd.f32 0.0, %v2377
    %v2379 = vpop.f32.mrb[0].mxu0
    %2380 = vmatprep.mubr.bf16.mxu0 0
    %2381 = vmatmul.mubr.bf16.gmra.mrb[0].mxu0 %v2300
    %v2382 = vpop.f32.mrb[0].mxu0
    %v2383 = vadd.f32 0.0, %v2382
    %v2384 = vpop.f32.mrb[0].mxu0
    %v2385 = vpop.f32.mrb[0].mxu0
    %v2386 = vadd.f32 0.0, %v2385
    %v2387 = vpop.f32.mrb[0].mxu0
    %2388 = vmatprep.mubr.bf16.mxu0 0
    %2389 = vmatmul.mubr.bf16.gmra.mrb[0].mxu0 %v2303
    %v2390 = vpop.f32.mrb[0].mxu0
    %v2391 = vadd.f32 0.0, %v2390
    %v2392 = vpop.f32.mrb[0].mxu0
    %v2393 = vpop.f32.mrb[0].mxu0
    %v2394 = vadd.f32 0.0, %v2393
    %v2395 = vpop.f32.mrb[0].mxu0
    %2396 = vmatprep.mubr.bf16.mxu0 0
    %2397 = vmatmul.mubr.bf16.gmra.mrb[0].mxu0 %v2306
    %v2398 = vpop.f32.mrb[0].mxu0
    %v2399 = vadd.f32 0.0, %v2398
    %v2400 = vpop.f32.mrb[0].mxu0
    %v2401 = vpop.f32.mrb[0].mxu0
    %v2402 = vadd.f32 0.0, %v2401
    %v2403 = vpop.f32.mrb[0].mxu0
    %2404 = vdwg.mxu0
    %v2405 = vadd.f32 %v2235, %v2343
    %v2406 = vadd.f32 %v2236, %v2346
    %v2407 = vadd.f32 %v2237, %v2351
    %v2408 = vadd.f32 %v2238, %v2354
    %v2409 = vadd.f32 %v2239, %v2359
    %v2410 = vadd.f32 %v2240, %v2362
    %v2411 = vadd.f32 %v2241, %v2367
    %v2412 = vadd.f32 %v2242, %v2370
    %v2413 = vadd.f32 %v2243, %v2375
    %v2414 = vadd.f32 %v2244, %v2378
    %v2415 = vadd.f32 %v2245, %v2383
    %v2416 = vadd.f32 %v2246, %v2386
    %v2417 = vadd.f32 %v2247, %v2391
    %v2418 = vadd.f32 %v2248, %v2394
    %v2419 = vadd.f32 %v2249, %v2399
    %v2420 = vadd.f32 %v2250, %v2402
    %v2421 = vld [vmem:[#allocation2 + $0xa] sm:$0xff]
    %v2422 = vld [vmem:[#allocation2 + $0x12] sm:$0xff]
    %v2423 = vld [vmem:[#allocation2 + $0x1a] sm:$0xff]
    %v2424 = vld [vmem:[#allocation2 + $0x22] sm:$0xff]
    %v2425 = vld [vmem:[#allocation2 + $0x2a] sm:$0xff]
    %v2426 = vld [vmem:[#allocation2 + $0x32] sm:$0xff]
    %v2427 = vld [vmem:[#allocation2 + $0x3a] sm:$0xff]
    %v2428 = vld [vmem:[#allocation2 + $0x42] sm:$0xff]
    %v2429 = vld [vmem:[#allocation2 + $0x4a] sm:$0xff]
    %v2430 = vld [vmem:[#allocation2 + $0x52] sm:$0xff]
    %v2431 = vld [vmem:[#allocation2 + $0x5a] sm:$0xff]
    %v2432 = vld [vmem:[#allocation2 + $0x62] sm:$0xff]
    %v2433 = vld [vmem:[#allocation2 + $0x6a] sm:$0xff]
    %v2434 = vld [vmem:[#allocation2 + $0x72] sm:$0xff]
    %v2435 = vld [vmem:[#allocation2 + $0x7a] sm:$0xff]
    %v2436 = vld [vmem:[#allocation2 + $0x82] sm:$0xff]
    %v2437 = vpack.c.bf16 %v2422, %v2421
    %v2438 = vpack.c.bf16 %v2424, %v2423
    %v2439 = vpack.c.bf16 %v2426, %v2425
    %v2440 = vpack.c.bf16 %v2428, %v2427
    %v2441 = vpack.c.bf16 %v2430, %v2429
    %v2442 = vpack.c.bf16 %v2432, %v2431
    %v2443 = vpack.c.bf16 %v2434, %v2433
    %v2444 = vpack.c.bf16 %v2436, %v2435
    %s2445 = scalar_lea.vmem %s3, 40
    %v2446 = vld [vmem:[%s2445] sm:$0xf]
    %v2447 = vld [vmem:[%s2445 + $0x4] sm:$0xf]
    %v2450 = vunpack.c.l.b16 %v2446
    %v2451 = vunpack.c.l.b16 %v2447
    %v2452 = vpack.c.b16 %v2451, %v2450
    %v2455 = vsel %vm107, %v2437, 0
    %v2458 = vsel %vm107, %v2438, 0
    %v2461 = vsel %vm107, %v2439, 0
    %v2464 = vsel %vm107, %v2440, 0
    %v2467 = vsel %vm107, %v2441, 0
    %v2470 = vsel %vm107, %v2442, 0
    %v2473 = vsel %vm107, %v2443, 0
    %v2476 = vsel %vm107, %v2444, 0
    %2478 = vmatprep.subr.bf16.mxu0 0
    %2479 = vmatpush1.bf16.msra.mxu0 %v2452
    %2480 = vmatprep.subr.bf16.mxu0 0
    %2481 = vmatpush1.bf16.msra.mxu0 0
    %2482 = vmatprep.subr.bf16.mxu0 0
    %2483 = vmatpush1.bf16.msra.mxu0 0
    %2484 = vmatprep.subr.bf16.mxu0 0
    %2485 = vmatpush1.bf16.msra.mxu0 0
    %2486 = vmatprep.subr.bf16.mxu0 0
    %2487 = vmatpush1.bf16.msra.mxu0 0
    %2488 = vmatprep.subr.bf16.mxu0 0
    %2489 = vmatpush1.bf16.msra.mxu0 0
    %2490 = vmatprep.subr.bf16.mxu0 0
    %2491 = vmatpush1.bf16.msra.mxu0 0
    %2492 = vmatprep.subr.bf16.mxu0 0
    %2493 = vmatpush1.bf16.msra.mxu0 0
    %2494 = vmatprep.subr.bf16.mxu0 0
    %2495 = vmatpush1.bf16.msra.mxu0 0
    %2496 = vmatprep.subr.bf16.mxu0 0
    %2497 = vmatpush1.bf16.msra.mxu0 0
    %2498 = vmatprep.subr.bf16.mxu0 0
    %2499 = vmatpush1.bf16.msra.mxu0 0
    %2500 = vmatprep.subr.bf16.mxu0 0
    %2501 = vmatpush1.bf16.msra.mxu0 0
    %2502 = vmatprep.subr.bf16.mxu0 0
    %2503 = vmatpush1.bf16.msra.mxu0 0
    %2504 = vmatprep.subr.bf16.mxu0 0
    %2505 = vmatpush1.bf16.msra.mxu0 0
    %2506 = vmatprep.subr.bf16.mxu0 0
    %2507 = vmatpush1.bf16.msra.mxu0 0
    %2508 = vmatprep.subr.bf16.mxu0 0
    %2509 = vmatpush1.bf16.msra.mxu0 0
    %2510 = vmatprep.mubr.bf16.mxu0 0
    %2511 = vmatmul.mubr.bf16.gmra.mrb[0].mxu0 %v2455
    %v2512 = vpop.f32.mrb[0].mxu0
    %v2513 = vadd.f32 0.0, %v2512
    %v2514 = vpop.f32.mrb[0].mxu0
    %v2515 = vpop.f32.mrb[0].mxu0
    %v2516 = vadd.f32 0.0, %v2515
    %v2517 = vpop.f32.mrb[0].mxu0
    %2518 = vmatprep.mubr.bf16.mxu0 0
    %2519 = vmatmul.mubr.bf16.gmra.mrb[0].mxu0 %v2458
    %v2520 = vpop.f32.mrb[0].mxu0
    %v2521 = vadd.f32 0.0, %v2520
    %v2522 = vpop.f32.mrb[0].mxu0
    %v2523 = vpop.f32.mrb[0].mxu0
    %v2524 = vadd.f32 0.0, %v2523
    %v2525 = vpop.f32.mrb[0].mxu0
    %2526 = vmatprep.mubr.bf16.mxu0 0
    %2527 = vmatmul.mubr.bf16.gmra.mrb[0].mxu0 %v2461
    %v2528 = vpop.f32.mrb[0].mxu0
    %v2529 = vadd.f32 0.0, %v2528
    %v2530 = vpop.f32.mrb[0].mxu0
    %v2531 = vpop.f32.mrb[0].mxu0
    %v2532 = vadd.f32 0.0, %v2531
    %v2533 = vpop.f32.mrb[0].mxu0
    %2534 = vmatprep.mubr.bf16.mxu0 0
    %2535 = vmatmul.mubr.bf16.gmra.mrb[0].mxu0 %v2464
    %v2536 = vpop.f32.mrb[0].mxu0
    %v2537 = vadd.f32 0.0, %v2536
    %v2538 = vpop.f32.mrb[0].mxu0
    %v2539 = vpop.f32.mrb[0].mxu0
    %v2540 = vadd.f32 0.0, %v2539
    %v2541 = vpop.f32.mrb[0].mxu0
    %2542 = vmatprep.mubr.bf16.mxu0 0
    %2543 = vmatmul.mubr.bf16.gmra.mrb[0].mxu0 %v2467
    %v2544 = vpop.f32.mrb[0].mxu0
    %v2545 = vadd.f32 0.0, %v2544
    %v2546 = vpop.f32.mrb[0].mxu0
    %v2547 = vpop.f32.mrb[0].mxu0
    %v2548 = vadd.f32 0.0, %v2547
    %v2549 = vpop.f32.mrb[0].mxu0
    %2550 = vmatprep.mubr.bf16.mxu0 0
    %2551 = vmatmul.mubr.bf16.gmra.mrb[0].mxu0 %v2470
    %v2552 = vpop.f32.mrb[0].mxu0
    %v2553 = vadd.f32 0.0, %v2552
    %v2554 = vpop.f32.mrb[0].mxu0
    %v2555 = vpop.f32.mrb[0].mxu0
    %v2556 = vadd.f32 0.0, %v2555
    %v2557 = vpop.f32.mrb[0].mxu0
    %2558 = vmatprep.mubr.bf16.mxu0 0
    %2559 = vmatmul.mubr.bf16.gmra.mrb[0].mxu0 %v2473
    %v2560 = vpop.f32.mrb[0].mxu0
    %v2561 = vadd.f32 0.0, %v2560
    %v2562 = vpop.f32.mrb[0].mxu0
    %v2563 = vpop.f32.mrb[0].mxu0
    %v2564 = vadd.f32 0.0, %v2563
    %v2565 = vpop.f32.mrb[0].mxu0
    %2566 = vmatprep.mubr.bf16.mxu0 0
    %2567 = vmatmul.mubr.bf16.gmra.mrb[0].mxu0 %v2476
    %v2568 = vpop.f32.mrb[0].mxu0
    %v2569 = vadd.f32 0.0, %v2568
    %v2570 = vpop.f32.mrb[0].mxu0
    %v2571 = vpop.f32.mrb[0].mxu0
    %v2572 = vadd.f32 0.0, %v2571
    %v2573 = vpop.f32.mrb[0].mxu0
    %2574 = vdwg.mxu0
    %v2575 = vadd.f32 %v2405, %v2513
    %v2576 = vadd.f32 %v2406, %v2516
    %v2577 = vadd.f32 %v2407, %v2521
    %v2578 = vadd.f32 %v2408, %v2524
    %v2579 = vadd.f32 %v2409, %v2529
    %v2580 = vadd.f32 %v2410, %v2532
    %v2581 = vadd.f32 %v2411, %v2537
    %v2582 = vadd.f32 %v2412, %v2540
    %v2583 = vadd.f32 %v2413, %v2545
    %v2584 = vadd.f32 %v2414, %v2548
    %v2585 = vadd.f32 %v2415, %v2553
    %v2586 = vadd.f32 %v2416, %v2556
    %v2587 = vadd.f32 %v2417, %v2561
    %v2588 = vadd.f32 %v2418, %v2564
    %v2589 = vadd.f32 %v2419, %v2569
    %v2590 = vadd.f32 %v2420, %v2572
    %v2591 = vld [vmem:[#allocation2 + $0x10] sm:$0xff]
    %v2592 = vld [vmem:[#allocation2 + $0x18] sm:$0xff]
    %v2593 = vld [vmem:[#allocation2 + $0x20] sm:$0xff]
    %v2594 = vld [vmem:[#allocation2 + $0x28] sm:$0xff]
    %v2595 = vld [vmem:[#allocation2 + $0x30] sm:$0xff]
    %v2596 = vld [vmem:[#allocation2 + $0x38] sm:$0xff]
    %v2597 = vld [vmem:[#allocation2 + $0x40] sm:$0xff]
    %v2598 = vld [vmem:[#allocation2 + $0x48] sm:$0xff]
    %v2599 = vld [vmem:[#allocation2 + $0x50] sm:$0xff]
    %v2600 = vld [vmem:[#allocation2 + $0x58] sm:$0xff]
    %v2601 = vld [vmem:[#allocation2 + $0x60] sm:$0xff]
    %v2602 = vld [vmem:[#allocation2 + $0x68] sm:$0xff]
    %v2603 = vld [vmem:[#allocation2 + $0x70] sm:$0xff]
    %v2604 = vld [vmem:[#allocation2 + $0x78] sm:$0xff]
    %v2605 = vld [vmem:[#allocation2 + $0x80] sm:$0xff]
    %v2606 = vld [vmem:[#allocation2 + $0x88] sm:$0xff]
    %v2607 = vpack.c.bf16 %v2592, %v2591
    %v2608 = vpack.c.bf16 %v2594, %v2593
    %v2609 = vpack.c.bf16 %v2596, %v2595
    %v2610 = vpack.c.bf16 %v2598, %v2597
    %v2611 = vpack.c.bf16 %v2600, %v2599
    %v2612 = vpack.c.bf16 %v2602, %v2601
    %v2613 = vpack.c.bf16 %v2604, %v2603
    %v2614 = vpack.c.bf16 %v2606, %v2605
    %s2615 = scalar_lea.vmem %s3, 48
    %v2616 = vld [vmem:[%s2615] sm:$0xf]
    %v2617 = vld [vmem:[%s2615 + $0x4] sm:$0xf]
    %v2620 = vunpack.c.l.b16 %v2616
    %v2621 = vunpack.c.l.b16 %v2617
    %v2622 = vpack.c.b16 %v2621, %v2620
    %v2625 = vsel %vm107, %v2607, 0
    %v2628 = vsel %vm107, %v2608, 0
    %v2631 = vsel %vm107, %v2609, 0
    %v2634 = vsel %vm107, %v2610, 0
    %v2637 = vsel %vm107, %v2611, 0
    %v2640 = vsel %vm107, %v2612, 0
    %v2643 = vsel %vm107, %v2613, 0
    %v2646 = vsel %vm107, %v2614, 0
    %2648 = vmatprep.subr.bf16.mxu0 0
    %2649 = vmatpush1.bf16.msra.mxu0 %v2622
    %2650 = vmatprep.subr.bf16.mxu0 0
    %2651 = vmatpush1.bf16.msra.mxu0 0
    %2652 = vmatprep.subr.bf16.mxu0 0
    %2653 = vmatpush1.bf16.msra.mxu0 0
    %2654 = vmatprep.subr.bf16.mxu0 0
    %2655 = vmatpush1.bf16.msra.mxu0 0
    %2656 = vmatprep.subr.bf16.mxu0 0
    %2657 = vmatpush1.bf16.msra.mxu0 0
    %2658 = vmatprep.subr.bf16.mxu0 0
    %2659 = vmatpush1.bf16.msra.mxu0 0
    %2660 = vmatprep.subr.bf16.mxu0 0
    %2661 = vmatpush1.bf16.msra.mxu0 0
    %2662 = vmatprep.subr.bf16.mxu0 0
    %2663 = vmatpush1.bf16.msra.mxu0 0
    %2664 = vmatprep.subr.bf16.mxu0 0
    %2665 = vmatpush1.bf16.msra.mxu0 0
    %2666 = vmatprep.subr.bf16.mxu0 0
    %2667 = vmatpush1.bf16.msra.mxu0 0
    %2668 = vmatprep.subr.bf16.mxu0 0
    %2669 = vmatpush1.bf16.msra.mxu0 0
    %2670 = vmatprep.subr.bf16.mxu0 0
    %2671 = vmatpush1.bf16.msra.mxu0 0
    %2672 = vmatprep.subr.bf16.mxu0 0
    %2673 = vmatpush1.bf16.msra.mxu0 0
    %2674 = vmatprep.subr.bf16.mxu0 0
    %2675 = vmatpush1.bf16.msra.mxu0 0
    %2676 = vmatprep.subr.bf16.mxu0 0
    %2677 = vmatpush1.bf16.msra.mxu0 0
    %2678 = vmatprep.subr.bf16.mxu0 0
    %2679 = vmatpush1.bf16.msra.mxu0 0
    %2680 = vmatprep.mubr.bf16.mxu0 0
    %2681 = vmatmul.mubr.bf16.gmra.mrb[0].mxu0 %v2625
    %v2682 = vpop.f32.mrb[0].mxu0
    %v2683 = vadd.f32 0.0, %v2682
    %v2684 = vpop.f32.mrb[0].mxu0
    %v2685 = vpop.f32.mrb[0].mxu0
    %v2686 = vadd.f32 0.0, %v2685
    %v2687 = vpop.f32.mrb[0].mxu0
    %2688 = vmatprep.mubr.bf16.mxu0 0
    %2689 = vmatmul.mubr.bf16.gmra.mrb[0].mxu0 %v2628
    %v2690 = vpop.f32.mrb[0].mxu0
    %v2691 = vadd.f32 0.0, %v2690
    %v2692 = vpop.f32.mrb[0].mxu0
    %v2693 = vpop.f32.mrb[0].mxu0
    %v2694 = vadd.f32 0.0, %v2693
    %v2695 = vpop.f32.mrb[0].mxu0
    %2696 = vmatprep.mubr.bf16.mxu0 0
    %2697 = vmatmul.mubr.bf16.gmra.mrb[0].mxu0 %v2631
    %v2698 = vpop.f32.mrb[0].mxu0
    %v2699 = vadd.f32 0.0, %v2698
    %v2700 = vpop.f32.mrb[0].mxu0
    %v2701 = vpop.f32.mrb[0].mxu0
    %v2702 = vadd.f32 0.0, %v2701
    %v2703 = vpop.f32.mrb[0].mxu0
    %2704 = vmatprep.mubr.bf16.mxu0 0
    %2705 = vmatmul.mubr.bf16.gmra.mrb[0].mxu0 %v2634
    %v2706 = vpop.f32.mrb[0].mxu0
    %v2707 = vadd.f32 0.0, %v2706
    %v2708 = vpop.f32.mrb[0].mxu0
    %v2709 = vpop.f32.mrb[0].mxu0
    %v2710 = vadd.f32 0.0, %v2709
    %v2711 = vpop.f32.mrb[0].mxu0
    %2712 = vmatprep.mubr.bf16.mxu0 0
    %2713 = vmatmul.mubr.bf16.gmra.mrb[0].mxu0 %v2637
    %v2714 = vpop.f32.mrb[0].mxu0
    %v2715 = vadd.f32 0.0, %v2714
    %v2716 = vpop.f32.mrb[0].mxu0
    %v2717 = vpop.f32.mrb[0].mxu0
    %v2718 = vadd.f32 0.0, %v2717
    %v2719 = vpop.f32.mrb[0].mxu0
    %2720 = vmatprep.mubr.bf16.mxu0 0
    %2721 = vmatmul.mubr.bf16.gmra.mrb[0].mxu0 %v2640
    %v2722 = vpop.f32.mrb[0].mxu0
    %v2723 = vadd.f32 0.0, %v2722
    %v2724 = vpop.f32.mrb[0].mxu0
    %v2725 = vpop.f32.mrb[0].mxu0
    %v2726 = vadd.f32 0.0, %v2725
    %v2727 = vpop.f32.mrb[0].mxu0
    %2728 = vmatprep.mubr.bf16.mxu0 0
    %2729 = vmatmul.mubr.bf16.gmra.mrb[0].mxu0 %v2643
    %v2730 = vpop.f32.mrb[0].mxu0
    %v2731 = vadd.f32 0.0, %v2730
    %v2732 = vpop.f32.mrb[0].mxu0
    %v2733 = vpop.f32.mrb[0].mxu0
    %v2734 = vadd.f32 0.0, %v2733
    %v2735 = vpop.f32.mrb[0].mxu0
    %2736 = vmatprep.mubr.bf16.mxu0 0
    %2737 = vmatmul.mubr.bf16.gmra.mrb[0].mxu0 %v2646
    %v2738 = vpop.f32.mrb[0].mxu0
    %v2739 = vadd.f32 0.0, %v2738
    %v2740 = vpop.f32.mrb[0].mxu0
    %v2741 = vpop.f32.mrb[0].mxu0
    %v2742 = vadd.f32 0.0, %v2741
    %v2743 = vpop.f32.mrb[0].mxu0
    %2744 = vdwg.mxu0
    %v2745 = vadd.f32 %v2575, %v2683
    %v2746 = vadd.f32 %v2576, %v2686
    %v2747 = vadd.f32 %v2577, %v2691
    %v2748 = vadd.f32 %v2578, %v2694
    %v2749 = vadd.f32 %v2579, %v2699
    %v2750 = vadd.f32 %v2580, %v2702
    %v2751 = vadd.f32 %v2581, %v2707
    %v2752 = vadd.f32 %v2582, %v2710
    %v2753 = vadd.f32 %v2583, %v2715
    %v2754 = vadd.f32 %v2584, %v2718
    %v2755 = vadd.f32 %v2585, %v2723
    %v2756 = vadd.f32 %v2586, %v2726
    %v2757 = vadd.f32 %v2587, %v2731
    %v2758 = vadd.f32 %v2588, %v2734
    %v2759 = vadd.f32 %v2589, %v2739
    %v2760 = vadd.f32 %v2590, %v2742
    %v2761 = vld [vmem:[#allocation2 + $0x11] sm:$0xff]
    %v2762 = vld [vmem:[#allocation2 + $0x19] sm:$0xff]
    %v2763 = vld [vmem:[#allocation2 + $0x21] sm:$0xff]
    %v2764 = vld [vmem:[#allocation2 + $0x29] sm:$0xff]
    %v2765 = vld [vmem:[#allocation2 + $0x31] sm:$0xff]
    %v2766 = vld [vmem:[#allocation2 + $0x39] sm:$0xff]
    %v2767 = vld [vmem:[#allocation2 + $0x41] sm:$0xff]
    %v2768 = vld [vmem:[#allocation2 + $0x49] sm:$0xff]
    %v2769 = vld [vmem:[#allocation2 + $0x51] sm:$0xff]
    %v2770 = vld [vmem:[#allocation2 + $0x59] sm:$0xff]
    %v2771 = vld [vmem:[#allocation2 + $0x61] sm:$0xff]
    %v2772 = vld [vmem:[#allocation2 + $0x69] sm:$0xff]
    %v2773 = vld [vmem:[#allocation2 + $0x71] sm:$0xff]
    %v2774 = vld [vmem:[#allocation2 + $0x79] sm:$0xff]
    %v2775 = vld [vmem:[#allocation2 + $0x81] sm:$0xff]
    %v2776 = vld [vmem:[#allocation2 + $0x89] sm:$0xff]
    %v2777 = vpack.c.bf16 %v2762, %v2761
    %v2778 = vpack.c.bf16 %v2764, %v2763
    %v2779 = vpack.c.bf16 %v2766, %v2765
    %v2780 = vpack.c.bf16 %v2768, %v2767
    %v2781 = vpack.c.bf16 %v2770, %v2769
    %v2782 = vpack.c.bf16 %v2772, %v2771
    %v2783 = vpack.c.bf16 %v2774, %v2773
    %v2784 = vpack.c.bf16 %v2776, %v2775
    %s2785 = scalar_lea.vmem %s3, 56
    %v2786 = vld [vmem:[%s2785] sm:$0xf]
    %v2787 = vld [vmem:[%s2785 + $0x4] sm:$0xf]
    %v2790 = vunpack.c.l.b16 %v2786
    %v2791 = vunpack.c.l.b16 %v2787
    %v2792 = vpack.c.b16 %v2791, %v2790
    %v2795 = vsel %vm107, %v2777, 0
    %v2798 = vsel %vm107, %v2778, 0
    %v2801 = vsel %vm107, %v2779, 0
    %v2804 = vsel %vm107, %v2780, 0
    %v2807 = vsel %vm107, %v2781, 0
    %v2810 = vsel %vm107, %v2782, 0
    %v2813 = vsel %vm107, %v2783, 0
    %v2816 = vsel %vm107, %v2784, 0
    %2818 = vmatprep.subr.bf16.mxu0 0
    %2819 = vmatpush1.bf16.msra.mxu0 %v2792
    %2820 = vmatprep.subr.bf16.mxu0 0
    %2821 = vmatpush1.bf16.msra.mxu0 0
    %2822 = vmatprep.subr.bf16.mxu0 0
    %2823 = vmatpush1.bf16.msra.mxu0 0
    %2824 = vmatprep.subr.bf16.mxu0 0
    %2825 = vmatpush1.bf16.msra.mxu0 0
    %2826 = vmatprep.subr.bf16.mxu0 0
    %2827 = vmatpush1.bf16.msra.mxu0 0
    %2828 = vmatprep.subr.bf16.mxu0 0
    %2829 = vmatpush1.bf16.msra.mxu0 0
    %2830 = vmatprep.subr.bf16.mxu0 0
    %2831 = vmatpush1.bf16.msra.mxu0 0
    %2832 = vmatprep.subr.bf16.mxu0 0
    %2833 = vmatpush1.bf16.msra.mxu0 0
    %2834 = vmatprep.subr.bf16.mxu0 0
    %2835 = vmatpush1.bf16.msra.mxu0 0
    %2836 = vmatprep.subr.bf16.mxu0 0
    %2837 = vmatpush1.bf16.msra.mxu0 0
    %2838 = vmatprep.subr.bf16.mxu0 0
    %2839 = vmatpush1.bf16.msra.mxu0 0
    %2840 = vmatprep.subr.bf16.mxu0 0
    %2841 = vmatpush1.bf16.msra.mxu0 0
    %2842 = vmatprep.subr.bf16.mxu0 0
    %2843 = vmatpush1.bf16.msra.mxu0 0
    %2844 = vmatprep.subr.bf16.mxu0 0
    %2845 = vmatpush1.bf16.msra.mxu0 0
    %2846 = vmatprep.subr.bf16.mxu0 0
    %2847 = vmatpush1.bf16.msra.mxu0 0
    %2848 = vmatprep.subr.bf16.mxu0 0
    %2849 = vmatpush1.bf16.msra.mxu0 0
    %2850 = vmatprep.mubr.bf16.mxu0 0
    %2851 = vmatmul.mubr.bf16.gmra.mrb[0].mxu0 %v2795
    %v2852 = vpop.f32.mrb[0].mxu0
    %v2853 = vadd.f32 0.0, %v2852
    %v2854 = vpop.f32.mrb[0].mxu0
    %v2855 = vpop.f32.mrb[0].mxu0
    %v2856 = vadd.f32 0.0, %v2855
    %v2857 = vpop.f32.mrb[0].mxu0
    %2858 = vmatprep.mubr.bf16.mxu0 0
    %2859 = vmatmul.mubr.bf16.gmra.mrb[0].mxu0 %v2798
    %v2860 = vpop.f32.mrb[0].mxu0
    %v2861 = vadd.f32 0.0, %v2860
    %v2862 = vpop.f32.mrb[0].mxu0
    %v2863 = vpop.f32.mrb[0].mxu0
    %v2864 = vadd.f32 0.0, %v2863
    %v2865 = vpop.f32.mrb[0].mxu0
    %2866 = vmatprep.mubr.bf16.mxu0 0
    %2867 = vmatmul.mubr.bf16.gmra.mrb[0].mxu0 %v2801
    %v2868 = vpop.f32.mrb[0].mxu0
    %v2869 = vadd.f32 0.0, %v2868
    %v2870 = vpop.f32.mrb[0].mxu0
    %v2871 = vpop.f32.mrb[0].mxu0
    %v2872 = vadd.f32 0.0, %v2871
    %v2873 = vpop.f32.mrb[0].mxu0
    %2874 = vmatprep.mubr.bf16.mxu0 0
    %2875 = vmatmul.mubr.bf16.gmra.mrb[0].mxu0 %v2804
    %v2876 = vpop.f32.mrb[0].mxu0
    %v2877 = vadd.f32 0.0, %v2876
    %v2878 = vpop.f32.mrb[0].mxu0
    %v2879 = vpop.f32.mrb[0].mxu0
    %v2880 = vadd.f32 0.0, %v2879
    %v2881 = vpop.f32.mrb[0].mxu0
    %2882 = vmatprep.mubr.bf16.mxu0 0
    %2883 = vmatmul.mubr.bf16.gmra.mrb[0].mxu0 %v2807
    %v2884 = vpop.f32.mrb[0].mxu0
    %v2885 = vadd.f32 0.0, %v2884
    %v2886 = vpop.f32.mrb[0].mxu0
    %v2887 = vpop.f32.mrb[0].mxu0
    %v2888 = vadd.f32 0.0, %v2887
    %v2889 = vpop.f32.mrb[0].mxu0
    %2890 = vmatprep.mubr.bf16.mxu0 0
    %2891 = vmatmul.mubr.bf16.gmra.mrb[0].mxu0 %v2810
    %v2892 = vpop.f32.mrb[0].mxu0
    %v2893 = vadd.f32 0.0, %v2892
    %v2894 = vpop.f32.mrb[0].mxu0
    %v2895 = vpop.f32.mrb[0].mxu0
    %v2896 = vadd.f32 0.0, %v2895
    %v2897 = vpop.f32.mrb[0].mxu0
    %2898 = vmatprep.mubr.bf16.mxu0 0
    %2899 = vmatmul.mubr.bf16.gmra.mrb[0].mxu0 %v2813
    %v2900 = vpop.f32.mrb[0].mxu0
    %v2901 = vadd.f32 0.0, %v2900
    %v2902 = vpop.f32.mrb[0].mxu0
    %v2903 = vpop.f32.mrb[0].mxu0
    %v2904 = vadd.f32 0.0, %v2903
    %v2905 = vpop.f32.mrb[0].mxu0
    %2906 = vmatprep.mubr.bf16.mxu0 0
    %2907 = vmatmul.mubr.bf16.gmra.mrb[0].mxu0 %v2816
    %v2908 = vpop.f32.mrb[0].mxu0
    %v2909 = vadd.f32 0.0, %v2908
    %v2910 = vpop.f32.mrb[0].mxu0
    %v2911 = vpop.f32.mrb[0].mxu0
    %v2912 = vadd.f32 0.0, %v2911
    %v2913 = vpop.f32.mrb[0].mxu0
    %2914 = vdwg.mxu0
    %v2915 = vadd.f32 %v2745, %v2853
    %v2916 = vadd.f32 %v2746, %v2856
    %v2917 = vadd.f32 %v2747, %v2861
    %v2918 = vadd.f32 %v2748, %v2864
    %v2919 = vadd.f32 %v2749, %v2869
    %v2920 = vadd.f32 %v2750, %v2872
    %v2921 = vadd.f32 %v2751, %v2877
    %v2922 = vadd.f32 %v2752, %v2880
    %v2923 = vadd.f32 %v2753, %v2885
    %v2924 = vadd.f32 %v2754, %v2888
    %v2925 = vadd.f32 %v2755, %v2893
    %v2926 = vadd.f32 %v2756, %v2896
    %v2927 = vadd.f32 %v2757, %v2901
    %v2928 = vadd.f32 %v2758, %v2904
    %v2929 = vadd.f32 %v2759, %v2909
    %v2930 = vadd.f32 %v2760, %v2912
    %v2931 = vld [vmem:[#allocation2 + $0x12] sm:$0xff]
    %v2932 = vld [vmem:[#allocation2 + $0x1a] sm:$0xff]
    %v2933 = vld [vmem:[#allocation2 + $0x22] sm:$0xff]
    %v2934 = vld [vmem:[#allocation2 + $0x2a] sm:$0xff]
    %v2935 = vld [vmem:[#allocation2 + $0x32] sm:$0xff]
    %v2936 = vld [vmem:[#allocation2 + $0x3a] sm:$0xff]
    %v2937 = vld [vmem:[#allocation2 + $0x42] sm:$0xff]
    %v2938 = vld [vmem:[#allocation2 + $0x4a] sm:$0xff]
    %v2939 = vld [vmem:[#allocation2 + $0x52] sm:$0xff]
    %v2940 = vld [vmem:[#allocation2 + $0x5a] sm:$0xff]
    %v2941 = vld [vmem:[#allocation2 + $0x62] sm:$0xff]
    %v2942 = vld [vmem:[#allocation2 + $0x6a] sm:$0xff]
    %v2943 = vld [vmem:[#allocation2 + $0x72] sm:$0xff]
    %v2944 = vld [vmem:[#allocation2 + $0x7a] sm:$0xff]
    %v2945 = vld [vmem:[#allocation2 + $0x82] sm:$0xff]
    %v2946 = vld [vmem:[#allocation2 + $0x8a] sm:$0xff]
    %v2947 = vpack.c.bf16 %v2932, %v2931
    %v2948 = vpack.c.bf16 %v2934, %v2933
    %v2949 = vpack.c.bf16 %v2936, %v2935
    %v2950 = vpack.c.bf16 %v2938, %v2937
    %v2951 = vpack.c.bf16 %v2940, %v2939
    %v2952 = vpack.c.bf16 %v2942, %v2941
    %v2953 = vpack.c.bf16 %v2944, %v2943
    %v2954 = vpack.c.bf16 %v2946, %v2945
    %s2955 = scalar_lea.vmem %s3, 64
    %v2956 = vld [vmem:[%s2955] sm:$0xf]
    %v2957 = vld [vmem:[%s2955 + $0x4] sm:$0xf]
    %v2960 = vunpack.c.l.b16 %v2956
    %v2961 = vunpack.c.l.b16 %v2957
    %v2962 = vpack.c.b16 %v2961, %v2960
    %v2965 = vsel %vm107, %v2947, 0
    %v2968 = vsel %vm107, %v2948, 0
    %v2971 = vsel %vm107, %v2949, 0
    %v2974 = vsel %vm107, %v2950, 0
    %v2977 = vsel %vm107, %v2951, 0
    %v2980 = vsel %vm107, %v2952, 0
    %v2983 = vsel %vm107, %v2953, 0
    %v2986 = vsel %vm107, %v2954, 0
    %2988 = vmatprep.subr.bf16.mxu0 0
    %2989 = vmatpush1.bf16.msra.mxu0 %v2962
    %2990 = vmatprep.subr.bf16.mxu0 0
    %2991 = vmatpush1.bf16.msra.mxu0 0
    %2992 = vmatprep.subr.bf16.mxu0 0
    %2993 = vmatpush1.bf16.msra.mxu0 0
    %2994 = vmatprep.subr.bf16.mxu0 0
    %2995 = vmatpush1.bf16.msra.mxu0 0
    %2996 = vmatprep.subr.bf16.mxu0 0
    %2997 = vmatpush1.bf16.msra.mxu0 0
    %2998 = vmatprep.subr.bf16.mxu0 0
    %2999 = vmatpush1.bf16.msra.mxu0 0
    %3000 = vmatprep.subr.bf16.mxu0 0
    %3001 = vmatpush1.bf16.msra.mxu0 0
    %3002 = vmatprep.subr.bf16.mxu0 0
    %3003 = vmatpush1.bf16.msra.mxu0 0
    %3004 = vmatprep.subr.bf16.mxu0 0
    %3005 = vmatpush1.bf16.msra.mxu0 0
    %3006 = vmatprep.subr.bf16.mxu0 0
    %3007 = vmatpush1.bf16.msra.mxu0 0
    %3008 = vmatprep.subr.bf16.mxu0 0
    %3009 = vmatpush1.bf16.msra.mxu0 0
    %3010 = vmatprep.subr.bf16.mxu0 0
    %3011 = vmatpush1.bf16.msra.mxu0 0
    %3012 = vmatprep.subr.bf16.mxu0 0
    %3013 = vmatpush1.bf16.msra.mxu0 0
    %3014 = vmatprep.subr.bf16.mxu0 0
    %3015 = vmatpush1.bf16.msra.mxu0 0
    %3016 = vmatprep.subr.bf16.mxu0 0
    %3017 = vmatpush1.bf16.msra.mxu0 0
    %3018 = vmatprep.subr.bf16.mxu0 0
    %3019 = vmatpush1.bf16.msra.mxu0 0
    %3020 = vmatprep.mubr.bf16.mxu0 0
    %3021 = vmatmul.mubr.bf16.gmra.mrb[0].mxu0 %v2965
    %v3022 = vpop.f32.mrb[0].mxu0
    %v3023 = vadd.f32 0.0, %v3022
    %v3024 = vpop.f32.mrb[0].mxu0
    %v3025 = vpop.f32.mrb[0].mxu0
    %v3026 = vadd.f32 0.0, %v3025
    %v3027 = vpop.f32.mrb[0].mxu0
    %3028 = vmatprep.mubr.bf16.mxu0 0
    %3029 = vmatmul.mubr.bf16.gmra.mrb[0].mxu0 %v2968
    %v3030 = vpop.f32.mrb[0].mxu0
    %v3031 = vadd.f32 0.0, %v3030
    %v3032 = vpop.f32.mrb[0].mxu0
    %v3033 = vpop.f32.mrb[0].mxu0
    %v3034 = vadd.f32 0.0, %v3033
    %v3035 = vpop.f32.mrb[0].mxu0
    %3036 = vmatprep.mubr.bf16.mxu0 0
    %3037 = vmatmul.mubr.bf16.gmra.mrb[0].mxu0 %v2971
    %v3038 = vpop.f32.mrb[0].mxu0
    %v3039 = vadd.f32 0.0, %v3038
    %v3040 = vpop.f32.mrb[0].mxu0
    %v3041 = vpop.f32.mrb[0].mxu0
    %v3042 = vadd.f32 0.0, %v3041
    %v3043 = vpop.f32.mrb[0].mxu0
    %3044 = vmatprep.mubr.bf16.mxu0 0
    %3045 = vmatmul.mubr.bf16.gmra.mrb[0].mxu0 %v2974
    %v3046 = vpop.f32.mrb[0].mxu0
    %v3047 = vadd.f32 0.0, %v3046
    %v3048 = vpop.f32.mrb[0].mxu0
    %v3049 = vpop.f32.mrb[0].mxu0
    %v3050 = vadd.f32 0.0, %v3049
    %v3051 = vpop.f32.mrb[0].mxu0
    %3052 = vmatprep.mubr.bf16.mxu0 0
    %3053 = vmatmul.mubr.bf16.gmra.mrb[0].mxu0 %v2977
    %v3054 = vpop.f32.mrb[0].mxu0
    %v3055 = vadd.f32 0.0, %v3054
    %v3056 = vpop.f32.mrb[0].mxu0
    %v3057 = vpop.f32.mrb[0].mxu0
    %v3058 = vadd.f32 0.0, %v3057
    %v3059 = vpop.f32.mrb[0].mxu0
    %3060 = vmatprep.mubr.bf16.mxu0 0
    %3061 = vmatmul.mubr.bf16.gmra.mrb[0].mxu0 %v2980
    %v3062 = vpop.f32.mrb[0].mxu0
    %v3063 = vadd.f32 0.0, %v3062
    %v3064 = vpop.f32.mrb[0].mxu0
    %v3065 = vpop.f32.mrb[0].mxu0
    %v3066 = vadd.f32 0.0, %v3065
    %v3067 = vpop.f32.mrb[0].mxu0
    %3068 = vmatprep.mubr.bf16.mxu0 0
    %3069 = vmatmul.mubr.bf16.gmra.mrb[0].mxu0 %v2983
    %v3070 = vpop.f32.mrb[0].mxu0
    %v3071 = vadd.f32 0.0, %v3070
    %v3072 = vpop.f32.mrb[0].mxu0
    %v3073 = vpop.f32.mrb[0].mxu0
    %v3074 = vadd.f32 0.0, %v3073
    %v3075 = vpop.f32.mrb[0].mxu0
    %3076 = vmatprep.mubr.bf16.mxu0 0
    %3077 = vmatmul.mubr.bf16.gmra.mrb[0].mxu0 %v2986
    %v3078 = vpop.f32.mrb[0].mxu0
    %v3079 = vadd.f32 0.0, %v3078
    %v3080 = vpop.f32.mrb[0].mxu0
    %v3081 = vpop.f32.mrb[0].mxu0
    %v3082 = vadd.f32 0.0, %v3081
    %v3083 = vpop.f32.mrb[0].mxu0
    %3084 = vdwg.mxu0
    %v3085 = vadd.f32 %v2915, %v3023
    %v3086 = vadd.f32 %v2916, %v3026
    %v3087 = vadd.f32 %v2917, %v3031
    %v3088 = vadd.f32 %v2918, %v3034
    %v3089 = vadd.f32 %v2919, %v3039
    %v3090 = vadd.f32 %v2920, %v3042
    %v3091 = vadd.f32 %v2921, %v3047
    %v3092 = vadd.f32 %v2922, %v3050
    %v3093 = vadd.f32 %v2923, %v3055
    %v3094 = vadd.f32 %v2924, %v3058
    %v3095 = vadd.f32 %v2925, %v3063
    %v3096 = vadd.f32 %v2926, %v3066
    %v3097 = vadd.f32 %v2927, %v3071
    %v3098 = vadd.f32 %v2928, %v3074
    %v3099 = vadd.f32 %v2929, %v3079
    %v3100 = vadd.f32 %v2930, %v3082
    %v3101 = vld [vmem:[%s4] sm:$0x1]
    %v3103 = vlaneseq
    %v3104 = vshrl.u32 %v3103, 7
    %v3105 = vsub.s32 0, %v3104
    %v3106 = vrot.slane %v3101, %v3105
    %v3108 = vadd.f32 %v3085, %v3106
    %v3109 = vadd.f32 %v3086, %v3106
    %v3110 = vadd.f32 %v3087, %v3106
    %v3111 = vadd.f32 %v3088, %v3106
    %v3112 = vadd.f32 %v3089, %v3106
    %v3113 = vadd.f32 %v3090, %v3106
    %v3114 = vadd.f32 %v3091, %v3106
    %v3115 = vadd.f32 %v3092, %v3106
    %v3116 = vadd.f32 %v3093, %v3106
    %v3117 = vadd.f32 %v3094, %v3106
    %v3118 = vadd.f32 %v3095, %v3106
    %v3119 = vadd.f32 %v3096, %v3106
    %v3120 = vadd.f32 %v3097, %v3106
    %v3121 = vadd.f32 %v3098, %v3106
    %v3122 = vadd.f32 %v3099, %v3106
    %v3123 = vadd.f32 %v3100, %v3106
    %v3124 = vmax.f32 %v3108, 0.0
    %v3125 = vmax.f32 %v3109, 0.0
    %v3126 = vmax.f32 %v3110, 0.0
    %v3127 = vmax.f32 %v3111, 0.0
    %v3128 = vmax.f32 %v3112, 0.0
    %v3129 = vmax.f32 %v3113, 0.0
    %v3130 = vmax.f32 %v3114, 0.0
    %v3131 = vmax.f32 %v3115, 0.0
    %v3132 = vmax.f32 %v3116, 0.0
    %v3133 = vmax.f32 %v3117, 0.0
    %v3134 = vmax.f32 %v3118, 0.0
    %v3135 = vmax.f32 %v3119, 0.0
    %v3136 = vmax.f32 %v3120, 0.0
    %v3137 = vmax.f32 %v3121, 0.0
    %v3138 = vmax.f32 %v3122, 0.0
    %v3139 = vmax.f32 %v3123, 0.0
    %3140 = vst.msk [vmem:[#allocation2] sm:$0xff] %vm107, %v3124
    %3141 = vst.msk [vmem:[#allocation2 + $0x8] sm:$0xff] %vm107, %v3125
    %3142 = vst.msk [vmem:[#allocation2 + $0x10] sm:$0xff] %vm107, %v3126
    %3143 = vst.msk [vmem:[#allocation2 + $0x18] sm:$0xff] %vm107, %v3127
    %3144 = vst.msk [vmem:[#allocation2 + $0x20] sm:$0xff] %vm107, %v3128
    %3145 = vst.msk [vmem:[#allocation2 + $0x28] sm:$0xff] %vm107, %v3129
    %3146 = vst.msk [vmem:[#allocation2 + $0x30] sm:$0xff] %vm107, %v3130
    %3147 = vst.msk [vmem:[#allocation2 + $0x38] sm:$0xff] %vm107, %v3131
    %3148 = vst.msk [vmem:[#allocation2 + $0x40] sm:$0xff] %vm107, %v3132
    %3149 = vst.msk [vmem:[#allocation2 + $0x48] sm:$0xff] %vm107, %v3133
    %3150 = vst.msk [vmem:[#allocation2 + $0x50] sm:$0xff] %vm107, %v3134
    %3151 = vst.msk [vmem:[#allocation2 + $0x58] sm:$0xff] %vm107, %v3135
    %3152 = vst.msk [vmem:[#allocation2 + $0x60] sm:$0xff] %vm107, %v3136
    %3153 = vst.msk [vmem:[#allocation2 + $0x68] sm:$0xff] %vm107, %v3137
    %3154 = vst.msk [vmem:[#allocation2 + $0x70] sm:$0xff] %vm107, %v3138
    %3155 = vst.msk [vmem:[#allocation2 + $0x78] sm:$0xff] %vm107, %v3139
    %v3156 = vld [vmem:[#allocation2] ss:$64 sm:$0x1]
    %v3157 = vld [vmem:[#allocation2] ss:$64 sm:$0x2]
    %v3158 = vor.u32 %v3156, %v3157
    %v3159 = vpack.c.bf16 %v3158, %v3158
    %v3160 = vld [vmem:[#allocation3] sm:$0xff]
    %v3161 = vld [vmem:[#allocation3 + $0x8] sm:$0xff]
    %v3162 = vld [vmem:[#allocation3 + $0x10] sm:$0xff]
    %v3163 = vld [vmem:[#allocation3 + $0x18] sm:$0xff]
    %v3164 = vld [vmem:[#allocation3 + $0x20] sm:$0xff]
    %v3165 = vld [vmem:[#allocation3 + $0x28] sm:$0xff]
    %v3166 = vld [vmem:[#allocation3 + $0x30] sm:$0xff]
    %v3167 = vld [vmem:[#allocation3 + $0x38] sm:$0xff]
    %s3168 = scalar_lea.vmem [#allocation2], 1
    %v3169 = vld [vmem:[%s3168] ss:$64 sm:$0x1]
    %v3170 = vld [vmem:[%s3168] ss:$64 sm:$0x2]
    %v3171 = vor.u32 %v3169, %v3170
    %v3172 = vpack.c.bf16 %v3171, %v3171
    %s3173 = scalar_lea.vmem [#allocation3], 64
    %v3174 = vld [vmem:[%s3173] sm:$0xff]
    %v3175 = vld [vmem:[%s3173 + $0x8] sm:$0xff]
    %v3176 = vld [vmem:[%s3173 + $0x10] sm:$0xff]
    %v3177 = vld [vmem:[%s3173 + $0x18] sm:$0xff]
    %v3178 = vld [vmem:[%s3173 + $0x20] sm:$0xff]
    %v3179 = vld [vmem:[%s3173 + $0x28] sm:$0xff]
    %v3180 = vld [vmem:[%s3173 + $0x30] sm:$0xff]
    %v3181 = vld [vmem:[%s3173 + $0x38] sm:$0xff]
    %v3190 = vunpack.c.l.b16 %v3174
    %v3191 = vunpack.c.h.b16 %v3174
    %v3192 = vunpack.c.l.b16 %v3175
    %v3193 = vunpack.c.h.b16 %v3175
    %v3194 = vunpack.c.l.b16 %v3176
    %v3195 = vunpack.c.h.b16 %v3176
    %v3196 = vunpack.c.l.b16 %v3177
    %v3197 = vunpack.c.h.b16 %v3177
    %v3198 = vunpack.c.l.b16 %v3178
    %v3199 = vunpack.c.h.b16 %v3178
    %v3200 = vunpack.c.l.b16 %v3179
    %v3201 = vunpack.c.h.b16 %v3179
    %v3202 = vunpack.c.l.b16 %v3180
    %v3203 = vunpack.c.h.b16 %v3180
    %v3204 = vunpack.c.l.b16 %v3181
    %v3205 = vunpack.c.h.b16 %v3181
    %v3206 = vpack.c.b16 %v3198, %v3190
    %v3207 = vpack.c.b16 %v3199, %v3191
    %v3208 = vpack.c.b16 %v3200, %v3192
    %v3209 = vpack.c.b16 %v3201, %v3193
    %v3210 = vpack.c.b16 %v3202, %v3194
    %v3211 = vpack.c.b16 %v3203, %v3195
    %v3212 = vpack.c.b16 %v3204, %v3196
    %v3213 = vpack.c.b16 %v3205, %v3197
    %v3223 = vsel %vm107, %v3172, 0
    %3225 = vmatprep.subr.bf16.mxu0 %v3207
    %3226 = vmatpush1.bf16.msra.mxu0 %v3206
    %3227 = vmatprep.subr.bf16.mxu0 0
    %3228 = vmatpush1.bf16.msra.mxu0 0
    %3229 = vmatprep.subr.bf16.mxu0 0
    %3230 = vmatpush1.bf16.msra.mxu0 0
    %3231 = vmatprep.subr.bf16.mxu0 0
    %3232 = vmatpush1.bf16.msra.mxu0 0
    %3233 = vmatprep.subr.bf16.mxu0 0
    %3234 = vmatpush1.bf16.msra.mxu0 0
    %3235 = vmatprep.subr.bf16.mxu0 0
    %3236 = vmatpush1.bf16.msra.mxu0 0
    %3237 = vmatprep.subr.bf16.mxu0 0
    %3238 = vmatpush1.bf16.msra.mxu0 0
    %3239 = vmatprep.subr.bf16.mxu0 0
    %3240 = vmatpush1.bf16.msra.mxu0 0
    %3241 = vmatprep.subr.bf16.mxu0 0
    %3242 = vmatpush1.bf16.msra.mxu0 0
    %3243 = vmatprep.subr.bf16.mxu0 0
    %3244 = vmatpush1.bf16.msra.mxu0 0
    %3245 = vmatprep.subr.bf16.mxu0 0
    %3246 = vmatpush1.bf16.msra.mxu0 0
    %3247 = vmatprep.subr.bf16.mxu0 0
    %3248 = vmatpush1.bf16.msra.mxu0 0
    %3249 = vmatprep.subr.bf16.mxu0 0
    %3250 = vmatpush1.bf16.msra.mxu0 0
    %3251 = vmatprep.subr.bf16.mxu0 0
    %3252 = vmatpush1.bf16.msra.mxu0 0
    %3253 = vmatprep.subr.bf16.mxu0 0
    %3254 = vmatpush1.bf16.msra.mxu0 0
    %3255 = vmatprep.subr.bf16.mxu0 0
    %3256 = vmatpush1.bf16.msra.mxu0 0
    %3257 = vmatprep.mubr.bf16.mxu0 0
    %3258 = vmatmul.mubr.bf16.gmra.mrb[0].mxu0 %v3223
    %v3259 = vpop.f32.mrb[0].mxu0
    %v3260 = vadd.f32 0.0, %v3259
    %v3261 = vpop.f32.mrb[0].mxu0
    %v3262 = vadd.f32 0.0, %v3261
    %v3263 = vpop.f32.mrb[0].mxu0
    %v3264 = vpop.f32.mrb[0].mxu0
    %3265 = vdwg.mxu0
    %3266 = vmatprep.subr.bf16.mxu0 %v3209
    %3267 = vmatpush1.bf16.msra.mxu0 %v3208
    %3268 = vmatprep.subr.bf16.mxu0 0
    %3269 = vmatpush1.bf16.msra.mxu0 0
    %3270 = vmatprep.subr.bf16.mxu0 0
    %3271 = vmatpush1.bf16.msra.mxu0 0
    %3272 = vmatprep.subr.bf16.mxu0 0
    %3273 = vmatpush1.bf16.msra.mxu0 0
    %3274 = vmatprep.subr.bf16.mxu0 0
    %3275 = vmatpush1.bf16.msra.mxu0 0
    %3276 = vmatprep.subr.bf16.mxu0 0
    %3277 = vmatpush1.bf16.msra.mxu0 0
    %3278 = vmatprep.subr.bf16.mxu0 0
    %3279 = vmatpush1.bf16.msra.mxu0 0
    %3280 = vmatprep.subr.bf16.mxu0 0
    %3281 = vmatpush1.bf16.msra.mxu0 0
    %3282 = vmatprep.subr.bf16.mxu0 0
    %3283 = vmatpush1.bf16.msra.mxu0 0
    %3284 = vmatprep.subr.bf16.mxu0 0
    %3285 = vmatpush1.bf16.msra.mxu0 0
    %3286 = vmatprep.subr.bf16.mxu0 0
    %3287 = vmatpush1.bf16.msra.mxu0 0
    %3288 = vmatprep.subr.bf16.mxu0 0
    %3289 = vmatpush1.bf16.msra.mxu0 0
    %3290 = vmatprep.subr.bf16.mxu0 0
    %3291 = vmatpush1.bf16.msra.mxu0 0
    %3292 = vmatprep.subr.bf16.mxu0 0
    %3293 = vmatpush1.bf16.msra.mxu0 0
    %3294 = vmatprep.subr.bf16.mxu0 0
    %3295 = vmatpush1.bf16.msra.mxu0 0
    %3296 = vmatprep.subr.bf16.mxu0 0
    %3297 = vmatpush1.bf16.msra.mxu0 0
    %3298 = vmatprep.mubr.bf16.mxu0 0
    %3299 = vmatmul.mubr.bf16.gmra.mrb[0].mxu0 %v3223
    %v3300 = vpop.f32.mrb[0].mxu0
    %v3301 = vadd.f32 0.0, %v3300
    %v3302 = vpop.f32.mrb[0].mxu0
    %v3303 = vadd.f32 0.0, %v3302
    %v3304 = vpop.f32.mrb[0].mxu0
    %v3305 = vpop.f32.mrb[0].mxu0
    %3306 = vdwg.mxu0
    %3307 = vmatprep.subr.bf16.mxu0 %v3211
    %3308 = vmatpush1.bf16.msra.mxu0 %v3210
    %3309 = vmatprep.subr.bf16.mxu0 0
    %3310 = vmatpush1.bf16.msra.mxu0 0
    %3311 = vmatprep.subr.bf16.mxu0 0
    %3312 = vmatpush1.bf16.msra.mxu0 0
    %3313 = vmatprep.subr.bf16.mxu0 0
    %3314 = vmatpush1.bf16.msra.mxu0 0
    %3315 = vmatprep.subr.bf16.mxu0 0
    %3316 = vmatpush1.bf16.msra.mxu0 0
    %3317 = vmatprep.subr.bf16.mxu0 0
    %3318 = vmatpush1.bf16.msra.mxu0 0
    %3319 = vmatprep.subr.bf16.mxu0 0
    %3320 = vmatpush1.bf16.msra.mxu0 0
    %3321 = vmatprep.subr.bf16.mxu0 0
    %3322 = vmatpush1.bf16.msra.mxu0 0
    %3323 = vmatprep.subr.bf16.mxu0 0
    %3324 = vmatpush1.bf16.msra.mxu0 0
    %3325 = vmatprep.subr.bf16.mxu0 0
    %3326 = vmatpush1.bf16.msra.mxu0 0
    %3327 = vmatprep.subr.bf16.mxu0 0
    %3328 = vmatpush1.bf16.msra.mxu0 0
    %3329 = vmatprep.subr.bf16.mxu0 0
    %3330 = vmatpush1.bf16.msra.mxu0 0
    %3331 = vmatprep.subr.bf16.mxu0 0
    %3332 = vmatpush1.bf16.msra.mxu0 0
    %3333 = vmatprep.subr.bf16.mxu0 0
    %3334 = vmatpush1.bf16.msra.mxu0 0
    %3335 = vmatprep.subr.bf16.mxu0 0
    %3336 = vmatpush1.bf16.msra.mxu0 0
    %3337 = vmatprep.subr.bf16.mxu0 0
    %3338 = vmatpush1.bf16.msra.mxu0 0
    %3339 = vmatprep.mubr.bf16.mxu0 0
    %3340 = vmatmul.mubr.bf16.gmra.mrb[0].mxu0 %v3223
    %v3341 = vpop.f32.mrb[0].mxu0
    %v3342 = vadd.f32 0.0, %v3341
    %v3343 = vpop.f32.mrb[0].mxu0
    %v3344 = vadd.f32 0.0, %v3343
    %v3345 = vpop.f32.mrb[0].mxu0
    %v3346 = vpop.f32.mrb[0].mxu0
    %3347 = vdwg.mxu0
    %3348 = vmatprep.subr.bf16.mxu0 %v3213
    %3349 = vmatpush1.bf16.msra.mxu0 %v3212
    %3350 = vmatprep.subr.bf16.mxu0 0
    %3351 = vmatpush1.bf16.msra.mxu0 0
    %3352 = vmatprep.subr.bf16.mxu0 0
    %3353 = vmatpush1.bf16.msra.mxu0 0
    %3354 = vmatprep.subr.bf16.mxu0 0
    %3355 = vmatpush1.bf16.msra.mxu0 0
    %3356 = vmatprep.subr.bf16.mxu0 0
    %3357 = vmatpush1.bf16.msra.mxu0 0
    %3358 = vmatprep.subr.bf16.mxu0 0
    %3359 = vmatpush1.bf16.msra.mxu0 0
    %3360 = vmatprep.subr.bf16.mxu0 0
    %3361 = vmatpush1.bf16.msra.mxu0 0
    %3362 = vmatprep.subr.bf16.mxu0 0
    %3363 = vmatpush1.bf16.msra.mxu0 0
    %3364 = vmatprep.subr.bf16.mxu0 0
    %3365 = vmatpush1.bf16.msra.mxu0 0
    %3366 = vmatprep.subr.bf16.mxu0 0
    %3367 = vmatpush1.bf16.msra.mxu0 0
    %3368 = vmatprep.subr.bf16.mxu0 0
    %3369 = vmatpush1.bf16.msra.mxu0 0
    %3370 = vmatprep.subr.bf16.mxu0 0
    %3371 = vmatpush1.bf16.msra.mxu0 0
    %3372 = vmatprep.subr.bf16.mxu0 0
    %3373 = vmatpush1.bf16.msra.mxu0 0
    %3374 = vmatprep.subr.bf16.mxu0 0
    %3375 = vmatpush1.bf16.msra.mxu0 0
    %3376 = vmatprep.subr.bf16.mxu0 0
    %3377 = vmatpush1.bf16.msra.mxu0 0
    %3378 = vmatprep.subr.bf16.mxu0 0
    %3379 = vmatpush1.bf16.msra.mxu0 0
    %3380 = vmatprep.mubr.bf16.mxu0 0
    %3381 = vmatmul.mubr.bf16.gmra.mrb[0].mxu0 %v3223
    %v3382 = vpop.f32.mrb[0].mxu0
    %v3383 = vadd.f32 0.0, %v3382
    %v3384 = vpop.f32.mrb[0].mxu0
    %v3385 = vadd.f32 0.0, %v3384
    %v3386 = vpop.f32.mrb[0].mxu0
    %v3387 = vpop.f32.mrb[0].mxu0
    %3388 = vdwg.mxu0
    %v3397 = vunpack.c.l.b16 %v3160
    %v3398 = vunpack.c.h.b16 %v3160
    %v3399 = vunpack.c.l.b16 %v3161
    %v3400 = vunpack.c.h.b16 %v3161
    %v3401 = vunpack.c.l.b16 %v3162
    %v3402 = vunpack.c.h.b16 %v3162
    %v3403 = vunpack.c.l.b16 %v3163
    %v3404 = vunpack.c.h.b16 %v3163
    %v3405 = vunpack.c.l.b16 %v3164
    %v3406 = vunpack.c.h.b16 %v3164
    %v3407 = vunpack.c.l.b16 %v3165
    %v3408 = vunpack.c.h.b16 %v3165
    %v3409 = vunpack.c.l.b16 %v3166
    %v3410 = vunpack.c.h.b16 %v3166
    %v3411 = vunpack.c.l.b16 %v3167
    %v3412 = vunpack.c.h.b16 %v3167
    %v3413 = vpack.c.b16 %v3405, %v3397
    %v3414 = vpack.c.b16 %v3406, %v3398
    %v3415 = vpack.c.b16 %v3407, %v3399
    %v3416 = vpack.c.b16 %v3408, %v3400
    %v3417 = vpack.c.b16 %v3409, %v3401
    %v3418 = vpack.c.b16 %v3410, %v3402
    %v3419 = vpack.c.b16 %v3411, %v3403
    %v3420 = vpack.c.b16 %v3412, %v3404
    %v3430 = vsel %vm107, %v3159, 0
    %3432 = vmatprep.subr.bf16.mxu0 %v3414
    %3433 = vmatpush1.bf16.msra.mxu0 %v3413
    %3434 = vmatprep.subr.bf16.mxu0 0
    %3435 = vmatpush1.bf16.msra.mxu0 0
    %3436 = vmatprep.subr.bf16.mxu0 0
    %3437 = vmatpush1.bf16.msra.mxu0 0
    %3438 = vmatprep.subr.bf16.mxu0 0
    %3439 = vmatpush1.bf16.msra.mxu0 0
    %3440 = vmatprep.subr.bf16.mxu0 0
    %3441 = vmatpush1.bf16.msra.mxu0 0
    %3442 = vmatprep.subr.bf16.mxu0 0
    %3443 = vmatpush1.bf16.msra.mxu0 0
    %3444 = vmatprep.subr.bf16.mxu0 0
    %3445 = vmatpush1.bf16.msra.mxu0 0
    %3446 = vmatprep.subr.bf16.mxu0 0
    %3447 = vmatpush1.bf16.msra.mxu0 0
    %3448 = vmatprep.subr.bf16.mxu0 0
    %3449 = vmatpush1.bf16.msra.mxu0 0
    %3450 = vmatprep.subr.bf16.mxu0 0
    %3451 = vmatpush1.bf16.msra.mxu0 0
    %3452 = vmatprep.subr.bf16.mxu0 0
    %3453 = vmatpush1.bf16.msra.mxu0 0
    %3454 = vmatprep.subr.bf16.mxu0 0
    %3455 = vmatpush1.bf16.msra.mxu0 0
    %3456 = vmatprep.subr.bf16.mxu0 0
    %3457 = vmatpush1.bf16.msra.mxu0 0
    %3458 = vmatprep.subr.bf16.mxu0 0
    %3459 = vmatpush1.bf16.msra.mxu0 0
    %3460 = vmatprep.subr.bf16.mxu0 0
    %3461 = vmatpush1.bf16.msra.mxu0 0
    %3462 = vmatprep.subr.bf16.mxu0 0
    %3463 = vmatpush1.bf16.msra.mxu0 0
    %3464 = vmatprep.mubr.bf16.mxu0 0
    %3465 = vmatmul.mubr.bf16.gmra.mrb[0].mxu0 %v3430
    %v3466 = vpop.f32.mrb[0].mxu0
    %v3467 = vadd.f32 %v3260, %v3466
    %v3468 = vpop.f32.mrb[0].mxu0
    %v3469 = vadd.f32 %v3262, %v3468
    %v3470 = vpop.f32.mrb[0].mxu0
    %v3471 = vpop.f32.mrb[0].mxu0
    %3472 = vdwg.mxu0
    %3473 = vmatprep.subr.bf16.mxu0 %v3416
    %3474 = vmatpush1.bf16.msra.mxu0 %v3415
    %3475 = vmatprep.subr.bf16.mxu0 0
    %3476 = vmatpush1.bf16.msra.mxu0 0
    %3477 = vmatprep.subr.bf16.mxu0 0
    %3478 = vmatpush1.bf16.msra.mxu0 0
    %3479 = vmatprep.subr.bf16.mxu0 0
    %3480 = vmatpush1.bf16.msra.mxu0 0
    %3481 = vmatprep.subr.bf16.mxu0 0
    %3482 = vmatpush1.bf16.msra.mxu0 0
    %3483 = vmatprep.subr.bf16.mxu0 0
    %3484 = vmatpush1.bf16.msra.mxu0 0
    %3485 = vmatprep.subr.bf16.mxu0 0
    %3486 = vmatpush1.bf16.msra.mxu0 0
    %3487 = vmatprep.subr.bf16.mxu0 0
    %3488 = vmatpush1.bf16.msra.mxu0 0
    %3489 = vmatprep.subr.bf16.mxu0 0
    %3490 = vmatpush1.bf16.msra.mxu0 0
    %3491 = vmatprep.subr.bf16.mxu0 0
    %3492 = vmatpush1.bf16.msra.mxu0 0
    %3493 = vmatprep.subr.bf16.mxu0 0
    %3494 = vmatpush1.bf16.msra.mxu0 0
    %3495 = vmatprep.subr.bf16.mxu0 0
    %3496 = vmatpush1.bf16.msra.mxu0 0
    %3497 = vmatprep.subr.bf16.mxu0 0
    %3498 = vmatpush1.bf16.msra.mxu0 0
    %3499 = vmatprep.subr.bf16.mxu0 0
    %3500 = vmatpush1.bf16.msra.mxu0 0
    %3501 = vmatprep.subr.bf16.mxu0 0
    %3502 = vmatpush1.bf16.msra.mxu0 0
    %3503 = vmatprep.subr.bf16.mxu0 0
    %3504 = vmatpush1.bf16.msra.mxu0 0
    %3505 = vmatprep.mubr.bf16.mxu0 0
    %3506 = vmatmul.mubr.bf16.gmra.mrb[0].mxu0 %v3430
    %v3507 = vpop.f32.mrb[0].mxu0
    %v3508 = vadd.f32 %v3301, %v3507
    %v3509 = vpop.f32.mrb[0].mxu0
    %v3510 = vadd.f32 %v3303, %v3509
    %v3511 = vpop.f32.mrb[0].mxu0
    %v3512 = vpop.f32.mrb[0].mxu0
    %3513 = vdwg.mxu0
    %3514 = vmatprep.subr.bf16.mxu0 %v3418
    %3515 = vmatpush1.bf16.msra.mxu0 %v3417
    %3516 = vmatprep.subr.bf16.mxu0 0
    %3517 = vmatpush1.bf16.msra.mxu0 0
    %3518 = vmatprep.subr.bf16.mxu0 0
    %3519 = vmatpush1.bf16.msra.mxu0 0
    %3520 = vmatprep.subr.bf16.mxu0 0
    %3521 = vmatpush1.bf16.msra.mxu0 0
    %3522 = vmatprep.subr.bf16.mxu0 0
    %3523 = vmatpush1.bf16.msra.mxu0 0
    %3524 = vmatprep.subr.bf16.mxu0 0
    %3525 = vmatpush1.bf16.msra.mxu0 0
    %3526 = vmatprep.subr.bf16.mxu0 0
    %3527 = vmatpush1.bf16.msra.mxu0 0
    %3528 = vmatprep.subr.bf16.mxu0 0
    %3529 = vmatpush1.bf16.msra.mxu0 0
    %3530 = vmatprep.subr.bf16.mxu0 0
    %3531 = vmatpush1.bf16.msra.mxu0 0
    %3532 = vmatprep.subr.bf16.mxu0 0
    %3533 = vmatpush1.bf16.msra.mxu0 0
    %3534 = vmatprep.subr.bf16.mxu0 0
    %3535 = vmatpush1.bf16.msra.mxu0 0
    %3536 = vmatprep.subr.bf16.mxu0 0
    %3537 = vmatpush1.bf16.msra.mxu0 0
    %3538 = vmatprep.subr.bf16.mxu0 0
    %3539 = vmatpush1.bf16.msra.mxu0 0
    %3540 = vmatprep.subr.bf16.mxu0 0
    %3541 = vmatpush1.bf16.msra.mxu0 0
    %3542 = vmatprep.subr.bf16.mxu0 0
    %3543 = vmatpush1.bf16.msra.mxu0 0
    %3544 = vmatprep.subr.bf16.mxu0 0
    %3545 = vmatpush1.bf16.msra.mxu0 0
    %3546 = vmatprep.mubr.bf16.mxu0 0
    %3547 = vmatmul.mubr.bf16.gmra.mrb[0].mxu0 %v3430
    %v3548 = vpop.f32.mrb[0].mxu0
    %v3549 = vadd.f32 %v3342, %v3548
    %v3550 = vpop.f32.mrb[0].mxu0
    %v3551 = vadd.f32 %v3344, %v3550
    %v3552 = vpop.f32.mrb[0].mxu0
    %v3553 = vpop.f32.mrb[0].mxu0
    %3554 = vdwg.mxu0
    %3555 = vmatprep.subr.bf16.mxu0 %v3420
    %3556 = vmatpush1.bf16.msra.mxu0 %v3419
    %3557 = vmatprep.subr.bf16.mxu0 0
    %3558 = vmatpush1.bf16.msra.mxu0 0
    %3559 = vmatprep.subr.bf16.mxu0 0
    %3560 = vmatpush1.bf16.msra.mxu0 0
    %3561 = vmatprep.subr.bf16.mxu0 0
    %3562 = vmatpush1.bf16.msra.mxu0 0
    %3563 = vmatprep.subr.bf16.mxu0 0
    %3564 = vmatpush1.bf16.msra.mxu0 0
    %3565 = vmatprep.subr.bf16.mxu0 0
    %3566 = vmatpush1.bf16.msra.mxu0 0
    %3567 = vmatprep.subr.bf16.mxu0 0
    %3568 = vmatpush1.bf16.msra.mxu0 0
    %3569 = vmatprep.subr.bf16.mxu0 0
    %3570 = vmatpush1.bf16.msra.mxu0 0
    %3571 = vmatprep.subr.bf16.mxu0 0
    %3572 = vmatpush1.bf16.msra.mxu0 0
    %3573 = vmatprep.subr.bf16.mxu0 0
    %3574 = vmatpush1.bf16.msra.mxu0 0
    %3575 = vmatprep.subr.bf16.mxu0 0
    %3576 = vmatpush1.bf16.msra.mxu0 0
    %3577 = vmatprep.subr.bf16.mxu0 0
    %3578 = vmatpush1.bf16.msra.mxu0 0
    %3579 = vmatprep.subr.bf16.mxu0 0
    %3580 = vmatpush1.bf16.msra.mxu0 0
    %3581 = vmatprep.subr.bf16.mxu0 0
    %3582 = vmatpush1.bf16.msra.mxu0 0
    %3583 = vmatprep.subr.bf16.mxu0 0
    %3584 = vmatpush1.bf16.msra.mxu0 0
    %3585 = vmatprep.subr.bf16.mxu0 0
    %3586 = vmatpush1.bf16.msra.mxu0 0
    %3587 = vmatprep.mubr.bf16.mxu0 0
    %3588 = vmatmul.mubr.bf16.gmra.mrb[0].mxu0 %v3430
    %v3589 = vpop.f32.mrb[0].mxu0
    %v3590 = vadd.f32 %v3383, %v3589
    %v3591 = vpop.f32.mrb[0].mxu0
    %v3592 = vadd.f32 %v3385, %v3591
    %v3593 = vpop.f32.mrb[0].mxu0
    %v3594 = vpop.f32.mrb[0].mxu0
    %3595 = vdwg.mxu0
    %s3596 = scalar_lea.vmem [#allocation2], 2
    %v3597 = vld [vmem:[%s3596] ss:$64 sm:$0x1]
    %v3598 = vld [vmem:[%s3596] ss:$64 sm:$0x2]
    %v3599 = vor.u32 %v3597, %v3598
    %v3600 = vpack.c.bf16 %v3599, %v3599
    %s3601 = scalar_lea.vmem [#allocation3], 128
    %v3602 = vld [vmem:[%s3601] sm:$0xff]
    %v3603 = vld [vmem:[%s3601 + $0x8] sm:$0xff]
    %v3604 = vld [vmem:[%s3601 + $0x10] sm:$0xff]
    %v3605 = vld [vmem:[%s3601 + $0x18] sm:$0xff]
    %v3606 = vld [vmem:[%s3601 + $0x20] sm:$0xff]
    %v3607 = vld [vmem:[%s3601 + $0x28] sm:$0xff]
    %v3608 = vld [vmem:[%s3601 + $0x30] sm:$0xff]
    %v3609 = vld [vmem:[%s3601 + $0x38] sm:$0xff]
    %v3618 = vunpack.c.l.b16 %v3602
    %v3619 = vunpack.c.h.b16 %v3602
    %v3620 = vunpack.c.l.b16 %v3603
    %v3621 = vunpack.c.h.b16 %v3603
    %v3622 = vunpack.c.l.b16 %v3604
    %v3623 = vunpack.c.h.b16 %v3604
    %v3624 = vunpack.c.l.b16 %v3605
    %v3625 = vunpack.c.h.b16 %v3605
    %v3626 = vunpack.c.l.b16 %v3606
    %v3627 = vunpack.c.h.b16 %v3606
    %v3628 = vunpack.c.l.b16 %v3607
    %v3629 = vunpack.c.h.b16 %v3607
    %v3630 = vunpack.c.l.b16 %v3608
    %v3631 = vunpack.c.h.b16 %v3608
    %v3632 = vunpack.c.l.b16 %v3609
    %v3633 = vunpack.c.h.b16 %v3609
    %v3634 = vpack.c.b16 %v3626, %v3618
    %v3635 = vpack.c.b16 %v3627, %v3619
    %v3636 = vpack.c.b16 %v3628, %v3620
    %v3637 = vpack.c.b16 %v3629, %v3621
    %v3638 = vpack.c.b16 %v3630, %v3622
    %v3639 = vpack.c.b16 %v3631, %v3623
    %v3640 = vpack.c.b16 %v3632, %v3624
    %v3641 = vpack.c.b16 %v3633, %v3625
    %v3651 = vsel %vm107, %v3600, 0
    %3653 = vmatprep.subr.bf16.mxu0 %v3635
    %3654 = vmatpush1.bf16.msra.mxu0 %v3634
    %3655 = vmatprep.subr.bf16.mxu0 0
    %3656 = vmatpush1.bf16.msra.mxu0 0
    %3657 = vmatprep.subr.bf16.mxu0 0
    %3658 = vmatpush1.bf16.msra.mxu0 0
    %3659 = vmatprep.subr.bf16.mxu0 0
    %3660 = vmatpush1.bf16.msra.mxu0 0
    %3661 = vmatprep.subr.bf16.mxu0 0
    %3662 = vmatpush1.bf16.msra.mxu0 0
    %3663 = vmatprep.subr.bf16.mxu0 0
    %3664 = vmatpush1.bf16.msra.mxu0 0
    %3665 = vmatprep.subr.bf16.mxu0 0
    %3666 = vmatpush1.bf16.msra.mxu0 0
    %3667 = vmatprep.subr.bf16.mxu0 0
    %3668 = vmatpush1.bf16.msra.mxu0 0
    %3669 = vmatprep.subr.bf16.mxu0 0
    %3670 = vmatpush1.bf16.msra.mxu0 0
    %3671 = vmatprep.subr.bf16.mxu0 0
    %3672 = vmatpush1.bf16.msra.mxu0 0
    %3673 = vmatprep.subr.bf16.mxu0 0
    %3674 = vmatpush1.bf16.msra.mxu0 0
    %3675 = vmatprep.subr.bf16.mxu0 0
    %3676 = vmatpush1.bf16.msra.mxu0 0
    %3677 = vmatprep.subr.bf16.mxu0 0
    %3678 = vmatpush1.bf16.msra.mxu0 0
    %3679 = vmatprep.subr.bf16.mxu0 0
    %3680 = vmatpush1.bf16.msra.mxu0 0
    %3681 = vmatprep.subr.bf16.mxu0 0
    %3682 = vmatpush1.bf16.msra.mxu0 0
    %3683 = vmatprep.subr.bf16.mxu0 0
    %3684 = vmatpush1.bf16.msra.mxu0 0
    %3685 = vmatprep.mubr.bf16.mxu0 0
    %3686 = vmatmul.mubr.bf16.gmra.mrb[0].mxu0 %v3651
    %v3687 = vpop.f32.mrb[0].mxu0
    %v3688 = vadd.f32 0.0, %v3687
    %v3689 = vpop.f32.mrb[0].mxu0
    %v3690 = vadd.f32 0.0, %v3689
    %v3691 = vpop.f32.mrb[0].mxu0
    %v3692 = vpop.f32.mrb[0].mxu0
    %3693 = vdwg.mxu0
    %3694 = vmatprep.subr.bf16.mxu0 %v3637
    %3695 = vmatpush1.bf16.msra.mxu0 %v3636
    %3696 = vmatprep.subr.bf16.mxu0 0
    %3697 = vmatpush1.bf16.msra.mxu0 0
    %3698 = vmatprep.subr.bf16.mxu0 0
    %3699 = vmatpush1.bf16.msra.mxu0 0
    %3700 = vmatprep.subr.bf16.mxu0 0
    %3701 = vmatpush1.bf16.msra.mxu0 0
    %3702 = vmatprep.subr.bf16.mxu0 0
    %3703 = vmatpush1.bf16.msra.mxu0 0
    %3704 = vmatprep.subr.bf16.mxu0 0
    %3705 = vmatpush1.bf16.msra.mxu0 0
    %3706 = vmatprep.subr.bf16.mxu0 0
    %3707 = vmatpush1.bf16.msra.mxu0 0
    %3708 = vmatprep.subr.bf16.mxu0 0
    %3709 = vmatpush1.bf16.msra.mxu0 0
    %3710 = vmatprep.subr.bf16.mxu0 0
    %3711 = vmatpush1.bf16.msra.mxu0 0
    %3712 = vmatprep.subr.bf16.mxu0 0
    %3713 = vmatpush1.bf16.msra.mxu0 0
    %3714 = vmatprep.subr.bf16.mxu0 0
    %3715 = vmatpush1.bf16.msra.mxu0 0
    %3716 = vmatprep.subr.bf16.mxu0 0
    %3717 = vmatpush1.bf16.msra.mxu0 0
    %3718 = vmatprep.subr.bf16.mxu0 0
    %3719 = vmatpush1.bf16.msra.mxu0 0
    %3720 = vmatprep.subr.bf16.mxu0 0
    %3721 = vmatpush1.bf16.msra.mxu0 0
    %3722 = vmatprep.subr.bf16.mxu0 0
    %3723 = vmatpush1.bf16.msra.mxu0 0
    %3724 = vmatprep.subr.bf16.mxu0 0
    %3725 = vmatpush1.bf16.msra.mxu0 0
    %3726 = vmatprep.mubr.bf16.mxu0 0
    %3727 = vmatmul.mubr.bf16.gmra.mrb[0].mxu0 %v3651
    %v3728 = vpop.f32.mrb[0].mxu0
    %v3729 = vadd.f32 0.0, %v3728
    %v3730 = vpop.f32.mrb[0].mxu0
    %v3731 = vadd.f32 0.0, %v3730
    %v3732 = vpop.f32.mrb[0].mxu0
    %v3733 = vpop.f32.mrb[0].mxu0
    %3734 = vdwg.mxu0
    %3735 = vmatprep.subr.bf16.mxu0 %v3639
    %3736 = vmatpush1.bf16.msra.mxu0 %v3638
    %3737 = vmatprep.subr.bf16.mxu0 0
    %3738 = vmatpush1.bf16.msra.mxu0 0
    %3739 = vmatprep.subr.bf16.mxu0 0
    %3740 = vmatpush1.bf16.msra.mxu0 0
    %3741 = vmatprep.subr.bf16.mxu0 0
    %3742 = vmatpush1.bf16.msra.mxu0 0
    %3743 = vmatprep.subr.bf16.mxu0 0
    %3744 = vmatpush1.bf16.msra.mxu0 0
    %3745 = vmatprep.subr.bf16.mxu0 0
    %3746 = vmatpush1.bf16.msra.mxu0 0
    %3747 = vmatprep.subr.bf16.mxu0 0
    %3748 = vmatpush1.bf16.msra.mxu0 0
    %3749 = vmatprep.subr.bf16.mxu0 0
    %3750 = vmatpush1.bf16.msra.mxu0 0
    %3751 = vmatprep.subr.bf16.mxu0 0
    %3752 = vmatpush1.bf16.msra.mxu0 0
    %3753 = vmatprep.subr.bf16.mxu0 0
    %3754 = vmatpush1.bf16.msra.mxu0 0
    %3755 = vmatprep.subr.bf16.mxu0 0
    %3756 = vmatpush1.bf16.msra.mxu0 0
    %3757 = vmatprep.subr.bf16.mxu0 0
    %3758 = vmatpush1.bf16.msra.mxu0 0
    %3759 = vmatprep.subr.bf16.mxu0 0
    %3760 = vmatpush1.bf16.msra.mxu0 0
    %3761 = vmatprep.subr.bf16.mxu0 0
    %3762 = vmatpush1.bf16.msra.mxu0 0
    %3763 = vmatprep.subr.bf16.mxu0 0
    %3764 = vmatpush1.bf16.msra.mxu0 0
    %3765 = vmatprep.subr.bf16.mxu0 0
    %3766 = vmatpush1.bf16.msra.mxu0 0
    %3767 = vmatprep.mubr.bf16.mxu0 0
    %3768 = vmatmul.mubr.bf16.gmra.mrb[0].mxu0 %v3651
    %v3769 = vpop.f32.mrb[0].mxu0
    %v3770 = vadd.f32 0.0, %v3769
    %v3771 = vpop.f32.mrb[0].mxu0
    %v3772 = vadd.f32 0.0, %v3771
    %v3773 = vpop.f32.mrb[0].mxu0
    %v3774 = vpop.f32.mrb[0].mxu0
    %3775 = vdwg.mxu0
    %3776 = vmatprep.subr.bf16.mxu0 %v3641
    %3777 = vmatpush1.bf16.msra.mxu0 %v3640
    %3778 = vmatprep.subr.bf16.mxu0 0
    %3779 = vmatpush1.bf16.msra.mxu0 0
    %3780 = vmatprep.subr.bf16.mxu0 0
    %3781 = vmatpush1.bf16.msra.mxu0 0
    %3782 = vmatprep.subr.bf16.mxu0 0
    %3783 = vmatpush1.bf16.msra.mxu0 0
    %3784 = vmatprep.subr.bf16.mxu0 0
    %3785 = vmatpush1.bf16.msra.mxu0 0
    %3786 = vmatprep.subr.bf16.mxu0 0
    %3787 = vmatpush1.bf16.msra.mxu0 0
    %3788 = vmatprep.subr.bf16.mxu0 0
    %3789 = vmatpush1.bf16.msra.mxu0 0
    %3790 = vmatprep.subr.bf16.mxu0 0
    %3791 = vmatpush1.bf16.msra.mxu0 0
    %3792 = vmatprep.subr.bf16.mxu0 0
    %3793 = vmatpush1.bf16.msra.mxu0 0
    %3794 = vmatprep.subr.bf16.mxu0 0
    %3795 = vmatpush1.bf16.msra.mxu0 0
    %3796 = vmatprep.subr.bf16.mxu0 0
    %3797 = vmatpush1.bf16.msra.mxu0 0
    %3798 = vmatprep.subr.bf16.mxu0 0
    %3799 = vmatpush1.bf16.msra.mxu0 0
    %3800 = vmatprep.subr.bf16.mxu0 0
    %3801 = vmatpush1.bf16.msra.mxu0 0
    %3802 = vmatprep.subr.bf16.mxu0 0
    %3803 = vmatpush1.bf16.msra.mxu0 0
    %3804 = vmatprep.subr.bf16.mxu0 0
    %3805 = vmatpush1.bf16.msra.mxu0 0
    %3806 = vmatprep.subr.bf16.mxu0 0
    %3807 = vmatpush1.bf16.msra.mxu0 0
    %3808 = vmatprep.mubr.bf16.mxu0 0
    %3809 = vmatmul.mubr.bf16.gmra.mrb[0].mxu0 %v3651
    %v3810 = vpop.f32.mrb[0].mxu0
    %v3811 = vadd.f32 0.0, %v3810
    %v3812 = vpop.f32.mrb[0].mxu0
    %v3813 = vadd.f32 0.0, %v3812
    %v3814 = vpop.f32.mrb[0].mxu0
    %v3815 = vpop.f32.mrb[0].mxu0
    %3816 = vdwg.mxu0
    %v3817 = vadd.f32 %v3467, %v3688
    %v3818 = vadd.f32 %v3469, %v3690
    %v3819 = vadd.f32 %v3508, %v3729
    %v3820 = vadd.f32 %v3510, %v3731
    %v3821 = vadd.f32 %v3549, %v3770
    %v3822 = vadd.f32 %v3551, %v3772
    %v3823 = vadd.f32 %v3590, %v3811
    %v3824 = vadd.f32 %v3592, %v3813
    %s3825 = scalar_lea.vmem [#allocation2], 3
    %v3826 = vld [vmem:[%s3825] ss:$64 sm:$0x1]
    %v3827 = vld [vmem:[%s3825] ss:$64 sm:$0x2]
    %v3828 = vor.u32 %v3826, %v3827
    %v3829 = vpack.c.bf16 %v3828, %v3828
    %s3830 = scalar_lea.vmem [#allocation3], 192
    %v3831 = vld [vmem:[%s3830] sm:$0xff]
    %v3832 = vld [vmem:[%s3830 + $0x8] sm:$0xff]
    %v3833 = vld [vmem:[%s3830 + $0x10] sm:$0xff]
    %v3834 = vld [vmem:[%s3830 + $0x18] sm:$0xff]
    %v3835 = vld [vmem:[%s3830 + $0x20] sm:$0xff]
    %v3836 = vld [vmem:[%s3830 + $0x28] sm:$0xff]
    %v3837 = vld [vmem:[%s3830 + $0x30] sm:$0xff]
    %v3838 = vld [vmem:[%s3830 + $0x38] sm:$0xff]
    %v3847 = vunpack.c.l.b16 %v3831
    %v3848 = vunpack.c.h.b16 %v3831
    %v3849 = vunpack.c.l.b16 %v3832
    %v3850 = vunpack.c.h.b16 %v3832
    %v3851 = vunpack.c.l.b16 %v3833
    %v3852 = vunpack.c.h.b16 %v3833
    %v3853 = vunpack.c.l.b16 %v3834
    %v3854 = vunpack.c.h.b16 %v3834
    %v3855 = vunpack.c.l.b16 %v3835
    %v3856 = vunpack.c.h.b16 %v3835
    %v3857 = vunpack.c.l.b16 %v3836
    %v3858 = vunpack.c.h.b16 %v3836
    %v3859 = vunpack.c.l.b16 %v3837
    %v3860 = vunpack.c.h.b16 %v3837
    %v3861 = vunpack.c.l.b16 %v3838
    %v3862 = vunpack.c.h.b16 %v3838
    %v3863 = vpack.c.b16 %v3855, %v3847
    %v3864 = vpack.c.b16 %v3856, %v3848
    %v3865 = vpack.c.b16 %v3857, %v3849
    %v3866 = vpack.c.b16 %v3858, %v3850
    %v3867 = vpack.c.b16 %v3859, %v3851
    %v3868 = vpack.c.b16 %v3860, %v3852
    %v3869 = vpack.c.b16 %v3861, %v3853
    %v3870 = vpack.c.b16 %v3862, %v3854
    %v3880 = vsel %vm107, %v3829, 0
    %3882 = vmatprep.subr.bf16.mxu0 %v3864
    %3883 = vmatpush1.bf16.msra.mxu0 %v3863
    %3884 = vmatprep.subr.bf16.mxu0 0
    %3885 = vmatpush1.bf16.msra.mxu0 0
    %3886 = vmatprep.subr.bf16.mxu0 0
    %3887 = vmatpush1.bf16.msra.mxu0 0
    %3888 = vmatprep.subr.bf16.mxu0 0
    %3889 = vmatpush1.bf16.msra.mxu0 0
    %3890 = vmatprep.subr.bf16.mxu0 0
    %3891 = vmatpush1.bf16.msra.mxu0 0
    %3892 = vmatprep.subr.bf16.mxu0 0
    %3893 = vmatpush1.bf16.msra.mxu0 0
    %3894 = vmatprep.subr.bf16.mxu0 0
    %3895 = vmatpush1.bf16.msra.mxu0 0
    %3896 = vmatprep.subr.bf16.mxu0 0
    %3897 = vmatpush1.bf16.msra.mxu0 0
    %3898 = vmatprep.subr.bf16.mxu0 0
    %3899 = vmatpush1.bf16.msra.mxu0 0
    %3900 = vmatprep.subr.bf16.mxu0 0
    %3901 = vmatpush1.bf16.msra.mxu0 0
    %3902 = vmatprep.subr.bf16.mxu0 0
    %3903 = vmatpush1.bf16.msra.mxu0 0
    %3904 = vmatprep.subr.bf16.mxu0 0
    %3905 = vmatpush1.bf16.msra.mxu0 0
    %3906 = vmatprep.subr.bf16.mxu0 0
    %3907 = vmatpush1.bf16.msra.mxu0 0
    %3908 = vmatprep.subr.bf16.mxu0 0
    %3909 = vmatpush1.bf16.msra.mxu0 0
    %3910 = vmatprep.subr.bf16.mxu0 0
    %3911 = vmatpush1.bf16.msra.mxu0 0
    %3912 = vmatprep.subr.bf16.mxu0 0
    %3913 = vmatpush1.bf16.msra.mxu0 0
    %3914 = vmatprep.mubr.bf16.mxu0 0
    %3915 = vmatmul.mubr.bf16.gmra.mrb[0].mxu0 %v3880
    %v3916 = vpop.f32.mrb[0].mxu0
    %v3917 = vadd.f32 0.0, %v3916
    %v3918 = vpop.f32.mrb[0].mxu0
    %v3919 = vadd.f32 0.0, %v3918
    %v3920 = vpop.f32.mrb[0].mxu0
    %v3921 = vpop.f32.mrb[0].mxu0
    %3922 = vdwg.mxu0
    %3923 = vmatprep.subr.bf16.mxu0 %v3866
    %3924 = vmatpush1.bf16.msra.mxu0 %v3865
    %3925 = vmatprep.subr.bf16.mxu0 0
    %3926 = vmatpush1.bf16.msra.mxu0 0
    %3927 = vmatprep.subr.bf16.mxu0 0
    %3928 = vmatpush1.bf16.msra.mxu0 0
    %3929 = vmatprep.subr.bf16.mxu0 0
    %3930 = vmatpush1.bf16.msra.mxu0 0
    %3931 = vmatprep.subr.bf16.mxu0 0
    %3932 = vmatpush1.bf16.msra.mxu0 0
    %3933 = vmatprep.subr.bf16.mxu0 0
    %3934 = vmatpush1.bf16.msra.mxu0 0
    %3935 = vmatprep.subr.bf16.mxu0 0
    %3936 = vmatpush1.bf16.msra.mxu0 0
    %3937 = vmatprep.subr.bf16.mxu0 0
    %3938 = vmatpush1.bf16.msra.mxu0 0
    %3939 = vmatprep.subr.bf16.mxu0 0
    %3940 = vmatpush1.bf16.msra.mxu0 0
    %3941 = vmatprep.subr.bf16.mxu0 0
    %3942 = vmatpush1.bf16.msra.mxu0 0
    %3943 = vmatprep.subr.bf16.mxu0 0
    %3944 = vmatpush1.bf16.msra.mxu0 0
    %3945 = vmatprep.subr.bf16.mxu0 0
    %3946 = vmatpush1.bf16.msra.mxu0 0
    %3947 = vmatprep.subr.bf16.mxu0 0
    %3948 = vmatpush1.bf16.msra.mxu0 0
    %3949 = vmatprep.subr.bf16.mxu0 0
    %3950 = vmatpush1.bf16.msra.mxu0 0
    %3951 = vmatprep.subr.bf16.mxu0 0
    %3952 = vmatpush1.bf16.msra.mxu0 0
    %3953 = vmatprep.subr.bf16.mxu0 0
    %3954 = vmatpush1.bf16.msra.mxu0 0
    %3955 = vmatprep.mubr.bf16.mxu0 0
    %3956 = vmatmul.mubr.bf16.gmra.mrb[0].mxu0 %v3880
    %v3957 = vpop.f32.mrb[0].mxu0
    %v3958 = vadd.f32 0.0, %v3957
    %v3959 = vpop.f32.mrb[0].mxu0
    %v3960 = vadd.f32 0.0, %v3959
    %v3961 = vpop.f32.mrb[0].mxu0
    %v3962 = vpop.f32.mrb[0].mxu0
    %3963 = vdwg.mxu0
    %3964 = vmatprep.subr.bf16.mxu0 %v3868
    %3965 = vmatpush1.bf16.msra.mxu0 %v3867
    %3966 = vmatprep.subr.bf16.mxu0 0
    %3967 = vmatpush1.bf16.msra.mxu0 0
    %3968 = vmatprep.subr.bf16.mxu0 0
    %3969 = vmatpush1.bf16.msra.mxu0 0
    %3970 = vmatprep.subr.bf16.mxu0 0
    %3971 = vmatpush1.bf16.msra.mxu0 0
    %3972 = vmatprep.subr.bf16.mxu0 0
    %3973 = vmatpush1.bf16.msra.mxu0 0
    %3974 = vmatprep.subr.bf16.mxu0 0
    %3975 = vmatpush1.bf16.msra.mxu0 0
    %3976 = vmatprep.subr.bf16.mxu0 0
    %3977 = vmatpush1.bf16.msra.mxu0 0
    %3978 = vmatprep.subr.bf16.mxu0 0
    %3979 = vmatpush1.bf16.msra.mxu0 0
    %3980 = vmatprep.subr.bf16.mxu0 0
    %3981 = vmatpush1.bf16.msra.mxu0 0
    %3982 = vmatprep.subr.bf16.mxu0 0
    %3983 = vmatpush1.bf16.msra.mxu0 0
    %3984 = vmatprep.subr.bf16.mxu0 0
    %3985 = vmatpush1.bf16.msra.mxu0 0
    %3986 = vmatprep.subr.bf16.mxu0 0
    %3987 = vmatpush1.bf16.msra.mxu0 0
    %3988 = vmatprep.subr.bf16.mxu0 0
    %3989 = vmatpush1.bf16.msra.mxu0 0
    %3990 = vmatprep.subr.bf16.mxu0 0
    %3991 = vmatpush1.bf16.msra.mxu0 0
    %3992 = vmatprep.subr.bf16.mxu0 0
    %3993 = vmatpush1.bf16.msra.mxu0 0
    %3994 = vmatprep.subr.bf16.mxu0 0
    %3995 = vmatpush1.bf16.msra.mxu0 0
    %3996 = vmatprep.mubr.bf16.mxu0 0
    %3997 = vmatmul.mubr.bf16.gmra.mrb[0].mxu0 %v3880
    %v3998 = vpop.f32.mrb[0].mxu0
    %v3999 = vadd.f32 0.0, %v3998
    %v4000 = vpop.f32.mrb[0].mxu0
    %v4001 = vadd.f32 0.0, %v4000
    %v4002 = vpop.f32.mrb[0].mxu0
    %v4003 = vpop.f32.mrb[0].mxu0
    %4004 = vdwg.mxu0
    %4005 = vmatprep.subr.bf16.mxu0 %v3870
    %4006 = vmatpush1.bf16.msra.mxu0 %v3869
    %4007 = vmatprep.subr.bf16.mxu0 0
    %4008 = vmatpush1.bf16.msra.mxu0 0
    %4009 = vmatprep.subr.bf16.mxu0 0
    %4010 = vmatpush1.bf16.msra.mxu0 0
    %4011 = vmatprep.subr.bf16.mxu0 0
    %4012 = vmatpush1.bf16.msra.mxu0 0
    %4013 = vmatprep.subr.bf16.mxu0 0
    %4014 = vmatpush1.bf16.msra.mxu0 0
    %4015 = vmatprep.subr.bf16.mxu0 0
    %4016 = vmatpush1.bf16.msra.mxu0 0
    %4017 = vmatprep.subr.bf16.mxu0 0
    %4018 = vmatpush1.bf16.msra.mxu0 0
    %4019 = vmatprep.subr.bf16.mxu0 0
    %4020 = vmatpush1.bf16.msra.mxu0 0
    %4021 = vmatprep.subr.bf16.mxu0 0
    %4022 = vmatpush1.bf16.msra.mxu0 0
    %4023 = vmatprep.subr.bf16.mxu0 0
    %4024 = vmatpush1.bf16.msra.mxu0 0
    %4025 = vmatprep.subr.bf16.mxu0 0
    %4026 = vmatpush1.bf16.msra.mxu0 0
    %4027 = vmatprep.subr.bf16.mxu0 0
    %4028 = vmatpush1.bf16.msra.mxu0 0
    %4029 = vmatprep.subr.bf16.mxu0 0
    %4030 = vmatpush1.bf16.msra.mxu0 0
    %4031 = vmatprep.subr.bf16.mxu0 0
    %4032 = vmatpush1.bf16.msra.mxu0 0
    %4033 = vmatprep.subr.bf16.mxu0 0
    %4034 = vmatpush1.bf16.msra.mxu0 0
    %4035 = vmatprep.subr.bf16.mxu0 0
    %4036 = vmatpush1.bf16.msra.mxu0 0
    %4037 = vmatprep.mubr.bf16.mxu0 0
    %4038 = vmatmul.mubr.bf16.gmra.mrb[0].mxu0 %v3880
    %v4039 = vpop.f32.mrb[0].mxu0
    %v4040 = vadd.f32 0.0, %v4039
    %v4041 = vpop.f32.mrb[0].mxu0
    %v4042 = vadd.f32 0.0, %v4041
    %v4043 = vpop.f32.mrb[0].mxu0
    %v4044 = vpop.f32.mrb[0].mxu0
    %4045 = vdwg.mxu0
    %v4046 = vadd.f32 %v3817, %v3917
    %v4047 = vadd.f32 %v3818, %v3919
    %v4048 = vadd.f32 %v3819, %v3958
    %v4049 = vadd.f32 %v3820, %v3960
    %v4050 = vadd.f32 %v3821, %v3999
    %v4051 = vadd.f32 %v3822, %v4001
    %v4052 = vadd.f32 %v3823, %v4040
    %v4053 = vadd.f32 %v3824, %v4042
    %s4054 = scalar_lea.vmem [#allocation2], 8
    %v4055 = vld [vmem:[%s4054] ss:$64 sm:$0x1]
    %v4056 = vld [vmem:[%s4054] ss:$64 sm:$0x2]
    %v4057 = vor.u32 %v4055, %v4056
    %v4058 = vpack.c.bf16 %v4057, %v4057
    %s4059 = scalar_lea.vmem [#allocation3], 256
    %v4060 = vld [vmem:[%s4059] sm:$0xff]
    %v4061 = vld [vmem:[%s4059 + $0x8] sm:$0xff]
    %v4062 = vld [vmem:[%s4059 + $0x10] sm:$0xff]
    %v4063 = vld [vmem:[%s4059 + $0x18] sm:$0xff]
    %v4064 = vld [vmem:[%s4059 + $0x20] sm:$0xff]
    %v4065 = vld [vmem:[%s4059 + $0x28] sm:$0xff]
    %v4066 = vld [vmem:[%s4059 + $0x30] sm:$0xff]
    %v4067 = vld [vmem:[%s4059 + $0x38] sm:$0xff]
    %v4076 = vunpack.c.l.b16 %v4060
    %v4077 = vunpack.c.h.b16 %v4060
    %v4078 = vunpack.c.l.b16 %v4061
    %v4079 = vunpack.c.h.b16 %v4061
    %v4080 = vunpack.c.l.b16 %v4062
    %v4081 = vunpack.c.h.b16 %v4062
    %v4082 = vunpack.c.l.b16 %v4063
    %v4083 = vunpack.c.h.b16 %v4063
    %v4084 = vunpack.c.l.b16 %v4064
    %v4085 = vunpack.c.h.b16 %v4064
    %v4086 = vunpack.c.l.b16 %v4065
    %v4087 = vunpack.c.h.b16 %v4065
    %v4088 = vunpack.c.l.b16 %v4066
    %v4089 = vunpack.c.h.b16 %v4066
    %v4090 = vunpack.c.l.b16 %v4067
    %v4091 = vunpack.c.h.b16 %v4067
    %v4092 = vpack.c.b16 %v4084, %v4076
    %v4093 = vpack.c.b16 %v4085, %v4077
    %v4094 = vpack.c.b16 %v4086, %v4078
    %v4095 = vpack.c.b16 %v4087, %v4079
    %v4096 = vpack.c.b16 %v4088, %v4080
    %v4097 = vpack.c.b16 %v4089, %v4081
    %v4098 = vpack.c.b16 %v4090, %v4082
    %v4099 = vpack.c.b16 %v4091, %v4083
    %v4109 = vsel %vm107, %v4058, 0
    %4111 = vmatprep.subr.bf16.mxu0 %v4093
    %4112 = vmatpush1.bf16.msra.mxu0 %v4092
    %4113 = vmatprep.subr.bf16.mxu0 0
    %4114 = vmatpush1.bf16.msra.mxu0 0
    %4115 = vmatprep.subr.bf16.mxu0 0
    %4116 = vmatpush1.bf16.msra.mxu0 0
    %4117 = vmatprep.subr.bf16.mxu0 0
    %4118 = vmatpush1.bf16.msra.mxu0 0
    %4119 = vmatprep.subr.bf16.mxu0 0
    %4120 = vmatpush1.bf16.msra.mxu0 0
    %4121 = vmatprep.subr.bf16.mxu0 0
    %4122 = vmatpush1.bf16.msra.mxu0 0
    %4123 = vmatprep.subr.bf16.mxu0 0
    %4124 = vmatpush1.bf16.msra.mxu0 0
    %4125 = vmatprep.subr.bf16.mxu0 0
    %4126 = vmatpush1.bf16.msra.mxu0 0
    %4127 = vmatprep.subr.bf16.mxu0 0
    %4128 = vmatpush1.bf16.msra.mxu0 0
    %4129 = vmatprep.subr.bf16.mxu0 0
    %4130 = vmatpush1.bf16.msra.mxu0 0
    %4131 = vmatprep.subr.bf16.mxu0 0
    %4132 = vmatpush1.bf16.msra.mxu0 0
    %4133 = vmatprep.subr.bf16.mxu0 0
    %4134 = vmatpush1.bf16.msra.mxu0 0
    %4135 = vmatprep.subr.bf16.mxu0 0
    %4136 = vmatpush1.bf16.msra.mxu0 0
    %4137 = vmatprep.subr.bf16.mxu0 0
    %4138 = vmatpush1.bf16.msra.mxu0 0
    %4139 = vmatprep.subr.bf16.mxu0 0
    %4140 = vmatpush1.bf16.msra.mxu0 0
    %4141 = vmatprep.subr.bf16.mxu0 0
    %4142 = vmatpush1.bf16.msra.mxu0 0
    %4143 = vmatprep.mubr.bf16.mxu0 0
    %4144 = vmatmul.mubr.bf16.gmra.mrb[0].mxu0 %v4109
    %v4145 = vpop.f32.mrb[0].mxu0
    %v4146 = vadd.f32 0.0, %v4145
    %v4147 = vpop.f32.mrb[0].mxu0
    %v4148 = vadd.f32 0.0, %v4147
    %v4149 = vpop.f32.mrb[0].mxu0
    %v4150 = vpop.f32.mrb[0].mxu0
    %4151 = vdwg.mxu0
    %4152 = vmatprep.subr.bf16.mxu0 %v4095
    %4153 = vmatpush1.bf16.msra.mxu0 %v4094
    %4154 = vmatprep.subr.bf16.mxu0 0
    %4155 = vmatpush1.bf16.msra.mxu0 0
    %4156 = vmatprep.subr.bf16.mxu0 0
    %4157 = vmatpush1.bf16.msra.mxu0 0
    %4158 = vmatprep.subr.bf16.mxu0 0
    %4159 = vmatpush1.bf16.msra.mxu0 0
    %4160 = vmatprep.subr.bf16.mxu0 0
    %4161 = vmatpush1.bf16.msra.mxu0 0
    %4162 = vmatprep.subr.bf16.mxu0 0
    %4163 = vmatpush1.bf16.msra.mxu0 0
    %4164 = vmatprep.subr.bf16.mxu0 0
    %4165 = vmatpush1.bf16.msra.mxu0 0
    %4166 = vmatprep.subr.bf16.mxu0 0
    %4167 = vmatpush1.bf16.msra.mxu0 0
    %4168 = vmatprep.subr.bf16.mxu0 0
    %4169 = vmatpush1.bf16.msra.mxu0 0
    %4170 = vmatprep.subr.bf16.mxu0 0
    %4171 = vmatpush1.bf16.msra.mxu0 0
    %4172 = vmatprep.subr.bf16.mxu0 0
    %4173 = vmatpush1.bf16.msra.mxu0 0
    %4174 = vmatprep.subr.bf16.mxu0 0
    %4175 = vmatpush1.bf16.msra.mxu0 0
    %4176 = vmatprep.subr.bf16.mxu0 0
    %4177 = vmatpush1.bf16.msra.mxu0 0
    %4178 = vmatprep.subr.bf16.mxu0 0
    %4179 = vmatpush1.bf16.msra.mxu0 0
    %4180 = vmatprep.subr.bf16.mxu0 0
    %4181 = vmatpush1.bf16.msra.mxu0 0
    %4182 = vmatprep.subr.bf16.mxu0 0
    %4183 = vmatpush1.bf16.msra.mxu0 0
    %4184 = vmatprep.mubr.bf16.mxu0 0
    %4185 = vmatmul.mubr.bf16.gmra.mrb[0].mxu0 %v4109
    %v4186 = vpop.f32.mrb[0].mxu0
    %v4187 = vadd.f32 0.0, %v4186
    %v4188 = vpop.f32.mrb[0].mxu0
    %v4189 = vadd.f32 0.0, %v4188
    %v4190 = vpop.f32.mrb[0].mxu0
    %v4191 = vpop.f32.mrb[0].mxu0
    %4192 = vdwg.mxu0
    %4193 = vmatprep.subr.bf16.mxu0 %v4097
    %4194 = vmatpush1.bf16.msra.mxu0 %v4096
    %4195 = vmatprep.subr.bf16.mxu0 0
    %4196 = vmatpush1.bf16.msra.mxu0 0
    %4197 = vmatprep.subr.bf16.mxu0 0
    %4198 = vmatpush1.bf16.msra.mxu0 0
    %4199 = vmatprep.subr.bf16.mxu0 0
    %4200 = vmatpush1.bf16.msra.mxu0 0
    %4201 = vmatprep.subr.bf16.mxu0 0
    %4202 = vmatpush1.bf16.msra.mxu0 0
    %4203 = vmatprep.subr.bf16.mxu0 0
    %4204 = vmatpush1.bf16.msra.mxu0 0
    %4205 = vmatprep.subr.bf16.mxu0 0
    %4206 = vmatpush1.bf16.msra.mxu0 0
    %4207 = vmatprep.subr.bf16.mxu0 0
    %4208 = vmatpush1.bf16.msra.mxu0 0
    %4209 = vmatprep.subr.bf16.mxu0 0
    %4210 = vmatpush1.bf16.msra.mxu0 0
    %4211 = vmatprep.subr.bf16.mxu0 0
    %4212 = vmatpush1.bf16.msra.mxu0 0
    %4213 = vmatprep.subr.bf16.mxu0 0
    %4214 = vmatpush1.bf16.msra.mxu0 0
    %4215 = vmatprep.subr.bf16.mxu0 0
    %4216 = vmatpush1.bf16.msra.mxu0 0
    %4217 = vmatprep.subr.bf16.mxu0 0
    %4218 = vmatpush1.bf16.msra.mxu0 0
    %4219 = vmatprep.subr.bf16.mxu0 0
    %4220 = vmatpush1.bf16.msra.mxu0 0
    %4221 = vmatprep.subr.bf16.mxu0 0
    %4222 = vmatpush1.bf16.msra.mxu0 0
    %4223 = vmatprep.subr.bf16.mxu0 0
    %4224 = vmatpush1.bf16.msra.mxu0 0
    %4225 = vmatprep.mubr.bf16.mxu0 0
    %4226 = vmatmul.mubr.bf16.gmra.mrb[0].mxu0 %v4109
    %v4227 = vpop.f32.mrb[0].mxu0
    %v4228 = vadd.f32 0.0, %v4227
    %v4229 = vpop.f32.mrb[0].mxu0
    %v4230 = vadd.f32 0.0, %v4229
    %v4231 = vpop.f32.mrb[0].mxu0
    %v4232 = vpop.f32.mrb[0].mxu0
    %4233 = vdwg.mxu0
    %4234 = vmatprep.subr.bf16.mxu0 %v4099
    %4235 = vmatpush1.bf16.msra.mxu0 %v4098
    %4236 = vmatprep.subr.bf16.mxu0 0
    %4237 = vmatpush1.bf16.msra.mxu0 0
    %4238 = vmatprep.subr.bf16.mxu0 0
    %4239 = vmatpush1.bf16.msra.mxu0 0
    %4240 = vmatprep.subr.bf16.mxu0 0
    %4241 = vmatpush1.bf16.msra.mxu0 0
    %4242 = vmatprep.subr.bf16.mxu0 0
    %4243 = vmatpush1.bf16.msra.mxu0 0
    %4244 = vmatprep.subr.bf16.mxu0 0
    %4245 = vmatpush1.bf16.msra.mxu0 0
    %4246 = vmatprep.subr.bf16.mxu0 0
    %4247 = vmatpush1.bf16.msra.mxu0 0
    %4248 = vmatprep.subr.bf16.mxu0 0
    %4249 = vmatpush1.bf16.msra.mxu0 0
    %4250 = vmatprep.subr.bf16.mxu0 0
    %4251 = vmatpush1.bf16.msra.mxu0 0
    %4252 = vmatprep.subr.bf16.mxu0 0
    %4253 = vmatpush1.bf16.msra.mxu0 0
    %4254 = vmatprep.subr.bf16.mxu0 0
    %4255 = vmatpush1.bf16.msra.mxu0 0
    %4256 = vmatprep.subr.bf16.mxu0 0
    %4257 = vmatpush1.bf16.msra.mxu0 0
    %4258 = vmatprep.subr.bf16.mxu0 0
    %4259 = vmatpush1.bf16.msra.mxu0 0
    %4260 = vmatprep.subr.bf16.mxu0 0
    %4261 = vmatpush1.bf16.msra.mxu0 0
    %4262 = vmatprep.subr.bf16.mxu0 0
    %4263 = vmatpush1.bf16.msra.mxu0 0
    %4264 = vmatprep.subr.bf16.mxu0 0
    %4265 = vmatpush1.bf16.msra.mxu0 0
    %4266 = vmatprep.mubr.bf16.mxu0 0
    %4267 = vmatmul.mubr.bf16.gmra.mrb[0].mxu0 %v4109
    %v4268 = vpop.f32.mrb[0].mxu0
    %v4269 = vadd.f32 0.0, %v4268
    %v4270 = vpop.f32.mrb[0].mxu0
    %v4271 = vadd.f32 0.0, %v4270
    %v4272 = vpop.f32.mrb[0].mxu0
    %v4273 = vpop.f32.mrb[0].mxu0
    %4274 = vdwg.mxu0
    %v4275 = vadd.f32 %v4046, %v4146
    %v4276 = vadd.f32 %v4047, %v4148
    %v4277 = vadd.f32 %v4048, %v4187
    %v4278 = vadd.f32 %v4049, %v4189
    %v4279 = vadd.f32 %v4050, %v4228
    %v4280 = vadd.f32 %v4051, %v4230
    %v4281 = vadd.f32 %v4052, %v4269
    %v4282 = vadd.f32 %v4053, %v4271
    %s4283 = scalar_lea.vmem [#allocation2], 9
    %v4284 = vld [vmem:[%s4283] ss:$64 sm:$0x1]
    %v4285 = vld [vmem:[%s4283] ss:$64 sm:$0x2]
    %v4286 = vor.u32 %v4284, %v4285
    %v4287 = vpack.c.bf16 %v4286, %v4286
    %s4288 = scalar_lea.vmem [#allocation3], 320
    %v4289 = vld [vmem:[%s4288] sm:$0xff]
    %v4290 = vld [vmem:[%s4288 + $0x8] sm:$0xff]
    %v4291 = vld [vmem:[%s4288 + $0x10] sm:$0xff]
    %v4292 = vld [vmem:[%s4288 + $0x18] sm:$0xff]
    %v4293 = vld [vmem:[%s4288 + $0x20] sm:$0xff]
    %v4294 = vld [vmem:[%s4288 + $0x28] sm:$0xff]
    %v4295 = vld [vmem:[%s4288 + $0x30] sm:$0xff]
    %v4296 = vld [vmem:[%s4288 + $0x38] sm:$0xff]
    %v4305 = vunpack.c.l.b16 %v4289
    %v4306 = vunpack.c.h.b16 %v4289
    %v4307 = vunpack.c.l.b16 %v4290
    %v4308 = vunpack.c.h.b16 %v4290
    %v4309 = vunpack.c.l.b16 %v4291
    %v4310 = vunpack.c.h.b16 %v4291
    %v4311 = vunpack.c.l.b16 %v4292
    %v4312 = vunpack.c.h.b16 %v4292
    %v4313 = vunpack.c.l.b16 %v4293
    %v4314 = vunpack.c.h.b16 %v4293
    %v4315 = vunpack.c.l.b16 %v4294
    %v4316 = vunpack.c.h.b16 %v4294
    %v4317 = vunpack.c.l.b16 %v4295
    %v4318 = vunpack.c.h.b16 %v4295
    %v4319 = vunpack.c.l.b16 %v4296
    %v4320 = vunpack.c.h.b16 %v4296
    %v4321 = vpack.c.b16 %v4313, %v4305
    %v4322 = vpack.c.b16 %v4314, %v4306
    %v4323 = vpack.c.b16 %v4315, %v4307
    %v4324 = vpack.c.b16 %v4316, %v4308
    %v4325 = vpack.c.b16 %v4317, %v4309
    %v4326 = vpack.c.b16 %v4318, %v4310
    %v4327 = vpack.c.b16 %v4319, %v4311
    %v4328 = vpack.c.b16 %v4320, %v4312
    %v4338 = vsel %vm107, %v4287, 0
    %4340 = vmatprep.subr.bf16.mxu0 %v4322
    %4341 = vmatpush1.bf16.msra.mxu0 %v4321
    %4342 = vmatprep.subr.bf16.mxu0 0
    %4343 = vmatpush1.bf16.msra.mxu0 0
    %4344 = vmatprep.subr.bf16.mxu0 0
    %4345 = vmatpush1.bf16.msra.mxu0 0
    %4346 = vmatprep.subr.bf16.mxu0 0
    %4347 = vmatpush1.bf16.msra.mxu0 0
    %4348 = vmatprep.subr.bf16.mxu0 0
    %4349 = vmatpush1.bf16.msra.mxu0 0
    %4350 = vmatprep.subr.bf16.mxu0 0
    %4351 = vmatpush1.bf16.msra.mxu0 0
    %4352 = vmatprep.subr.bf16.mxu0 0
    %4353 = vmatpush1.bf16.msra.mxu0 0
    %4354 = vmatprep.subr.bf16.mxu0 0
    %4355 = vmatpush1.bf16.msra.mxu0 0
    %4356 = vmatprep.subr.bf16.mxu0 0
    %4357 = vmatpush1.bf16.msra.mxu0 0
    %4358 = vmatprep.subr.bf16.mxu0 0
    %4359 = vmatpush1.bf16.msra.mxu0 0
    %4360 = vmatprep.subr.bf16.mxu0 0
    %4361 = vmatpush1.bf16.msra.mxu0 0
    %4362 = vmatprep.subr.bf16.mxu0 0
    %4363 = vmatpush1.bf16.msra.mxu0 0
    %4364 = vmatprep.subr.bf16.mxu0 0
    %4365 = vmatpush1.bf16.msra.mxu0 0
    %4366 = vmatprep.subr.bf16.mxu0 0
    %4367 = vmatpush1.bf16.msra.mxu0 0
    %4368 = vmatprep.subr.bf16.mxu0 0
    %4369 = vmatpush1.bf16.msra.mxu0 0
    %4370 = vmatprep.subr.bf16.mxu0 0
    %4371 = vmatpush1.bf16.msra.mxu0 0
    %4372 = vmatprep.mubr.bf16.mxu0 0
    %4373 = vmatmul.mubr.bf16.gmra.mrb[0].mxu0 %v4338
    %v4374 = vpop.f32.mrb[0].mxu0
    %v4375 = vadd.f32 0.0, %v4374
    %v4376 = vpop.f32.mrb[0].mxu0
    %v4377 = vadd.f32 0.0, %v4376
    %v4378 = vpop.f32.mrb[0].mxu0
    %v4379 = vpop.f32.mrb[0].mxu0
    %4380 = vdwg.mxu0
    %4381 = vmatprep.subr.bf16.mxu0 %v4324
    %4382 = vmatpush1.bf16.msra.mxu0 %v4323
    %4383 = vmatprep.subr.bf16.mxu0 0
    %4384 = vmatpush1.bf16.msra.mxu0 0
    %4385 = vmatprep.subr.bf16.mxu0 0
    %4386 = vmatpush1.bf16.msra.mxu0 0
    %4387 = vmatprep.subr.bf16.mxu0 0
    %4388 = vmatpush1.bf16.msra.mxu0 0
    %4389 = vmatprep.subr.bf16.mxu0 0
    %4390 = vmatpush1.bf16.msra.mxu0 0
    %4391 = vmatprep.subr.bf16.mxu0 0
    %4392 = vmatpush1.bf16.msra.mxu0 0
    %4393 = vmatprep.subr.bf16.mxu0 0
    %4394 = vmatpush1.bf16.msra.mxu0 0
    %4395 = vmatprep.subr.bf16.mxu0 0
    %4396 = vmatpush1.bf16.msra.mxu0 0
    %4397 = vmatprep.subr.bf16.mxu0 0
    %4398 = vmatpush1.bf16.msra.mxu0 0
    %4399 = vmatprep.subr.bf16.mxu0 0
    %4400 = vmatpush1.bf16.msra.mxu0 0
    %4401 = vmatprep.subr.bf16.mxu0 0
    %4402 = vmatpush1.bf16.msra.mxu0 0
    %4403 = vmatprep.subr.bf16.mxu0 0
    %4404 = vmatpush1.bf16.msra.mxu0 0
    %4405 = vmatprep.subr.bf16.mxu0 0
    %4406 = vmatpush1.bf16.msra.mxu0 0
    %4407 = vmatprep.subr.bf16.mxu0 0
    %4408 = vmatpush1.bf16.msra.mxu0 0
    %4409 = vmatprep.subr.bf16.mxu0 0
    %4410 = vmatpush1.bf16.msra.mxu0 0
    %4411 = vmatprep.subr.bf16.mxu0 0
    %4412 = vmatpush1.bf16.msra.mxu0 0
    %4413 = vmatprep.mubr.bf16.mxu0 0
    %4414 = vmatmul.mubr.bf16.gmra.mrb[0].mxu0 %v4338
    %v4415 = vpop.f32.mrb[0].mxu0
    %v4416 = vadd.f32 0.0, %v4415
    %v4417 = vpop.f32.mrb[0].mxu0
    %v4418 = vadd.f32 0.0, %v4417
    %v4419 = vpop.f32.mrb[0].mxu0
    %v4420 = vpop.f32.mrb[0].mxu0
    %4421 = vdwg.mxu0
    %4422 = vmatprep.subr.bf16.mxu0 %v4326
    %4423 = vmatpush1.bf16.msra.mxu0 %v4325
    %4424 = vmatprep.subr.bf16.mxu0 0
    %4425 = vmatpush1.bf16.msra.mxu0 0
    %4426 = vmatprep.subr.bf16.mxu0 0
    %4427 = vmatpush1.bf16.msra.mxu0 0
    %4428 = vmatprep.subr.bf16.mxu0 0
    %4429 = vmatpush1.bf16.msra.mxu0 0
    %4430 = vmatprep.subr.bf16.mxu0 0
    %4431 = vmatpush1.bf16.msra.mxu0 0
    %4432 = vmatprep.subr.bf16.mxu0 0
    %4433 = vmatpush1.bf16.msra.mxu0 0
    %4434 = vmatprep.subr.bf16.mxu0 0
    %4435 = vmatpush1.bf16.msra.mxu0 0
    %4436 = vmatprep.subr.bf16.mxu0 0
    %4437 = vmatpush1.bf16.msra.mxu0 0
    %4438 = vmatprep.subr.bf16.mxu0 0
    %4439 = vmatpush1.bf16.msra.mxu0 0
    %4440 = vmatprep.subr.bf16.mxu0 0
    %4441 = vmatpush1.bf16.msra.mxu0 0
    %4442 = vmatprep.subr.bf16.mxu0 0
    %4443 = vmatpush1.bf16.msra.mxu0 0
    %4444 = vmatprep.subr.bf16.mxu0 0
    %4445 = vmatpush1.bf16.msra.mxu0 0
    %4446 = vmatprep.subr.bf16.mxu0 0
    %4447 = vmatpush1.bf16.msra.mxu0 0
    %4448 = vmatprep.subr.bf16.mxu0 0
    %4449 = vmatpush1.bf16.msra.mxu0 0
    %4450 = vmatprep.subr.bf16.mxu0 0
    %4451 = vmatpush1.bf16.msra.mxu0 0
    %4452 = vmatprep.subr.bf16.mxu0 0
    %4453 = vmatpush1.bf16.msra.mxu0 0
    %4454 = vmatprep.mubr.bf16.mxu0 0
    %4455 = vmatmul.mubr.bf16.gmra.mrb[0].mxu0 %v4338
    %v4456 = vpop.f32.mrb[0].mxu0
    %v4457 = vadd.f32 0.0, %v4456
    %v4458 = vpop.f32.mrb[0].mxu0
    %v4459 = vadd.f32 0.0, %v4458
    %v4460 = vpop.f32.mrb[0].mxu0
    %v4461 = vpop.f32.mrb[0].mxu0
    %4462 = vdwg.mxu0
    %4463 = vmatprep.subr.bf16.mxu0 %v4328
    %4464 = vmatpush1.bf16.msra.mxu0 %v4327
    %4465 = vmatprep.subr.bf16.mxu0 0
    %4466 = vmatpush1.bf16.msra.mxu0 0
    %4467 = vmatprep.subr.bf16.mxu0 0
    %4468 = vmatpush1.bf16.msra.mxu0 0
    %4469 = vmatprep.subr.bf16.mxu0 0
    %4470 = vmatpush1.bf16.msra.mxu0 0
    %4471 = vmatprep.subr.bf16.mxu0 0
    %4472 = vmatpush1.bf16.msra.mxu0 0
    %4473 = vmatprep.subr.bf16.mxu0 0
    %4474 = vmatpush1.bf16.msra.mxu0 0
    %4475 = vmatprep.subr.bf16.mxu0 0
    %4476 = vmatpush1.bf16.msra.mxu0 0
    %4477 = vmatprep.subr.bf16.mxu0 0
    %4478 = vmatpush1.bf16.msra.mxu0 0
    %4479 = vmatprep.subr.bf16.mxu0 0
    %4480 = vmatpush1.bf16.msra.mxu0 0
    %4481 = vmatprep.subr.bf16.mxu0 0
    %4482 = vmatpush1.bf16.msra.mxu0 0
    %4483 = vmatprep.subr.bf16.mxu0 0
    %4484 = vmatpush1.bf16.msra.mxu0 0
    %4485 = vmatprep.subr.bf16.mxu0 0
    %4486 = vmatpush1.bf16.msra.mxu0 0
    %4487 = vmatprep.subr.bf16.mxu0 0
    %4488 = vmatpush1.bf16.msra.mxu0 0
    %4489 = vmatprep.subr.bf16.mxu0 0
    %4490 = vmatpush1.bf16.msra.mxu0 0
    %4491 = vmatprep.subr.bf16.mxu0 0
    %4492 = vmatpush1.bf16.msra.mxu0 0
    %4493 = vmatprep.subr.bf16.mxu0 0
    %4494 = vmatpush1.bf16.msra.mxu0 0
    %4495 = vmatprep.mubr.bf16.mxu0 0
    %4496 = vmatmul.mubr.bf16.gmra.mrb[0].mxu0 %v4338
    %v4497 = vpop.f32.mrb[0].mxu0
    %v4498 = vadd.f32 0.0, %v4497
    %v4499 = vpop.f32.mrb[0].mxu0
    %v4500 = vadd.f32 0.0, %v4499
    %v4501 = vpop.f32.mrb[0].mxu0
    %v4502 = vpop.f32.mrb[0].mxu0
    %4503 = vdwg.mxu0
    %v4504 = vadd.f32 %v4275, %v4375
    %v4505 = vadd.f32 %v4276, %v4377
    %v4506 = vadd.f32 %v4277, %v4416
    %v4507 = vadd.f32 %v4278, %v4418
    %v4508 = vadd.f32 %v4279, %v4457
    %v4509 = vadd.f32 %v4280, %v4459
    %v4510 = vadd.f32 %v4281, %v4498
    %v4511 = vadd.f32 %v4282, %v4500
    %s4512 = scalar_lea.vmem [#allocation2], 10
    %v4513 = vld [vmem:[%s4512] ss:$64 sm:$0x1]
    %v4514 = vld [vmem:[%s4512] ss:$64 sm:$0x2]
    %v4515 = vor.u32 %v4513, %v4514
    %v4516 = vpack.c.bf16 %v4515, %v4515
    %s4517 = scalar_lea.vmem [#allocation3], 384
    %v4518 = vld [vmem:[%s4517] sm:$0xff]
    %v4519 = vld [vmem:[%s4517 + $0x8] sm:$0xff]
    %v4520 = vld [vmem:[%s4517 + $0x10] sm:$0xff]
    %v4521 = vld [vmem:[%s4517 + $0x18] sm:$0xff]
    %v4522 = vld [vmem:[%s4517 + $0x20] sm:$0xff]
    %v4523 = vld [vmem:[%s4517 + $0x28] sm:$0xff]
    %v4524 = vld [vmem:[%s4517 + $0x30] sm:$0xff]
    %v4525 = vld [vmem:[%s4517 + $0x38] sm:$0xff]
    %v4534 = vunpack.c.l.b16 %v4518
    %v4535 = vunpack.c.h.b16 %v4518
    %v4536 = vunpack.c.l.b16 %v4519
    %v4537 = vunpack.c.h.b16 %v4519
    %v4538 = vunpack.c.l.b16 %v4520
    %v4539 = vunpack.c.h.b16 %v4520
    %v4540 = vunpack.c.l.b16 %v4521
    %v4541 = vunpack.c.h.b16 %v4521
    %v4542 = vunpack.c.l.b16 %v4522
    %v4543 = vunpack.c.h.b16 %v4522
    %v4544 = vunpack.c.l.b16 %v4523
    %v4545 = vunpack.c.h.b16 %v4523
    %v4546 = vunpack.c.l.b16 %v4524
    %v4547 = vunpack.c.h.b16 %v4524
    %v4548 = vunpack.c.l.b16 %v4525
    %v4549 = vunpack.c.h.b16 %v4525
    %v4550 = vpack.c.b16 %v4542, %v4534
    %v4551 = vpack.c.b16 %v4543, %v4535
    %v4552 = vpack.c.b16 %v4544, %v4536
    %v4553 = vpack.c.b16 %v4545, %v4537
    %v4554 = vpack.c.b16 %v4546, %v4538
    %v4555 = vpack.c.b16 %v4547, %v4539
    %v4556 = vpack.c.b16 %v4548, %v4540
    %v4557 = vpack.c.b16 %v4549, %v4541
    %v4567 = vsel %vm107, %v4516, 0
    %4569 = vmatprep.subr.bf16.mxu0 %v4551
    %4570 = vmatpush1.bf16.msra.mxu0 %v4550
    %4571 = vmatprep.subr.bf16.mxu0 0
    %4572 = vmatpush1.bf16.msra.mxu0 0
    %4573 = vmatprep.subr.bf16.mxu0 0
    %4574 = vmatpush1.bf16.msra.mxu0 0
    %4575 = vmatprep.subr.bf16.mxu0 0
    %4576 = vmatpush1.bf16.msra.mxu0 0
    %4577 = vmatprep.subr.bf16.mxu0 0
    %4578 = vmatpush1.bf16.msra.mxu0 0
    %4579 = vmatprep.subr.bf16.mxu0 0
    %4580 = vmatpush1.bf16.msra.mxu0 0
    %4581 = vmatprep.subr.bf16.mxu0 0
    %4582 = vmatpush1.bf16.msra.mxu0 0
    %4583 = vmatprep.subr.bf16.mxu0 0
    %4584 = vmatpush1.bf16.msra.mxu0 0
    %4585 = vmatprep.subr.bf16.mxu0 0
    %4586 = vmatpush1.bf16.msra.mxu0 0
    %4587 = vmatprep.subr.bf16.mxu0 0
    %4588 = vmatpush1.bf16.msra.mxu0 0
    %4589 = vmatprep.subr.bf16.mxu0 0
    %4590 = vmatpush1.bf16.msra.mxu0 0
    %4591 = vmatprep.subr.bf16.mxu0 0
    %4592 = vmatpush1.bf16.msra.mxu0 0
    %4593 = vmatprep.subr.bf16.mxu0 0
    %4594 = vmatpush1.bf16.msra.mxu0 0
    %4595 = vmatprep.subr.bf16.mxu0 0
    %4596 = vmatpush1.bf16.msra.mxu0 0
    %4597 = vmatprep.subr.bf16.mxu0 0
    %4598 = vmatpush1.bf16.msra.mxu0 0
    %4599 = vmatprep.subr.bf16.mxu0 0
    %4600 = vmatpush1.bf16.msra.mxu0 0
    %4601 = vmatprep.mubr.bf16.mxu0 0
    %4602 = vmatmul.mubr.bf16.gmra.mrb[0].mxu0 %v4567
    %v4603 = vpop.f32.mrb[0].mxu0
    %v4604 = vadd.f32 0.0, %v4603
    %v4605 = vpop.f32.mrb[0].mxu0
    %v4606 = vadd.f32 0.0, %v4605
    %v4607 = vpop.f32.mrb[0].mxu0
    %v4608 = vpop.f32.mrb[0].mxu0
    %4609 = vdwg.mxu0
    %4610 = vmatprep.subr.bf16.mxu0 %v4553
    %4611 = vmatpush1.bf16.msra.mxu0 %v4552
    %4612 = vmatprep.subr.bf16.mxu0 0
    %4613 = vmatpush1.bf16.msra.mxu0 0
    %4614 = vmatprep.subr.bf16.mxu0 0
    %4615 = vmatpush1.bf16.msra.mxu0 0
    %4616 = vmatprep.subr.bf16.mxu0 0
    %4617 = vmatpush1.bf16.msra.mxu0 0
    %4618 = vmatprep.subr.bf16.mxu0 0
    %4619 = vmatpush1.bf16.msra.mxu0 0
    %4620 = vmatprep.subr.bf16.mxu0 0
    %4621 = vmatpush1.bf16.msra.mxu0 0
    %4622 = vmatprep.subr.bf16.mxu0 0
    %4623 = vmatpush1.bf16.msra.mxu0 0
    %4624 = vmatprep.subr.bf16.mxu0 0
    %4625 = vmatpush1.bf16.msra.mxu0 0
    %4626 = vmatprep.subr.bf16.mxu0 0
    %4627 = vmatpush1.bf16.msra.mxu0 0
    %4628 = vmatprep.subr.bf16.mxu0 0
    %4629 = vmatpush1.bf16.msra.mxu0 0
    %4630 = vmatprep.subr.bf16.mxu0 0
    %4631 = vmatpush1.bf16.msra.mxu0 0
    %4632 = vmatprep.subr.bf16.mxu0 0
    %4633 = vmatpush1.bf16.msra.mxu0 0
    %4634 = vmatprep.subr.bf16.mxu0 0
    %4635 = vmatpush1.bf16.msra.mxu0 0
    %4636 = vmatprep.subr.bf16.mxu0 0
    %4637 = vmatpush1.bf16.msra.mxu0 0
    %4638 = vmatprep.subr.bf16.mxu0 0
    %4639 = vmatpush1.bf16.msra.mxu0 0
    %4640 = vmatprep.subr.bf16.mxu0 0
    %4641 = vmatpush1.bf16.msra.mxu0 0
    %4642 = vmatprep.mubr.bf16.mxu0 0
    %4643 = vmatmul.mubr.bf16.gmra.mrb[0].mxu0 %v4567
    %v4644 = vpop.f32.mrb[0].mxu0
    %v4645 = vadd.f32 0.0, %v4644
    %v4646 = vpop.f32.mrb[0].mxu0
    %v4647 = vadd.f32 0.0, %v4646
    %v4648 = vpop.f32.mrb[0].mxu0
    %v4649 = vpop.f32.mrb[0].mxu0
    %4650 = vdwg.mxu0
    %4651 = vmatprep.subr.bf16.mxu0 %v4555
    %4652 = vmatpush1.bf16.msra.mxu0 %v4554
    %4653 = vmatprep.subr.bf16.mxu0 0
    %4654 = vmatpush1.bf16.msra.mxu0 0
    %4655 = vmatprep.subr.bf16.mxu0 0
    %4656 = vmatpush1.bf16.msra.mxu0 0
    %4657 = vmatprep.subr.bf16.mxu0 0
    %4658 = vmatpush1.bf16.msra.mxu0 0
    %4659 = vmatprep.subr.bf16.mxu0 0
    %4660 = vmatpush1.bf16.msra.mxu0 0
    %4661 = vmatprep.subr.bf16.mxu0 0
    %4662 = vmatpush1.bf16.msra.mxu0 0
    %4663 = vmatprep.subr.bf16.mxu0 0
    %4664 = vmatpush1.bf16.msra.mxu0 0
    %4665 = vmatprep.subr.bf16.mxu0 0
    %4666 = vmatpush1.bf16.msra.mxu0 0
    %4667 = vmatprep.subr.bf16.mxu0 0
    %4668 = vmatpush1.bf16.msra.mxu0 0
    %4669 = vmatprep.subr.bf16.mxu0 0
    %4670 = vmatpush1.bf16.msra.mxu0 0
    %4671 = vmatprep.subr.bf16.mxu0 0
    %4672 = vmatpush1.bf16.msra.mxu0 0
    %4673 = vmatprep.subr.bf16.mxu0 0
    %4674 = vmatpush1.bf16.msra.mxu0 0
    %4675 = vmatprep.subr.bf16.mxu0 0
    %4676 = vmatpush1.bf16.msra.mxu0 0
    %4677 = vmatprep.subr.bf16.mxu0 0
    %4678 = vmatpush1.bf16.msra.mxu0 0
    %4679 = vmatprep.subr.bf16.mxu0 0
    %4680 = vmatpush1.bf16.msra.mxu0 0
    %4681 = vmatprep.subr.bf16.mxu0 0
    %4682 = vmatpush1.bf16.msra.mxu0 0
    %4683 = vmatprep.mubr.bf16.mxu0 0
    %4684 = vmatmul.mubr.bf16.gmra.mrb[0].mxu0 %v4567
    %v4685 = vpop.f32.mrb[0].mxu0
    %v4686 = vadd.f32 0.0, %v4685
    %v4687 = vpop.f32.mrb[0].mxu0
    %v4688 = vadd.f32 0.0, %v4687
    %v4689 = vpop.f32.mrb[0].mxu0
    %v4690 = vpop.f32.mrb[0].mxu0
    %4691 = vdwg.mxu0
    %4692 = vmatprep.subr.bf16.mxu0 %v4557
    %4693 = vmatpush1.bf16.msra.mxu0 %v4556
    %4694 = vmatprep.subr.bf16.mxu0 0
    %4695 = vmatpush1.bf16.msra.mxu0 0
    %4696 = vmatprep.subr.bf16.mxu0 0
    %4697 = vmatpush1.bf16.msra.mxu0 0
    %4698 = vmatprep.subr.bf16.mxu0 0
    %4699 = vmatpush1.bf16.msra.mxu0 0
    %4700 = vmatprep.subr.bf16.mxu0 0
    %4701 = vmatpush1.bf16.msra.mxu0 0
    %4702 = vmatprep.subr.bf16.mxu0 0
    %4703 = vmatpush1.bf16.msra.mxu0 0
    %4704 = vmatprep.subr.bf16.mxu0 0
    %4705 = vmatpush1.bf16.msra.mxu0 0
    %4706 = vmatprep.subr.bf16.mxu0 0
    %4707 = vmatpush1.bf16.msra.mxu0 0
    %4708 = vmatprep.subr.bf16.mxu0 0
    %4709 = vmatpush1.bf16.msra.mxu0 0
    %4710 = vmatprep.subr.bf16.mxu0 0
    %4711 = vmatpush1.bf16.msra.mxu0 0
    %4712 = vmatprep.subr.bf16.mxu0 0
    %4713 = vmatpush1.bf16.msra.mxu0 0
    %4714 = vmatprep.subr.bf16.mxu0 0
    %4715 = vmatpush1.bf16.msra.mxu0 0
    %4716 = vmatprep.subr.bf16.mxu0 0
    %4717 = vmatpush1.bf16.msra.mxu0 0
    %4718 = vmatprep.subr.bf16.mxu0 0
    %4719 = vmatpush1.bf16.msra.mxu0 0
    %4720 = vmatprep.subr.bf16.mxu0 0
    %4721 = vmatpush1.bf16.msra.mxu0 0
    %4722 = vmatprep.subr.bf16.mxu0 0
    %4723 = vmatpush1.bf16.msra.mxu0 0
    %4724 = vmatprep.mubr.bf16.mxu0 0
    %4725 = vmatmul.mubr.bf16.gmra.mrb[0].mxu0 %v4567
    %v4726 = vpop.f32.mrb[0].mxu0
    %v4727 = vadd.f32 0.0, %v4726
    %v4728 = vpop.f32.mrb[0].mxu0
    %v4729 = vadd.f32 0.0, %v4728
    %v4730 = vpop.f32.mrb[0].mxu0
    %v4731 = vpop.f32.mrb[0].mxu0
    %4732 = vdwg.mxu0
    %v4733 = vadd.f32 %v4504, %v4604
    %v4734 = vadd.f32 %v4505, %v4606
    %v4735 = vadd.f32 %v4506, %v4645
    %v4736 = vadd.f32 %v4507, %v4647
    %v4737 = vadd.f32 %v4508, %v4686
    %v4738 = vadd.f32 %v4509, %v4688
    %v4739 = vadd.f32 %v4510, %v4727
    %v4740 = vadd.f32 %v4511, %v4729
    %s4741 = scalar_lea.vmem [#allocation2], 11
    %v4742 = vld [vmem:[%s4741] ss:$64 sm:$0x1]
    %v4743 = vld [vmem:[%s4741] ss:$64 sm:$0x2]
    %v4744 = vor.u32 %v4742, %v4743
    %v4745 = vpack.c.bf16 %v4744, %v4744
    %s4746 = scalar_lea.vmem [#allocation3], 448
    %v4747 = vld [vmem:[%s4746] sm:$0xff]
    %v4748 = vld [vmem:[%s4746 + $0x8] sm:$0xff]
    %v4749 = vld [vmem:[%s4746 + $0x10] sm:$0xff]
    %v4750 = vld [vmem:[%s4746 + $0x18] sm:$0xff]
    %v4751 = vld [vmem:[%s4746 + $0x20] sm:$0xff]
    %v4752 = vld [vmem:[%s4746 + $0x28] sm:$0xff]
    %v4753 = vld [vmem:[%s4746 + $0x30] sm:$0xff]
    %v4754 = vld [vmem:[%s4746 + $0x38] sm:$0xff]
    %v4763 = vunpack.c.l.b16 %v4747
    %v4764 = vunpack.c.h.b16 %v4747
    %v4765 = vunpack.c.l.b16 %v4748
    %v4766 = vunpack.c.h.b16 %v4748
    %v4767 = vunpack.c.l.b16 %v4749
    %v4768 = vunpack.c.h.b16 %v4749
    %v4769 = vunpack.c.l.b16 %v4750
    %v4770 = vunpack.c.h.b16 %v4750
    %v4771 = vunpack.c.l.b16 %v4751
    %v4772 = vunpack.c.h.b16 %v4751
    %v4773 = vunpack.c.l.b16 %v4752
    %v4774 = vunpack.c.h.b16 %v4752
    %v4775 = vunpack.c.l.b16 %v4753
    %v4776 = vunpack.c.h.b16 %v4753
    %v4777 = vunpack.c.l.b16 %v4754
    %v4778 = vunpack.c.h.b16 %v4754
    %v4779 = vpack.c.b16 %v4771, %v4763
    %v4780 = vpack.c.b16 %v4772, %v4764
    %v4781 = vpack.c.b16 %v4773, %v4765
    %v4782 = vpack.c.b16 %v4774, %v4766
    %v4783 = vpack.c.b16 %v4775, %v4767
    %v4784 = vpack.c.b16 %v4776, %v4768
    %v4785 = vpack.c.b16 %v4777, %v4769
    %v4786 = vpack.c.b16 %v4778, %v4770
    %v4796 = vsel %vm107, %v4745, 0
    %4798 = vmatprep.subr.bf16.mxu0 %v4780
    %4799 = vmatpush1.bf16.msra.mxu0 %v4779
    %4800 = vmatprep.subr.bf16.mxu0 0
    %4801 = vmatpush1.bf16.msra.mxu0 0
    %4802 = vmatprep.subr.bf16.mxu0 0
    %4803 = vmatpush1.bf16.msra.mxu0 0
    %4804 = vmatprep.subr.bf16.mxu0 0
    %4805 = vmatpush1.bf16.msra.mxu0 0
    %4806 = vmatprep.subr.bf16.mxu0 0
    %4807 = vmatpush1.bf16.msra.mxu0 0
    %4808 = vmatprep.subr.bf16.mxu0 0
    %4809 = vmatpush1.bf16.msra.mxu0 0
    %4810 = vmatprep.subr.bf16.mxu0 0
    %4811 = vmatpush1.bf16.msra.mxu0 0
    %4812 = vmatprep.subr.bf16.mxu0 0
    %4813 = vmatpush1.bf16.msra.mxu0 0
    %4814 = vmatprep.subr.bf16.mxu0 0
    %4815 = vmatpush1.bf16.msra.mxu0 0
    %4816 = vmatprep.subr.bf16.mxu0 0
    %4817 = vmatpush1.bf16.msra.mxu0 0
    %4818 = vmatprep.subr.bf16.mxu0 0
    %4819 = vmatpush1.bf16.msra.mxu0 0
    %4820 = vmatprep.subr.bf16.mxu0 0
    %4821 = vmatpush1.bf16.msra.mxu0 0
    %4822 = vmatprep.subr.bf16.mxu0 0
    %4823 = vmatpush1.bf16.msra.mxu0 0
    %4824 = vmatprep.subr.bf16.mxu0 0
    %4825 = vmatpush1.bf16.msra.mxu0 0
    %4826 = vmatprep.subr.bf16.mxu0 0
    %4827 = vmatpush1.bf16.msra.mxu0 0
    %4828 = vmatprep.subr.bf16.mxu0 0
    %4829 = vmatpush1.bf16.msra.mxu0 0
    %4830 = vmatprep.mubr.bf16.mxu0 0
    %4831 = vmatmul.mubr.bf16.gmra.mrb[0].mxu0 %v4796
    %v4832 = vpop.f32.mrb[0].mxu0
    %v4833 = vadd.f32 0.0, %v4832
    %v4834 = vpop.f32.mrb[0].mxu0
    %v4835 = vadd.f32 0.0, %v4834
    %v4836 = vpop.f32.mrb[0].mxu0
    %v4837 = vpop.f32.mrb[0].mxu0
    %4838 = vdwg.mxu0
    %4839 = vmatprep.subr.bf16.mxu0 %v4782
    %4840 = vmatpush1.bf16.msra.mxu0 %v4781
    %4841 = vmatprep.subr.bf16.mxu0 0
    %4842 = vmatpush1.bf16.msra.mxu0 0
    %4843 = vmatprep.subr.bf16.mxu0 0
    %4844 = vmatpush1.bf16.msra.mxu0 0
    %4845 = vmatprep.subr.bf16.mxu0 0
    %4846 = vmatpush1.bf16.msra.mxu0 0
    %4847 = vmatprep.subr.bf16.mxu0 0
    %4848 = vmatpush1.bf16.msra.mxu0 0
    %4849 = vmatprep.subr.bf16.mxu0 0
    %4850 = vmatpush1.bf16.msra.mxu0 0
    %4851 = vmatprep.subr.bf16.mxu0 0
    %4852 = vmatpush1.bf16.msra.mxu0 0
    %4853 = vmatprep.subr.bf16.mxu0 0
    %4854 = vmatpush1.bf16.msra.mxu0 0
    %4855 = vmatprep.subr.bf16.mxu0 0
    %4856 = vmatpush1.bf16.msra.mxu0 0
    %4857 = vmatprep.subr.bf16.mxu0 0
    %4858 = vmatpush1.bf16.msra.mxu0 0
    %4859 = vmatprep.subr.bf16.mxu0 0
    %4860 = vmatpush1.bf16.msra.mxu0 0
    %4861 = vmatprep.subr.bf16.mxu0 0
    %4862 = vmatpush1.bf16.msra.mxu0 0
    %4863 = vmatprep.subr.bf16.mxu0 0
    %4864 = vmatpush1.bf16.msra.mxu0 0
    %4865 = vmatprep.subr.bf16.mxu0 0
    %4866 = vmatpush1.bf16.msra.mxu0 0
    %4867 = vmatprep.subr.bf16.mxu0 0
    %4868 = vmatpush1.bf16.msra.mxu0 0
    %4869 = vmatprep.subr.bf16.mxu0 0
    %4870 = vmatpush1.bf16.msra.mxu0 0
    %4871 = vmatprep.mubr.bf16.mxu0 0
    %4872 = vmatmul.mubr.bf16.gmra.mrb[0].mxu0 %v4796
    %v4873 = vpop.f32.mrb[0].mxu0
    %v4874 = vadd.f32 0.0, %v4873
    %v4875 = vpop.f32.mrb[0].mxu0
    %v4876 = vadd.f32 0.0, %v4875
    %v4877 = vpop.f32.mrb[0].mxu0
    %v4878 = vpop.f32.mrb[0].mxu0
    %4879 = vdwg.mxu0
    %4880 = vmatprep.subr.bf16.mxu0 %v4784
    %4881 = vmatpush1.bf16.msra.mxu0 %v4783
    %4882 = vmatprep.subr.bf16.mxu0 0
    %4883 = vmatpush1.bf16.msra.mxu0 0
    %4884 = vmatprep.subr.bf16.mxu0 0
    %4885 = vmatpush1.bf16.msra.mxu0 0
    %4886 = vmatprep.subr.bf16.mxu0 0
    %4887 = vmatpush1.bf16.msra.mxu0 0
    %4888 = vmatprep.subr.bf16.mxu0 0
    %4889 = vmatpush1.bf16.msra.mxu0 0
    %4890 = vmatprep.subr.bf16.mxu0 0
    %4891 = vmatpush1.bf16.msra.mxu0 0
    %4892 = vmatprep.subr.bf16.mxu0 0
    %4893 = vmatpush1.bf16.msra.mxu0 0
    %4894 = vmatprep.subr.bf16.mxu0 0
    %4895 = vmatpush1.bf16.msra.mxu0 0
    %4896 = vmatprep.subr.bf16.mxu0 0
    %4897 = vmatpush1.bf16.msra.mxu0 0
    %4898 = vmatprep.subr.bf16.mxu0 0
    %4899 = vmatpush1.bf16.msra.mxu0 0
    %4900 = vmatprep.subr.bf16.mxu0 0
    %4901 = vmatpush1.bf16.msra.mxu0 0
    %4902 = vmatprep.subr.bf16.mxu0 0
    %4903 = vmatpush1.bf16.msra.mxu0 0
    %4904 = vmatprep.subr.bf16.mxu0 0
    %4905 = vmatpush1.bf16.msra.mxu0 0
    %4906 = vmatprep.subr.bf16.mxu0 0
    %4907 = vmatpush1.bf16.msra.mxu0 0
    %4908 = vmatprep.subr.bf16.mxu0 0
    %4909 = vmatpush1.bf16.msra.mxu0 0
    %4910 = vmatprep.subr.bf16.mxu0 0
    %4911 = vmatpush1.bf16.msra.mxu0 0
    %4912 = vmatprep.mubr.bf16.mxu0 0
    %4913 = vmatmul.mubr.bf16.gmra.mrb[0].mxu0 %v4796
    %v4914 = vpop.f32.mrb[0].mxu0
    %v4915 = vadd.f32 0.0, %v4914
    %v4916 = vpop.f32.mrb[0].mxu0
    %v4917 = vadd.f32 0.0, %v4916
    %v4918 = vpop.f32.mrb[0].mxu0
    %v4919 = vpop.f32.mrb[0].mxu0
    %4920 = vdwg.mxu0
    %4921 = vmatprep.subr.bf16.mxu0 %v4786
    %4922 = vmatpush1.bf16.msra.mxu0 %v4785
    %4923 = vmatprep.subr.bf16.mxu0 0
    %4924 = vmatpush1.bf16.msra.mxu0 0
    %4925 = vmatprep.subr.bf16.mxu0 0
    %4926 = vmatpush1.bf16.msra.mxu0 0
    %4927 = vmatprep.subr.bf16.mxu0 0
    %4928 = vmatpush1.bf16.msra.mxu0 0
    %4929 = vmatprep.subr.bf16.mxu0 0
    %4930 = vmatpush1.bf16.msra.mxu0 0
    %4931 = vmatprep.subr.bf16.mxu0 0
    %4932 = vmatpush1.bf16.msra.mxu0 0
    %4933 = vmatprep.subr.bf16.mxu0 0
    %4934 = vmatpush1.bf16.msra.mxu0 0
    %4935 = vmatprep.subr.bf16.mxu0 0
    %4936 = vmatpush1.bf16.msra.mxu0 0
    %4937 = vmatprep.subr.bf16.mxu0 0
    %4938 = vmatpush1.bf16.msra.mxu0 0
    %4939 = vmatprep.subr.bf16.mxu0 0
    %4940 = vmatpush1.bf16.msra.mxu0 0
    %4941 = vmatprep.subr.bf16.mxu0 0
    %4942 = vmatpush1.bf16.msra.mxu0 0
    %4943 = vmatprep.subr.bf16.mxu0 0
    %4944 = vmatpush1.bf16.msra.mxu0 0
    %4945 = vmatprep.subr.bf16.mxu0 0
    %4946 = vmatpush1.bf16.msra.mxu0 0
    %4947 = vmatprep.subr.bf16.mxu0 0
    %4948 = vmatpush1.bf16.msra.mxu0 0
    %4949 = vmatprep.subr.bf16.mxu0 0
    %4950 = vmatpush1.bf16.msra.mxu0 0
    %4951 = vmatprep.subr.bf16.mxu0 0
    %4952 = vmatpush1.bf16.msra.mxu0 0
    %4953 = vmatprep.mubr.bf16.mxu0 0
    %4954 = vmatmul.mubr.bf16.gmra.mrb[0].mxu0 %v4796
    %v4955 = vpop.f32.mrb[0].mxu0
    %v4956 = vadd.f32 0.0, %v4955
    %v4957 = vpop.f32.mrb[0].mxu0
    %v4958 = vadd.f32 0.0, %v4957
    %v4959 = vpop.f32.mrb[0].mxu0
    %v4960 = vpop.f32.mrb[0].mxu0
    %4961 = vdwg.mxu0
    %v4962 = vadd.f32 %v4733, %v4833
    %v4963 = vadd.f32 %v4734, %v4835
    %v4964 = vadd.f32 %v4735, %v4874
    %v4965 = vadd.f32 %v4736, %v4876
    %v4966 = vadd.f32 %v4737, %v4915
    %v4967 = vadd.f32 %v4738, %v4917
    %v4968 = vadd.f32 %v4739, %v4956
    %v4969 = vadd.f32 %v4740, %v4958
    %s4970 = scalar_lea.vmem [#allocation2], 16
    %v4971 = vld [vmem:[%s4970] ss:$64 sm:$0x1]
    %v4972 = vld [vmem:[%s4970] ss:$64 sm:$0x2]
    %v4973 = vor.u32 %v4971, %v4972
    %v4974 = vpack.c.bf16 %v4973, %v4973
    %s4975 = scalar_lea.vmem [#allocation3], 512
    %v4976 = vld [vmem:[%s4975] sm:$0xff]
    %v4977 = vld [vmem:[%s4975 + $0x8] sm:$0xff]
    %v4978 = vld [vmem:[%s4975 + $0x10] sm:$0xff]
    %v4979 = vld [vmem:[%s4975 + $0x18] sm:$0xff]
    %v4980 = vld [vmem:[%s4975 + $0x20] sm:$0xff]
    %v4981 = vld [vmem:[%s4975 + $0x28] sm:$0xff]
    %v4982 = vld [vmem:[%s4975 + $0x30] sm:$0xff]
    %v4983 = vld [vmem:[%s4975 + $0x38] sm:$0xff]
    %v4992 = vunpack.c.l.b16 %v4976
    %v4993 = vunpack.c.h.b16 %v4976
    %v4994 = vunpack.c.l.b16 %v4977
    %v4995 = vunpack.c.h.b16 %v4977
    %v4996 = vunpack.c.l.b16 %v4978
    %v4997 = vunpack.c.h.b16 %v4978
    %v4998 = vunpack.c.l.b16 %v4979
    %v4999 = vunpack.c.h.b16 %v4979
    %v5000 = vunpack.c.l.b16 %v4980
    %v5001 = vunpack.c.h.b16 %v4980
    %v5002 = vunpack.c.l.b16 %v4981
    %v5003 = vunpack.c.h.b16 %v4981
    %v5004 = vunpack.c.l.b16 %v4982
    %v5005 = vunpack.c.h.b16 %v4982
    %v5006 = vunpack.c.l.b16 %v4983
    %v5007 = vunpack.c.h.b16 %v4983
    %v5008 = vpack.c.b16 %v5000, %v4992
    %v5009 = vpack.c.b16 %v5001, %v4993
    %v5010 = vpack.c.b16 %v5002, %v4994
    %v5011 = vpack.c.b16 %v5003, %v4995
    %v5012 = vpack.c.b16 %v5004, %v4996
    %v5013 = vpack.c.b16 %v5005, %v4997
    %v5014 = vpack.c.b16 %v5006, %v4998
    %v5015 = vpack.c.b16 %v5007, %v4999
    %v5025 = vsel %vm107, %v4974, 0
    %5027 = vmatprep.subr.bf16.mxu0 %v5009
    %5028 = vmatpush1.bf16.msra.mxu0 %v5008
    %5029 = vmatprep.subr.bf16.mxu0 0
    %5030 = vmatpush1.bf16.msra.mxu0 0
    %5031 = vmatprep.subr.bf16.mxu0 0
    %5032 = vmatpush1.bf16.msra.mxu0 0
    %5033 = vmatprep.subr.bf16.mxu0 0
    %5034 = vmatpush1.bf16.msra.mxu0 0
    %5035 = vmatprep.subr.bf16.mxu0 0
    %5036 = vmatpush1.bf16.msra.mxu0 0
    %5037 = vmatprep.subr.bf16.mxu0 0
    %5038 = vmatpush1.bf16.msra.mxu0 0
    %5039 = vmatprep.subr.bf16.mxu0 0
    %5040 = vmatpush1.bf16.msra.mxu0 0
    %5041 = vmatprep.subr.bf16.mxu0 0
    %5042 = vmatpush1.bf16.msra.mxu0 0
    %5043 = vmatprep.subr.bf16.mxu0 0
    %5044 = vmatpush1.bf16.msra.mxu0 0
    %5045 = vmatprep.subr.bf16.mxu0 0
    %5046 = vmatpush1.bf16.msra.mxu0 0
    %5047 = vmatprep.subr.bf16.mxu0 0
    %5048 = vmatpush1.bf16.msra.mxu0 0
    %5049 = vmatprep.subr.bf16.mxu0 0
    %5050 = vmatpush1.bf16.msra.mxu0 0
    %5051 = vmatprep.subr.bf16.mxu0 0
    %5052 = vmatpush1.bf16.msra.mxu0 0
    %5053 = vmatprep.subr.bf16.mxu0 0
    %5054 = vmatpush1.bf16.msra.mxu0 0
    %5055 = vmatprep.subr.bf16.mxu0 0
    %5056 = vmatpush1.bf16.msra.mxu0 0
    %5057 = vmatprep.subr.bf16.mxu0 0
    %5058 = vmatpush1.bf16.msra.mxu0 0
    %5059 = vmatprep.mubr.bf16.mxu0 0
    %5060 = vmatmul.mubr.bf16.gmra.mrb[0].mxu0 %v5025
    %v5061 = vpop.f32.mrb[0].mxu0
    %v5062 = vadd.f32 0.0, %v5061
    %v5063 = vpop.f32.mrb[0].mxu0
    %v5064 = vadd.f32 0.0, %v5063
    %v5065 = vpop.f32.mrb[0].mxu0
    %v5066 = vpop.f32.mrb[0].mxu0
    %5067 = vdwg.mxu0
    %5068 = vmatprep.subr.bf16.mxu0 %v5011
    %5069 = vmatpush1.bf16.msra.mxu0 %v5010
    %5070 = vmatprep.subr.bf16.mxu0 0
    %5071 = vmatpush1.bf16.msra.mxu0 0
    %5072 = vmatprep.subr.bf16.mxu0 0
    %5073 = vmatpush1.bf16.msra.mxu0 0
    %5074 = vmatprep.subr.bf16.mxu0 0
    %5075 = vmatpush1.bf16.msra.mxu0 0
    %5076 = vmatprep.subr.bf16.mxu0 0
    %5077 = vmatpush1.bf16.msra.mxu0 0
    %5078 = vmatprep.subr.bf16.mxu0 0
    %5079 = vmatpush1.bf16.msra.mxu0 0
    %5080 = vmatprep.subr.bf16.mxu0 0
    %5081 = vmatpush1.bf16.msra.mxu0 0
    %5082 = vmatprep.subr.bf16.mxu0 0
    %5083 = vmatpush1.bf16.msra.mxu0 0
    %5084 = vmatprep.subr.bf16.mxu0 0
    %5085 = vmatpush1.bf16.msra.mxu0 0
    %5086 = vmatprep.subr.bf16.mxu0 0
    %5087 = vmatpush1.bf16.msra.mxu0 0
    %5088 = vmatprep.subr.bf16.mxu0 0
    %5089 = vmatpush1.bf16.msra.mxu0 0
    %5090 = vmatprep.subr.bf16.mxu0 0
    %5091 = vmatpush1.bf16.msra.mxu0 0
    %5092 = vmatprep.subr.bf16.mxu0 0
    %5093 = vmatpush1.bf16.msra.mxu0 0
    %5094 = vmatprep.subr.bf16.mxu0 0
    %5095 = vmatpush1.bf16.msra.mxu0 0
    %5096 = vmatprep.subr.bf16.mxu0 0
    %5097 = vmatpush1.bf16.msra.mxu0 0
    %5098 = vmatprep.subr.bf16.mxu0 0
    %5099 = vmatpush1.bf16.msra.mxu0 0
    %5100 = vmatprep.mubr.bf16.mxu0 0
    %5101 = vmatmul.mubr.bf16.gmra.mrb[0].mxu0 %v5025
    %v5102 = vpop.f32.mrb[0].mxu0
    %v5103 = vadd.f32 0.0, %v5102
    %v5104 = vpop.f32.mrb[0].mxu0
    %v5105 = vadd.f32 0.0, %v5104
    %v5106 = vpop.f32.mrb[0].mxu0
    %v5107 = vpop.f32.mrb[0].mxu0
    %5108 = vdwg.mxu0
    %5109 = vmatprep.subr.bf16.mxu0 %v5013
    %5110 = vmatpush1.bf16.msra.mxu0 %v5012
    %5111 = vmatprep.subr.bf16.mxu0 0
    %5112 = vmatpush1.bf16.msra.mxu0 0
    %5113 = vmatprep.subr.bf16.mxu0 0
    %5114 = vmatpush1.bf16.msra.mxu0 0
    %5115 = vmatprep.subr.bf16.mxu0 0
    %5116 = vmatpush1.bf16.msra.mxu0 0
    %5117 = vmatprep.subr.bf16.mxu0 0
    %5118 = vmatpush1.bf16.msra.mxu0 0
    %5119 = vmatprep.subr.bf16.mxu0 0
    %5120 = vmatpush1.bf16.msra.mxu0 0
    %5121 = vmatprep.subr.bf16.mxu0 0
    %5122 = vmatpush1.bf16.msra.mxu0 0
    %5123 = vmatprep.subr.bf16.mxu0 0
    %5124 = vmatpush1.bf16.msra.mxu0 0
    %5125 = vmatprep.subr.bf16.mxu0 0
    %5126 = vmatpush1.bf16.msra.mxu0 0
    %5127 = vmatprep.subr.bf16.mxu0 0
    %5128 = vmatpush1.bf16.msra.mxu0 0
    %5129 = vmatprep.subr.bf16.mxu0 0
    %5130 = vmatpush1.bf16.msra.mxu0 0
    %5131 = vmatprep.subr.bf16.mxu0 0
    %5132 = vmatpush1.bf16.msra.mxu0 0
    %5133 = vmatprep.subr.bf16.mxu0 0
    %5134 = vmatpush1.bf16.msra.mxu0 0
    %5135 = vmatprep.subr.bf16.mxu0 0
    %5136 = vmatpush1.bf16.msra.mxu0 0
    %5137 = vmatprep.subr.bf16.mxu0 0
    %5138 = vmatpush1.bf16.msra.mxu0 0
    %5139 = vmatprep.subr.bf16.mxu0 0
    %5140 = vmatpush1.bf16.msra.mxu0 0
    %5141 = vmatprep.mubr.bf16.mxu0 0
    %5142 = vmatmul.mubr.bf16.gmra.mrb[0].mxu0 %v5025
    %v5143 = vpop.f32.mrb[0].mxu0
    %v5144 = vadd.f32 0.0, %v5143
    %v5145 = vpop.f32.mrb[0].mxu0
    %v5146 = vadd.f32 0.0, %v5145
    %v5147 = vpop.f32.mrb[0].mxu0
    %v5148 = vpop.f32.mrb[0].mxu0
    %5149 = vdwg.mxu0
    %5150 = vmatprep.subr.bf16.mxu0 %v5015
    %5151 = vmatpush1.bf16.msra.mxu0 %v5014
    %5152 = vmatprep.subr.bf16.mxu0 0
    %5153 = vmatpush1.bf16.msra.mxu0 0
    %5154 = vmatprep.subr.bf16.mxu0 0
    %5155 = vmatpush1.bf16.msra.mxu0 0
    %5156 = vmatprep.subr.bf16.mxu0 0
    %5157 = vmatpush1.bf16.msra.mxu0 0
    %5158 = vmatprep.subr.bf16.mxu0 0
    %5159 = vmatpush1.bf16.msra.mxu0 0
    %5160 = vmatprep.subr.bf16.mxu0 0
    %5161 = vmatpush1.bf16.msra.mxu0 0
    %5162 = vmatprep.subr.bf16.mxu0 0
    %5163 = vmatpush1.bf16.msra.mxu0 0
    %5164 = vmatprep.subr.bf16.mxu0 0
    %5165 = vmatpush1.bf16.msra.mxu0 0
    %5166 = vmatprep.subr.bf16.mxu0 0
    %5167 = vmatpush1.bf16.msra.mxu0 0
    %5168 = vmatprep.subr.bf16.mxu0 0
    %5169 = vmatpush1.bf16.msra.mxu0 0
    %5170 = vmatprep.subr.bf16.mxu0 0
    %5171 = vmatpush1.bf16.msra.mxu0 0
    %5172 = vmatprep.subr.bf16.mxu0 0
    %5173 = vmatpush1.bf16.msra.mxu0 0
    %5174 = vmatprep.subr.bf16.mxu0 0
    %5175 = vmatpush1.bf16.msra.mxu0 0
    %5176 = vmatprep.subr.bf16.mxu0 0
    %5177 = vmatpush1.bf16.msra.mxu0 0
    %5178 = vmatprep.subr.bf16.mxu0 0
    %5179 = vmatpush1.bf16.msra.mxu0 0
    %5180 = vmatprep.subr.bf16.mxu0 0
    %5181 = vmatpush1.bf16.msra.mxu0 0
    %5182 = vmatprep.mubr.bf16.mxu0 0
    %5183 = vmatmul.mubr.bf16.gmra.mrb[0].mxu0 %v5025
    %v5184 = vpop.f32.mrb[0].mxu0
    %v5185 = vadd.f32 0.0, %v5184
    %v5186 = vpop.f32.mrb[0].mxu0
    %v5187 = vadd.f32 0.0, %v5186
    %v5188 = vpop.f32.mrb[0].mxu0
    %v5189 = vpop.f32.mrb[0].mxu0
    %5190 = vdwg.mxu0
    %v5191 = vadd.f32 %v4962, %v5062
    %v5192 = vadd.f32 %v4963, %v5064
    %v5193 = vadd.f32 %v4964, %v5103
    %v5194 = vadd.f32 %v4965, %v5105
    %v5195 = vadd.f32 %v4966, %v5144
    %v5196 = vadd.f32 %v4967, %v5146
    %v5197 = vadd.f32 %v4968, %v5185
    %v5198 = vadd.f32 %v4969, %v5187
    %s5199 = scalar_lea.vmem [#allocation2], 17
    %v5200 = vld [vmem:[%s5199] ss:$64 sm:$0x1]
    %v5201 = vld [vmem:[%s5199] ss:$64 sm:$0x2]
    %v5202 = vor.u32 %v5200, %v5201
    %v5203 = vpack.c.bf16 %v5202, %v5202
    %s5204 = scalar_lea.vmem [#allocation3], 576
    %v5205 = vld [vmem:[%s5204] sm:$0xff]
    %v5206 = vld [vmem:[%s5204 + $0x8] sm:$0xff]
    %v5207 = vld [vmem:[%s5204 + $0x10] sm:$0xff]
    %v5208 = vld [vmem:[%s5204 + $0x18] sm:$0xff]
    %v5209 = vld [vmem:[%s5204 + $0x20] sm:$0xff]
    %v5210 = vld [vmem:[%s5204 + $0x28] sm:$0xff]
    %v5211 = vld [vmem:[%s5204 + $0x30] sm:$0xff]
    %v5212 = vld [vmem:[%s5204 + $0x38] sm:$0xff]
    %v5221 = vunpack.c.l.b16 %v5205
    %v5222 = vunpack.c.h.b16 %v5205
    %v5223 = vunpack.c.l.b16 %v5206
    %v5224 = vunpack.c.h.b16 %v5206
    %v5225 = vunpack.c.l.b16 %v5207
    %v5226 = vunpack.c.h.b16 %v5207
    %v5227 = vunpack.c.l.b16 %v5208
    %v5228 = vunpack.c.h.b16 %v5208
    %v5229 = vunpack.c.l.b16 %v5209
    %v5230 = vunpack.c.h.b16 %v5209
    %v5231 = vunpack.c.l.b16 %v5210
    %v5232 = vunpack.c.h.b16 %v5210
    %v5233 = vunpack.c.l.b16 %v5211
    %v5234 = vunpack.c.h.b16 %v5211
    %v5235 = vunpack.c.l.b16 %v5212
    %v5236 = vunpack.c.h.b16 %v5212
    %v5237 = vpack.c.b16 %v5229, %v5221
    %v5238 = vpack.c.b16 %v5230, %v5222
    %v5239 = vpack.c.b16 %v5231, %v5223
    %v5240 = vpack.c.b16 %v5232, %v5224
    %v5241 = vpack.c.b16 %v5233, %v5225
    %v5242 = vpack.c.b16 %v5234, %v5226
    %v5243 = vpack.c.b16 %v5235, %v5227
    %v5244 = vpack.c.b16 %v5236, %v5228
    %v5254 = vsel %vm107, %v5203, 0
    %5256 = vmatprep.subr.bf16.mxu0 %v5238
    %5257 = vmatpush1.bf16.msra.mxu0 %v5237
    %5258 = vmatprep.subr.bf16.mxu0 0
    %5259 = vmatpush1.bf16.msra.mxu0 0
    %5260 = vmatprep.subr.bf16.mxu0 0
    %5261 = vmatpush1.bf16.msra.mxu0 0
    %5262 = vmatprep.subr.bf16.mxu0 0
    %5263 = vmatpush1.bf16.msra.mxu0 0
    %5264 = vmatprep.subr.bf16.mxu0 0
    %5265 = vmatpush1.bf16.msra.mxu0 0
    %5266 = vmatprep.subr.bf16.mxu0 0
    %5267 = vmatpush1.bf16.msra.mxu0 0
    %5268 = vmatprep.subr.bf16.mxu0 0
    %5269 = vmatpush1.bf16.msra.mxu0 0
    %5270 = vmatprep.subr.bf16.mxu0 0
    %5271 = vmatpush1.bf16.msra.mxu0 0
    %5272 = vmatprep.subr.bf16.mxu0 0
    %5273 = vmatpush1.bf16.msra.mxu0 0
    %5274 = vmatprep.subr.bf16.mxu0 0
    %5275 = vmatpush1.bf16.msra.mxu0 0
    %5276 = vmatprep.subr.bf16.mxu0 0
    %5277 = vmatpush1.bf16.msra.mxu0 0
    %5278 = vmatprep.subr.bf16.mxu0 0
    %5279 = vmatpush1.bf16.msra.mxu0 0
    %5280 = vmatprep.subr.bf16.mxu0 0
    %5281 = vmatpush1.bf16.msra.mxu0 0
    %5282 = vmatprep.subr.bf16.mxu0 0
    %5283 = vmatpush1.bf16.msra.mxu0 0
    %5284 = vmatprep.subr.bf16.mxu0 0
    %5285 = vmatpush1.bf16.msra.mxu0 0
    %5286 = vmatprep.subr.bf16.mxu0 0
    %5287 = vmatpush1.bf16.msra.mxu0 0
    %5288 = vmatprep.mubr.bf16.mxu0 0
    %5289 = vmatmul.mubr.bf16.gmra.mrb[0].mxu0 %v5254
    %v5290 = vpop.f32.mrb[0].mxu0
    %v5291 = vadd.f32 0.0, %v5290
    %v5292 = vpop.f32.mrb[0].mxu0
    %v5293 = vadd.f32 0.0, %v5292
    %v5294 = vpop.f32.mrb[0].mxu0
    %v5295 = vpop.f32.mrb[0].mxu0
    %5296 = vdwg.mxu0
    %5297 = vmatprep.subr.bf16.mxu0 %v5240
    %5298 = vmatpush1.bf16.msra.mxu0 %v5239
    %5299 = vmatprep.subr.bf16.mxu0 0
    %5300 = vmatpush1.bf16.msra.mxu0 0
    %5301 = vmatprep.subr.bf16.mxu0 0
    %5302 = vmatpush1.bf16.msra.mxu0 0
    %5303 = vmatprep.subr.bf16.mxu0 0
    %5304 = vmatpush1.bf16.msra.mxu0 0
    %5305 = vmatprep.subr.bf16.mxu0 0
    %5306 = vmatpush1.bf16.msra.mxu0 0
    %5307 = vmatprep.subr.bf16.mxu0 0
    %5308 = vmatpush1.bf16.msra.mxu0 0
    %5309 = vmatprep.subr.bf16.mxu0 0
    %5310 = vmatpush1.bf16.msra.mxu0 0
    %5311 = vmatprep.subr.bf16.mxu0 0
    %5312 = vmatpush1.bf16.msra.mxu0 0
    %5313 = vmatprep.subr.bf16.mxu0 0
    %5314 = vmatpush1.bf16.msra.mxu0 0
    %5315 = vmatprep.subr.bf16.mxu0 0
    %5316 = vmatpush1.bf16.msra.mxu0 0
    %5317 = vmatprep.subr.bf16.mxu0 0
    %5318 = vmatpush1.bf16.msra.mxu0 0
    %5319 = vmatprep.subr.bf16.mxu0 0
    %5320 = vmatpush1.bf16.msra.mxu0 0
    %5321 = vmatprep.subr.bf16.mxu0 0
    %5322 = vmatpush1.bf16.msra.mxu0 0
    %5323 = vmatprep.subr.bf16.mxu0 0
    %5324 = vmatpush1.bf16.msra.mxu0 0
    %5325 = vmatprep.subr.bf16.mxu0 0
    %5326 = vmatpush1.bf16.msra.mxu0 0
    %5327 = vmatprep.subr.bf16.mxu0 0
    %5328 = vmatpush1.bf16.msra.mxu0 0
    %5329 = vmatprep.mubr.bf16.mxu0 0
    %5330 = vmatmul.mubr.bf16.gmra.mrb[0].mxu0 %v5254
    %v5331 = vpop.f32.mrb[0].mxu0
    %v5332 = vadd.f32 0.0, %v5331
    %v5333 = vpop.f32.mrb[0].mxu0
    %v5334 = vadd.f32 0.0, %v5333
    %v5335 = vpop.f32.mrb[0].mxu0
    %v5336 = vpop.f32.mrb[0].mxu0
    %5337 = vdwg.mxu0
    %5338 = vmatprep.subr.bf16.mxu0 %v5242
    %5339 = vmatpush1.bf16.msra.mxu0 %v5241
    %5340 = vmatprep.subr.bf16.mxu0 0
    %5341 = vmatpush1.bf16.msra.mxu0 0
    %5342 = vmatprep.subr.bf16.mxu0 0
    %5343 = vmatpush1.bf16.msra.mxu0 0
    %5344 = vmatprep.subr.bf16.mxu0 0
    %5345 = vmatpush1.bf16.msra.mxu0 0
    %5346 = vmatprep.subr.bf16.mxu0 0
    %5347 = vmatpush1.bf16.msra.mxu0 0
    %5348 = vmatprep.subr.bf16.mxu0 0
    %5349 = vmatpush1.bf16.msra.mxu0 0
    %5350 = vmatprep.subr.bf16.mxu0 0
    %5351 = vmatpush1.bf16.msra.mxu0 0
    %5352 = vmatprep.subr.bf16.mxu0 0
    %5353 = vmatpush1.bf16.msra.mxu0 0
    %5354 = vmatprep.subr.bf16.mxu0 0
    %5355 = vmatpush1.bf16.msra.mxu0 0
    %5356 = vmatprep.subr.bf16.mxu0 0
    %5357 = vmatpush1.bf16.msra.mxu0 0
    %5358 = vmatprep.subr.bf16.mxu0 0
    %5359 = vmatpush1.bf16.msra.mxu0 0
    %5360 = vmatprep.subr.bf16.mxu0 0
    %5361 = vmatpush1.bf16.msra.mxu0 0
    %5362 = vmatprep.subr.bf16.mxu0 0
    %5363 = vmatpush1.bf16.msra.mxu0 0
    %5364 = vmatprep.subr.bf16.mxu0 0
    %5365 = vmatpush1.bf16.msra.mxu0 0
    %5366 = vmatprep.subr.bf16.mxu0 0
    %5367 = vmatpush1.bf16.msra.mxu0 0
    %5368 = vmatprep.subr.bf16.mxu0 0
    %5369 = vmatpush1.bf16.msra.mxu0 0
    %5370 = vmatprep.mubr.bf16.mxu0 0
    %5371 = vmatmul.mubr.bf16.gmra.mrb[0].mxu0 %v5254
    %v5372 = vpop.f32.mrb[0].mxu0
    %v5373 = vadd.f32 0.0, %v5372
    %v5374 = vpop.f32.mrb[0].mxu0
    %v5375 = vadd.f32 0.0, %v5374
    %v5376 = vpop.f32.mrb[0].mxu0
    %v5377 = vpop.f32.mrb[0].mxu0
    %5378 = vdwg.mxu0
    %5379 = vmatprep.subr.bf16.mxu0 %v5244
    %5380 = vmatpush1.bf16.msra.mxu0 %v5243
    %5381 = vmatprep.subr.bf16.mxu0 0
    %5382 = vmatpush1.bf16.msra.mxu0 0
    %5383 = vmatprep.subr.bf16.mxu0 0
    %5384 = vmatpush1.bf16.msra.mxu0 0
    %5385 = vmatprep.subr.bf16.mxu0 0
    %5386 = vmatpush1.bf16.msra.mxu0 0
    %5387 = vmatprep.subr.bf16.mxu0 0
    %5388 = vmatpush1.bf16.msra.mxu0 0
    %5389 = vmatprep.subr.bf16.mxu0 0
    %5390 = vmatpush1.bf16.msra.mxu0 0
    %5391 = vmatprep.subr.bf16.mxu0 0
    %5392 = vmatpush1.bf16.msra.mxu0 0
    %5393 = vmatprep.subr.bf16.mxu0 0
    %5394 = vmatpush1.bf16.msra.mxu0 0
    %5395 = vmatprep.subr.bf16.mxu0 0
    %5396 = vmatpush1.bf16.msra.mxu0 0
    %5397 = vmatprep.subr.bf16.mxu0 0
    %5398 = vmatpush1.bf16.msra.mxu0 0
    %5399 = vmatprep.subr.bf16.mxu0 0
    %5400 = vmatpush1.bf16.msra.mxu0 0
    %5401 = vmatprep.subr.bf16.mxu0 0
    %5402 = vmatpush1.bf16.msra.mxu0 0
    %5403 = vmatprep.subr.bf16.mxu0 0
    %5404 = vmatpush1.bf16.msra.mxu0 0
    %5405 = vmatprep.subr.bf16.mxu0 0
    %5406 = vmatpush1.bf16.msra.mxu0 0
    %5407 = vmatprep.subr.bf16.mxu0 0
    %5408 = vmatpush1.bf16.msra.mxu0 0
    %5409 = vmatprep.subr.bf16.mxu0 0
    %5410 = vmatpush1.bf16.msra.mxu0 0
    %5411 = vmatprep.mubr.bf16.mxu0 0
    %5412 = vmatmul.mubr.bf16.gmra.mrb[0].mxu0 %v5254
    %v5413 = vpop.f32.mrb[0].mxu0
    %v5414 = vadd.f32 0.0, %v5413
    %v5415 = vpop.f32.mrb[0].mxu0
    %v5416 = vadd.f32 0.0, %v5415
    %v5417 = vpop.f32.mrb[0].mxu0
    %v5418 = vpop.f32.mrb[0].mxu0
    %5419 = vdwg.mxu0
    %v5420 = vadd.f32 %v5191, %v5291
    %v5421 = vadd.f32 %v5192, %v5293
    %v5422 = vadd.f32 %v5193, %v5332
    %v5423 = vadd.f32 %v5194, %v5334
    %v5424 = vadd.f32 %v5195, %v5373
    %v5425 = vadd.f32 %v5196, %v5375
    %v5426 = vadd.f32 %v5197, %v5414
    %v5427 = vadd.f32 %v5198, %v5416
    %s5428 = scalar_lea.vmem [#allocation2], 18
    %v5429 = vld [vmem:[%s5428] ss:$64 sm:$0x1]
    %v5430 = vld [vmem:[%s5428] ss:$64 sm:$0x2]
    %v5431 = vor.u32 %v5429, %v5430
    %v5432 = vpack.c.bf16 %v5431, %v5431
    %s5433 = scalar_lea.vmem [#allocation3], 640
    %v5434 = vld [vmem:[%s5433] sm:$0xff]
    %v5435 = vld [vmem:[%s5433 + $0x8] sm:$0xff]
    %v5436 = vld [vmem:[%s5433 + $0x10] sm:$0xff]
    %v5437 = vld [vmem:[%s5433 + $0x18] sm:$0xff]
    %v5438 = vld [vmem:[%s5433 + $0x20] sm:$0xff]
    %v5439 = vld [vmem:[%s5433 + $0x28] sm:$0xff]
    %v5440 = vld [vmem:[%s5433 + $0x30] sm:$0xff]
    %v5441 = vld [vmem:[%s5433 + $0x38] sm:$0xff]
    %v5450 = vunpack.c.l.b16 %v5434
    %v5451 = vunpack.c.h.b16 %v5434
    %v5452 = vunpack.c.l.b16 %v5435
    %v5453 = vunpack.c.h.b16 %v5435
    %v5454 = vunpack.c.l.b16 %v5436
    %v5455 = vunpack.c.h.b16 %v5436
    %v5456 = vunpack.c.l.b16 %v5437
    %v5457 = vunpack.c.h.b16 %v5437
    %v5458 = vunpack.c.l.b16 %v5438
    %v5459 = vunpack.c.h.b16 %v5438
    %v5460 = vunpack.c.l.b16 %v5439
    %v5461 = vunpack.c.h.b16 %v5439
    %v5462 = vunpack.c.l.b16 %v5440
    %v5463 = vunpack.c.h.b16 %v5440
    %v5464 = vunpack.c.l.b16 %v5441
    %v5465 = vunpack.c.h.b16 %v5441
    %v5466 = vpack.c.b16 %v5458, %v5450
    %v5467 = vpack.c.b16 %v5459, %v5451
    %v5468 = vpack.c.b16 %v5460, %v5452
    %v5469 = vpack.c.b16 %v5461, %v5453
    %v5470 = vpack.c.b16 %v5462, %v5454
    %v5471 = vpack.c.b16 %v5463, %v5455
    %v5472 = vpack.c.b16 %v5464, %v5456
    %v5473 = vpack.c.b16 %v5465, %v5457
    %v5483 = vsel %vm107, %v5432, 0
    %5485 = vmatprep.subr.bf16.mxu0 %v5467
    %5486 = vmatpush1.bf16.msra.mxu0 %v5466
    %5487 = vmatprep.subr.bf16.mxu0 0
    %5488 = vmatpush1.bf16.msra.mxu0 0
    %5489 = vmatprep.subr.bf16.mxu0 0
    %5490 = vmatpush1.bf16.msra.mxu0 0
    %5491 = vmatprep.subr.bf16.mxu0 0
    %5492 = vmatpush1.bf16.msra.mxu0 0
    %5493 = vmatprep.subr.bf16.mxu0 0
    %5494 = vmatpush1.bf16.msra.mxu0 0
    %5495 = vmatprep.subr.bf16.mxu0 0
    %5496 = vmatpush1.bf16.msra.mxu0 0
    %5497 = vmatprep.subr.bf16.mxu0 0
    %5498 = vmatpush1.bf16.msra.mxu0 0
    %5499 = vmatprep.subr.bf16.mxu0 0
    %5500 = vmatpush1.bf16.msra.mxu0 0
    %5501 = vmatprep.subr.bf16.mxu0 0
    %5502 = vmatpush1.bf16.msra.mxu0 0
    %5503 = vmatprep.subr.bf16.mxu0 0
    %5504 = vmatpush1.bf16.msra.mxu0 0
    %5505 = vmatprep.subr.bf16.mxu0 0
    %5506 = vmatpush1.bf16.msra.mxu0 0
    %5507 = vmatprep.subr.bf16.mxu0 0
    %5508 = vmatpush1.bf16.msra.mxu0 0
    %5509 = vmatprep.subr.bf16.mxu0 0
    %5510 = vmatpush1.bf16.msra.mxu0 0
    %5511 = vmatprep.subr.bf16.mxu0 0
    %5512 = vmatpush1.bf16.msra.mxu0 0
    %5513 = vmatprep.subr.bf16.mxu0 0
    %5514 = vmatpush1.bf16.msra.mxu0 0
    %5515 = vmatprep.subr.bf16.mxu0 0
    %5516 = vmatpush1.bf16.msra.mxu0 0
    %5517 = vmatprep.mubr.bf16.mxu0 0
    %5518 = vmatmul.mubr.bf16.gmra.mrb[0].mxu0 %v5483
    %v5519 = vpop.f32.mrb[0].mxu0
    %v5520 = vadd.f32 0.0, %v5519
    %v5521 = vpop.f32.mrb[0].mxu0
    %v5522 = vadd.f32 0.0, %v5521
    %v5523 = vpop.f32.mrb[0].mxu0
    %v5524 = vpop.f32.mrb[0].mxu0
    %5525 = vdwg.mxu0
    %5526 = vmatprep.subr.bf16.mxu0 %v5469
    %5527 = vmatpush1.bf16.msra.mxu0 %v5468
    %5528 = vmatprep.subr.bf16.mxu0 0
    %5529 = vmatpush1.bf16.msra.mxu0 0
    %5530 = vmatprep.subr.bf16.mxu0 0
    %5531 = vmatpush1.bf16.msra.mxu0 0
    %5532 = vmatprep.subr.bf16.mxu0 0
    %5533 = vmatpush1.bf16.msra.mxu0 0
    %5534 = vmatprep.subr.bf16.mxu0 0
    %5535 = vmatpush1.bf16.msra.mxu0 0
    %5536 = vmatprep.subr.bf16.mxu0 0
    %5537 = vmatpush1.bf16.msra.mxu0 0
    %5538 = vmatprep.subr.bf16.mxu0 0
    %5539 = vmatpush1.bf16.msra.mxu0 0
    %5540 = vmatprep.subr.bf16.mxu0 0
    %5541 = vmatpush1.bf16.msra.mxu0 0
    %5542 = vmatprep.subr.bf16.mxu0 0
    %5543 = vmatpush1.bf16.msra.mxu0 0
    %5544 = vmatprep.subr.bf16.mxu0 0
    %5545 = vmatpush1.bf16.msra.mxu0 0
    %5546 = vmatprep.subr.bf16.mxu0 0
    %5547 = vmatpush1.bf16.msra.mxu0 0
    %5548 = vmatprep.subr.bf16.mxu0 0
    %5549 = vmatpush1.bf16.msra.mxu0 0
    %5550 = vmatprep.subr.bf16.mxu0 0
    %5551 = vmatpush1.bf16.msra.mxu0 0
    %5552 = vmatprep.subr.bf16.mxu0 0
    %5553 = vmatpush1.bf16.msra.mxu0 0
    %5554 = vmatprep.subr.bf16.mxu0 0
    %5555 = vmatpush1.bf16.msra.mxu0 0
    %5556 = vmatprep.subr.bf16.mxu0 0
    %5557 = vmatpush1.bf16.msra.mxu0 0
    %5558 = vmatprep.mubr.bf16.mxu0 0
    %5559 = vmatmul.mubr.bf16.gmra.mrb[0].mxu0 %v5483
    %v5560 = vpop.f32.mrb[0].mxu0
    %v5561 = vadd.f32 0.0, %v5560
    %v5562 = vpop.f32.mrb[0].mxu0
    %v5563 = vadd.f32 0.0, %v5562
    %v5564 = vpop.f32.mrb[0].mxu0
    %v5565 = vpop.f32.mrb[0].mxu0
    %5566 = vdwg.mxu0
    %5567 = vmatprep.subr.bf16.mxu0 %v5471
    %5568 = vmatpush1.bf16.msra.mxu0 %v5470
    %5569 = vmatprep.subr.bf16.mxu0 0
    %5570 = vmatpush1.bf16.msra.mxu0 0
    %5571 = vmatprep.subr.bf16.mxu0 0
    %5572 = vmatpush1.bf16.msra.mxu0 0
    %5573 = vmatprep.subr.bf16.mxu0 0
    %5574 = vmatpush1.bf16.msra.mxu0 0
    %5575 = vmatprep.subr.bf16.mxu0 0
    %5576 = vmatpush1.bf16.msra.mxu0 0
    %5577 = vmatprep.subr.bf16.mxu0 0
    %5578 = vmatpush1.bf16.msra.mxu0 0
    %5579 = vmatprep.subr.bf16.mxu0 0
    %5580 = vmatpush1.bf16.msra.mxu0 0
    %5581 = vmatprep.subr.bf16.mxu0 0
    %5582 = vmatpush1.bf16.msra.mxu0 0
    %5583 = vmatprep.subr.bf16.mxu0 0
    %5584 = vmatpush1.bf16.msra.mxu0 0
    %5585 = vmatprep.subr.bf16.mxu0 0
    %5586 = vmatpush1.bf16.msra.mxu0 0
    %5587 = vmatprep.subr.bf16.mxu0 0
    %5588 = vmatpush1.bf16.msra.mxu0 0
    %5589 = vmatprep.subr.bf16.mxu0 0
    %5590 = vmatpush1.bf16.msra.mxu0 0
    %5591 = vmatprep.subr.bf16.mxu0 0
    %5592 = vmatpush1.bf16.msra.mxu0 0
    %5593 = vmatprep.subr.bf16.mxu0 0
    %5594 = vmatpush1.bf16.msra.mxu0 0
    %5595 = vmatprep.subr.bf16.mxu0 0
    %5596 = vmatpush1.bf16.msra.mxu0 0
    %5597 = vmatprep.subr.bf16.mxu0 0
    %5598 = vmatpush1.bf16.msra.mxu0 0
    %5599 = vmatprep.mubr.bf16.mxu0 0
    %5600 = vmatmul.mubr.bf16.gmra.mrb[0].mxu0 %v5483
    %v5601 = vpop.f32.mrb[0].mxu0
    %v5602 = vadd.f32 0.0, %v5601
    %v5603 = vpop.f32.mrb[0].mxu0
    %v5604 = vadd.f32 0.0, %v5603
    %v5605 = vpop.f32.mrb[0].mxu0
    %v5606 = vpop.f32.mrb[0].mxu0
    %5607 = vdwg.mxu0
    %5608 = vmatprep.subr.bf16.mxu0 %v5473
    %5609 = vmatpush1.bf16.msra.mxu0 %v5472
    %5610 = vmatprep.subr.bf16.mxu0 0
    %5611 = vmatpush1.bf16.msra.mxu0 0
    %5612 = vmatprep.subr.bf16.mxu0 0
    %5613 = vmatpush1.bf16.msra.mxu0 0
    %5614 = vmatprep.subr.bf16.mxu0 0
    %5615 = vmatpush1.bf16.msra.mxu0 0
    %5616 = vmatprep.subr.bf16.mxu0 0
    %5617 = vmatpush1.bf16.msra.mxu0 0
    %5618 = vmatprep.subr.bf16.mxu0 0
    %5619 = vmatpush1.bf16.msra.mxu0 0
    %5620 = vmatprep.subr.bf16.mxu0 0
    %5621 = vmatpush1.bf16.msra.mxu0 0
    %5622 = vmatprep.subr.bf16.mxu0 0
    %5623 = vmatpush1.bf16.msra.mxu0 0
    %5624 = vmatprep.subr.bf16.mxu0 0
    %5625 = vmatpush1.bf16.msra.mxu0 0
    %5626 = vmatprep.subr.bf16.mxu0 0
    %5627 = vmatpush1.bf16.msra.mxu0 0
    %5628 = vmatprep.subr.bf16.mxu0 0
    %5629 = vmatpush1.bf16.msra.mxu0 0
    %5630 = vmatprep.subr.bf16.mxu0 0
    %5631 = vmatpush1.bf16.msra.mxu0 0
    %5632 = vmatprep.subr.bf16.mxu0 0
    %5633 = vmatpush1.bf16.msra.mxu0 0
    %5634 = vmatprep.subr.bf16.mxu0 0
    %5635 = vmatpush1.bf16.msra.mxu0 0
    %5636 = vmatprep.subr.bf16.mxu0 0
    %5637 = vmatpush1.bf16.msra.mxu0 0
    %5638 = vmatprep.subr.bf16.mxu0 0
    %5639 = vmatpush1.bf16.msra.mxu0 0
    %5640 = vmatprep.mubr.bf16.mxu0 0
    %5641 = vmatmul.mubr.bf16.gmra.mrb[0].mxu0 %v5483
    %v5642 = vpop.f32.mrb[0].mxu0
    %v5643 = vadd.f32 0.0, %v5642
    %v5644 = vpop.f32.mrb[0].mxu0
    %v5645 = vadd.f32 0.0, %v5644
    %v5646 = vpop.f32.mrb[0].mxu0
    %v5647 = vpop.f32.mrb[0].mxu0
    %5648 = vdwg.mxu0
    %v5649 = vadd.f32 %v5420, %v5520
    %v5650 = vadd.f32 %v5421, %v5522
    %v5651 = vadd.f32 %v5422, %v5561
    %v5652 = vadd.f32 %v5423, %v5563
    %v5653 = vadd.f32 %v5424, %v5602
    %v5654 = vadd.f32 %v5425, %v5604
    %v5655 = vadd.f32 %v5426, %v5643
    %v5656 = vadd.f32 %v5427, %v5645
    %s5657 = scalar_lea.vmem [#allocation2], 19
    %v5658 = vld [vmem:[%s5657] ss:$64 sm:$0x1]
    %v5659 = vld [vmem:[%s5657] ss:$64 sm:$0x2]
    %v5660 = vor.u32 %v5658, %v5659
    %v5661 = vpack.c.bf16 %v5660, %v5660
    %s5662 = scalar_lea.vmem [#allocation3], 704
    %v5663 = vld [vmem:[%s5662] sm:$0xff]
    %v5664 = vld [vmem:[%s5662 + $0x8] sm:$0xff]
    %v5665 = vld [vmem:[%s5662 + $0x10] sm:$0xff]
    %v5666 = vld [vmem:[%s5662 + $0x18] sm:$0xff]
    %v5667 = vld [vmem:[%s5662 + $0x20] sm:$0xff]
    %v5668 = vld [vmem:[%s5662 + $0x28] sm:$0xff]
    %v5669 = vld [vmem:[%s5662 + $0x30] sm:$0xff]
    %v5670 = vld [vmem:[%s5662 + $0x38] sm:$0xff]
    %v5679 = vunpack.c.l.b16 %v5663
    %v5680 = vunpack.c.h.b16 %v5663
    %v5681 = vunpack.c.l.b16 %v5664
    %v5682 = vunpack.c.h.b16 %v5664
    %v5683 = vunpack.c.l.b16 %v5665
    %v5684 = vunpack.c.h.b16 %v5665
    %v5685 = vunpack.c.l.b16 %v5666
    %v5686 = vunpack.c.h.b16 %v5666
    %v5687 = vunpack.c.l.b16 %v5667
    %v5688 = vunpack.c.h.b16 %v5667
    %v5689 = vunpack.c.l.b16 %v5668
    %v5690 = vunpack.c.h.b16 %v5668
    %v5691 = vunpack.c.l.b16 %v5669
    %v5692 = vunpack.c.h.b16 %v5669
    %v5693 = vunpack.c.l.b16 %v5670
    %v5694 = vunpack.c.h.b16 %v5670
    %v5695 = vpack.c.b16 %v5687, %v5679
    %v5696 = vpack.c.b16 %v5688, %v5680
    %v5697 = vpack.c.b16 %v5689, %v5681
    %v5698 = vpack.c.b16 %v5690, %v5682
    %v5699 = vpack.c.b16 %v5691, %v5683
    %v5700 = vpack.c.b16 %v5692, %v5684
    %v5701 = vpack.c.b16 %v5693, %v5685
    %v5702 = vpack.c.b16 %v5694, %v5686
    %v5712 = vsel %vm107, %v5661, 0
    %5714 = vmatprep.subr.bf16.mxu0 %v5696
    %5715 = vmatpush1.bf16.msra.mxu0 %v5695
    %5716 = vmatprep.subr.bf16.mxu0 0
    %5717 = vmatpush1.bf16.msra.mxu0 0
    %5718 = vmatprep.subr.bf16.mxu0 0
    %5719 = vmatpush1.bf16.msra.mxu0 0
    %5720 = vmatprep.subr.bf16.mxu0 0
    %5721 = vmatpush1.bf16.msra.mxu0 0
    %5722 = vmatprep.subr.bf16.mxu0 0
    %5723 = vmatpush1.bf16.msra.mxu0 0
    %5724 = vmatprep.subr.bf16.mxu0 0
    %5725 = vmatpush1.bf16.msra.mxu0 0
    %5726 = vmatprep.subr.bf16.mxu0 0
    %5727 = vmatpush1.bf16.msra.mxu0 0
    %5728 = vmatprep.subr.bf16.mxu0 0
    %5729 = vmatpush1.bf16.msra.mxu0 0
    %5730 = vmatprep.subr.bf16.mxu0 0
    %5731 = vmatpush1.bf16.msra.mxu0 0
    %5732 = vmatprep.subr.bf16.mxu0 0
    %5733 = vmatpush1.bf16.msra.mxu0 0
    %5734 = vmatprep.subr.bf16.mxu0 0
    %5735 = vmatpush1.bf16.msra.mxu0 0
    %5736 = vmatprep.subr.bf16.mxu0 0
    %5737 = vmatpush1.bf16.msra.mxu0 0
    %5738 = vmatprep.subr.bf16.mxu0 0
    %5739 = vmatpush1.bf16.msra.mxu0 0
    %5740 = vmatprep.subr.bf16.mxu0 0
    %5741 = vmatpush1.bf16.msra.mxu0 0
    %5742 = vmatprep.subr.bf16.mxu0 0
    %5743 = vmatpush1.bf16.msra.mxu0 0
    %5744 = vmatprep.subr.bf16.mxu0 0
    %5745 = vmatpush1.bf16.msra.mxu0 0
    %5746 = vmatprep.mubr.bf16.mxu0 0
    %5747 = vmatmul.mubr.bf16.gmra.mrb[0].mxu0 %v5712
    %v5748 = vpop.f32.mrb[0].mxu0
    %v5749 = vadd.f32 0.0, %v5748
    %v5750 = vpop.f32.mrb[0].mxu0
    %v5751 = vadd.f32 0.0, %v5750
    %v5752 = vpop.f32.mrb[0].mxu0
    %v5753 = vpop.f32.mrb[0].mxu0
    %5754 = vdwg.mxu0
    %5755 = vmatprep.subr.bf16.mxu0 %v5698
    %5756 = vmatpush1.bf16.msra.mxu0 %v5697
    %5757 = vmatprep.subr.bf16.mxu0 0
    %5758 = vmatpush1.bf16.msra.mxu0 0
    %5759 = vmatprep.subr.bf16.mxu0 0
    %5760 = vmatpush1.bf16.msra.mxu0 0
    %5761 = vmatprep.subr.bf16.mxu0 0
    %5762 = vmatpush1.bf16.msra.mxu0 0
    %5763 = vmatprep.subr.bf16.mxu0 0
    %5764 = vmatpush1.bf16.msra.mxu0 0
    %5765 = vmatprep.subr.bf16.mxu0 0
    %5766 = vmatpush1.bf16.msra.mxu0 0
    %5767 = vmatprep.subr.bf16.mxu0 0
    %5768 = vmatpush1.bf16.msra.mxu0 0
    %5769 = vmatprep.subr.bf16.mxu0 0
    %5770 = vmatpush1.bf16.msra.mxu0 0
    %5771 = vmatprep.subr.bf16.mxu0 0
    %5772 = vmatpush1.bf16.msra.mxu0 0
    %5773 = vmatprep.subr.bf16.mxu0 0
    %5774 = vmatpush1.bf16.msra.mxu0 0
    %5775 = vmatprep.subr.bf16.mxu0 0
    %5776 = vmatpush1.bf16.msra.mxu0 0
    %5777 = vmatprep.subr.bf16.mxu0 0
    %5778 = vmatpush1.bf16.msra.mxu0 0
    %5779 = vmatprep.subr.bf16.mxu0 0
    %5780 = vmatpush1.bf16.msra.mxu0 0
    %5781 = vmatprep.subr.bf16.mxu0 0
    %5782 = vmatpush1.bf16.msra.mxu0 0
    %5783 = vmatprep.subr.bf16.mxu0 0
    %5784 = vmatpush1.bf16.msra.mxu0 0
    %5785 = vmatprep.subr.bf16.mxu0 0
    %5786 = vmatpush1.bf16.msra.mxu0 0
    %5787 = vmatprep.mubr.bf16.mxu0 0
    %5788 = vmatmul.mubr.bf16.gmra.mrb[0].mxu0 %v5712
    %v5789 = vpop.f32.mrb[0].mxu0
    %v5790 = vadd.f32 0.0, %v5789
    %v5791 = vpop.f32.mrb[0].mxu0
    %v5792 = vadd.f32 0.0, %v5791
    %v5793 = vpop.f32.mrb[0].mxu0
    %v5794 = vpop.f32.mrb[0].mxu0
    %5795 = vdwg.mxu0
    %5796 = vmatprep.subr.bf16.mxu0 %v5700
    %5797 = vmatpush1.bf16.msra.mxu0 %v5699
    %5798 = vmatprep.subr.bf16.mxu0 0
    %5799 = vmatpush1.bf16.msra.mxu0 0
    %5800 = vmatprep.subr.bf16.mxu0 0
    %5801 = vmatpush1.bf16.msra.mxu0 0
    %5802 = vmatprep.subr.bf16.mxu0 0
    %5803 = vmatpush1.bf16.msra.mxu0 0
    %5804 = vmatprep.subr.bf16.mxu0 0
    %5805 = vmatpush1.bf16.msra.mxu0 0
    %5806 = vmatprep.subr.bf16.mxu0 0
    %5807 = vmatpush1.bf16.msra.mxu0 0
    %5808 = vmatprep.subr.bf16.mxu0 0
    %5809 = vmatpush1.bf16.msra.mxu0 0
    %5810 = vmatprep.subr.bf16.mxu0 0
    %5811 = vmatpush1.bf16.msra.mxu0 0
    %5812 = vmatprep.subr.bf16.mxu0 0
    %5813 = vmatpush1.bf16.msra.mxu0 0
    %5814 = vmatprep.subr.bf16.mxu0 0
    %5815 = vmatpush1.bf16.msra.mxu0 0
    %5816 = vmatprep.subr.bf16.mxu0 0
    %5817 = vmatpush1.bf16.msra.mxu0 0
    %5818 = vmatprep.subr.bf16.mxu0 0
    %5819 = vmatpush1.bf16.msra.mxu0 0
    %5820 = vmatprep.subr.bf16.mxu0 0
    %5821 = vmatpush1.bf16.msra.mxu0 0
    %5822 = vmatprep.subr.bf16.mxu0 0
    %5823 = vmatpush1.bf16.msra.mxu0 0
    %5824 = vmatprep.subr.bf16.mxu0 0
    %5825 = vmatpush1.bf16.msra.mxu0 0
    %5826 = vmatprep.subr.bf16.mxu0 0
    %5827 = vmatpush1.bf16.msra.mxu0 0
    %5828 = vmatprep.mubr.bf16.mxu0 0
    %5829 = vmatmul.mubr.bf16.gmra.mrb[0].mxu0 %v5712
    %v5830 = vpop.f32.mrb[0].mxu0
    %v5831 = vadd.f32 0.0, %v5830
    %v5832 = vpop.f32.mrb[0].mxu0
    %v5833 = vadd.f32 0.0, %v5832
    %v5834 = vpop.f32.mrb[0].mxu0
    %v5835 = vpop.f32.mrb[0].mxu0
    %5836 = vdwg.mxu0
    %5837 = vmatprep.subr.bf16.mxu0 %v5702
    %5838 = vmatpush1.bf16.msra.mxu0 %v5701
    %5839 = vmatprep.subr.bf16.mxu0 0
    %5840 = vmatpush1.bf16.msra.mxu0 0
    %5841 = vmatprep.subr.bf16.mxu0 0
    %5842 = vmatpush1.bf16.msra.mxu0 0
    %5843 = vmatprep.subr.bf16.mxu0 0
    %5844 = vmatpush1.bf16.msra.mxu0 0
    %5845 = vmatprep.subr.bf16.mxu0 0
    %5846 = vmatpush1.bf16.msra.mxu0 0
    %5847 = vmatprep.subr.bf16.mxu0 0
    %5848 = vmatpush1.bf16.msra.mxu0 0
    %5849 = vmatprep.subr.bf16.mxu0 0
    %5850 = vmatpush1.bf16.msra.mxu0 0
    %5851 = vmatprep.subr.bf16.mxu0 0
    %5852 = vmatpush1.bf16.msra.mxu0 0
    %5853 = vmatprep.subr.bf16.mxu0 0
    %5854 = vmatpush1.bf16.msra.mxu0 0
    %5855 = vmatprep.subr.bf16.mxu0 0
    %5856 = vmatpush1.bf16.msra.mxu0 0
    %5857 = vmatprep.subr.bf16.mxu0 0
    %5858 = vmatpush1.bf16.msra.mxu0 0
    %5859 = vmatprep.subr.bf16.mxu0 0
    %5860 = vmatpush1.bf16.msra.mxu0 0
    %5861 = vmatprep.subr.bf16.mxu0 0
    %5862 = vmatpush1.bf16.msra.mxu0 0
    %5863 = vmatprep.subr.bf16.mxu0 0
    %5864 = vmatpush1.bf16.msra.mxu0 0
    %5865 = vmatprep.subr.bf16.mxu0 0
    %5866 = vmatpush1.bf16.msra.mxu0 0
    %5867 = vmatprep.subr.bf16.mxu0 0
    %5868 = vmatpush1.bf16.msra.mxu0 0
    %5869 = vmatprep.mubr.bf16.mxu0 0
    %5870 = vmatmul.mubr.bf16.gmra.mrb[0].mxu0 %v5712
    %v5871 = vpop.f32.mrb[0].mxu0
    %v5872 = vadd.f32 0.0, %v5871
    %v5873 = vpop.f32.mrb[0].mxu0
    %v5874 = vadd.f32 0.0, %v5873
    %v5875 = vpop.f32.mrb[0].mxu0
    %v5876 = vpop.f32.mrb[0].mxu0
    %5877 = vdwg.mxu0
    %v5878 = vadd.f32 %v5649, %v5749
    %v5879 = vadd.f32 %v5650, %v5751
    %v5880 = vadd.f32 %v5651, %v5790
    %v5881 = vadd.f32 %v5652, %v5792
    %v5882 = vadd.f32 %v5653, %v5831
    %v5883 = vadd.f32 %v5654, %v5833
    %v5884 = vadd.f32 %v5655, %v5872
    %v5885 = vadd.f32 %v5656, %v5874
    %s5886 = scalar_lea.vmem [#allocation2], 24
    %v5887 = vld [vmem:[%s5886] ss:$64 sm:$0x1]
    %v5888 = vld [vmem:[%s5886] ss:$64 sm:$0x2]
    %v5889 = vor.u32 %v5887, %v5888
    %v5890 = vpack.c.bf16 %v5889, %v5889
    %s5891 = scalar_lea.vmem [#allocation3], 768
    %v5892 = vld [vmem:[%s5891] sm:$0xff]
    %v5893 = vld [vmem:[%s5891 + $0x8] sm:$0xff]
    %v5894 = vld [vmem:[%s5891 + $0x10] sm:$0xff]
    %v5895 = vld [vmem:[%s5891 + $0x18] sm:$0xff]
    %v5896 = vld [vmem:[%s5891 + $0x20] sm:$0xff]
    %v5897 = vld [vmem:[%s5891 + $0x28] sm:$0xff]
    %v5898 = vld [vmem:[%s5891 + $0x30] sm:$0xff]
    %v5899 = vld [vmem:[%s5891 + $0x38] sm:$0xff]
    %v5908 = vunpack.c.l.b16 %v5892
    %v5909 = vunpack.c.h.b16 %v5892
    %v5910 = vunpack.c.l.b16 %v5893
    %v5911 = vunpack.c.h.b16 %v5893
    %v5912 = vunpack.c.l.b16 %v5894
    %v5913 = vunpack.c.h.b16 %v5894
    %v5914 = vunpack.c.l.b16 %v5895
    %v5915 = vunpack.c.h.b16 %v5895
    %v5916 = vunpack.c.l.b16 %v5896
    %v5917 = vunpack.c.h.b16 %v5896
    %v5918 = vunpack.c.l.b16 %v5897
    %v5919 = vunpack.c.h.b16 %v5897
    %v5920 = vunpack.c.l.b16 %v5898
    %v5921 = vunpack.c.h.b16 %v5898
    %v5922 = vunpack.c.l.b16 %v5899
    %v5923 = vunpack.c.h.b16 %v5899
    %v5924 = vpack.c.b16 %v5916, %v5908
    %v5925 = vpack.c.b16 %v5917, %v5909
    %v5926 = vpack.c.b16 %v5918, %v5910
    %v5927 = vpack.c.b16 %v5919, %v5911
    %v5928 = vpack.c.b16 %v5920, %v5912
    %v5929 = vpack.c.b16 %v5921, %v5913
    %v5930 = vpack.c.b16 %v5922, %v5914
    %v5931 = vpack.c.b16 %v5923, %v5915
    %v5941 = vsel %vm107, %v5890, 0
    %5943 = vmatprep.subr.bf16.mxu0 %v5925
    %5944 = vmatpush1.bf16.msra.mxu0 %v5924
    %5945 = vmatprep.subr.bf16.mxu0 0
    %5946 = vmatpush1.bf16.msra.mxu0 0
    %5947 = vmatprep.subr.bf16.mxu0 0
    %5948 = vmatpush1.bf16.msra.mxu0 0
    %5949 = vmatprep.subr.bf16.mxu0 0
    %5950 = vmatpush1.bf16.msra.mxu0 0
    %5951 = vmatprep.subr.bf16.mxu0 0
    %5952 = vmatpush1.bf16.msra.mxu0 0
    %5953 = vmatprep.subr.bf16.mxu0 0
    %5954 = vmatpush1.bf16.msra.mxu0 0
    %5955 = vmatprep.subr.bf16.mxu0 0
    %5956 = vmatpush1.bf16.msra.mxu0 0
    %5957 = vmatprep.subr.bf16.mxu0 0
    %5958 = vmatpush1.bf16.msra.mxu0 0
    %5959 = vmatprep.subr.bf16.mxu0 0
    %5960 = vmatpush1.bf16.msra.mxu0 0
    %5961 = vmatprep.subr.bf16.mxu0 0
    %5962 = vmatpush1.bf16.msra.mxu0 0
    %5963 = vmatprep.subr.bf16.mxu0 0
    %5964 = vmatpush1.bf16.msra.mxu0 0
    %5965 = vmatprep.subr.bf16.mxu0 0
    %5966 = vmatpush1.bf16.msra.mxu0 0
    %5967 = vmatprep.subr.bf16.mxu0 0
    %5968 = vmatpush1.bf16.msra.mxu0 0
    %5969 = vmatprep.subr.bf16.mxu0 0
    %5970 = vmatpush1.bf16.msra.mxu0 0
    %5971 = vmatprep.subr.bf16.mxu0 0
    %5972 = vmatpush1.bf16.msra.mxu0 0
    %5973 = vmatprep.subr.bf16.mxu0 0
    %5974 = vmatpush1.bf16.msra.mxu0 0
    %5975 = vmatprep.mubr.bf16.mxu0 0
    %5976 = vmatmul.mubr.bf16.gmra.mrb[0].mxu0 %v5941
    %v5977 = vpop.f32.mrb[0].mxu0
    %v5978 = vadd.f32 0.0, %v5977
    %v5979 = vpop.f32.mrb[0].mxu0
    %v5980 = vadd.f32 0.0, %v5979
    %v5981 = vpop.f32.mrb[0].mxu0
    %v5982 = vpop.f32.mrb[0].mxu0
    %5983 = vdwg.mxu0
    %5984 = vmatprep.subr.bf16.mxu0 %v5927
    %5985 = vmatpush1.bf16.msra.mxu0 %v5926
    %5986 = vmatprep.subr.bf16.mxu0 0
    %5987 = vmatpush1.bf16.msra.mxu0 0
    %5988 = vmatprep.subr.bf16.mxu0 0
    %5989 = vmatpush1.bf16.msra.mxu0 0
    %5990 = vmatprep.subr.bf16.mxu0 0
    %5991 = vmatpush1.bf16.msra.mxu0 0
    %5992 = vmatprep.subr.bf16.mxu0 0
    %5993 = vmatpush1.bf16.msra.mxu0 0
    %5994 = vmatprep.subr.bf16.mxu0 0
    %5995 = vmatpush1.bf16.msra.mxu0 0
    %5996 = vmatprep.subr.bf16.mxu0 0
    %5997 = vmatpush1.bf16.msra.mxu0 0
    %5998 = vmatprep.subr.bf16.mxu0 0
    %5999 = vmatpush1.bf16.msra.mxu0 0
    %6000 = vmatprep.subr.bf16.mxu0 0
    %6001 = vmatpush1.bf16.msra.mxu0 0
    %6002 = vmatprep.subr.bf16.mxu0 0
    %6003 = vmatpush1.bf16.msra.mxu0 0
    %6004 = vmatprep.subr.bf16.mxu0 0
    %6005 = vmatpush1.bf16.msra.mxu0 0
    %6006 = vmatprep.subr.bf16.mxu0 0
    %6007 = vmatpush1.bf16.msra.mxu0 0
    %6008 = vmatprep.subr.bf16.mxu0 0
    %6009 = vmatpush1.bf16.msra.mxu0 0
    %6010 = vmatprep.subr.bf16.mxu0 0
    %6011 = vmatpush1.bf16.msra.mxu0 0
    %6012 = vmatprep.subr.bf16.mxu0 0
    %6013 = vmatpush1.bf16.msra.mxu0 0
    %6014 = vmatprep.subr.bf16.mxu0 0
    %6015 = vmatpush1.bf16.msra.mxu0 0
    %6016 = vmatprep.mubr.bf16.mxu0 0
    %6017 = vmatmul.mubr.bf16.gmra.mrb[0].mxu0 %v5941
    %v6018 = vpop.f32.mrb[0].mxu0
    %v6019 = vadd.f32 0.0, %v6018
    %v6020 = vpop.f32.mrb[0].mxu0
    %v6021 = vadd.f32 0.0, %v6020
    %v6022 = vpop.f32.mrb[0].mxu0
    %v6023 = vpop.f32.mrb[0].mxu0
    %6024 = vdwg.mxu0
    %6025 = vmatprep.subr.bf16.mxu0 %v5929
    %6026 = vmatpush1.bf16.msra.mxu0 %v5928
    %6027 = vmatprep.subr.bf16.mxu0 0
    %6028 = vmatpush1.bf16.msra.mxu0 0
    %6029 = vmatprep.subr.bf16.mxu0 0
    %6030 = vmatpush1.bf16.msra.mxu0 0
    %6031 = vmatprep.subr.bf16.mxu0 0
    %6032 = vmatpush1.bf16.msra.mxu0 0
    %6033 = vmatprep.subr.bf16.mxu0 0
    %6034 = vmatpush1.bf16.msra.mxu0 0
    %6035 = vmatprep.subr.bf16.mxu0 0
    %6036 = vmatpush1.bf16.msra.mxu0 0
    %6037 = vmatprep.subr.bf16.mxu0 0
    %6038 = vmatpush1.bf16.msra.mxu0 0
    %6039 = vmatprep.subr.bf16.mxu0 0
    %6040 = vmatpush1.bf16.msra.mxu0 0
    %6041 = vmatprep.subr.bf16.mxu0 0
    %6042 = vmatpush1.bf16.msra.mxu0 0
    %6043 = vmatprep.subr.bf16.mxu0 0
    %6044 = vmatpush1.bf16.msra.mxu0 0
    %6045 = vmatprep.subr.bf16.mxu0 0
    %6046 = vmatpush1.bf16.msra.mxu0 0
    %6047 = vmatprep.subr.bf16.mxu0 0
    %6048 = vmatpush1.bf16.msra.mxu0 0
    %6049 = vmatprep.subr.bf16.mxu0 0
    %6050 = vmatpush1.bf16.msra.mxu0 0
    %6051 = vmatprep.subr.bf16.mxu0 0
    %6052 = vmatpush1.bf16.msra.mxu0 0
    %6053 = vmatprep.subr.bf16.mxu0 0
    %6054 = vmatpush1.bf16.msra.mxu0 0
    %6055 = vmatprep.subr.bf16.mxu0 0
    %6056 = vmatpush1.bf16.msra.mxu0 0
    %6057 = vmatprep.mubr.bf16.mxu0 0
    %6058 = vmatmul.mubr.bf16.gmra.mrb[0].mxu0 %v5941
    %v6059 = vpop.f32.mrb[0].mxu0
    %v6060 = vadd.f32 0.0, %v6059
    %v6061 = vpop.f32.mrb[0].mxu0
    %v6062 = vadd.f32 0.0, %v6061
    %v6063 = vpop.f32.mrb[0].mxu0
    %v6064 = vpop.f32.mrb[0].mxu0
    %6065 = vdwg.mxu0
    %6066 = vmatprep.subr.bf16.mxu0 %v5931
    %6067 = vmatpush1.bf16.msra.mxu0 %v5930
    %6068 = vmatprep.subr.bf16.mxu0 0
    %6069 = vmatpush1.bf16.msra.mxu0 0
    %6070 = vmatprep.subr.bf16.mxu0 0
    %6071 = vmatpush1.bf16.msra.mxu0 0
    %6072 = vmatprep.subr.bf16.mxu0 0
    %6073 = vmatpush1.bf16.msra.mxu0 0
    %6074 = vmatprep.subr.bf16.mxu0 0
    %6075 = vmatpush1.bf16.msra.mxu0 0
    %6076 = vmatprep.subr.bf16.mxu0 0
    %6077 = vmatpush1.bf16.msra.mxu0 0
    %6078 = vmatprep.subr.bf16.mxu0 0
    %6079 = vmatpush1.bf16.msra.mxu0 0
    %6080 = vmatprep.subr.bf16.mxu0 0
    %6081 = vmatpush1.bf16.msra.mxu0 0
    %6082 = vmatprep.subr.bf16.mxu0 0
    %6083 = vmatpush1.bf16.msra.mxu0 0
    %6084 = vmatprep.subr.bf16.mxu0 0
    %6085 = vmatpush1.bf16.msra.mxu0 0
    %6086 = vmatprep.subr.bf16.mxu0 0
    %6087 = vmatpush1.bf16.msra.mxu0 0
    %6088 = vmatprep.subr.bf16.mxu0 0
    %6089 = vmatpush1.bf16.msra.mxu0 0
    %6090 = vmatprep.subr.bf16.mxu0 0
    %6091 = vmatpush1.bf16.msra.mxu0 0
    %6092 = vmatprep.subr.bf16.mxu0 0
    %6093 = vmatpush1.bf16.msra.mxu0 0
    %6094 = vmatprep.subr.bf16.mxu0 0
    %6095 = vmatpush1.bf16.msra.mxu0 0
    %6096 = vmatprep.subr.bf16.mxu0 0
    %6097 = vmatpush1.bf16.msra.mxu0 0
    %6098 = vmatprep.mubr.bf16.mxu0 0
    %6099 = vmatmul.mubr.bf16.gmra.mrb[0].mxu0 %v5941
    %v6100 = vpop.f32.mrb[0].mxu0
    %v6101 = vadd.f32 0.0, %v6100
    %v6102 = vpop.f32.mrb[0].mxu0
    %v6103 = vadd.f32 0.0, %v6102
    %v6104 = vpop.f32.mrb[0].mxu0
    %v6105 = vpop.f32.mrb[0].mxu0
    %6106 = vdwg.mxu0
    %v6107 = vadd.f32 %v5878, %v5978
    %v6108 = vadd.f32 %v5879, %v5980
    %v6109 = vadd.f32 %v5880, %v6019
    %v6110 = vadd.f32 %v5881, %v6021
    %v6111 = vadd.f32 %v5882, %v6060
    %v6112 = vadd.f32 %v5883, %v6062
    %v6113 = vadd.f32 %v5884, %v6101
    %v6114 = vadd.f32 %v5885, %v6103
    %s6115 = scalar_lea.vmem [#allocation2], 25
    %v6116 = vld [vmem:[%s6115] ss:$64 sm:$0x1]
    %v6117 = vld [vmem:[%s6115] ss:$64 sm:$0x2]
    %v6118 = vor.u32 %v6116, %v6117
    %v6119 = vpack.c.bf16 %v6118, %v6118
    %s6120 = scalar_lea.vmem [#allocation3], 832
    %v6121 = vld [vmem:[%s6120] sm:$0xff]
    %v6122 = vld [vmem:[%s6120 + $0x8] sm:$0xff]
    %v6123 = vld [vmem:[%s6120 + $0x10] sm:$0xff]
    %v6124 = vld [vmem:[%s6120 + $0x18] sm:$0xff]
    %v6125 = vld [vmem:[%s6120 + $0x20] sm:$0xff]
    %v6126 = vld [vmem:[%s6120 + $0x28] sm:$0xff]
    %v6127 = vld [vmem:[%s6120 + $0x30] sm:$0xff]
    %v6128 = vld [vmem:[%s6120 + $0x38] sm:$0xff]
    %v6137 = vunpack.c.l.b16 %v6121
    %v6138 = vunpack.c.h.b16 %v6121
    %v6139 = vunpack.c.l.b16 %v6122
    %v6140 = vunpack.c.h.b16 %v6122
    %v6141 = vunpack.c.l.b16 %v6123
    %v6142 = vunpack.c.h.b16 %v6123
    %v6143 = vunpack.c.l.b16 %v6124
    %v6144 = vunpack.c.h.b16 %v6124
    %v6145 = vunpack.c.l.b16 %v6125
    %v6146 = vunpack.c.h.b16 %v6125
    %v6147 = vunpack.c.l.b16 %v6126
    %v6148 = vunpack.c.h.b16 %v6126
    %v6149 = vunpack.c.l.b16 %v6127
    %v6150 = vunpack.c.h.b16 %v6127
    %v6151 = vunpack.c.l.b16 %v6128
    %v6152 = vunpack.c.h.b16 %v6128
    %v6153 = vpack.c.b16 %v6145, %v6137
    %v6154 = vpack.c.b16 %v6146, %v6138
    %v6155 = vpack.c.b16 %v6147, %v6139
    %v6156 = vpack.c.b16 %v6148, %v6140
    %v6157 = vpack.c.b16 %v6149, %v6141
    %v6158 = vpack.c.b16 %v6150, %v6142
    %v6159 = vpack.c.b16 %v6151, %v6143
    %v6160 = vpack.c.b16 %v6152, %v6144
    %v6170 = vsel %vm107, %v6119, 0
    %6172 = vmatprep.subr.bf16.mxu0 %v6154
    %6173 = vmatpush1.bf16.msra.mxu0 %v6153
    %6174 = vmatprep.subr.bf16.mxu0 0
    %6175 = vmatpush1.bf16.msra.mxu0 0
    %6176 = vmatprep.subr.bf16.mxu0 0
    %6177 = vmatpush1.bf16.msra.mxu0 0
    %6178 = vmatprep.subr.bf16.mxu0 0
    %6179 = vmatpush1.bf16.msra.mxu0 0
    %6180 = vmatprep.subr.bf16.mxu0 0
    %6181 = vmatpush1.bf16.msra.mxu0 0
    %6182 = vmatprep.subr.bf16.mxu0 0
    %6183 = vmatpush1.bf16.msra.mxu0 0
    %6184 = vmatprep.subr.bf16.mxu0 0
    %6185 = vmatpush1.bf16.msra.mxu0 0
    %6186 = vmatprep.subr.bf16.mxu0 0
    %6187 = vmatpush1.bf16.msra.mxu0 0
    %6188 = vmatprep.subr.bf16.mxu0 0
    %6189 = vmatpush1.bf16.msra.mxu0 0
    %6190 = vmatprep.subr.bf16.mxu0 0
    %6191 = vmatpush1.bf16.msra.mxu0 0
    %6192 = vmatprep.subr.bf16.mxu0 0
    %6193 = vmatpush1.bf16.msra.mxu0 0
    %6194 = vmatprep.subr.bf16.mxu0 0
    %6195 = vmatpush1.bf16.msra.mxu0 0
    %6196 = vmatprep.subr.bf16.mxu0 0
    %6197 = vmatpush1.bf16.msra.mxu0 0
    %6198 = vmatprep.subr.bf16.mxu0 0
    %6199 = vmatpush1.bf16.msra.mxu0 0
    %6200 = vmatprep.subr.bf16.mxu0 0
    %6201 = vmatpush1.bf16.msra.mxu0 0
    %6202 = vmatprep.subr.bf16.mxu0 0
    %6203 = vmatpush1.bf16.msra.mxu0 0
    %6204 = vmatprep.mubr.bf16.mxu0 0
    %6205 = vmatmul.mubr.bf16.gmra.mrb[0].mxu0 %v6170
    %v6206 = vpop.f32.mrb[0].mxu0
    %v6207 = vadd.f32 0.0, %v6206
    %v6208 = vpop.f32.mrb[0].mxu0
    %v6209 = vadd.f32 0.0, %v6208
    %v6210 = vpop.f32.mrb[0].mxu0
    %v6211 = vpop.f32.mrb[0].mxu0
    %6212 = vdwg.mxu0
    %6213 = vmatprep.subr.bf16.mxu0 %v6156
    %6214 = vmatpush1.bf16.msra.mxu0 %v6155
    %6215 = vmatprep.subr.bf16.mxu0 0
    %6216 = vmatpush1.bf16.msra.mxu0 0
    %6217 = vmatprep.subr.bf16.mxu0 0
    %6218 = vmatpush1.bf16.msra.mxu0 0
    %6219 = vmatprep.subr.bf16.mxu0 0
    %6220 = vmatpush1.bf16.msra.mxu0 0
    %6221 = vmatprep.subr.bf16.mxu0 0
    %6222 = vmatpush1.bf16.msra.mxu0 0
    %6223 = vmatprep.subr.bf16.mxu0 0
    %6224 = vmatpush1.bf16.msra.mxu0 0
    %6225 = vmatprep.subr.bf16.mxu0 0
    %6226 = vmatpush1.bf16.msra.mxu0 0
    %6227 = vmatprep.subr.bf16.mxu0 0
    %6228 = vmatpush1.bf16.msra.mxu0 0
    %6229 = vmatprep.subr.bf16.mxu0 0
    %6230 = vmatpush1.bf16.msra.mxu0 0
    %6231 = vmatprep.subr.bf16.mxu0 0
    %6232 = vmatpush1.bf16.msra.mxu0 0
    %6233 = vmatprep.subr.bf16.mxu0 0
    %6234 = vmatpush1.bf16.msra.mxu0 0
    %6235 = vmatprep.subr.bf16.mxu0 0
    %6236 = vmatpush1.bf16.msra.mxu0 0
    %6237 = vmatprep.subr.bf16.mxu0 0
    %6238 = vmatpush1.bf16.msra.mxu0 0
    %6239 = vmatprep.subr.bf16.mxu0 0
    %6240 = vmatpush1.bf16.msra.mxu0 0
    %6241 = vmatprep.subr.bf16.mxu0 0
    %6242 = vmatpush1.bf16.msra.mxu0 0
    %6243 = vmatprep.subr.bf16.mxu0 0
    %6244 = vmatpush1.bf16.msra.mxu0 0
    %6245 = vmatprep.mubr.bf16.mxu0 0
    %6246 = vmatmul.mubr.bf16.gmra.mrb[0].mxu0 %v6170
    %v6247 = vpop.f32.mrb[0].mxu0
    %v6248 = vadd.f32 0.0, %v6247
    %v6249 = vpop.f32.mrb[0].mxu0
    %v6250 = vadd.f32 0.0, %v6249
    %v6251 = vpop.f32.mrb[0].mxu0
    %v6252 = vpop.f32.mrb[0].mxu0
    %6253 = vdwg.mxu0
    %6254 = vmatprep.subr.bf16.mxu0 %v6158
    %6255 = vmatpush1.bf16.msra.mxu0 %v6157
    %6256 = vmatprep.subr.bf16.mxu0 0
    %6257 = vmatpush1.bf16.msra.mxu0 0
    %6258 = vmatprep.subr.bf16.mxu0 0
    %6259 = vmatpush1.bf16.msra.mxu0 0
    %6260 = vmatprep.subr.bf16.mxu0 0
    %6261 = vmatpush1.bf16.msra.mxu0 0
    %6262 = vmatprep.subr.bf16.mxu0 0
    %6263 = vmatpush1.bf16.msra.mxu0 0
    %6264 = vmatprep.subr.bf16.mxu0 0
    %6265 = vmatpush1.bf16.msra.mxu0 0
    %6266 = vmatprep.subr.bf16.mxu0 0
    %6267 = vmatpush1.bf16.msra.mxu0 0
    %6268 = vmatprep.subr.bf16.mxu0 0
    %6269 = vmatpush1.bf16.msra.mxu0 0
    %6270 = vmatprep.subr.bf16.mxu0 0
    %6271 = vmatpush1.bf16.msra.mxu0 0
    %6272 = vmatprep.subr.bf16.mxu0 0
    %6273 = vmatpush1.bf16.msra.mxu0 0
    %6274 = vmatprep.subr.bf16.mxu0 0
    %6275 = vmatpush1.bf16.msra.mxu0 0
    %6276 = vmatprep.subr.bf16.mxu0 0
    %6277 = vmatpush1.bf16.msra.mxu0 0
    %6278 = vmatprep.subr.bf16.mxu0 0
    %6279 = vmatpush1.bf16.msra.mxu0 0
    %6280 = vmatprep.subr.bf16.mxu0 0
    %6281 = vmatpush1.bf16.msra.mxu0 0
    %6282 = vmatprep.subr.bf16.mxu0 0
    %6283 = vmatpush1.bf16.msra.mxu0 0
    %6284 = vmatprep.subr.bf16.mxu0 0
    %6285 = vmatpush1.bf16.msra.mxu0 0
    %6286 = vmatprep.mubr.bf16.mxu0 0
    %6287 = vmatmul.mubr.bf16.gmra.mrb[0].mxu0 %v6170
    %v6288 = vpop.f32.mrb[0].mxu0
    %v6289 = vadd.f32 0.0, %v6288
    %v6290 = vpop.f32.mrb[0].mxu0
    %v6291 = vadd.f32 0.0, %v6290
    %v6292 = vpop.f32.mrb[0].mxu0
    %v6293 = vpop.f32.mrb[0].mxu0
    %6294 = vdwg.mxu0
    %6295 = vmatprep.subr.bf16.mxu0 %v6160
    %6296 = vmatpush1.bf16.msra.mxu0 %v6159
    %6297 = vmatprep.subr.bf16.mxu0 0
    %6298 = vmatpush1.bf16.msra.mxu0 0
    %6299 = vmatprep.subr.bf16.mxu0 0
    %6300 = vmatpush1.bf16.msra.mxu0 0
    %6301 = vmatprep.subr.bf16.mxu0 0
    %6302 = vmatpush1.bf16.msra.mxu0 0
    %6303 = vmatprep.subr.bf16.mxu0 0
    %6304 = vmatpush1.bf16.msra.mxu0 0
    %6305 = vmatprep.subr.bf16.mxu0 0
    %6306 = vmatpush1.bf16.msra.mxu0 0
    %6307 = vmatprep.subr.bf16.mxu0 0
    %6308 = vmatpush1.bf16.msra.mxu0 0
    %6309 = vmatprep.subr.bf16.mxu0 0
    %6310 = vmatpush1.bf16.msra.mxu0 0
    %6311 = vmatprep.subr.bf16.mxu0 0
    %6312 = vmatpush1.bf16.msra.mxu0 0
    %6313 = vmatprep.subr.bf16.mxu0 0
    %6314 = vmatpush1.bf16.msra.mxu0 0
    %6315 = vmatprep.subr.bf16.mxu0 0
    %6316 = vmatpush1.bf16.msra.mxu0 0
    %6317 = vmatprep.subr.bf16.mxu0 0
    %6318 = vmatpush1.bf16.msra.mxu0 0
    %6319 = vmatprep.subr.bf16.mxu0 0
    %6320 = vmatpush1.bf16.msra.mxu0 0
    %6321 = vmatprep.subr.bf16.mxu0 0
    %6322 = vmatpush1.bf16.msra.mxu0 0
    %6323 = vmatprep.subr.bf16.mxu0 0
    %6324 = vmatpush1.bf16.msra.mxu0 0
    %6325 = vmatprep.subr.bf16.mxu0 0
    %6326 = vmatpush1.bf16.msra.mxu0 0
    %6327 = vmatprep.mubr.bf16.mxu0 0
    %6328 = vmatmul.mubr.bf16.gmra.mrb[0].mxu0 %v6170
    %v6329 = vpop.f32.mrb[0].mxu0
    %v6330 = vadd.f32 0.0, %v6329
    %v6331 = vpop.f32.mrb[0].mxu0
    %v6332 = vadd.f32 0.0, %v6331
    %v6333 = vpop.f32.mrb[0].mxu0
    %v6334 = vpop.f32.mrb[0].mxu0
    %6335 = vdwg.mxu0
    %v6336 = vadd.f32 %v6107, %v6207
    %v6337 = vadd.f32 %v6108, %v6209
    %v6338 = vadd.f32 %v6109, %v6248
    %v6339 = vadd.f32 %v6110, %v6250
    %v6340 = vadd.f32 %v6111, %v6289
    %v6341 = vadd.f32 %v6112, %v6291
    %v6342 = vadd.f32 %v6113, %v6330
    %v6343 = vadd.f32 %v6114, %v6332
    %s6344 = scalar_lea.vmem [#allocation2], 26
    %v6345 = vld [vmem:[%s6344] ss:$64 sm:$0x1]
    %v6346 = vld [vmem:[%s6344] ss:$64 sm:$0x2]
    %v6347 = vor.u32 %v6345, %v6346
    %v6348 = vpack.c.bf16 %v6347, %v6347
    %s6349 = scalar_lea.vmem [#allocation3], 896
    %v6350 = vld [vmem:[%s6349] sm:$0xff]
    %v6351 = vld [vmem:[%s6349 + $0x8] sm:$0xff]
    %v6352 = vld [vmem:[%s6349 + $0x10] sm:$0xff]
    %v6353 = vld [vmem:[%s6349 + $0x18] sm:$0xff]
    %v6354 = vld [vmem:[%s6349 + $0x20] sm:$0xff]
    %v6355 = vld [vmem:[%s6349 + $0x28] sm:$0xff]
    %v6356 = vld [vmem:[%s6349 + $0x30] sm:$0xff]
    %v6357 = vld [vmem:[%s6349 + $0x38] sm:$0xff]
    %v6366 = vunpack.c.l.b16 %v6350
    %v6367 = vunpack.c.h.b16 %v6350
    %v6368 = vunpack.c.l.b16 %v6351
    %v6369 = vunpack.c.h.b16 %v6351
    %v6370 = vunpack.c.l.b16 %v6352
    %v6371 = vunpack.c.h.b16 %v6352
    %v6372 = vunpack.c.l.b16 %v6353
    %v6373 = vunpack.c.h.b16 %v6353
    %v6374 = vunpack.c.l.b16 %v6354
    %v6375 = vunpack.c.h.b16 %v6354
    %v6376 = vunpack.c.l.b16 %v6355
    %v6377 = vunpack.c.h.b16 %v6355
    %v6378 = vunpack.c.l.b16 %v6356
    %v6379 = vunpack.c.h.b16 %v6356
    %v6380 = vunpack.c.l.b16 %v6357
    %v6381 = vunpack.c.h.b16 %v6357
    %v6382 = vpack.c.b16 %v6374, %v6366
    %v6383 = vpack.c.b16 %v6375, %v6367
    %v6384 = vpack.c.b16 %v6376, %v6368
    %v6385 = vpack.c.b16 %v6377, %v6369
    %v6386 = vpack.c.b16 %v6378, %v6370
    %v6387 = vpack.c.b16 %v6379, %v6371
    %v6388 = vpack.c.b16 %v6380, %v6372
    %v6389 = vpack.c.b16 %v6381, %v6373
    %v6399 = vsel %vm107, %v6348, 0
    %6401 = vmatprep.subr.bf16.mxu0 %v6383
    %6402 = vmatpush1.bf16.msra.mxu0 %v6382
    %6403 = vmatprep.subr.bf16.mxu0 0
    %6404 = vmatpush1.bf16.msra.mxu0 0
    %6405 = vmatprep.subr.bf16.mxu0 0
    %6406 = vmatpush1.bf16.msra.mxu0 0
    %6407 = vmatprep.subr.bf16.mxu0 0
    %6408 = vmatpush1.bf16.msra.mxu0 0
    %6409 = vmatprep.subr.bf16.mxu0 0
    %6410 = vmatpush1.bf16.msra.mxu0 0
    %6411 = vmatprep.subr.bf16.mxu0 0
    %6412 = vmatpush1.bf16.msra.mxu0 0
    %6413 = vmatprep.subr.bf16.mxu0 0
    %6414 = vmatpush1.bf16.msra.mxu0 0
    %6415 = vmatprep.subr.bf16.mxu0 0
    %6416 = vmatpush1.bf16.msra.mxu0 0
    %6417 = vmatprep.subr.bf16.mxu0 0
    %6418 = vmatpush1.bf16.msra.mxu0 0
    %6419 = vmatprep.subr.bf16.mxu0 0
    %6420 = vmatpush1.bf16.msra.mxu0 0
    %6421 = vmatprep.subr.bf16.mxu0 0
    %6422 = vmatpush1.bf16.msra.mxu0 0
    %6423 = vmatprep.subr.bf16.mxu0 0
    %6424 = vmatpush1.bf16.msra.mxu0 0
    %6425 = vmatprep.subr.bf16.mxu0 0
    %6426 = vmatpush1.bf16.msra.mxu0 0
    %6427 = vmatprep.subr.bf16.mxu0 0
    %6428 = vmatpush1.bf16.msra.mxu0 0
    %6429 = vmatprep.subr.bf16.mxu0 0
    %6430 = vmatpush1.bf16.msra.mxu0 0
    %6431 = vmatprep.subr.bf16.mxu0 0
    %6432 = vmatpush1.bf16.msra.mxu0 0
    %6433 = vmatprep.mubr.bf16.mxu0 0
    %6434 = vmatmul.mubr.bf16.gmra.mrb[0].mxu0 %v6399
    %v6435 = vpop.f32.mrb[0].mxu0
    %v6436 = vadd.f32 0.0, %v6435
    %v6437 = vpop.f32.mrb[0].mxu0
    %v6438 = vadd.f32 0.0, %v6437
    %v6439 = vpop.f32.mrb[0].mxu0
    %v6440 = vpop.f32.mrb[0].mxu0
    %6441 = vdwg.mxu0
    %6442 = vmatprep.subr.bf16.mxu0 %v6385
    %6443 = vmatpush1.bf16.msra.mxu0 %v6384
    %6444 = vmatprep.subr.bf16.mxu0 0
    %6445 = vmatpush1.bf16.msra.mxu0 0
    %6446 = vmatprep.subr.bf16.mxu0 0
    %6447 = vmatpush1.bf16.msra.mxu0 0
    %6448 = vmatprep.subr.bf16.mxu0 0
    %6449 = vmatpush1.bf16.msra.mxu0 0
    %6450 = vmatprep.subr.bf16.mxu0 0
    %6451 = vmatpush1.bf16.msra.mxu0 0
    %6452 = vmatprep.subr.bf16.mxu0 0
    %6453 = vmatpush1.bf16.msra.mxu0 0
    %6454 = vmatprep.subr.bf16.mxu0 0
    %6455 = vmatpush1.bf16.msra.mxu0 0
    %6456 = vmatprep.subr.bf16.mxu0 0
    %6457 = vmatpush1.bf16.msra.mxu0 0
    %6458 = vmatprep.subr.bf16.mxu0 0
    %6459 = vmatpush1.bf16.msra.mxu0 0
    %6460 = vmatprep.subr.bf16.mxu0 0
    %6461 = vmatpush1.bf16.msra.mxu0 0
    %6462 = vmatprep.subr.bf16.mxu0 0
    %6463 = vmatpush1.bf16.msra.mxu0 0
    %6464 = vmatprep.subr.bf16.mxu0 0
    %6465 = vmatpush1.bf16.msra.mxu0 0
    %6466 = vmatprep.subr.bf16.mxu0 0
    %6467 = vmatpush1.bf16.msra.mxu0 0
    %6468 = vmatprep.subr.bf16.mxu0 0
    %6469 = vmatpush1.bf16.msra.mxu0 0
    %6470 = vmatprep.subr.bf16.mxu0 0
    %6471 = vmatpush1.bf16.msra.mxu0 0
    %6472 = vmatprep.subr.bf16.mxu0 0
    %6473 = vmatpush1.bf16.msra.mxu0 0
    %6474 = vmatprep.mubr.bf16.mxu0 0
    %6475 = vmatmul.mubr.bf16.gmra.mrb[0].mxu0 %v6399
    %v6476 = vpop.f32.mrb[0].mxu0
    %v6477 = vadd.f32 0.0, %v6476
    %v6478 = vpop.f32.mrb[0].mxu0
    %v6479 = vadd.f32 0.0, %v6478
    %v6480 = vpop.f32.mrb[0].mxu0
    %v6481 = vpop.f32.mrb[0].mxu0
    %6482 = vdwg.mxu0
    %6483 = vmatprep.subr.bf16.mxu0 %v6387
    %6484 = vmatpush1.bf16.msra.mxu0 %v6386
    %6485 = vmatprep.subr.bf16.mxu0 0
    %6486 = vmatpush1.bf16.msra.mxu0 0
    %6487 = vmatprep.subr.bf16.mxu0 0
    %6488 = vmatpush1.bf16.msra.mxu0 0
    %6489 = vmatprep.subr.bf16.mxu0 0
    %6490 = vmatpush1.bf16.msra.mxu0 0
    %6491 = vmatprep.subr.bf16.mxu0 0
    %6492 = vmatpush1.bf16.msra.mxu0 0
    %6493 = vmatprep.subr.bf16.mxu0 0
    %6494 = vmatpush1.bf16.msra.mxu0 0
    %6495 = vmatprep.subr.bf16.mxu0 0
    %6496 = vmatpush1.bf16.msra.mxu0 0
    %6497 = vmatprep.subr.bf16.mxu0 0
    %6498 = vmatpush1.bf16.msra.mxu0 0
    %6499 = vmatprep.subr.bf16.mxu0 0
    %6500 = vmatpush1.bf16.msra.mxu0 0
    %6501 = vmatprep.subr.bf16.mxu0 0
    %6502 = vmatpush1.bf16.msra.mxu0 0
    %6503 = vmatprep.subr.bf16.mxu0 0
    %6504 = vmatpush1.bf16.msra.mxu0 0
    %6505 = vmatprep.subr.bf16.mxu0 0
    %6506 = vmatpush1.bf16.msra.mxu0 0
    %6507 = vmatprep.subr.bf16.mxu0 0
    %6508 = vmatpush1.bf16.msra.mxu0 0
    %6509 = vmatprep.subr.bf16.mxu0 0
    %6510 = vmatpush1.bf16.msra.mxu0 0
    %6511 = vmatprep.subr.bf16.mxu0 0
    %6512 = vmatpush1.bf16.msra.mxu0 0
    %6513 = vmatprep.subr.bf16.mxu0 0
    %6514 = vmatpush1.bf16.msra.mxu0 0
    %6515 = vmatprep.mubr.bf16.mxu0 0
    %6516 = vmatmul.mubr.bf16.gmra.mrb[0].mxu0 %v6399
    %v6517 = vpop.f32.mrb[0].mxu0
    %v6518 = vadd.f32 0.0, %v6517
    %v6519 = vpop.f32.mrb[0].mxu0
    %v6520 = vadd.f32 0.0, %v6519
    %v6521 = vpop.f32.mrb[0].mxu0
    %v6522 = vpop.f32.mrb[0].mxu0
    %6523 = vdwg.mxu0
    %6524 = vmatprep.subr.bf16.mxu0 %v6389
    %6525 = vmatpush1.bf16.msra.mxu0 %v6388
    %6526 = vmatprep.subr.bf16.mxu0 0
    %6527 = vmatpush1.bf16.msra.mxu0 0
    %6528 = vmatprep.subr.bf16.mxu0 0
    %6529 = vmatpush1.bf16.msra.mxu0 0
    %6530 = vmatprep.subr.bf16.mxu0 0
    %6531 = vmatpush1.bf16.msra.mxu0 0
    %6532 = vmatprep.subr.bf16.mxu0 0
    %6533 = vmatpush1.bf16.msra.mxu0 0
    %6534 = vmatprep.subr.bf16.mxu0 0
    %6535 = vmatpush1.bf16.msra.mxu0 0
    %6536 = vmatprep.subr.bf16.mxu0 0
    %6537 = vmatpush1.bf16.msra.mxu0 0
    %6538 = vmatprep.subr.bf16.mxu0 0
    %6539 = vmatpush1.bf16.msra.mxu0 0
    %6540 = vmatprep.subr.bf16.mxu0 0
    %6541 = vmatpush1.bf16.msra.mxu0 0
    %6542 = vmatprep.subr.bf16.mxu0 0
    %6543 = vmatpush1.bf16.msra.mxu0 0
    %6544 = vmatprep.subr.bf16.mxu0 0
    %6545 = vmatpush1.bf16.msra.mxu0 0
    %6546 = vmatprep.subr.bf16.mxu0 0
    %6547 = vmatpush1.bf16.msra.mxu0 0
    %6548 = vmatprep.subr.bf16.mxu0 0
    %6549 = vmatpush1.bf16.msra.mxu0 0
    %6550 = vmatprep.subr.bf16.mxu0 0
    %6551 = vmatpush1.bf16.msra.mxu0 0
    %6552 = vmatprep.subr.bf16.mxu0 0
    %6553 = vmatpush1.bf16.msra.mxu0 0
    %6554 = vmatprep.subr.bf16.mxu0 0
    %6555 = vmatpush1.bf16.msra.mxu0 0
    %6556 = vmatprep.mubr.bf16.mxu0 0
    %6557 = vmatmul.mubr.bf16.gmra.mrb[0].mxu0 %v6399
    %v6558 = vpop.f32.mrb[0].mxu0
    %v6559 = vadd.f32 0.0, %v6558
    %v6560 = vpop.f32.mrb[0].mxu0
    %v6561 = vadd.f32 0.0, %v6560
    %v6562 = vpop.f32.mrb[0].mxu0
    %v6563 = vpop.f32.mrb[0].mxu0
    %6564 = vdwg.mxu0
    %v6565 = vadd.f32 %v6336, %v6436
    %v6566 = vadd.f32 %v6337, %v6438
    %v6567 = vadd.f32 %v6338, %v6477
    %v6568 = vadd.f32 %v6339, %v6479
    %v6569 = vadd.f32 %v6340, %v6518
    %v6570 = vadd.f32 %v6341, %v6520
    %v6571 = vadd.f32 %v6342, %v6559
    %v6572 = vadd.f32 %v6343, %v6561
    %s6573 = scalar_lea.vmem [#allocation2], 27
    %v6574 = vld [vmem:[%s6573] ss:$64 sm:$0x1]
    %v6575 = vld [vmem:[%s6573] ss:$64 sm:$0x2]
    %v6576 = vor.u32 %v6574, %v6575
    %v6577 = vpack.c.bf16 %v6576, %v6576
    %s6578 = scalar_lea.vmem [#allocation3], 960
    %v6579 = vld [vmem:[%s6578] sm:$0xff]
    %v6580 = vld [vmem:[%s6578 + $0x8] sm:$0xff]
    %v6581 = vld [vmem:[%s6578 + $0x10] sm:$0xff]
    %v6582 = vld [vmem:[%s6578 + $0x18] sm:$0xff]
    %v6583 = vld [vmem:[%s6578 + $0x20] sm:$0xff]
    %v6584 = vld [vmem:[%s6578 + $0x28] sm:$0xff]
    %v6585 = vld [vmem:[%s6578 + $0x30] sm:$0xff]
    %v6586 = vld [vmem:[%s6578 + $0x38] sm:$0xff]
    %v6595 = vunpack.c.l.b16 %v6579
    %v6596 = vunpack.c.h.b16 %v6579
    %v6597 = vunpack.c.l.b16 %v6580
    %v6598 = vunpack.c.h.b16 %v6580
    %v6599 = vunpack.c.l.b16 %v6581
    %v6600 = vunpack.c.h.b16 %v6581
    %v6601 = vunpack.c.l.b16 %v6582
    %v6602 = vunpack.c.h.b16 %v6582
    %v6603 = vunpack.c.l.b16 %v6583
    %v6604 = vunpack.c.h.b16 %v6583
    %v6605 = vunpack.c.l.b16 %v6584
    %v6606 = vunpack.c.h.b16 %v6584
    %v6607 = vunpack.c.l.b16 %v6585
    %v6608 = vunpack.c.h.b16 %v6585
    %v6609 = vunpack.c.l.b16 %v6586
    %v6610 = vunpack.c.h.b16 %v6586
    %v6611 = vpack.c.b16 %v6603, %v6595
    %v6612 = vpack.c.b16 %v6604, %v6596
    %v6613 = vpack.c.b16 %v6605, %v6597
    %v6614 = vpack.c.b16 %v6606, %v6598
    %v6615 = vpack.c.b16 %v6607, %v6599
    %v6616 = vpack.c.b16 %v6608, %v6600
    %v6617 = vpack.c.b16 %v6609, %v6601
    %v6618 = vpack.c.b16 %v6610, %v6602
    %v6628 = vsel %vm107, %v6577, 0
    %6630 = vmatprep.subr.bf16.mxu0 %v6612
    %6631 = vmatpush1.bf16.msra.mxu0 %v6611
    %6632 = vmatprep.subr.bf16.mxu0 0
    %6633 = vmatpush1.bf16.msra.mxu0 0
    %6634 = vmatprep.subr.bf16.mxu0 0
    %6635 = vmatpush1.bf16.msra.mxu0 0
    %6636 = vmatprep.subr.bf16.mxu0 0
    %6637 = vmatpush1.bf16.msra.mxu0 0
    %6638 = vmatprep.subr.bf16.mxu0 0
    %6639 = vmatpush1.bf16.msra.mxu0 0
    %6640 = vmatprep.subr.bf16.mxu0 0
    %6641 = vmatpush1.bf16.msra.mxu0 0
    %6642 = vmatprep.subr.bf16.mxu0 0
    %6643 = vmatpush1.bf16.msra.mxu0 0
    %6644 = vmatprep.subr.bf16.mxu0 0
    %6645 = vmatpush1.bf16.msra.mxu0 0
    %6646 = vmatprep.subr.bf16.mxu0 0
    %6647 = vmatpush1.bf16.msra.mxu0 0
    %6648 = vmatprep.subr.bf16.mxu0 0
    %6649 = vmatpush1.bf16.msra.mxu0 0
    %6650 = vmatprep.subr.bf16.mxu0 0
    %6651 = vmatpush1.bf16.msra.mxu0 0
    %6652 = vmatprep.subr.bf16.mxu0 0
    %6653 = vmatpush1.bf16.msra.mxu0 0
    %6654 = vmatprep.subr.bf16.mxu0 0
    %6655 = vmatpush1.bf16.msra.mxu0 0
    %6656 = vmatprep.subr.bf16.mxu0 0
    %6657 = vmatpush1.bf16.msra.mxu0 0
    %6658 = vmatprep.subr.bf16.mxu0 0
    %6659 = vmatpush1.bf16.msra.mxu0 0
    %6660 = vmatprep.subr.bf16.mxu0 0
    %6661 = vmatpush1.bf16.msra.mxu0 0
    %6662 = vmatprep.mubr.bf16.mxu0 0
    %6663 = vmatmul.mubr.bf16.gmra.mrb[0].mxu0 %v6628
    %v6664 = vpop.f32.mrb[0].mxu0
    %v6665 = vadd.f32 0.0, %v6664
    %v6666 = vpop.f32.mrb[0].mxu0
    %v6667 = vadd.f32 0.0, %v6666
    %v6668 = vpop.f32.mrb[0].mxu0
    %v6669 = vpop.f32.mrb[0].mxu0
    %6670 = vdwg.mxu0
    %6671 = vmatprep.subr.bf16.mxu0 %v6614
    %6672 = vmatpush1.bf16.msra.mxu0 %v6613
    %6673 = vmatprep.subr.bf16.mxu0 0
    %6674 = vmatpush1.bf16.msra.mxu0 0
    %6675 = vmatprep.subr.bf16.mxu0 0
    %6676 = vmatpush1.bf16.msra.mxu0 0
    %6677 = vmatprep.subr.bf16.mxu0 0
    %6678 = vmatpush1.bf16.msra.mxu0 0
    %6679 = vmatprep.subr.bf16.mxu0 0
    %6680 = vmatpush1.bf16.msra.mxu0 0
    %6681 = vmatprep.subr.bf16.mxu0 0
    %6682 = vmatpush1.bf16.msra.mxu0 0
    %6683 = vmatprep.subr.bf16.mxu0 0
    %6684 = vmatpush1.bf16.msra.mxu0 0
    %6685 = vmatprep.subr.bf16.mxu0 0
    %6686 = vmatpush1.bf16.msra.mxu0 0
    %6687 = vmatprep.subr.bf16.mxu0 0
    %6688 = vmatpush1.bf16.msra.mxu0 0
    %6689 = vmatprep.subr.bf16.mxu0 0
    %6690 = vmatpush1.bf16.msra.mxu0 0
    %6691 = vmatprep.subr.bf16.mxu0 0
    %6692 = vmatpush1.bf16.msra.mxu0 0
    %6693 = vmatprep.subr.bf16.mxu0 0
    %6694 = vmatpush1.bf16.msra.mxu0 0
    %6695 = vmatprep.subr.bf16.mxu0 0
    %6696 = vmatpush1.bf16.msra.mxu0 0
    %6697 = vmatprep.subr.bf16.mxu0 0
    %6698 = vmatpush1.bf16.msra.mxu0 0
    %6699 = vmatprep.subr.bf16.mxu0 0
    %6700 = vmatpush1.bf16.msra.mxu0 0
    %6701 = vmatprep.subr.bf16.mxu0 0
    %6702 = vmatpush1.bf16.msra.mxu0 0
    %6703 = vmatprep.mubr.bf16.mxu0 0
    %6704 = vmatmul.mubr.bf16.gmra.mrb[0].mxu0 %v6628
    %v6705 = vpop.f32.mrb[0].mxu0
    %v6706 = vadd.f32 0.0, %v6705
    %v6707 = vpop.f32.mrb[0].mxu0
    %v6708 = vadd.f32 0.0, %v6707
    %v6709 = vpop.f32.mrb[0].mxu0
    %v6710 = vpop.f32.mrb[0].mxu0
    %6711 = vdwg.mxu0
    %6712 = vmatprep.subr.bf16.mxu0 %v6616
    %6713 = vmatpush1.bf16.msra.mxu0 %v6615
    %6714 = vmatprep.subr.bf16.mxu0 0
    %6715 = vmatpush1.bf16.msra.mxu0 0
    %6716 = vmatprep.subr.bf16.mxu0 0
    %6717 = vmatpush1.bf16.msra.mxu0 0
    %6718 = vmatprep.subr.bf16.mxu0 0
    %6719 = vmatpush1.bf16.msra.mxu0 0
    %6720 = vmatprep.subr.bf16.mxu0 0
    %6721 = vmatpush1.bf16.msra.mxu0 0
    %6722 = vmatprep.subr.bf16.mxu0 0
    %6723 = vmatpush1.bf16.msra.mxu0 0
    %6724 = vmatprep.subr.bf16.mxu0 0
    %6725 = vmatpush1.bf16.msra.mxu0 0
    %6726 = vmatprep.subr.bf16.mxu0 0
    %6727 = vmatpush1.bf16.msra.mxu0 0
    %6728 = vmatprep.subr.bf16.mxu0 0
    %6729 = vmatpush1.bf16.msra.mxu0 0
    %6730 = vmatprep.subr.bf16.mxu0 0
    %6731 = vmatpush1.bf16.msra.mxu0 0
    %6732 = vmatprep.subr.bf16.mxu0 0
    %6733 = vmatpush1.bf16.msra.mxu0 0
    %6734 = vmatprep.subr.bf16.mxu0 0
    %6735 = vmatpush1.bf16.msra.mxu0 0
    %6736 = vmatprep.subr.bf16.mxu0 0
    %6737 = vmatpush1.bf16.msra.mxu0 0
    %6738 = vmatprep.subr.bf16.mxu0 0
    %6739 = vmatpush1.bf16.msra.mxu0 0
    %6740 = vmatprep.subr.bf16.mxu0 0
    %6741 = vmatpush1.bf16.msra.mxu0 0
    %6742 = vmatprep.subr.bf16.mxu0 0
    %6743 = vmatpush1.bf16.msra.mxu0 0
    %6744 = vmatprep.mubr.bf16.mxu0 0
    %6745 = vmatmul.mubr.bf16.gmra.mrb[0].mxu0 %v6628
    %v6746 = vpop.f32.mrb[0].mxu0
    %v6747 = vadd.f32 0.0, %v6746
    %v6748 = vpop.f32.mrb[0].mxu0
    %v6749 = vadd.f32 0.0, %v6748
    %v6750 = vpop.f32.mrb[0].mxu0
    %v6751 = vpop.f32.mrb[0].mxu0
    %6752 = vdwg.mxu0
    %6753 = vmatprep.subr.bf16.mxu0 %v6618
    %6754 = vmatpush1.bf16.msra.mxu0 %v6617
    %6755 = vmatprep.subr.bf16.mxu0 0
    %6756 = vmatpush1.bf16.msra.mxu0 0
    %6757 = vmatprep.subr.bf16.mxu0 0
    %6758 = vmatpush1.bf16.msra.mxu0 0
    %6759 = vmatprep.subr.bf16.mxu0 0
    %6760 = vmatpush1.bf16.msra.mxu0 0
    %6761 = vmatprep.subr.bf16.mxu0 0
    %6762 = vmatpush1.bf16.msra.mxu0 0
    %6763 = vmatprep.subr.bf16.mxu0 0
    %6764 = vmatpush1.bf16.msra.mxu0 0
    %6765 = vmatprep.subr.bf16.mxu0 0
    %6766 = vmatpush1.bf16.msra.mxu0 0
    %6767 = vmatprep.subr.bf16.mxu0 0
    %6768 = vmatpush1.bf16.msra.mxu0 0
    %6769 = vmatprep.subr.bf16.mxu0 0
    %6770 = vmatpush1.bf16.msra.mxu0 0
    %6771 = vmatprep.subr.bf16.mxu0 0
    %6772 = vmatpush1.bf16.msra.mxu0 0
    %6773 = vmatprep.subr.bf16.mxu0 0
    %6774 = vmatpush1.bf16.msra.mxu0 0
    %6775 = vmatprep.subr.bf16.mxu0 0
    %6776 = vmatpush1.bf16.msra.mxu0 0
    %6777 = vmatprep.subr.bf16.mxu0 0
    %6778 = vmatpush1.bf16.msra.mxu0 0
    %6779 = vmatprep.subr.bf16.mxu0 0
    %6780 = vmatpush1.bf16.msra.mxu0 0
    %6781 = vmatprep.subr.bf16.mxu0 0
    %6782 = vmatpush1.bf16.msra.mxu0 0
    %6783 = vmatprep.subr.bf16.mxu0 0
    %6784 = vmatpush1.bf16.msra.mxu0 0
    %6785 = vmatprep.mubr.bf16.mxu0 0
    %6786 = vmatmul.mubr.bf16.gmra.mrb[0].mxu0 %v6628
    %v6787 = vpop.f32.mrb[0].mxu0
    %v6788 = vadd.f32 0.0, %v6787
    %v6789 = vpop.f32.mrb[0].mxu0
    %v6790 = vadd.f32 0.0, %v6789
    %v6791 = vpop.f32.mrb[0].mxu0
    %v6792 = vpop.f32.mrb[0].mxu0
    %6793 = vdwg.mxu0
    %v6794 = vadd.f32 %v6565, %v6665
    %v6795 = vadd.f32 %v6566, %v6667
    %v6796 = vadd.f32 %v6567, %v6706
    %v6797 = vadd.f32 %v6568, %v6708
    %v6798 = vadd.f32 %v6569, %v6747
    %v6799 = vadd.f32 %v6570, %v6749
    %v6800 = vadd.f32 %v6571, %v6788
    %v6801 = vadd.f32 %v6572, %v6790
    %v6802 = vld [vmem:[%s6] sm:$0xff]
    %v6804 = vlaneseq
    %v6805 = vshrl.u32 %v6804, 7
    %v6806 = vsub.s32 0, %v6805
    %v6807 = vrot.slane %v6802, %v6806
    %v6808 = vlaneseq
    %v6809 = vshrl.u32 %v6808, 7
    %v6810 = vsub.s32 1, %v6809
    %v6811 = vrot.slane %v6802, %v6810
    %v6812 = vlaneseq
    %v6813 = vshrl.u32 %v6812, 7
    %v6814 = vsub.s32 2, %v6813
    %v6815 = vrot.slane %v6802, %v6814
    %v6816 = vlaneseq
    %v6817 = vshrl.u32 %v6816, 7
    %v6818 = vsub.s32 3, %v6817
    %v6819 = vrot.slane %v6802, %v6818
    %v6820 = vlaneseq
    %v6821 = vshrl.u32 %v6820, 7
    %v6822 = vsub.s32 4, %v6821
    %v6823 = vrot.slane %v6802, %v6822
    %v6824 = vlaneseq
    %v6825 = vshrl.u32 %v6824, 7
    %v6826 = vsub.s32 5, %v6825
    %v6827 = vrot.slane %v6802, %v6826
    %v6828 = vlaneseq
    %v6829 = vshrl.u32 %v6828, 7
    %v6830 = vsub.s32 6, %v6829
    %v6831 = vrot.slane %v6802, %v6830
    %v6832 = vlaneseq
    %v6833 = vshrl.u32 %v6832, 7
    %v6834 = vsub.s32 7, %v6833
    %v6835 = vrot.slane %v6802, %v6834
    %v6844 = vadd.f32 %v6794, %v6807
    %v6845 = vadd.f32 %v6795, %v6811
    %v6846 = vadd.f32 %v6796, %v6815
    %v6847 = vadd.f32 %v6797, %v6819
    %v6848 = vadd.f32 %v6798, %v6823
    %v6849 = vadd.f32 %v6799, %v6827
    %v6850 = vadd.f32 %v6800, %v6831
    %v6851 = vadd.f32 %v6801, %v6835
    %v6852 = vsub.f32 0.0, %v6844
    %v6853 = vsub.f32 0.0, %v6845
    %v6854 = vsub.f32 0.0, %v6846
    %v6855 = vsub.f32 0.0, %v6847
    %v6856 = vsub.f32 0.0, %v6848
    %v6857 = vsub.f32 0.0, %v6849
    %v6858 = vsub.f32 0.0, %v6850
    %v6859 = vsub.f32 0.0, %v6851
    %v6860 = vmul.f32 %v6852, 1.442695
    %v6861 = vpow.pop %v6860
    %v6862 = vmul.f32 %v6853, 1.442695
    %v6863 = vpow.pop %v6862
    %v6864 = vmul.f32 %v6854, 1.442695
    %v6865 = vpow.pop %v6864
    %v6866 = vmul.f32 %v6855, 1.442695
    %v6867 = vpow.pop %v6866
    %v6868 = vmul.f32 %v6856, 1.442695
    %v6869 = vpow.pop %v6868
    %v6870 = vmul.f32 %v6857, 1.442695
    %v6871 = vpow.pop %v6870
    %v6872 = vmul.f32 %v6858, 1.442695
    %v6873 = vpow.pop %v6872
    %v6874 = vmul.f32 %v6859, 1.442695
    %v6875 = vpow.pop %v6874
    %v6876 = vadd.f32 %v6861, 1.0
    %v6877 = vadd.f32 %v6863, 1.0
    %v6878 = vadd.f32 %v6865, 1.0
    %v6879 = vadd.f32 %v6867, 1.0
    %v6880 = vadd.f32 %v6869, 1.0
    %v6881 = vadd.f32 %v6871, 1.0
    %v6882 = vadd.f32 %v6873, 1.0
    %v6883 = vadd.f32 %v6875, 1.0
    %v6884 = vrcp.pop %v6876
    %v6885 = vrcp.pop %v6877
    %v6886 = vrcp.pop %v6878
    %v6887 = vrcp.pop %v6879
    %v6888 = vrcp.pop %v6880
    %v6889 = vrcp.pop %v6881
    %v6890 = vrcp.pop %v6882
    %v6891 = vrcp.pop %v6883
    %v6892 = vpack.c.bf16 %v6884, %v6884
    %v6893 = vpack.c.bf16 %v6885, %v6885
    %v6894 = vpack.c.bf16 %v6886, %v6886
    %v6895 = vpack.c.bf16 %v6887, %v6887
    %v6896 = vpack.c.bf16 %v6888, %v6888
    %v6897 = vpack.c.bf16 %v6889, %v6889
    %v6898 = vpack.c.bf16 %v6890, %v6890
    %v6899 = vpack.c.bf16 %v6891, %v6891
    %v6900 = vld [vmem:[%s7] sm:$0xf]
    %v6901 = vld [vmem:[%s7 + $0x4] sm:$0xf]
    %v6902 = vld [vmem:[%s7 + $0x8] sm:$0xf]
    %v6903 = vld [vmem:[%s7 + $0xc] sm:$0xf]
    %v6904 = vld [vmem:[%s7 + $0x10] sm:$0xf]
    %v6905 = vld [vmem:[%s7 + $0x14] sm:$0xf]
    %v6906 = vld [vmem:[%s7 + $0x18] sm:$0xf]
    %v6907 = vld [vmem:[%s7 + $0x1c] sm:$0xf]
    %v6908 = vld [vmem:[%s7 + $0x20] sm:$0xf]
    %v6909 = vld [vmem:[%s7 + $0x24] sm:$0xf]
    %v6910 = vld [vmem:[%s7 + $0x28] sm:$0xf]
    %v6911 = vld [vmem:[%s7 + $0x2c] sm:$0xf]
    %v6912 = vld [vmem:[%s7 + $0x30] sm:$0xf]
    %v6913 = vld [vmem:[%s7 + $0x34] sm:$0xf]
    %v6914 = vld [vmem:[%s7 + $0x38] sm:$0xf]
    %v6915 = vld [vmem:[%s7 + $0x3c] sm:$0xf]
    %v6916 = vld [vmem:[%s7 + $0x40] sm:$0xf]
    %v6917 = vld [vmem:[%s7 + $0x44] sm:$0xf]
    %v6918 = vld [vmem:[%s7 + $0x48] sm:$0xf]
    %v6919 = vld [vmem:[%s7 + $0x4c] sm:$0xf]
    %v6920 = vld [vmem:[%s7 + $0x50] sm:$0xf]
    %v6921 = vld [vmem:[%s7 + $0x54] sm:$0xf]
    %v6922 = vld [vmem:[%s7 + $0x58] sm:$0xf]
    %v6923 = vld [vmem:[%s7 + $0x5c] sm:$0xf]
    %v6924 = vld [vmem:[%s7 + $0x60] sm:$0xf]
    %v6925 = vld [vmem:[%s7 + $0x64] sm:$0xf]
    %v6926 = vld [vmem:[%s7 + $0x68] sm:$0xf]
    %v6927 = vld [vmem:[%s7 + $0x6c] sm:$0xf]
    %v6928 = vld [vmem:[%s7 + $0x70] sm:$0xf]
    %v6929 = vld [vmem:[%s7 + $0x74] sm:$0xf]
    %v6930 = vld [vmem:[%s7 + $0x78] sm:$0xf]
    %v6931 = vld [vmem:[%s7 + $0x7c] sm:$0xf]
    %v6932 = vld [vmem:[%s7 + $0x80] sm:$0xf]
    %v6933 = vld [vmem:[%s7 + $0x84] sm:$0xf]
    %v6934 = vld [vmem:[%s7 + $0x88] sm:$0xf]
    %v6935 = vld [vmem:[%s7 + $0x8c] sm:$0xf]
    %v6936 = vld [vmem:[%s7 + $0x90] sm:$0xf]
    %v6937 = vld [vmem:[%s7 + $0x94] sm:$0xf]
    %v6938 = vld [vmem:[%s7 + $0x98] sm:$0xf]
    %v6939 = vld [vmem:[%s7 + $0x9c] sm:$0xf]
    %v6940 = vld [vmem:[%s7 + $0xa0] sm:$0xf]
    %v6941 = vld [vmem:[%s7 + $0xa4] sm:$0xf]
    %v6942 = vld [vmem:[%s7 + $0xa8] sm:$0xf]
    %v6943 = vld [vmem:[%s7 + $0xac] sm:$0xf]
    %v6944 = vld [vmem:[%s7 + $0xb0] sm:$0xf]
    %v6945 = vld [vmem:[%s7 + $0xb4] sm:$0xf]
    %v6946 = vld [vmem:[%s7 + $0xb8] sm:$0xf]
    %v6947 = vld [vmem:[%s7 + $0xbc] sm:$0xf]
    %v6948 = vld [vmem:[%s7 + $0xc0] sm:$0xf]
    %v6949 = vld [vmem:[%s7 + $0xc4] sm:$0xf]
    %v6950 = vld [vmem:[%s7 + $0xc8] sm:$0xf]
    %v6951 = vld [vmem:[%s7 + $0xcc] sm:$0xf]
    %v6952 = vld [vmem:[%s7 + $0xd0] sm:$0xf]
    %v6953 = vld [vmem:[%s7 + $0xd4] sm:$0xf]
    %v6954 = vld [vmem:[%s7 + $0xd8] sm:$0xf]
    %v6955 = vld [vmem:[%s7 + $0xdc] sm:$0xf]
    %v6956 = vld [vmem:[%s7 + $0xe0] sm:$0xf]
    %v6957 = vld [vmem:[%s7 + $0xe4] sm:$0xf]
    %v6958 = vld [vmem:[%s7 + $0xe8] sm:$0xf]
    %v6959 = vld [vmem:[%s7 + $0xec] sm:$0xf]
    %v6960 = vld [vmem:[%s7 + $0xf0] sm:$0xf]
    %v6961 = vld [vmem:[%s7 + $0xf4] sm:$0xf]
    %v6962 = vld [vmem:[%s7 + $0xf8] sm:$0xf]
    %v6963 = vld [vmem:[%s7 + $0xfc] sm:$0xf]
    %v6964 = vld [vmem:[%s7 + $0x100] sm:$0xf]
    %v6965 = vld [vmem:[%s7 + $0x104] sm:$0xf]
    %v6966 = vld [vmem:[%s7 + $0x108] sm:$0xf]
    %v6967 = vld [vmem:[%s7 + $0x10c] sm:$0xf]
    %v6968 = vld [vmem:[%s7 + $0x110] sm:$0xf]
    %v6969 = vld [vmem:[%s7 + $0x114] sm:$0xf]
    %v6970 = vld [vmem:[%s7 + $0x118] sm:$0xf]
    %v6971 = vld [vmem:[%s7 + $0x11c] sm:$0xf]
    %v6972 = vld [vmem:[%s7 + $0x120] sm:$0xf]
    %v6973 = vld [vmem:[%s7 + $0x124] sm:$0xf]
    %v6974 = vld [vmem:[%s7 + $0x128] sm:$0xf]
    %v6975 = vld [vmem:[%s7 + $0x12c] sm:$0xf]
    %v6976 = vld [vmem:[%s7 + $0x130] sm:$0xf]
    %v6977 = vld [vmem:[%s7 + $0x134] sm:$0xf]
    %v6978 = vld [vmem:[%s7 + $0x138] sm:$0xf]
    %v6979 = vld [vmem:[%s7 + $0x13c] sm:$0xf]
    %v6980 = vld [vmem:[%s7 + $0x140] sm:$0xf]
    %v6981 = vld [vmem:[%s7 + $0x144] sm:$0xf]
    %v6982 = vld [vmem:[%s7 + $0x148] sm:$0xf]
    %v6983 = vld [vmem:[%s7 + $0x14c] sm:$0xf]
    %v6984 = vld [vmem:[%s7 + $0x150] sm:$0xf]
    %v6985 = vld [vmem:[%s7 + $0x154] sm:$0xf]
    %v6986 = vld [vmem:[%s7 + $0x158] sm:$0xf]
    %v6987 = vld [vmem:[%s7 + $0x15c] sm:$0xf]
    %v6988 = vld [vmem:[%s7 + $0x160] sm:$0xf]
    %v6989 = vld [vmem:[%s7 + $0x164] sm:$0xf]
    %v6990 = vld [vmem:[%s7 + $0x168] sm:$0xf]
    %v6991 = vld [vmem:[%s7 + $0x16c] sm:$0xf]
    %v6992 = vld [vmem:[%s7 + $0x170] sm:$0xf]
    %v6993 = vld [vmem:[%s7 + $0x174] sm:$0xf]
    %v6994 = vld [vmem:[%s7 + $0x178] sm:$0xf]
    %v6995 = vld [vmem:[%s7 + $0x17c] sm:$0xf]
    %v6996 = vld [vmem:[%s7 + $0x180] sm:$0xf]
    %v6997 = vld [vmem:[%s7 + $0x184] sm:$0xf]
    %v6998 = vld [vmem:[%s7 + $0x188] sm:$0xf]
    %v6999 = vld [vmem:[%s7 + $0x18c] sm:$0xf]
    %v7000 = vld [vmem:[%s7 + $0x190] sm:$0xf]
    %v7001 = vld [vmem:[%s7 + $0x194] sm:$0xf]
    %v7002 = vld [vmem:[%s7 + $0x198] sm:$0xf]
    %v7003 = vld [vmem:[%s7 + $0x19c] sm:$0xf]
    %v7004 = vld [vmem:[%s7 + $0x1a0] sm:$0xf]
    %v7005 = vld [vmem:[%s7 + $0x1a4] sm:$0xf]
    %v7006 = vld [vmem:[%s7 + $0x1a8] sm:$0xf]
    %v7007 = vld [vmem:[%s7 + $0x1ac] sm:$0xf]
    %v7008 = vld [vmem:[%s7 + $0x1b0] sm:$0xf]
    %v7009 = vld [vmem:[%s7 + $0x1b4] sm:$0xf]
    %v7010 = vld [vmem:[%s7 + $0x1b8] sm:$0xf]
    %v7011 = vld [vmem:[%s7 + $0x1bc] sm:$0xf]
    %v7012 = vld [vmem:[%s7 + $0x1c0] sm:$0xf]
    %v7013 = vld [vmem:[%s7 + $0x1c4] sm:$0xf]
    %v7014 = vld [vmem:[%s7 + $0x1c8] sm:$0xf]
    %v7015 = vld [vmem:[%s7 + $0x1cc] sm:$0xf]
    %v7016 = vld [vmem:[%s7 + $0x1d0] sm:$0xf]
    %v7017 = vld [vmem:[%s7 + $0x1d4] sm:$0xf]
    %v7018 = vld [vmem:[%s7 + $0x1d8] sm:$0xf]
    %v7019 = vld [vmem:[%s7 + $0x1dc] sm:$0xf]
    %v7020 = vld [vmem:[%s7 + $0x1e0] sm:$0xf]
    %v7021 = vld [vmem:[%s7 + $0x1e4] sm:$0xf]
    %v7022 = vld [vmem:[%s7 + $0x1e8] sm:$0xf]
    %v7023 = vld [vmem:[%s7 + $0x1ec] sm:$0xf]
    %v7024 = vld [vmem:[%s7 + $0x1f0] sm:$0xf]
    %v7025 = vld [vmem:[%s7 + $0x1f4] sm:$0xf]
    %v7026 = vld [vmem:[%s7 + $0x1f8] sm:$0xf]
    %v7027 = vld [vmem:[%s7 + $0x1fc] sm:$0xf]
    %v7028 = vld [vmem:[%s8] sm:$0x1]
    %v7030 = vlaneseq
    %v7031 = vshrl.u32 %v7030, 7
    %v7032 = vsub.s32 0, %v7031
    %v7033 = vrot.slane %v7028, %v7032
    %v7163 = vunpack.c.l.b16 %v6900
    %v7164 = vunpack.c.l.b16 %v6901
    %v7165 = vunpack.c.l.b16 %v6902
    %v7166 = vunpack.c.l.b16 %v6903
    %v7167 = vunpack.c.l.b16 %v6904
    %v7168 = vunpack.c.l.b16 %v6905
    %v7169 = vunpack.c.l.b16 %v6906
    %v7170 = vunpack.c.l.b16 %v6907
    %v7171 = vunpack.c.l.b16 %v6908
    %v7172 = vunpack.c.l.b16 %v6909
    %v7173 = vunpack.c.l.b16 %v6910
    %v7174 = vunpack.c.l.b16 %v6911
    %v7175 = vunpack.c.l.b16 %v6912
    %v7176 = vunpack.c.l.b16 %v6913
    %v7177 = vunpack.c.l.b16 %v6914
    %v7178 = vunpack.c.l.b16 %v6915
    %v7179 = vunpack.c.l.b16 %v6916
    %v7180 = vunpack.c.l.b16 %v6917
    %v7181 = vunpack.c.l.b16 %v6918
    %v7182 = vunpack.c.l.b16 %v6919
    %v7183 = vunpack.c.l.b16 %v6920
    %v7184 = vunpack.c.l.b16 %v6921
    %v7185 = vunpack.c.l.b16 %v6922
    %v7186 = vunpack.c.l.b16 %v6923
    %v7187 = vunpack.c.l.b16 %v6924
    %v7188 = vunpack.c.l.b16 %v6925
    %v7189 = vunpack.c.l.b16 %v6926
    %v7190 = vunpack.c.l.b16 %v6927
    %v7191 = vunpack.c.l.b16 %v6928
    %v7192 = vunpack.c.l.b16 %v6929
    %v7193 = vunpack.c.l.b16 %v6930
    %v7194 = vunpack.c.l.b16 %v6931
    %v7195 = vunpack.c.l.b16 %v6932
    %v7196 = vunpack.c.l.b16 %v6933
    %v7197 = vunpack.c.l.b16 %v6934
    %v7198 = vunpack.c.l.b16 %v6935
    %v7199 = vunpack.c.l.b16 %v6936
    %v7200 = vunpack.c.l.b16 %v6937
    %v7201 = vunpack.c.l.b16 %v6938
    %v7202 = vunpack.c.l.b16 %v6939
    %v7203 = vunpack.c.l.b16 %v6940
    %v7204 = vunpack.c.l.b16 %v6941
    %v7205 = vunpack.c.l.b16 %v6942
    %v7206 = vunpack.c.l.b16 %v6943
    %v7207 = vunpack.c.l.b16 %v6944
    %v7208 = vunpack.c.l.b16 %v6945
    %v7209 = vunpack.c.l.b16 %v6946
    %v7210 = vunpack.c.l.b16 %v6947
    %v7211 = vunpack.c.l.b16 %v6948
    %v7212 = vunpack.c.l.b16 %v6949
    %v7213 = vunpack.c.l.b16 %v6950
    %v7214 = vunpack.c.l.b16 %v6951
    %v7215 = vunpack.c.l.b16 %v6952
    %v7216 = vunpack.c.l.b16 %v6953
    %v7217 = vunpack.c.l.b16 %v6954
    %v7218 = vunpack.c.l.b16 %v6955
    %v7219 = vunpack.c.l.b16 %v6956
    %v7220 = vunpack.c.l.b16 %v6957
    %v7221 = vunpack.c.l.b16 %v6958
    %v7222 = vunpack.c.l.b16 %v6959
    %v7223 = vunpack.c.l.b16 %v6960
    %v7224 = vunpack.c.l.b16 %v6961
    %v7225 = vunpack.c.l.b16 %v6962
    %v7226 = vunpack.c.l.b16 %v6963
    %v7227 = vunpack.c.l.b16 %v6964
    %v7228 = vunpack.c.l.b16 %v6965
    %v7229 = vunpack.c.l.b16 %v6966
    %v7230 = vunpack.c.l.b16 %v6967
    %v7231 = vunpack.c.l.b16 %v6968
    %v7232 = vunpack.c.l.b16 %v6969
    %v7233 = vunpack.c.l.b16 %v6970
    %v7234 = vunpack.c.l.b16 %v6971
    %v7235 = vunpack.c.l.b16 %v6972
    %v7236 = vunpack.c.l.b16 %v6973
    %v7237 = vunpack.c.l.b16 %v6974
    %v7238 = vunpack.c.l.b16 %v6975
    %v7239 = vunpack.c.l.b16 %v6976
    %v7240 = vunpack.c.l.b16 %v6977
    %v7241 = vunpack.c.l.b16 %v6978
    %v7242 = vunpack.c.l.b16 %v6979
    %v7243 = vunpack.c.l.b16 %v6980
    %v7244 = vunpack.c.l.b16 %v6981
    %v7245 = vunpack.c.l.b16 %v6982
    %v7246 = vunpack.c.l.b16 %v6983
    %v7247 = vunpack.c.l.b16 %v6984
    %v7248 = vunpack.c.l.b16 %v6985
    %v7249 = vunpack.c.l.b16 %v6986
    %v7250 = vunpack.c.l.b16 %v6987
    %v7251 = vunpack.c.l.b16 %v6988
    %v7252 = vunpack.c.l.b16 %v6989
    %v7253 = vunpack.c.l.b16 %v6990
    %v7254 = vunpack.c.l.b16 %v6991
    %v7255 = vunpack.c.l.b16 %v6992
    %v7256 = vunpack.c.l.b16 %v6993
    %v7257 = vunpack.c.l.b16 %v6994
    %v7258 = vunpack.c.l.b16 %v6995
    %v7259 = vunpack.c.l.b16 %v6996
    %v7260 = vunpack.c.l.b16 %v6997
    %v7261 = vunpack.c.l.b16 %v6998
    %v7262 = vunpack.c.l.b16 %v6999
    %v7263 = vunpack.c.l.b16 %v7000
    %v7264 = vunpack.c.l.b16 %v7001
    %v7265 = vunpack.c.l.b16 %v7002
    %v7266 = vunpack.c.l.b16 %v7003
    %v7267 = vunpack.c.l.b16 %v7004
    %v7268 = vunpack.c.l.b16 %v7005
    %v7269 = vunpack.c.l.b16 %v7006
    %v7270 = vunpack.c.l.b16 %v7007
    %v7271 = vunpack.c.l.b16 %v7008
    %v7272 = vunpack.c.l.b16 %v7009
    %v7273 = vunpack.c.l.b16 %v7010
    %v7274 = vunpack.c.l.b16 %v7011
    %v7275 = vunpack.c.l.b16 %v7012
    %v7276 = vunpack.c.l.b16 %v7013
    %v7277 = vunpack.c.l.b16 %v7014
    %v7278 = vunpack.c.l.b16 %v7015
    %v7279 = vunpack.c.l.b16 %v7016
    %v7280 = vunpack.c.l.b16 %v7017
    %v7281 = vunpack.c.l.b16 %v7018
    %v7282 = vunpack.c.l.b16 %v7019
    %v7283 = vunpack.c.l.b16 %v7020
    %v7284 = vunpack.c.l.b16 %v7021
    %v7285 = vunpack.c.l.b16 %v7022
    %v7286 = vunpack.c.l.b16 %v7023
    %v7287 = vunpack.c.l.b16 %v7024
    %v7288 = vunpack.c.l.b16 %v7025
    %v7289 = vunpack.c.l.b16 %v7026
    %v7290 = vunpack.c.l.b16 %v7027
    %v7291 = vpack.c.b16 %v7164, %v7163
    %v7292 = vpack.c.b16 %v7166, %v7165
    %v7293 = vpack.c.b16 %v7168, %v7167
    %v7294 = vpack.c.b16 %v7170, %v7169
    %v7295 = vpack.c.b16 %v7172, %v7171
    %v7296 = vpack.c.b16 %v7174, %v7173
    %v7297 = vpack.c.b16 %v7176, %v7175
    %v7298 = vpack.c.b16 %v7178, %v7177
    %v7299 = vpack.c.b16 %v7180, %v7179
    %v7300 = vpack.c.b16 %v7182, %v7181
    %v7301 = vpack.c.b16 %v7184, %v7183
    %v7302 = vpack.c.b16 %v7186, %v7185
    %v7303 = vpack.c.b16 %v7188, %v7187
    %v7304 = vpack.c.b16 %v7190, %v7189
    %v7305 = vpack.c.b16 %v7192, %v7191
    %v7306 = vpack.c.b16 %v7194, %v7193
    %v7307 = vpack.c.b16 %v7196, %v7195
    %v7308 = vpack.c.b16 %v7198, %v7197
    %v7309 = vpack.c.b16 %v7200, %v7199
    %v7310 = vpack.c.b16 %v7202, %v7201
    %v7311 = vpack.c.b16 %v7204, %v7203
    %v7312 = vpack.c.b16 %v7206, %v7205
    %v7313 = vpack.c.b16 %v7208, %v7207
    %v7314 = vpack.c.b16 %v7210, %v7209
    %v7315 = vpack.c.b16 %v7212, %v7211
    %v7316 = vpack.c.b16 %v7214, %v7213
    %v7317 = vpack.c.b16 %v7216, %v7215
    %v7318 = vpack.c.b16 %v7218, %v7217
    %v7319 = vpack.c.b16 %v7220, %v7219
    %v7320 = vpack.c.b16 %v7222, %v7221
    %v7321 = vpack.c.b16 %v7224, %v7223
    %v7322 = vpack.c.b16 %v7226, %v7225
    %v7323 = vpack.c.b16 %v7228, %v7227
    %v7324 = vpack.c.b16 %v7230, %v7229
    %v7325 = vpack.c.b16 %v7232, %v7231
    %v7326 = vpack.c.b16 %v7234, %v7233
    %v7327 = vpack.c.b16 %v7236, %v7235
    %v7328 = vpack.c.b16 %v7238, %v7237
    %v7329 = vpack.c.b16 %v7240, %v7239
    %v7330 = vpack.c.b16 %v7242, %v7241
    %v7331 = vpack.c.b16 %v7244, %v7243
    %v7332 = vpack.c.b16 %v7246, %v7245
    %v7333 = vpack.c.b16 %v7248, %v7247
    %v7334 = vpack.c.b16 %v7250, %v7249
    %v7335 = vpack.c.b16 %v7252, %v7251
    %v7336 = vpack.c.b16 %v7254, %v7253
    %v7337 = vpack.c.b16 %v7256, %v7255
    %v7338 = vpack.c.b16 %v7258, %v7257
    %v7339 = vpack.c.b16 %v7260, %v7259
    %v7340 = vpack.c.b16 %v7262, %v7261
    %v7341 = vpack.c.b16 %v7264, %v7263
    %v7342 = vpack.c.b16 %v7266, %v7265
    %v7343 = vpack.c.b16 %v7268, %v7267
    %v7344 = vpack.c.b16 %v7270, %v7269
    %v7345 = vpack.c.b16 %v7272, %v7271
    %v7346 = vpack.c.b16 %v7274, %v7273
    %v7347 = vpack.c.b16 %v7276, %v7275
    %v7348 = vpack.c.b16 %v7278, %v7277
    %v7349 = vpack.c.b16 %v7280, %v7279
    %v7350 = vpack.c.b16 %v7282, %v7281
    %v7351 = vpack.c.b16 %v7284, %v7283
    %v7352 = vpack.c.b16 %v7286, %v7285
    %v7353 = vpack.c.b16 %v7288, %v7287
    %v7354 = vpack.c.b16 %v7290, %v7289
    %7419 = vmatprep.subr.bf16.mxu0 0
    %7420 = vmatpush1.bf16.msra.mxu0 %v7291
    %7421 = vmatprep.subr.bf16.mxu0 0
    %7422 = vmatpush1.bf16.msra.mxu0 %v7292
    %7423 = vmatprep.subr.bf16.mxu0 0
    %7424 = vmatpush1.bf16.msra.mxu0 %v7293
    %7425 = vmatprep.subr.bf16.mxu0 0
    %7426 = vmatpush1.bf16.msra.mxu0 %v7294
    %7427 = vmatprep.subr.bf16.mxu0 0
    %7428 = vmatpush1.bf16.msra.mxu0 %v7295
    %7429 = vmatprep.subr.bf16.mxu0 0
    %7430 = vmatpush1.bf16.msra.mxu0 %v7296
    %7431 = vmatprep.subr.bf16.mxu0 0
    %7432 = vmatpush1.bf16.msra.mxu0 %v7297
    %7433 = vmatprep.subr.bf16.mxu0 0
    %7434 = vmatpush1.bf16.msra.mxu0 %v7298
    %7435 = vmatprep.subr.bf16.mxu0 0
    %7436 = vmatpush1.bf16.msra.mxu0 %v7299
    %7437 = vmatprep.subr.bf16.mxu0 0
    %7438 = vmatpush1.bf16.msra.mxu0 %v7300
    %7439 = vmatprep.subr.bf16.mxu0 0
    %7440 = vmatpush1.bf16.msra.mxu0 %v7301
    %7441 = vmatprep.subr.bf16.mxu0 0
    %7442 = vmatpush1.bf16.msra.mxu0 %v7302
    %7443 = vmatprep.subr.bf16.mxu0 0
    %7444 = vmatpush1.bf16.msra.mxu0 %v7303
    %7445 = vmatprep.subr.bf16.mxu0 0
    %7446 = vmatpush1.bf16.msra.mxu0 %v7304
    %7447 = vmatprep.subr.bf16.mxu0 0
    %7448 = vmatpush1.bf16.msra.mxu0 %v7305
    %7449 = vmatprep.subr.bf16.mxu0 0
    %7450 = vmatpush1.bf16.msra.mxu0 %v7306
    %7451 = vmatprep.mubr.bf16.mxu0 %v6893
    %7452 = vmatmul.mubr.bf16.gmra.mrb[0].mxu0 %v6892
    %v7453 = vpop.f32.mrb[0].mxu0
    %v7454 = vadd.f32 %v7033, %v7453
    %v7455 = vpop.f32.mrb[0].mxu0
    %v7456 = vpop.f32.mrb[0].mxu0
    %v7457 = vpop.f32.mrb[0].mxu0
    %7458 = vdwg.mxu0
    %7459 = vmatprep.subr.bf16.mxu0 0
    %7460 = vmatpush1.bf16.msra.mxu0 %v7307
    %7461 = vmatprep.subr.bf16.mxu0 0
    %7462 = vmatpush1.bf16.msra.mxu0 %v7308
    %7463 = vmatprep.subr.bf16.mxu0 0
    %7464 = vmatpush1.bf16.msra.mxu0 %v7309
    %7465 = vmatprep.subr.bf16.mxu0 0
    %7466 = vmatpush1.bf16.msra.mxu0 %v7310
    %7467 = vmatprep.subr.bf16.mxu0 0
    %7468 = vmatpush1.bf16.msra.mxu0 %v7311
    %7469 = vmatprep.subr.bf16.mxu0 0
    %7470 = vmatpush1.bf16.msra.mxu0 %v7312
    %7471 = vmatprep.subr.bf16.mxu0 0
    %7472 = vmatpush1.bf16.msra.mxu0 %v7313
    %7473 = vmatprep.subr.bf16.mxu0 0
    %7474 = vmatpush1.bf16.msra.mxu0 %v7314
    %7475 = vmatprep.subr.bf16.mxu0 0
    %7476 = vmatpush1.bf16.msra.mxu0 %v7315
    %7477 = vmatprep.subr.bf16.mxu0 0
    %7478 = vmatpush1.bf16.msra.mxu0 %v7316
    %7479 = vmatprep.subr.bf16.mxu0 0
    %7480 = vmatpush1.bf16.msra.mxu0 %v7317
    %7481 = vmatprep.subr.bf16.mxu0 0
    %7482 = vmatpush1.bf16.msra.mxu0 %v7318
    %7483 = vmatprep.subr.bf16.mxu0 0
    %7484 = vmatpush1.bf16.msra.mxu0 %v7319
    %7485 = vmatprep.subr.bf16.mxu0 0
    %7486 = vmatpush1.bf16.msra.mxu0 %v7320
    %7487 = vmatprep.subr.bf16.mxu0 0
    %7488 = vmatpush1.bf16.msra.mxu0 %v7321
    %7489 = vmatprep.subr.bf16.mxu0 0
    %7490 = vmatpush1.bf16.msra.mxu0 %v7322
    %7491 = vmatprep.mubr.bf16.mxu0 %v6895
    %7492 = vmatmul.mubr.bf16.gmra.mrb[0].mxu0 %v6894
    %v7493 = vpop.f32.mrb[0].mxu0
    %v7494 = vadd.f32 %v7454, %v7493
    %v7495 = vpop.f32.mrb[0].mxu0
    %v7496 = vpop.f32.mrb[0].mxu0
    %v7497 = vpop.f32.mrb[0].mxu0
    %7498 = vdwg.mxu0
    %7499 = vmatprep.subr.bf16.mxu0 0
    %7500 = vmatpush1.bf16.msra.mxu0 %v7323
    %7501 = vmatprep.subr.bf16.mxu0 0
    %7502 = vmatpush1.bf16.msra.mxu0 %v7324
    %7503 = vmatprep.subr.bf16.mxu0 0
    %7504 = vmatpush1.bf16.msra.mxu0 %v7325
    %7505 = vmatprep.subr.bf16.mxu0 0
    %7506 = vmatpush1.bf16.msra.mxu0 %v7326
    %7507 = vmatprep.subr.bf16.mxu0 0
    %7508 = vmatpush1.bf16.msra.mxu0 %v7327
    %7509 = vmatprep.subr.bf16.mxu0 0
    %7510 = vmatpush1.bf16.msra.mxu0 %v7328
    %7511 = vmatprep.subr.bf16.mxu0 0
    %7512 = vmatpush1.bf16.msra.mxu0 %v7329
    %7513 = vmatprep.subr.bf16.mxu0 0
    %7514 = vmatpush1.bf16.msra.mxu0 %v7330
    %7515 = vmatprep.subr.bf16.mxu0 0
    %7516 = vmatpush1.bf16.msra.mxu0 %v7331
    %7517 = vmatprep.subr.bf16.mxu0 0
    %7518 = vmatpush1.bf16.msra.mxu0 %v7332
    %7519 = vmatprep.subr.bf16.mxu0 0
    %7520 = vmatpush1.bf16.msra.mxu0 %v7333
    %7521 = vmatprep.subr.bf16.mxu0 0
    %7522 = vmatpush1.bf16.msra.mxu0 %v7334
    %7523 = vmatprep.subr.bf16.mxu0 0
    %7524 = vmatpush1.bf16.msra.mxu0 %v7335
    %7525 = vmatprep.subr.bf16.mxu0 0
    %7526 = vmatpush1.bf16.msra.mxu0 %v7336
    %7527 = vmatprep.subr.bf16.mxu0 0
    %7528 = vmatpush1.bf16.msra.mxu0 %v7337
    %7529 = vmatprep.subr.bf16.mxu0 0
    %7530 = vmatpush1.bf16.msra.mxu0 %v7338
    %7531 = vmatprep.mubr.bf16.mxu0 %v6897
    %7532 = vmatmul.mubr.bf16.gmra.mrb[0].mxu0 %v6896
    %v7533 = vpop.f32.mrb[0].mxu0
    %v7534 = vadd.f32 %v7494, %v7533
    %v7535 = vpop.f32.mrb[0].mxu0
    %v7536 = vpop.f32.mrb[0].mxu0
    %v7537 = vpop.f32.mrb[0].mxu0
    %7538 = vdwg.mxu0
    %7539 = vmatprep.subr.bf16.mxu0 0
    %7540 = vmatpush1.bf16.msra.mxu0 %v7339
    %7541 = vmatprep.subr.bf16.mxu0 0
    %7542 = vmatpush1.bf16.msra.mxu0 %v7340
    %7543 = vmatprep.subr.bf16.mxu0 0
    %7544 = vmatpush1.bf16.msra.mxu0 %v7341
    %7545 = vmatprep.subr.bf16.mxu0 0
    %7546 = vmatpush1.bf16.msra.mxu0 %v7342
    %7547 = vmatprep.subr.bf16.mxu0 0
    %7548 = vmatpush1.bf16.msra.mxu0 %v7343
    %7549 = vmatprep.subr.bf16.mxu0 0
    %7550 = vmatpush1.bf16.msra.mxu0 %v7344
    %7551 = vmatprep.subr.bf16.mxu0 0
    %7552 = vmatpush1.bf16.msra.mxu0 %v7345
    %7553 = vmatprep.subr.bf16.mxu0 0
    %7554 = vmatpush1.bf16.msra.mxu0 %v7346
    %7555 = vmatprep.subr.bf16.mxu0 0
    %7556 = vmatpush1.bf16.msra.mxu0 %v7347
    %7557 = vmatprep.subr.bf16.mxu0 0
    %7558 = vmatpush1.bf16.msra.mxu0 %v7348
    %7559 = vmatprep.subr.bf16.mxu0 0
    %7560 = vmatpush1.bf16.msra.mxu0 %v7349
    %7561 = vmatprep.subr.bf16.mxu0 0
    %7562 = vmatpush1.bf16.msra.mxu0 %v7350
    %7563 = vmatprep.subr.bf16.mxu0 0
    %7564 = vmatpush1.bf16.msra.mxu0 %v7351
    %7565 = vmatprep.subr.bf16.mxu0 0
    %7566 = vmatpush1.bf16.msra.mxu0 %v7352
    %7567 = vmatprep.subr.bf16.mxu0 0
    %7568 = vmatpush1.bf16.msra.mxu0 %v7353
    %7569 = vmatprep.subr.bf16.mxu0 0
    %7570 = vmatpush1.bf16.msra.mxu0 %v7354
    %7571 = vmatprep.mubr.bf16.mxu0 %v6899
    %7572 = vmatmul.mubr.bf16.gmra.mrb[0].mxu0 %v6898
    %v7573 = vpop.f32.mrb[0].mxu0
    %v7574 = vadd.f32 %v7534, %v7573
    %v7575 = vpop.f32.mrb[0].mxu0
    %v7576 = vpop.f32.mrb[0].mxu0
    %v7577 = vpop.f32.mrb[0].mxu0
    %7578 = vdwg.mxu0
    %7579 = vst [vmem:[#allocation6] sm:$0x3] %v7574
    // Predicated region
    $region42: #{neural_forward.1} parent=1 // pred_check
      _
    $region43: #{neural_forward.1} parent=1 // pred_check_branch
      %7581 = sbr.rel (0) target = $region45
    $region44: #{neural_forward.1} parent=1 // pred_region
      %s7583 = ssub.s32 32, 32
      %7584 = vsyncadd [#allocation5], %s7583
      %s7586 = sshll.u32 [#allocation6], 4
      %s7587 = int_to_ptr.vmem [resolvable:$true] %s7586
      %7589 = dma.vmem_to_hbm [thread:$0]  %s7587, 32, %s9, [#allocation5]
    $region45: #{neural_forward.1} parent=1 // pred_fallthru
      _
    // Predicated region
    $region46: #{neural_forward.1} parent=1 // pred_check
      _
    $region47: #{neural_forward.1} parent=1 // pred_check_branch
      %7591 = sbr.rel (0) target = $region49
    $region48: #{neural_forward.1} parent=1 // pred_region
      %7592 = dma.done [#allocation5], 32
    $region49: #{neural_forward.1} parent=1 // pred_fallthru
      _
    %7593 = vsyncpa [#allocation4], 1
    %7594 = vsyncpa [#allocation5], 1

</llo_original>
